<compile_context>
chip_gen: v7x
topology: tpu7x:2x2x1
jax: 0.10.0
libtpu: 0.0.40
codegen_flags: <defaults>
</compile_context>

<pallas_src>
import jax
import jax.numpy as jnp
from jax.experimental import pallas as pl
from jax.experimental.pallas import tpu as pltpu

CODE_L = 512    # encoder hidden width
CODE = 256      # code width
CODE_R = 128    # classifier hidden width
CLS_PAD = 128   # classifier logits padded to a full 128-lane tile

_WEIGHT_ORDER = ("w1e", "b1e", "w2p", "b2p", "w2s", "b2s",
                 "wc1", "bc1", "wc2", "bc2",
                 "wd1p", "wd1s", "bd1", "wd2", "bd2")


def _round_up(n, m):
    return ((n + m - 1) // m) * m


# ---------------------------------------------------------------------------
# Fused SpaDicer forward kernel (one batch tile per grid step)
# ---------------------------------------------------------------------------
def _spadicer_kernel(x_ref,
                     w1e_ref, b1e_ref,
                     w2p_ref, b2p_ref,
                     w2s_ref, b2s_ref,
                     wc1_ref, bc1_ref,
                     wc2_ref, bc2_ref,
                     wd1p_ref, wd1s_ref, bd1_ref,
                     wd2_ref, bd2_ref,
                     priv_ref, shr_ref, cls_ref, rec_ref):
    f32 = jnp.float32
    bf16 = jnp.bfloat16

    # x arrives as f32 straight from HBM (no wrapper-side cast pass); cast once here.
    x = x_ref[...].astype(bf16)                                     # (tm, in_f)

    # --- fused [private | shared] encoder, layer 1: (tm, 2*CODE_L) ---
    h = jnp.dot(x, w1e_ref[...], preferred_element_type=f32) + b1e_ref[...]
    h = jnp.maximum(h, 0.0).astype(bf16)
    h_priv = h[:, :CODE_L]                                          # lane-aligned slices
    h_shr = h[:, CODE_L:]

    # --- private encoder, layer 2 (+ ReLU) ---
    priv = jnp.dot(h_priv, w2p_ref[...], preferred_element_type=f32) + b2p_ref[...]
    priv = jnp.maximum(priv, 0.0)
    priv_ref[...] = priv.astype(priv_ref.dtype)

    # --- shared encoder, layer 2 (no ReLU) ---
    shr = jnp.dot(h_shr, w2s_ref[...], preferred_element_type=f32) + b2s_ref[...]
    shr_ref[...] = shr.astype(shr_ref.dtype)

    # --- classifier head: Linear -> ReLU -> Linear (logits padded to CLS_PAD lanes) ---
    shr_bf = shr.astype(bf16)
    c = jnp.dot(shr_bf, wc1_ref[...], preferred_element_type=f32) + bc1_ref[...]
    c = jnp.maximum(c, 0.0).astype(bf16)
    cls = jnp.dot(c, wc2_ref[...], preferred_element_type=f32) + bc2_ref[...]
    cls_ref[...] = cls.astype(cls_ref.dtype)

    # --- decoder over union = [private | shared]: split-W1 -> two accumulating dots,
    #     so no (M, 512) concat is ever materialized in HBM. wd2/bd2 are lane-padded
    #     to in_f_pad at pack time -> rec writeback is unmasked full-lane stores. ---
    priv_bf = priv.astype(bf16)
    d = (jnp.dot(priv_bf, wd1p_ref[...], preferred_element_type=f32)
         + jnp.dot(shr_bf, wd1s_ref[...], preferred_element_type=f32)
         + bd1_ref[...])
    d = jnp.maximum(d, 0.0).astype(bf16)
    rec = jnp.dot(d, wd2_ref[...], preferred_element_type=f32) + bd2_ref[...]
    rec_ref[...] = rec.astype(rec_ref.dtype)


# ---------------------------------------------------------------------------
# pallas_call construction
# ---------------------------------------------------------------------------
def _build_pallas_call(weight_arrays, m_pad, in_f, in_f_pad, tm, out_dtype,
                       single_buffer_weights):
    row = lambda i: (i, 0)      # batch-tiled arrays
    const = lambda i: (0, 0)    # grid-invariant weights/biases

    in_specs = [pl.BlockSpec((tm, in_f), row)]
    for w in weight_arrays:
        if single_buffer_weights:
            # Grid-invariant block: a second pipeline buffer is pure VMEM waste.
            in_specs.append(
                pl.BlockSpec(w.shape, const, pipeline_mode=pl.Buffered(1)))
        else:
            in_specs.append(pl.BlockSpec(w.shape, const))

    out_shapes = (
        jax.ShapeDtypeStruct((m_pad, CODE), out_dtype),      # private_code
        jax.ShapeDtypeStruct((m_pad, CODE), out_dtype),      # shared_code
        jax.ShapeDtypeStruct((m_pad, CLS_PAD), out_dtype),   # class logits (padded)
        jax.ShapeDtypeStruct((m_pad, in_f_pad), out_dtype),  # reconstruction (padded)
    )
    out_specs = [
        pl.BlockSpec((tm, CODE), row),
        pl.BlockSpec((tm, CODE), row),
        pl.BlockSpec((tm, CLS_PAD), row),
        pl.BlockSpec((tm, in_f_pad), row),
    ]

    # Derived VMEM budget: weights x buffer-count, double-buffered x/out tiles,
    # f32 intermediates (h, codes, classifier, d, rec) + headroom.
    out_itemsize = jnp.dtype(out_dtype).itemsize
    weight_bytes = sum(int(w.size) * jnp.dtype(w.dtype).itemsize for w in weight_arrays)
    wbuf = 1 if single_buffer_weights else 2
    x_tile = tm * in_f * 4
    out_tile = tm * (2 * CODE + CLS_PAD + in_f_pad) * out_itemsize
    interm = tm * (2 * CODE_L + 2 * CODE + CODE_R + CLS_PAD + CODE_L + in_f_pad) * 4
    vmem_limit = wbuf * weight_bytes + 2 * (x_tile + out_tile) + interm + (16 << 20)
    vmem_limit = int(min(max(vmem_limit, 32 << 20), 100 << 20))
    # TODO(synk): for very large in_f (> ~8k) whole-weight VMEM residency stops
    # fitting on v7x (64 MiB); a K-tiled grid axis for w1e and an N-tiled axis for
    # wd2 with an f32 accumulator would remove that cap.

    return pl.pallas_call(
        _spadicer_kernel,
        out_shape=out_shapes,
        grid_spec=pltpu.PrefetchScalarGridSpec(
            num_scalar_prefetch=0,
            grid=(m_pad // tm,),
            in_specs=in_specs,
            out_specs=out_specs,
        ),
        compiler_params=pltpu.CompilerParams(
            dimension_semantics=("parallel",),
            vmem_limit_bytes=vmem_limit,
        ),
    )


def _spadicer_pallas(weight_arrays, x_pad, *, tm, in_f, in_f_pad, out_dtype):
    m_pad = x_pad.shape[0]
    try:
        call = _build_pallas_call(weight_arrays, m_pad, in_f, in_f_pad, tm,
                                  out_dtype, single_buffer_weights=True)
        return call(x_pad, *weight_arrays)
    except Exception:
        # Fallback if pipeline_mode / Buffered(1) is not supported by this JAX build:
        # identical kernel, default double-buffered weights (known-good path).
        call = _build_pallas_call(weight_arrays, m_pad, in_f, in_f_pad, tm,
                                  out_dtype, single_buffer_weights=False)
        return call(x_pad, *weight_arrays)


# ---------------------------------------------------------------------------
# Tiling heuristics
# ---------------------------------------------------------------------------
def _tensorcores_per_chip_hint():
    try:
        kind = jax.devices()[0].device_kind.lower()
    except Exception:
        return 2
    if "v7" in kind:
        return 2
    if any(t in kind for t in ("v5e", "v5 lite", "v5lite", "v6e", "v6 lite", "v6lite")):
        return 1
    return 2  # unknown -> conservative (more grid steps never hurts correctness)


def _pick_tiling(M, tm=None):
    m16 = _round_up(max(int(M), 1), 16)   # 16 rows: full bf16 sublane packing
    if tm is None:
        # >= 2 "parallel" grid steps whenever the padded batch exceeds 128 so v7x's
        # two TensorCores both get work; larger tiles on 1-TC chips (v5e/v6e).
        cap = 256 if _tensorcores_per_chip_hint() >= 2 else 512
        if m16 <= 128:
            tm = m16
        else:
            tm = min(cap, _round_up((m16 + 1) // 2, 16))
    m_pad = _round_up(max(int(M), 1), tm)
    return tm, m_pad


# ---------------------------------------------------------------------------
# Parameter construction (deterministic, synthetic) + kernel-ready packing
# ---------------------------------------------------------------------------
def _linear_params(key, in_f, out_f, dtype=jnp.float32):
    kw, kb = jax.random.split(key)
    bound = 1.0 / jnp.sqrt(in_f)
    # Stored as (in, out) so the kernel computes x @ W + b (== PyTorch x @ W.T + b).
    w = jax.random.uniform(kw, (in_f, out_f), dtype, -bound, bound)
    b = jax.random.uniform(kb, (out_f,), dtype, -bound, bound)
    return w, b


def init_spadicer_params(key, in_f, n_class):
    keys = jax.random.split(key, 12)
    p = {}
    p["src_fc1"] = _linear_params(keys[0], in_f, CODE_L)
    p["src_fc2"] = _linear_params(keys[1], CODE_L, CODE)
    p["tgt_fc1"] = _linear_params(keys[2], in_f, CODE_L)
    p["tgt_fc2"] = _linear_params(keys[3], CODE_L, CODE)
    p["shr_fc1"] = _linear_params(keys[4], in_f, CODE_L)
    p["shr_fc2"] = _linear_params(keys[5], CODE_L, CODE)
    p["cls_src_fc1"] = _linear_params(keys[6], CODE, CODE_R)
    p["cls_src_fc2"] = _linear_params(keys[7], CODE_R, 2)
    p["cls_tgt_fc1"] = _linear_params(keys[8], CODE, CODE_R)
    p["cls_tgt_fc2"] = _linear_params(keys[9], CODE_R, n_class)
    p["dec_fc1"] = _linear_params(keys[10], CODE * 2, CODE_L)
    p["dec_fc2"] = _linear_params(keys[11], CODE_L, in_f)
    return p


def prepare_fused_params(params, mode, dtype=jnp.bfloat16):
    """Pack / pad / cast weights into the kernel-ready layout (do ONCE, reuse)."""
    if mode == "source":
        w1p, b1p = params["src_fc1"]; w2p, b2p = params["src_fc2"]
        wc1, bc1 = params["cls_src_fc1"]; wc2, bc2 = params["cls_src_fc2"]
    elif mode == "target":
        w1p, b1p = params["tgt_fc1"]; w2p, b2p = params["tgt_fc2"]
        wc1, bc1 = params["cls_tgt_fc1"]; wc2, bc2 = params["cls_tgt_fc2"]
    else:
        raise ValueError(f"unknown mode: {mode}")
    w1s, b1s = params["shr_fc1"]; w2s, b2s = params["shr_fc2"]
    wd1, bd1 = params["dec_fc1"]; wd2, bd2 = params["dec_fc2"]

    f32 = jnp.float32
    in_f = wd2.shape[1]
    in_f_pad = _round_up(in_f, 128)   # lane-dense rec output
    n_out = wc2.shape[1]
    assert n_out <= CLS_PAD

    wc2_pad = jnp.zeros((CODE_R, CLS_PAD), dtype).at[:, :n_out].set(wc2.astype(dtype))
    bc2_pad = jnp.zeros((1, CLS_PAD), f32).at[0, :n_out].set(bc2.astype(f32))
    wd2_pad = jnp.zeros((CODE_L, in_f_pad), dtype).at[:, :in_f].set(wd2.astype(dtype))
    bd2_pad = jnp.zeros((1, in_f_pad), f32).at[0, :in_f].set(bd2.astype(f32))

    fused = {
        # fused [private | shared] first encoder layer: (in_f, 2*CODE_L)
        "w1e": jnp.concatenate([w1p, w1s], axis=1).astype(dtype),
        "b1e": jnp.concatenate([b1p, b1s]).astype(f32).reshape(1, -1),
        "w2p": w2p.astype(dtype), "b2p": b2p.astype(f32).reshape(1, -1),
        "w2s": w2s.astype(dtype), "b2s": b2s.astype(f32).reshape(1, -1),
        "wc1": wc1.astype(dtype), "bc1": bc1.astype(f32).reshape(1, -1),
        "wc2": wc2_pad, "bc2": bc2_pad,
        # decoder layer-1 weight split along its input dim (private rows / shared rows)
        "wd1p": wd1[:CODE].astype(dtype),
        "wd1s": wd1[CODE:].astype(dtype),
        "bd1": bd1.astype(f32).reshape(1, -1),
        "wd2": wd2_pad, "bd2": bd2_pad,
    }
    return fused, n_out, in_f, in_f_pad


# ---------------------------------------------------------------------------
# Forward pass (mirrors SpaDicer.forward)
# ---------------------------------------------------------------------------
def make_spadicer_forward(params, mode, out_dtype=jnp.float32):
    """Pack weights once; returns a forward(x) closure that only runs the kernel."""
    fused, n_out, in_f, in_f_pad = prepare_fused_params(params, mode)
    weight_arrays = [fused[k] for k in _WEIGHT_ORDER]

    def forward(x, rec_scheme="all", tm=None):
        if rec_scheme != "all":
            # TODO(synk): rec_scheme='share'/'private' feed a (M, 256) code into
            # dec_fc1 which expects 2*code=512 inputs -- shape-inconsistent in the
            # reference nn.Module as well; only the 'all' path is implemented.
            raise NotImplementedError(
                "only rec_scheme='all' is shape-consistent with dec_fc1")
        M, xf = x.shape
        assert xf == in_f, (xf, in_f)

        tm_eff, m_pad = _pick_tiling(M, tm)
        x_pad = x if m_pad == M else jnp.pad(x, ((0, m_pad - M), (0, 0)))

        priv, shr, cls, rec = _spadicer_pallas(
            weight_arrays, x_pad, tm=tm_eff, in_f=in_f, in_f_pad=in_f_pad,
            out_dtype=out_dtype)
        return [priv[:M], shr[:M], cls[:M, :n_out], rec[:M, :in_f]]

    return forward


_FWD_CACHE = {}


def spadicer_forward(params, x, mode="source", rec_scheme="all", tm=None,
                     out_dtype=jnp.float32):
    """Drop-in forward; caches the packed weights per (params, mode)."""
    key = (id(params), mode, jnp.dtype(out_dtype).name)
    fwd = _FWD_CACHE.get(key)
    if fwd is None:
        fwd = make_spadicer_forward(params, mode, out_dtype=out_dtype)
        _FWD_CACHE[key] = fwd
    return fwd(x, rec_scheme=rec_scheme, tm=tm)


# ---------------------------------------------------------------------------
# Pure-JAX f32 reference for verification
# ---------------------------------------------------------------------------
def _ref_mlp2(x, w1, b1, w2, b2, relu_out):
    h = jnp.maximum(x @ w1 + b1, 0.0)
    o = h @ w2 + b2
    return jnp.maximum(o, 0.0) if relu_out else o


def _ref_forward(params, x, mode, rec_scheme):
    if mode == "source":
        pw1, pb1 = params["src_fc1"]; pw2, pb2 = params["src_fc2"]
        cw1, cb1 = params["cls_src_fc1"]; cw2, cb2 = params["cls_src_fc2"]
    else:
        pw1, pb1 = params["tgt_fc1"]; pw2, pb2 = params["tgt_fc2"]
        cw1, cb1 = params["cls_tgt_fc1"]; cw2, cb2 = params["cls_tgt_fc2"]
    private_code = _ref_mlp2(x, pw1, pb1, pw2, pb2, True)
    sw1, sb1 = params["shr_fc1"]; sw2, sb2 = params["shr_fc2"]
    shared_code = _ref_mlp2(x, sw1, sb1, sw2, sb2, False)
    class_label = _ref_mlp2(shared_code, cw1, cb1, cw2, cb2, False)
    union = jnp.concatenate((private_code, shared_code), axis=1)
    dw1, db1 = params["dec_fc1"]; dw2, db2 = params["dec_fc2"]
    rec_vec = _ref_mlp2(union, dw1, db1, dw2, db2, False)
    return [private_code, shared_code, class_label, rec_vec]


if __name__ == "__main__":
    batch, in_f, n_class = 8, 64, 4
    key = jax.random.PRNGKey(0)
    k_params, k_x = jax.random.split(key)

    params = init_spadicer_params(k_params, in_f, n_class)
    x = jax.random.normal(k_x, (batch, in_f), dtype=jnp.float32)

    forward = make_spadicer_forward(params, mode="source")   # pack weights once
    outs = forward(x, rec_scheme="all")
    outs = jax.block_until_ready(outs)

    refs = _ref_forward(params, x, "source", "all")
    names = ["private_code", "shared_code", "class_label", "rec_vec"]
    for name, o, r in zip(names, outs, refs):
        assert o.shape == r.shape, (name, o.shape, r.shape)
        # bf16 matmul operands (f32 accumulate) vs f32 reference -> loose tolerance.
        assert jnp.allclose(o, r, atol=5e-2, rtol=5e-2), name

    print("KERNEL_OK")
</pallas_src>

<mosaic_0001>
module attributes {stable_mosaic.version = 11 : i64} {
  func.func @_spadicer_kernel(%arg0: i32, %arg1: memref<16x64xf32, #tpu.memory_space<vmem>>, %arg2: memref<64x1024xbf16, #tpu.memory_space<vmem>>, %arg3: memref<1x1024xf32, #tpu.memory_space<vmem>>, %arg4: memref<512x256xbf16, #tpu.memory_space<vmem>>, %arg5: memref<1x256xf32, #tpu.memory_space<vmem>>, %arg6: memref<512x256xbf16, #tpu.memory_space<vmem>>, %arg7: memref<1x256xf32, #tpu.memory_space<vmem>>, %arg8: memref<256x128xbf16, #tpu.memory_space<vmem>>, %arg9: memref<1x128xf32, #tpu.memory_space<vmem>>, %arg10: memref<128x128xbf16, #tpu.memory_space<vmem>>, %arg11: memref<1x128xf32, #tpu.memory_space<vmem>>, %arg12: memref<256x512xbf16, #tpu.memory_space<vmem>>, %arg13: memref<256x512xbf16, #tpu.memory_space<vmem>>, %arg14: memref<1x512xf32, #tpu.memory_space<vmem>>, %arg15: memref<512x128xbf16, #tpu.memory_space<vmem>>, %arg16: memref<1x128xf32, #tpu.memory_space<vmem>>, %arg17: memref<16x256xf32, #tpu.memory_space<vmem>>, %arg18: memref<16x256xf32, #tpu.memory_space<vmem>>, %arg19: memref<16x128xf32, #tpu.memory_space<vmem>>, %arg20: memref<16x128xf32, #tpu.memory_space<vmem>>) attributes {dimension_semantics = [#tpu.dimension_semantics<parallel>], iteration_bounds = array<i64: 1>, scalar_prefetch = 0 : i64, scratch_operands = 0 : i64, tpu.core_type = #tpu.core_type<tc>, window_params = [{transform_indices = @transform_0, window_bounds = array<i64: 16, 64>}, {pipeline_mode = #tpu.pipeline_mode<synchronous>, transform_indices = @transform_1, window_bounds = array<i64: 64, 1024>}, {pipeline_mode = #tpu.pipeline_mode<synchronous>, transform_indices = @transform_2, window_bounds = array<i64: 1, 1024>}, {pipeline_mode = #tpu.pipeline_mode<synchronous>, transform_indices = @transform_3, window_bounds = array<i64: 512, 256>}, {pipeline_mode = #tpu.pipeline_mode<synchronous>, transform_indices = @transform_4, window_bounds = array<i64: 1, 256>}, {pipeline_mode = #tpu.pipeline_mode<synchronous>, transform_indices = @transform_5, window_bounds = array<i64: 512, 256>}, {pipeline_mode = #tpu.pipeline_mode<synchronous>, transform_indices = @transform_6, window_bounds = array<i64: 1, 256>}, {pipeline_mode = #tpu.pipeline_mode<synchronous>, transform_indices = @transform_7, window_bounds = array<i64: 256, 128>}, {pipeline_mode = #tpu.pipeline_mode<synchronous>, transform_indices = @transform_8, window_bounds = array<i64: 1, 128>}, {pipeline_mode = #tpu.pipeline_mode<synchronous>, transform_indices = @transform_9, window_bounds = array<i64: 128, 128>}, {pipeline_mode = #tpu.pipeline_mode<synchronous>, transform_indices = @transform_10, window_bounds = array<i64: 1, 128>}, {pipeline_mode = #tpu.pipeline_mode<synchronous>, transform_indices = @transform_11, window_bounds = array<i64: 256, 512>}, {pipeline_mode = #tpu.pipeline_mode<synchronous>, transform_indices = @transform_12, window_bounds = array<i64: 256, 512>}, {pipeline_mode = #tpu.pipeline_mode<synchronous>, transform_indices = @transform_13, window_bounds = array<i64: 1, 512>}, {pipeline_mode = #tpu.pipeline_mode<synchronous>, transform_indices = @transform_14, window_bounds = array<i64: 512, 128>}, {pipeline_mode = #tpu.pipeline_mode<synchronous>, transform_indices = @transform_15, window_bounds = array<i64: 1, 128>}, {transform_indices = @transform_16, window_bounds = array<i64: 16, 256>}, {transform_indices = @transform_17, window_bounds = array<i64: 16, 256>}, {transform_indices = @transform_18, window_bounds = array<i64: 16, 128>}, {transform_indices = @transform_19, window_bounds = array<i64: 16, 128>}]} {
    %c0 = arith.constant 0 : index
    %c0_0 = arith.constant 0 : index
    %0 = vector.load %arg1[%c0, %c0_0] : memref<16x64xf32, #tpu.memory_space<vmem>>, vector<16x64xf32>
    %1 = arith.truncf %0 : vector<16x64xf32> to vector<16x64xbf16>
    %c0_1 = arith.constant 0 : index
    %c0_2 = arith.constant 0 : index
    %2 = vector.load %arg2[%c0_1, %c0_2] : memref<64x1024xbf16, #tpu.memory_space<vmem>>, vector<64x1024xbf16>
    %cst = arith.constant dense<0.000000e+00> : vector<16x1024xf32>
    %3 = tpu.matmul %1, %2, %cst {dimension_numbers = #tpu.dot_dimension_numbers<[1], [0], [0], [1], [0, 0, 1, 1], [], []>} : vector<16x64xbf16>, vector<64x1024xbf16>, vector<16x1024xf32> -> vector<16x1024xf32>
    %c0_3 = arith.constant 0 : index
    %c0_4 = arith.constant 0 : index
    %4 = vector.load %arg3[%c0_3, %c0_4] : memref<1x1024xf32, #tpu.memory_space<vmem>>, vector<1x1024xf32>
    %5 = vector.broadcast %4 : vector<1x1024xf32> to vector<16x1024xf32>
    %6 = arith.addf %3, %5 : vector<16x1024xf32>
    %cst_5 = arith.constant 0.000000e+00 : f32
    %7 = vector.broadcast %cst_5 : f32 to vector<16x1024xf32>
    %8 = arith.maximumf %6, %7 : vector<16x1024xf32>
    %9 = arith.truncf %8 : vector<16x1024xf32> to vector<16x1024xbf16>
    %10 = vector.extract_strided_slice %9 {offsets = [0, 0], sizes = [16, 512], strides = [1, 1]} : vector<16x1024xbf16> to vector<16x512xbf16>
    %11 = vector.extract_strided_slice %9 {offsets = [0, 512], sizes = [16, 512], strides = [1, 1]} : vector<16x1024xbf16> to vector<16x512xbf16>
    %c0_6 = arith.constant 0 : index
    %c0_7 = arith.constant 0 : index
    %12 = vector.load %arg4[%c0_6, %c0_7] : memref<512x256xbf16, #tpu.memory_space<vmem>>, vector<512x256xbf16>
    %cst_8 = arith.constant dense<0.000000e+00> : vector<16x256xf32>
    %13 = tpu.matmul %10, %12, %cst_8 {dimension_numbers = #tpu.dot_dimension_numbers<[1], [0], [0], [1], [0, 0, 1, 1], [], []>} : vector<16x512xbf16>, vector<512x256xbf16>, vector<16x256xf32> -> vector<16x256xf32>
    %c0_9 = arith.constant 0 : index
    %c0_10 = arith.constant 0 : index
    %14 = vector.load %arg5[%c0_9, %c0_10] : memref<1x256xf32, #tpu.memory_space<vmem>>, vector<1x256xf32>
    %15 = vector.broadcast %14 : vector<1x256xf32> to vector<16x256xf32>
    %16 = arith.addf %13, %15 : vector<16x256xf32>
    %cst_11 = arith.constant 0.000000e+00 : f32
    %17 = vector.broadcast %cst_11 : f32 to vector<16x256xf32>
    %18 = arith.maximumf %16, %17 : vector<16x256xf32>
    %c0_12 = arith.constant 0 : index
    %c0_13 = arith.constant 0 : index
    %19 = vector.load %arg17[%c0_12, %c0_13] : memref<16x256xf32, #tpu.memory_space<vmem>>, vector<16x256xf32>
    tpu.vector_store %arg17[%c0_12, %c0_13], %18 {strides = array<i32>} : memref<16x256xf32, #tpu.memory_space<vmem>>, vector<16x256xf32>,
    %c0_14 = arith.constant 0 : index
    %c0_15 = arith.constant 0 : index
    %20 = vector.load %arg6[%c0_14, %c0_15] : memref<512x256xbf16, #tpu.memory_space<vmem>>, vector<512x256xbf16>
    %cst_16 = arith.constant dense<0.000000e+00> : vector<16x256xf32>
    %21 = tpu.matmul %11, %20, %cst_16 {dimension_numbers = #tpu.dot_dimension_numbers<[1], [0], [0], [1], [0, 0, 1, 1], [], []>} : vector<16x512xbf16>, vector<512x256xbf16>, vector<16x256xf32> -> vector<16x256xf32>
    %c0_17 = arith.constant 0 : index
    %c0_18 = arith.constant 0 : index
    %22 = vector.load %arg7[%c0_17, %c0_18] : memref<1x256xf32, #tpu.memory_space<vmem>>, vector<1x256xf32>
    %23 = vector.broadcast %22 : vector<1x256xf32> to vector<16x256xf32>
    %24 = arith.addf %21, %23 : vector<16x256xf32>
    %c0_19 = arith.constant 0 : index
    %c0_20 = arith.constant 0 : index
    %25 = vector.load %arg18[%c0_19, %c0_20] : memref<16x256xf32, #tpu.memory_space<vmem>>, vector<16x256xf32>
    tpu.vector_store %arg18[%c0_19, %c0_20], %24 {strides = array<i32>} : memref<16x256xf32, #tpu.memory_space<vmem>>, vector<16x256xf32>,
    %26 = arith.truncf %24 : vector<16x256xf32> to vector<16x256xbf16>
    %c0_21 = arith.constant 0 : index
    %c0_22 = arith.constant 0 : index
    %27 = vector.load %arg8[%c0_21, %c0_22] : memref<256x128xbf16, #tpu.memory_space<vmem>>, vector<256x128xbf16>
    %cst_23 = arith.constant dense<0.000000e+00> : vector<16x128xf32>
    %28 = tpu.matmul %26, %27, %cst_23 {dimension_numbers = #tpu.dot_dimension_numbers<[1], [0], [0], [1], [0, 0, 1, 1], [], []>} : vector<16x256xbf16>, vector<256x128xbf16>, vector<16x128xf32> -> vector<16x128xf32>
    %c0_24 = arith.constant 0 : index
    %c0_25 = arith.constant 0 : index
    %29 = vector.load %arg9[%c0_24, %c0_25] : memref<1x128xf32, #tpu.memory_space<vmem>>, vector<1x128xf32>
    %30 = vector.broadcast %29 : vector<1x128xf32> to vector<16x128xf32>
    %31 = arith.addf %28, %30 : vector<16x128xf32>
    %cst_26 = arith.constant 0.000000e+00 : f32
    %32 = vector.broadcast %cst_26 : f32 to vector<16x128xf32>
    %33 = arith.maximumf %31, %32 : vector<16x128xf32>
    %34 = arith.truncf %33 : vector<16x128xf32> to vector<16x128xbf16>
    %c0_27 = arith.constant 0 : index
    %c0_28 = arith.constant 0 : index
    %35 = vector.load %arg10[%c0_27, %c0_28] : memref<128x128xbf16, #tpu.memory_space<vmem>>, vector<128x128xbf16>
    %cst_29 = arith.constant dense<0.000000e+00> : vector<16x128xf32>
    %36 = tpu.matmul %34, %35, %cst_29 {dimension_numbers = #tpu.dot_dimension_numbers<[1], [0], [0], [1], [0, 0, 1, 1], [], []>} : vector<16x128xbf16>, vector<128x128xbf16>, vector<16x128xf32> -> vector<16x128xf32>
    %c0_30 = arith.constant 0 : index
    %c0_31 = arith.constant 0 : index
    %37 = vector.load %arg11[%c0_30, %c0_31] : memref<1x128xf32, #tpu.memory_space<vmem>>, vector<1x128xf32>
    %38 = vector.broadcast %37 : vector<1x128xf32> to vector<16x128xf32>
    %39 = arith.addf %36, %38 : vector<16x128xf32>
    %c0_32 = arith.constant 0 : index
    %c0_33 = arith.constant 0 : index
    %40 = vector.load %arg19[%c0_32, %c0_33] : memref<16x128xf32, #tpu.memory_space<vmem>>, vector<16x128xf32>
    tpu.vector_store %arg19[%c0_32, %c0_33], %39 {strides = array<i32>} : memref<16x128xf32, #tpu.memory_space<vmem>>, vector<16x128xf32>,
    %41 = arith.truncf %18 : vector<16x256xf32> to vector<16x256xbf16>
    %c0_34 = arith.constant 0 : index
    %c0_35 = arith.constant 0 : index
    %42 = vector.load %arg12[%c0_34, %c0_35] : memref<256x512xbf16, #tpu.memory_space<vmem>>, vector<256x512xbf16>
    %cst_36 = arith.constant dense<0.000000e+00> : vector<16x512xf32>
    %43 = tpu.matmul %41, %42, %cst_36 {dimension_numbers = #tpu.dot_dimension_numbers<[1], [0], [0], [1], [0, 0, 1, 1], [], []>} : vector<16x256xbf16>, vector<256x512xbf16>, vector<16x512xf32> -> vector<16x512xf32>
    %c0_37 = arith.constant 0 : index
    %c0_38 = arith.constant 0 : index
    %44 = vector.load %arg13[%c0_37, %c0_38] : memref<256x512xbf16, #tpu.memory_space<vmem>>, vector<256x512xbf16>
    %cst_39 = arith.constant dense<0.000000e+00> : vector<16x512xf32>
    %45 = tpu.matmul %26, %44, %cst_39 {dimension_numbers = #tpu.dot_dimension_numbers<[1], [0], [0], [1], [0, 0, 1, 1], [], []>} : vector<16x256xbf16>, vector<256x512xbf16>, vector<16x512xf32> -> vector<16x512xf32>
    %46 = arith.addf %43, %45 : vector<16x512xf32>
    %c0_40 = arith.constant 0 : index
    %c0_41 = arith.constant 0 : index
    %47 = vector.load %arg14[%c0_40, %c0_41] : memref<1x512xf32, #tpu.memory_space<vmem>>, vector<1x512xf32>
    %48 = vector.broadcast %47 : vector<1x512xf32> to vector<16x512xf32>
    %49 = arith.addf %46, %48 : vector<16x512xf32>
    %cst_42 = arith.constant 0.000000e+00 : f32
    %50 = vector.broadcast %cst_42 : f32 to vector<16x512xf32>
    %51 = arith.maximumf %49, %50 : vector<16x512xf32>
    %52 = arith.truncf %51 : vector<16x512xf32> to vector<16x512xbf16>
    %c0_43 = arith.constant 0 : index
    %c0_44 = arith.constant 0 : index
    %53 = vector.load %arg15[%c0_43, %c0_44] : memref<512x128xbf16, #tpu.memory_space<vmem>>, vector<512x128xbf16>
    %cst_45 = arith.constant dense<0.000000e+00> : vector<16x128xf32>
    %54 = tpu.matmul %52, %53, %cst_45 {dimension_numbers = #tpu.dot_dimension_numbers<[1], [0], [0], [1], [0, 0, 1, 1], [], []>} : vector<16x512xbf16>, vector<512x128xbf16>, vector<16x128xf32> -> vector<16x128xf32>
    %c0_46 = arith.constant 0 : index
    %c0_47 = arith.constant 0 : index
    %55 = vector.load %arg16[%c0_46, %c0_47] : memref<1x128xf32, #tpu.memory_space<vmem>>, vector<1x128xf32>
    %56 = vector.broadcast %55 : vector<1x128xf32> to vector<16x128xf32>
    %57 = arith.addf %54, %56 : vector<16x128xf32>
    %c0_48 = arith.constant 0 : index
    %c0_49 = arith.constant 0 : index
    %58 = vector.load %arg20[%c0_48, %c0_49] : memref<16x128xf32, #tpu.memory_space<vmem>>, vector<16x128xf32>
    tpu.vector_store %arg20[%c0_48, %c0_49], %57 {strides = array<i32>} : memref<16x128xf32, #tpu.memory_space<vmem>>, vector<16x128xf32>,
    return
  }
  func.func @transform_0(%arg0: i32) -> (i32, i32) {
    %c0_i32 = arith.constant 0 : i32
    %c0_i32_0 = arith.constant 0 : i32
    return %arg0, %c0_i32 : i32, i32
  }
  func.func @transform_1(%arg0: i32) -> (i32, i32) {
    %c0_i32 = arith.constant 0 : i32
    %c0_i32_0 = arith.constant 0 : i32
    %c0_i32_1 = arith.constant 0 : i32
    return %c0_i32, %c0_i32_0 : i32, i32
  }
  func.func @transform_2(%arg0: i32) -> (i32, i32) {
    %c0_i32 = arith.constant 0 : i32
    %c0_i32_0 = arith.constant 0 : i32
    %c0_i32_1 = arith.constant 0 : i32
    return %c0_i32, %c0_i32_0 : i32, i32
  }
  func.func @transform_3(%arg0: i32) -> (i32, i32) {
    %c0_i32 = arith.constant 0 : i32
    %c0_i32_0 = arith.constant 0 : i32
    %c0_i32_1 = arith.constant 0 : i32
    return %c0_i32, %c0_i32_0 : i32, i32
  }
  func.func @transform_4(%arg0: i32) -> (i32, i32) {
    %c0_i32 = arith.constant 0 : i32
    %c0_i32_0 = arith.constant 0 : i32
    %c0_i32_1 = arith.constant 0 : i32
    return %c0_i32, %c0_i32_0 : i32, i32
  }
  func.func @transform_5(%arg0: i32) -> (i32, i32) {
    %c0_i32 = arith.constant 0 : i32
    %c0_i32_0 = arith.constant 0 : i32
    %c0_i32_1 = arith.constant 0 : i32
    return %c0_i32, %c0_i32_0 : i32, i32
  }
  func.func @transform_6(%arg0: i32) -> (i32, i32) {
    %c0_i32 = arith.constant 0 : i32
    %c0_i32_0 = arith.constant 0 : i32
    %c0_i32_1 = arith.constant 0 : i32
    return %c0_i32, %c0_i32_0 : i32, i32
  }
  func.func @transform_7(%arg0: i32) -> (i32, i32) {
    %c0_i32 = arith.constant 0 : i32
    %c0_i32_0 = arith.constant 0 : i32
    %c0_i32_1 = arith.constant 0 : i32
    return %c0_i32, %c0_i32_0 : i32, i32
  }
  func.func @transform_8(%arg0: i32) -> (i32, i32) {
    %c0_i32 = arith.constant 0 : i32
    %c0_i32_0 = arith.constant 0 : i32
    %c0_i32_1 = arith.constant 0 : i32
    return %c0_i32, %c0_i32_0 : i32, i32
  }
  func.func @transform_9(%arg0: i32) -> (i32, i32) {
    %c0_i32 = arith.constant 0 : i32
    %c0_i32_0 = arith.constant 0 : i32
    %c0_i32_1 = arith.constant 0 : i32
    return %c0_i32, %c0_i32_0 : i32, i32
  }
  func.func @transform_10(%arg0: i32) -> (i32, i32) {
    %c0_i32 = arith.constant 0 : i32
    %c0_i32_0 = arith.constant 0 : i32
    %c0_i32_1 = arith.constant 0 : i32
    return %c0_i32, %c0_i32_0 : i32, i32
  }
  func.func @transform_11(%arg0: i32) -> (i32, i32) {
    %c0_i32 = arith.constant 0 : i32
    %c0_i32_0 = arith.constant 0 : i32
    %c0_i32_1 = arith.constant 0 : i32
    return %c0_i32, %c0_i32_0 : i32, i32
  }
  func.func @transform_12(%arg0: i32) -> (i32, i32) {
    %c0_i32 = arith.constant 0 : i32
    %c0_i32_0 = arith.constant 0 : i32
    %c0_i32_1 = arith.constant 0 : i32
    return %c0_i32, %c0_i32_0 : i32, i32
  }
  func.func @transform_13(%arg0: i32) -> (i32, i32) {
    %c0_i32 = arith.constant 0 : i32
    %c0_i32_0 = arith.constant 0 : i32
    %c0_i32_1 = arith.constant 0 : i32
    return %c0_i32, %c0_i32_0 : i32, i32
  }
  func.func @transform_14(%arg0: i32) -> (i32, i32) {
    %c0_i32 = arith.constant 0 : i32
    %c0_i32_0 = arith.constant 0 : i32
    %c0_i32_1 = arith.constant 0 : i32
    return %c0_i32, %c0_i32_0 : i32, i32
  }
  func.func @transform_15(%arg0: i32) -> (i32, i32) {
    %c0_i32 = arith.constant 0 : i32
    %c0_i32_0 = arith.constant 0 : i32
    %c0_i32_1 = arith.constant 0 : i32
    return %c0_i32, %c0_i32_0 : i32, i32
  }
  func.func @transform_16(%arg0: i32) -> (i32, i32) {
    %c0_i32 = arith.constant 0 : i32
    %c0_i32_0 = arith.constant 0 : i32
    return %arg0, %c0_i32 : i32, i32
  }
  func.func @transform_17(%arg0: i32) -> (i32, i32) {
    %c0_i32 = arith.constant 0 : i32
    %c0_i32_0 = arith.constant 0 : i32
    return %arg0, %c0_i32 : i32, i32
  }
  func.func @transform_18(%arg0: i32) -> (i32, i32) {
    %c0_i32 = arith.constant 0 : i32
    %c0_i32_0 = arith.constant 0 : i32
    return %arg0, %c0_i32 : i32, i32
  }
  func.func @transform_19(%arg0: i32) -> (i32, i32) {
    %c0_i32 = arith.constant 0 : i32
    %c0_i32_0 = arith.constant 0 : i32
    return %arg0, %c0_i32 : i32, i32
  }
}

module attributes {stable_mosaic.version = 11 : i64} {
  func.func @_spadicer_kernel(%arg0: i32, %arg1: memref<16x64xf32, #tpu.memory_space<vmem>>, %arg2: memref<64x1024xbf16, #tpu.memory_space<vmem>>, %arg3: memref<1x1024xf32, #tpu.memory_space<vmem>>, %arg4: memref<512x256xbf16, #tpu.memory_space<vmem>>, %arg5: memref<1x256xf32, #tpu.memory_space<vmem>>, %arg6: memref<512x256xbf16, #tpu.memory_space<vmem>>, %arg7: memref<1x256xf32, #tpu.memory_space<vmem>>, %arg8: memref<256x128xbf16, #tpu.memory_space<vmem>>, %arg9: memref<1x128xf32, #tpu.memory_space<vmem>>, %arg10: memref<128x128xbf16, #tpu.memory_space<vmem>>, %arg11: memref<1x128xf32, #tpu.memory_space<vmem>>, %arg12: memref<256x512xbf16, #tpu.memory_space<vmem>>, %arg13: memref<256x512xbf16, #tpu.memory_space<vmem>>, %arg14: memref<1x512xf32, #tpu.memory_space<vmem>>, %arg15: memref<512x128xbf16, #tpu.memory_space<vmem>>, %arg16: memref<1x128xf32, #tpu.memory_space<vmem>>, %arg17: memref<16x256xf32, #tpu.memory_space<vmem>>, %arg18: memref<16x256xf32, #tpu.memory_space<vmem>>, %arg19: memref<16x128xf32, #tpu.memory_space<vmem>>, %arg20: memref<16x128xf32, #tpu.memory_space<vmem>>) attributes {dimension_semantics = [#tpu.dimension_semantics<parallel>], iteration_bounds = array<i64: 1>, scalar_prefetch = 0 : i64, scratch_operands = 0 : i64, tpu.core_type = #tpu.core_type<tc>, window_params = [{transform_indices = @transform_0, window_bounds = array<i64: 16, 64>}, {pipeline_mode = #tpu.pipeline_mode<synchronous>, transform_indices = @transform_1, window_bounds = array<i64: 64, 1024>}, {pipeline_mode = #tpu.pipeline_mode<synchronous>, transform_indices = @transform_2, window_bounds = array<i64: 1, 1024>}, {pipeline_mode = #tpu.pipeline_mode<synchronous>, transform_indices = @transform_3, window_bounds = array<i64: 512, 256>}, {pipeline_mode = #tpu.pipeline_mode<synchronous>, transform_indices = @transform_4, window_bounds = array<i64: 1, 256>}, {pipeline_mode = #tpu.pipeline_mode<synchronous>, transform_indices = @transform_5, window_bounds = array<i64: 512, 256>}, {pipeline_mode = #tpu.pipeline_mode<synchronous>, transform_indices = @transform_6, window_bounds = array<i64: 1, 256>}, {pipeline_mode = #tpu.pipeline_mode<synchronous>, transform_indices = @transform_7, window_bounds = array<i64: 256, 128>}, {pipeline_mode = #tpu.pipeline_mode<synchronous>, transform_indices = @transform_8, window_bounds = array<i64: 1, 128>}, {pipeline_mode = #tpu.pipeline_mode<synchronous>, transform_indices = @transform_9, window_bounds = array<i64: 128, 128>}, {pipeline_mode = #tpu.pipeline_mode<synchronous>, transform_indices = @transform_10, window_bounds = array<i64: 1, 128>}, {pipeline_mode = #tpu.pipeline_mode<synchronous>, transform_indices = @transform_11, window_bounds = array<i64: 256, 512>}, {pipeline_mode = #tpu.pipeline_mode<synchronous>, transform_indices = @transform_12, window_bounds = array<i64: 256, 512>}, {pipeline_mode = #tpu.pipeline_mode<synchronous>, transform_indices = @transform_13, window_bounds = array<i64: 1, 512>}, {pipeline_mode = #tpu.pipeline_mode<synchronous>, transform_indices = @transform_14, window_bounds = array<i64: 512, 128>}, {pipeline_mode = #tpu.pipeline_mode<synchronous>, transform_indices = @transform_15, window_bounds = array<i64: 1, 128>}, {transform_indices = @transform_16, window_bounds = array<i64: 16, 256>}, {transform_indices = @transform_17, window_bounds = array<i64: 16, 256>}, {transform_indices = @transform_18, window_bounds = array<i64: 16, 128>}, {transform_indices = @transform_19, window_bounds = array<i64: 16, 128>}]} {
    %c0 = arith.constant 0 : index
    %c0_0 = arith.constant 0 : index
    %0 = vector.load %arg1[%c0, %c0_0] : memref<16x64xf32, #tpu.memory_space<vmem>>, vector<16x64xf32>
    %1 = arith.truncf %0 : vector<16x64xf32> to vector<16x64xbf16>
    %c0_1 = arith.constant 0 : index
    %c0_2 = arith.constant 0 : index
    %2 = vector.load %arg2[%c0_1, %c0_2] : memref<64x1024xbf16, #tpu.memory_space<vmem>>, vector<64x1024xbf16>
    %cst = arith.constant dense<0.000000e+00> : vector<16x1024xf32>
    %3 = tpu.matmul %1, %2, %cst {dimension_numbers = #tpu.dot_dimension_numbers<[1], [0], [0], [1], [0, 0, 1, 1], [], []>} : vector<16x64xbf16>, vector<64x1024xbf16>, vector<16x1024xf32> -> vector<16x1024xf32>
    %c0_3 = arith.constant 0 : index
    %c0_4 = arith.constant 0 : index
    %4 = vector.load %arg3[%c0_3, %c0_4] : memref<1x1024xf32, #tpu.memory_space<vmem>>, vector<1x1024xf32>
    %5 = vector.broadcast %4 : vector<1x1024xf32> to vector<16x1024xf32>
    %6 = arith.addf %3, %5 : vector<16x1024xf32>
    %cst_5 = arith.constant 0.000000e+00 : f32
    %7 = vector.broadcast %cst_5 : f32 to vector<16x1024xf32>
    %8 = arith.maximumf %6, %7 : vector<16x1024xf32>
    %9 = arith.truncf %8 : vector<16x1024xf32> to vector<16x1024xbf16>
    %10 = vector.extract_strided_slice %9 {offsets = [0, 0], sizes = [16, 512], strides = [1, 1]} : vector<16x1024xbf16> to vector<16x512xbf16>
    %11 = vector.extract_strided_slice %9 {offsets = [0, 512], sizes = [16, 512], strides = [1, 1]} : vector<16x1024xbf16> to vector<16x512xbf16>
    %c0_6 = arith.constant 0 : index
    %c0_7 = arith.constant 0 : index
    %12 = vector.load %arg4[%c0_6, %c0_7] : memref<512x256xbf16, #tpu.memory_space<vmem>>, vector<512x256xbf16>
    %cst_8 = arith.constant dense<0.000000e+00> : vector<16x256xf32>
    %13 = tpu.matmul %10, %12, %cst_8 {dimension_numbers = #tpu.dot_dimension_numbers<[1], [0], [0], [1], [0, 0, 1, 1], [], []>} : vector<16x512xbf16>, vector<512x256xbf16>, vector<16x256xf32> -> vector<16x256xf32>
    %c0_9 = arith.constant 0 : index
    %c0_10 = arith.constant 0 : index
    %14 = vector.load %arg5[%c0_9, %c0_10] : memref<1x256xf32, #tpu.memory_space<vmem>>, vector<1x256xf32>
    %15 = vector.broadcast %14 : vector<1x256xf32> to vector<16x256xf32>
    %16 = arith.addf %13, %15 : vector<16x256xf32>
    %cst_11 = arith.constant 0.000000e+00 : f32
    %17 = vector.broadcast %cst_11 : f32 to vector<16x256xf32>
    %18 = arith.maximumf %16, %17 : vector<16x256xf32>
    %c0_12 = arith.constant 0 : index
    %c0_13 = arith.constant 0 : index
    %19 = vector.load %arg17[%c0_12, %c0_13] : memref<16x256xf32, #tpu.memory_space<vmem>>, vector<16x256xf32>
    tpu.vector_store %arg17[%c0_12, %c0_13], %18 {strides = array<i32>} : memref<16x256xf32, #tpu.memory_space<vmem>>, vector<16x256xf32>,
    %c0_14 = arith.constant 0 : index
    %c0_15 = arith.constant 0 : index
    %20 = vector.load %arg6[%c0_14, %c0_15] : memref<512x256xbf16, #tpu.memory_space<vmem>>, vector<512x256xbf16>
    %cst_16 = arith.constant dense<0.000000e+00> : vector<16x256xf32>
    %21 = tpu.matmul %11, %20, %cst_16 {dimension_numbers = #tpu.dot_dimension_numbers<[1], [0], [0], [1], [0, 0, 1, 1], [], []>} : vector<16x512xbf16>, vector<512x256xbf16>, vector<16x256xf32> -> vector<16x256xf32>
    %c0_17 = arith.constant 0 : index
    %c0_18 = arith.constant 0 : index
    %22 = vector.load %arg7[%c0_17, %c0_18] : memref<1x256xf32, #tpu.memory_space<vmem>>, vector<1x256xf32>
    %23 = vector.broadcast %22 : vector<1x256xf32> to vector<16x256xf32>
    %24 = arith.addf %21, %23 : vector<16x256xf32>
    %c0_19 = arith.constant 0 : index
    %c0_20 = arith.constant 0 : index
    %25 = vector.load %arg18[%c0_19, %c0_20] : memref<16x256xf32, #tpu.memory_space<vmem>>, vector<16x256xf32>
    tpu.vector_store %arg18[%c0_19, %c0_20], %24 {strides = array<i32>} : memref<16x256xf32, #tpu.memory_space<vmem>>, vector<16x256xf32>,
    %26 = arith.truncf %24 : vector<16x256xf32> to vector<16x256xbf16>
    %c0_21 = arith.constant 0 : index
    %c0_22 = arith.constant 0 : index
    %27 = vector.load %arg8[%c0_21, %c0_22] : memref<256x128xbf16, #tpu.memory_space<vmem>>, vector<256x128xbf16>
    %cst_23 = arith.constant dense<0.000000e+00> : vector<16x128xf32>
    %28 = tpu.matmul %26, %27, %cst_23 {dimension_numbers = #tpu.dot_dimension_numbers<[1], [0], [0], [1], [0, 0, 1, 1], [], []>} : vector<16x256xbf16>, vector<256x128xbf16>, vector<16x128xf32> -> vector<16x128xf32>
    %c0_24 = arith.constant 0 : index
    %c0_25 = arith.constant 0 : index
    %29 = vector.load %arg9[%c0_24, %c0_25] : memref<1x128xf32, #tpu.memory_space<vmem>>, vector<1x128xf32>
    %30 = vector.broadcast %29 : vector<1x128xf32> to vector<16x128xf32>
    %31 = arith.addf %28, %30 : vector<16x128xf32>
    %cst_26 = arith.constant 0.000000e+00 : f32
    %32 = vector.broadcast %cst_26 : f32 to vector<16x128xf32>
    %33 = arith.maximumf %31, %32 : vector<16x128xf32>
    %34 = arith.truncf %33 : vector<16x128xf32> to vector<16x128xbf16>
    %c0_27 = arith.constant 0 : index
    %c0_28 = arith.constant 0 : index
    %35 = vector.load %arg10[%c0_27, %c0_28] : memref<128x128xbf16, #tpu.memory_space<vmem>>, vector<128x128xbf16>
    %cst_29 = arith.constant dense<0.000000e+00> : vector<16x128xf32>
    %36 = tpu.matmul %34, %35, %cst_29 {dimension_numbers = #tpu.dot_dimension_numbers<[1], [0], [0], [1], [0, 0, 1, 1], [], []>} : vector<16x128xbf16>, vector<128x128xbf16>, vector<16x128xf32> -> vector<16x128xf32>
    %c0_30 = arith.constant 0 : index
    %c0_31 = arith.constant 0 : index
    %37 = vector.load %arg11[%c0_30, %c0_31] : memref<1x128xf32, #tpu.memory_space<vmem>>, vector<1x128xf32>
    %38 = vector.broadcast %37 : vector<1x128xf32> to vector<16x128xf32>
    %39 = arith.addf %36, %38 : vector<16x128xf32>
    %c0_32 = arith.constant 0 : index
    %c0_33 = arith.constant 0 : index
    %40 = vector.load %arg19[%c0_32, %c0_33] : memref<16x128xf32, #tpu.memory_space<vmem>>, vector<16x128xf32>
    tpu.vector_store %arg19[%c0_32, %c0_33], %39 {strides = array<i32>} : memref<16x128xf32, #tpu.memory_space<vmem>>, vector<16x128xf32>,
    %41 = arith.truncf %18 : vector<16x256xf32> to vector<16x256xbf16>
    %c0_34 = arith.constant 0 : index
    %c0_35 = arith.constant 0 : index
    %42 = vector.load %arg12[%c0_34, %c0_35] : memref<256x512xbf16, #tpu.memory_space<vmem>>, vector<256x512xbf16>
    %cst_36 = arith.constant dense<0.000000e+00> : vector<16x512xf32>
    %43 = tpu.matmul %41, %42, %cst_36 {dimension_numbers = #tpu.dot_dimension_numbers<[1], [0], [0], [1], [0, 0, 1, 1], [], []>} : vector<16x256xbf16>, vector<256x512xbf16>, vector<16x512xf32> -> vector<16x512xf32>
    %c0_37 = arith.constant 0 : index
    %c0_38 = arith.constant 0 : index
    %44 = vector.load %arg13[%c0_37, %c0_38] : memref<256x512xbf16, #tpu.memory_space<vmem>>, vector<256x512xbf16>
    %cst_39 = arith.constant dense<0.000000e+00> : vector<16x512xf32>
    %45 = tpu.matmul %26, %44, %cst_39 {dimension_numbers = #tpu.dot_dimension_numbers<[1], [0], [0], [1], [0, 0, 1, 1], [], []>} : vector<16x256xbf16>, vector<256x512xbf16>, vector<16x512xf32> -> vector<16x512xf32>
    %46 = arith.addf %43, %45 : vector<16x512xf32>
    %c0_40 = arith.constant 0 : index
    %c0_41 = arith.constant 0 : index
    %47 = vector.load %arg14[%c0_40, %c0_41] : memref<1x512xf32, #tpu.memory_space<vmem>>, vector<1x512xf32>
    %48 = vector.broadcast %47 : vector<1x512xf32> to vector<16x512xf32>
    %49 = arith.addf %46, %48 : vector<16x512xf32>
    %cst_42 = arith.constant 0.000000e+00 : f32
    %50 = vector.broadcast %cst_42 : f32 to vector<16x512xf32>
    %51 = arith.maximumf %49, %50 : vector<16x512xf32>
    %52 = arith.truncf %51 : vector<16x512xf32> to vector<16x512xbf16>
    %c0_43 = arith.constant 0 : index
    %c0_44 = arith.constant 0 : index
    %53 = vector.load %arg15[%c0_43, %c0_44] : memref<512x128xbf16, #tpu.memory_space<vmem>>, vector<512x128xbf16>
    %cst_45 = arith.constant dense<0.000000e+00> : vector<16x128xf32>
    %54 = tpu.matmul %52, %53, %cst_45 {dimension_numbers = #tpu.dot_dimension_numbers<[1], [0], [0], [1], [0, 0, 1, 1], [], []>} : vector<16x512xbf16>, vector<512x128xbf16>, vector<16x128xf32> -> vector<16x128xf32>
    %c0_46 = arith.constant 0 : index
    %c0_47 = arith.constant 0 : index
    %55 = vector.load %arg16[%c0_46, %c0_47] : memref<1x128xf32, #tpu.memory_space<vmem>>, vector<1x128xf32>
    %56 = vector.broadcast %55 : vector<1x128xf32> to vector<16x128xf32>
    %57 = arith.addf %54, %56 : vector<16x128xf32>
    %c0_48 = arith.constant 0 : index
    %c0_49 = arith.constant 0 : index
    %58 = vector.load %arg20[%c0_48, %c0_49] : memref<16x128xf32, #tpu.memory_space<vmem>>, vector<16x128xf32>
    tpu.vector_store %arg20[%c0_48, %c0_49], %57 {strides = array<i32>} : memref<16x128xf32, #tpu.memory_space<vmem>>, vector<16x128xf32>,
    return
  }
  func.func @transform_0(%arg0: i32) -> (i32, i32) {
    %c0_i32 = arith.constant 0 : i32
    %c0_i32_0 = arith.constant 0 : i32
    return %arg0, %c0_i32 : i32, i32
  }
  func.func @transform_1(%arg0: i32) -> (i32, i32) {
    %c0_i32 = arith.constant 0 : i32
    %c0_i32_0 = arith.constant 0 : i32
    %c0_i32_1 = arith.constant 0 : i32
    return %c0_i32, %c0_i32_0 : i32, i32
  }
  func.func @transform_2(%arg0: i32) -> (i32, i32) {
    %c0_i32 = arith.constant 0 : i32
    %c0_i32_0 = arith.constant 0 : i32
    %c0_i32_1 = arith.constant 0 : i32
    return %c0_i32, %c0_i32_0 : i32, i32
  }
  func.func @transform_3(%arg0: i32) -> (i32, i32) {
    %c0_i32 = arith.constant 0 : i32
    %c0_i32_0 = arith.constant 0 : i32
    %c0_i32_1 = arith.constant 0 : i32
    return %c0_i32, %c0_i32_0 : i32, i32
  }
  func.func @transform_4(%arg0: i32) -> (i32, i32) {
    %c0_i32 = arith.constant 0 : i32
    %c0_i32_0 = arith.constant 0 : i32
    %c0_i32_1 = arith.constant 0 : i32
    return %c0_i32, %c0_i32_0 : i32, i32
  }
  func.func @transform_5(%arg0: i32) -> (i32, i32) {
    %c0_i32 = arith.constant 0 : i32
    %c0_i32_0 = arith.constant 0 : i32
    %c0_i32_1 = arith.constant 0 : i32
    return %c0_i32, %c0_i32_0 : i32, i32
  }
  func.func @transform_6(%arg0: i32) -> (i32, i32) {
    %c0_i32 = arith.constant 0 : i32
    %c0_i32_0 = arith.constant 0 : i32
    %c0_i32_1 = arith.constant 0 : i32
    return %c0_i32, %c0_i32_0 : i32, i32
  }
  func.func @transform_7(%arg0: i32) -> (i32, i32) {
    %c0_i32 = arith.constant 0 : i32
    %c0_i32_0 = arith.constant 0 : i32
    %c0_i32_1 = arith.constant 0 : i32
    return %c0_i32, %c0_i32_0 : i32, i32
  }
  func.func @transform_8(%arg0: i32) -> (i32, i32) {
    %c0_i32 = arith.constant 0 : i32
    %c0_i32_0 = arith.constant 0 : i32
    %c0_i32_1 = arith.constant 0 : i32
    return %c0_i32, %c0_i32_0 : i32, i32
  }
  func.func @transform_9(%arg0: i32) -> (i32, i32) {
    %c0_i32 = arith.constant 0 : i32
    %c0_i32_0 = arith.constant 0 : i32
    %c0_i32_1 = arith.constant 0 : i32
    return %c0_i32, %c0_i32_0 : i32, i32
  }
  func.func @transform_10(%arg0: i32) -> (i32, i32) {
    %c0_i32 = arith.constant 0 : i32
    %c0_i32_0 = arith.constant 0 : i32
    %c0_i32_1 = arith.constant 0 : i32
    return %c0_i32, %c0_i32_0 : i32, i32
  }
  func.func @transform_11(%arg0: i32) -> (i32, i32) {
    %c0_i32 = arith.constant 0 : i32
    %c0_i32_0 = arith.constant 0 : i32
    %c0_i32_1 = arith.constant 0 : i32
    return %c0_i32, %c0_i32_0 : i32, i32
  }
  func.func @transform_12(%arg0: i32) -> (i32, i32) {
    %c0_i32 = arith.constant 0 : i32
    %c0_i32_0 = arith.constant 0 : i32
    %c0_i32_1 = arith.constant 0 : i32
    return %c0_i32, %c0_i32_0 : i32, i32
  }
  func.func @transform_13(%arg0: i32) -> (i32, i32) {
    %c0_i32 = arith.constant 0 : i32
    %c0_i32_0 = arith.constant 0 : i32
    %c0_i32_1 = arith.constant 0 : i32
    return %c0_i32, %c0_i32_0 : i32, i32
  }
  func.func @transform_14(%arg0: i32) -> (i32, i32) {
    %c0_i32 = arith.constant 0 : i32
    %c0_i32_0 = arith.constant 0 : i32
    %c0_i32_1 = arith.constant 0 : i32
    return %c0_i32, %c0_i32_0 : i32, i32
  }
  func.func @transform_15(%arg0: i32) -> (i32, i32) {
    %c0_i32 = arith.constant 0 : i32
    %c0_i32_0 = arith.constant 0 : i32
    %c0_i32_1 = arith.constant 0 : i32
    return %c0_i32, %c0_i32_0 : i32, i32
  }
  func.func @transform_16(%arg0: i32) -> (i32, i32) {
    %c0_i32 = arith.constant 0 : i32
    %c0_i32_0 = arith.constant 0 : i32
    return %arg0, %c0_i32 : i32, i32
  }
  func.func @transform_17(%arg0: i32) -> (i32, i32) {
    %c0_i32 = arith.constant 0 : i32
    %c0_i32_0 = arith.constant 0 : i32
    return %arg0, %c0_i32 : i32, i32
  }
  func.func @transform_18(%arg0: i32) -> (i32, i32) {
    %c0_i32 = arith.constant 0 : i32
    %c0_i32_0 = arith.constant 0 : i32
    return %arg0, %c0_i32 : i32, i32
  }
  func.func @transform_19(%arg0: i32) -> (i32, i32) {
    %c0_i32 = arith.constant 0 : i32
    %c0_i32_0 = arith.constant 0 : i32
    return %arg0, %c0_i32 : i32, i32
  }
}

</mosaic_0001>

<llo_original>
// kernel: tpu_custom_call.1
$region0: #{tpu_custom_call.1}
  #allocation0 [shape = 'u32[]', space=smem, size = 0x4, offset = 0x4, fixed_abs, tag = 'smem constant byte address 0x4 - core index']
  #allocation1 [shape = 'u32[144,128]{1,0:T(1,128)}', space=vmem, size = 0x12000, scoped, tag = 'internal scratch']
  %s0 = inlined_call_operand.hbm [shape: f32[16,64], index: 0, kind: input, shape index: {}]
  %s1 = inlined_call_operand.hbm [shape: bf16[64,1024], index: 1, kind: input, shape index: {}]
  %s2 = inlined_call_operand.hbm [shape: f32[1,1024], index: 2, kind: input, shape index: {}]
  %s3 = inlined_call_operand.hbm [shape: bf16[512,256], index: 3, kind: input, shape index: {}]
  %s4 = inlined_call_operand.vmem [shape: f32[1,256], index: 4, kind: input, shape index: {}]
  %s5 = inlined_call_operand.hbm [shape: bf16[512,256], index: 5, kind: input, shape index: {}]
  %s6 = inlined_call_operand.vmem [shape: f32[1,256], index: 6, kind: input, shape index: {}]
  %s7 = inlined_call_operand.hbm [shape: bf16[256,128], index: 7, kind: input, shape index: {}]
  %s8 = inlined_call_operand.vmem [shape: f32[1,128], index: 8, kind: input, shape index: {}]
  %s9 = inlined_call_operand.hbm [shape: bf16[128,128], index: 9, kind: input, shape index: {}]
  %s10 = inlined_call_operand.vmem [shape: f32[1,128], index: 10, kind: input, shape index: {}]
  %s11 = inlined_call_operand.hbm [shape: bf16[256,512], index: 11, kind: input, shape index: {}]
  %s12 = inlined_call_operand.hbm [shape: bf16[256,512], index: 12, kind: input, shape index: {}]
  %s13 = inlined_call_operand.vmem [shape: f32[1,512], index: 13, kind: input, shape index: {}]
  %s14 = inlined_call_operand.hbm [shape: bf16[512,128], index: 14, kind: input, shape index: {}]
  %s15 = inlined_call_operand.vmem [shape: f32[1,128], index: 15, kind: input, shape index: {}]
  %s16 = inlined_call_operand.hbm [shape: f32[16,256], index: 16, kind: output, shape index: {0}]
  %s17 = inlined_call_operand.hbm [shape: f32[16,256], index: 17, kind: output, shape index: {1}]
  %s18 = inlined_call_operand.hbm [shape: f32[16,128], index: 18, kind: output, shape index: {2}]
  %s19 = inlined_call_operand.hbm [shape: f32[16,128], index: 19, kind: output, shape index: {3}]
  %20 = xla_tuple %s16, %s17, %s18, %s19
  %s21 = sld [smem:[#allocation0]]
  $region138: #{tpu_custom_call.1} parent=0
    _
  %s23 = ssub.s32 1, %s21
  %s24 = scalar_select 0, %s23, %s21
  $region1: #{tpu_custom_call.1} parent=0
    #allocation2 [shape = 'u8[8192]{0}', space=vmem, size = 0x2000, scoped, tag = 'input window, operand 0, single buffered']
    #allocation3 [shape = 's32[1]{0}', space=sflag, size = 0x4, scoped, tag = 'scoped memory for tpu_custom_call.1']
    #allocation4 [shape = 's32[1]{0}', space=sflag, size = 0x4, scoped, tag = 'scoped memory for tpu_custom_call.1']
    #allocation5 [shape = 'u8[131072]{0}', space=vmem, size = 0x20000, scoped, tag = 'input window, operand 1, single buffered']
    #allocation6 [shape = 's32[1]{0}', space=sflag, size = 0x4, scoped, tag = 'scoped memory for tpu_custom_call.1']
    #allocation7 [shape = 'u8[4096]{0}', space=vmem, size = 0x1000, scoped, tag = 'input window, operand 2, single buffered']
    #allocation8 [shape = 'u8[262144]{0}', space=vmem, size = 0x40000, scoped, tag = 'input window, operand 3, single buffered']
    #allocation9 [shape = 's32[1]{0}', space=sflag, size = 0x4, scoped, tag = 'scoped memory for tpu_custom_call.1']
    #allocation10 [shape = 'u8[262144]{0}', space=vmem, size = 0x40000, scoped, tag = 'input window, operand 5, single buffered']
    #allocation11 [shape = 'u8[65536]{0}', space=vmem, size = 0x10000, scoped, tag = 'input window, operand 7, single buffered']
    #allocation12 [shape = 's32[1]{0}', space=sflag, size = 0x4, scoped, tag = 'scoped memory for tpu_custom_call.1']
    #allocation13 [shape = 'u8[32768]{0}', space=vmem, size = 0x8000, scoped, tag = 'input window, operand 9, single buffered']
    #allocation14 [shape = 'u8[262144]{0}', space=vmem, size = 0x40000, scoped, tag = 'input window, operand 11, single buffered']
    #allocation15 [shape = 's32[1]{0}', space=sflag, size = 0x4, scoped, tag = 'scoped memory for tpu_custom_call.1']
    #allocation16 [shape = 'u8[262144]{0}', space=vmem, size = 0x40000, scoped, tag = 'input window, operand 12, single buffered']
    #allocation17 [shape = 'u8[131072]{0}', space=vmem, size = 0x20000, scoped, tag = 'input window, operand 14, single buffered']
    #allocation18 [shape = 's32[1]{0}', space=sflag, size = 0x4, scoped, tag = 'scoped memory for tpu_custom_call.1']
    #allocation19 [shape = 'u8[16384]{0}', space=vmem, size = 0x4000, scoped, tag = 'output window, operand 0, single buffered']
    #allocation20 [shape = 'u8[16384]{0}', space=vmem, size = 0x4000, scoped, tag = 'output window, operand 1, single buffered']
    #allocation21 [shape = 's32[1]{0}', space=sflag, size = 0x4, scoped, tag = 'scoped memory for tpu_custom_call.1']
    #allocation22 [shape = 'u8[8192]{0}', space=vmem, size = 0x2000, scoped, tag = 'output window, operand 2, single buffered']
    #allocation23 [shape = 'u8[8192]{0}', space=vmem, size = 0x2000, scoped, tag = 'output window, operand 3, single buffered']
    #allocation24 [shape = 's32[1]{0}', space=sflag, size = 0x4, scoped, tag = 'scoped memory for tpu_custom_call.1']
    %25 = vsyncpa [#allocation3], 0
    %26 = vsyncpa [#allocation6], 0
    %27 = vsyncpa [#allocation9], 0
    %28 = vsyncpa [#allocation12], 0
    %29 = vsyncpa [#allocation15], 0
    %30 = vsyncpa [#allocation18], 0
    %31 = vsyncpa [#allocation4], 0
    %32 = vsyncpa [#allocation21], 0
    %33 = vsyncpa [#allocation24], 0
    // Predicated region
    $region2: #{tpu_custom_call.1} parent=1 // pred_check
      _
    $region3: #{tpu_custom_call.1} parent=1 // pred_check_branch
      %35 = sbr.rel (0) target = $region5
    $region4: #{tpu_custom_call.1} parent=1 // pred_region
      %s37 = ssub.s32 256, 256
      %38 = vsyncadd [#allocation3], %s37
      %s39 = sshll.u32 [#allocation2], 4
      %s40 = int_to_ptr.vmem [resolvable:$true] %s39
      %45 = dma.hbm_to_vmem [thread:$0]  %s0, 256, %s40, [#allocation3], 128, 128, 8
    $region5: #{tpu_custom_call.1} parent=1 // pred_fallthru
      _
    // Predicated region
    $region6: #{tpu_custom_call.1} parent=1 // pred_check
      _
    $region7: #{tpu_custom_call.1} parent=1 // pred_check_branch
      %47 = sbr.rel (0) target = $region9
    $region8: #{tpu_custom_call.1} parent=1 // pred_region
      %s49 = ssub.s32 4096, 4096
      %50 = vsyncadd [#allocation6], %s49
      %s51 = sshll.u32 [#allocation5], 4
      %s52 = int_to_ptr.vmem [resolvable:$true] %s51
      %57 = dma.hbm_to_vmem [thread:$0]  %s1, 4096, %s52, [#allocation6], 512, 512, 32
    $region9: #{tpu_custom_call.1} parent=1 // pred_fallthru
      _
    // Predicated region
    $region10: #{tpu_custom_call.1} parent=1 // pred_check
      _
    $region11: #{tpu_custom_call.1} parent=1 // pred_check_branch
      %59 = sbr.rel (0) target = $region13
    $region12: #{tpu_custom_call.1} parent=1 // pred_region
      %s61 = ssub.s32 128, 128
      %62 = vsyncadd [#allocation6], %s61
      %s64 = sshll.u32 [#allocation7], 4
      %s65 = int_to_ptr.vmem [resolvable:$true] %s64
      %67 = dma.hbm_to_vmem [thread:$0]  %s2, 128, %s65, [#allocation6]
    $region13: #{tpu_custom_call.1} parent=1 // pred_fallthru
      _
    // Predicated region
    $region14: #{tpu_custom_call.1} parent=1 // pred_check
      _
    $region15: #{tpu_custom_call.1} parent=1 // pred_check_branch
      %69 = sbr.rel (0) target = $region17
    $region16: #{tpu_custom_call.1} parent=1 // pred_region
      %s71 = ssub.s32 8192, 8192
      %72 = vsyncadd [#allocation9], %s71
      %s73 = sshll.u32 [#allocation8], 4
      %s74 = int_to_ptr.vmem [resolvable:$true] %s73
      %79 = dma.hbm_to_vmem [thread:$0]  %s3, 8192, %s74, [#allocation9], 128, 128, 8
    $region17: #{tpu_custom_call.1} parent=1 // pred_fallthru
      _
    // Predicated region
    $region18: #{tpu_custom_call.1} parent=1 // pred_check
      _
    $region19: #{tpu_custom_call.1} parent=1 // pred_check_branch
      %81 = sbr.rel (0) target = $region21
    $region20: #{tpu_custom_call.1} parent=1 // pred_region
      _
    $region21: #{tpu_custom_call.1} parent=1 // pred_fallthru
      _
    // Predicated region
    $region22: #{tpu_custom_call.1} parent=1 // pred_check
      _
    $region23: #{tpu_custom_call.1} parent=1 // pred_check_branch
      %83 = sbr.rel (0) target = $region25
    $region24: #{tpu_custom_call.1} parent=1 // pred_region
      %s85 = ssub.s32 8192, 8192
      %86 = vsyncadd [#allocation9], %s85
      %s87 = sshll.u32 [#allocation10], 4
      %s88 = int_to_ptr.vmem [resolvable:$true] %s87
      %93 = dma.hbm_to_vmem [thread:$0]  %s5, 8192, %s88, [#allocation9], 128, 128, 8
    $region25: #{tpu_custom_call.1} parent=1 // pred_fallthru
      _
    // Predicated region
    $region26: #{tpu_custom_call.1} parent=1 // pred_check
      _
    $region27: #{tpu_custom_call.1} parent=1 // pred_check_branch
      %95 = sbr.rel (0) target = $region29
    $region28: #{tpu_custom_call.1} parent=1 // pred_region
      _
    $region29: #{tpu_custom_call.1} parent=1 // pred_fallthru
      _
    // Predicated region
    $region30: #{tpu_custom_call.1} parent=1 // pred_check
      _
    $region31: #{tpu_custom_call.1} parent=1 // pred_check_branch
      %97 = sbr.rel (0) target = $region33
    $region32: #{tpu_custom_call.1} parent=1 // pred_region
      %s99 = ssub.s32 2048, 2048
      %100 = vsyncadd [#allocation12], %s99
      %s101 = sshll.u32 [#allocation11], 4
      %s102 = int_to_ptr.vmem [resolvable:$true] %s101
      %107 = dma.hbm_to_vmem [thread:$0]  %s7, 2048, %s102, [#allocation12], 64, 64, 4
    $region33: #{tpu_custom_call.1} parent=1 // pred_fallthru
      _
    // Predicated region
    $region34: #{tpu_custom_call.1} parent=1 // pred_check
      _
    $region35: #{tpu_custom_call.1} parent=1 // pred_check_branch
      %109 = sbr.rel (0) target = $region37
    $region36: #{tpu_custom_call.1} parent=1 // pred_region
      _
    $region37: #{tpu_custom_call.1} parent=1 // pred_fallthru
      _
    // Predicated region
    $region38: #{tpu_custom_call.1} parent=1 // pred_check
      _
    $region39: #{tpu_custom_call.1} parent=1 // pred_check_branch
      %111 = sbr.rel (0) target = $region41
    $region40: #{tpu_custom_call.1} parent=1 // pred_region
      %s113 = ssub.s32 1024, 1024
      %114 = vsyncadd [#allocation12], %s113
      %s115 = sshll.u32 [#allocation13], 4
      %s116 = int_to_ptr.vmem [resolvable:$true] %s115
      %121 = dma.hbm_to_vmem [thread:$0]  %s9, 1024, %s116, [#allocation12], 64, 64, 4
    $region41: #{tpu_custom_call.1} parent=1 // pred_fallthru
      _
    // Predicated region
    $region42: #{tpu_custom_call.1} parent=1 // pred_check
      _
    $region43: #{tpu_custom_call.1} parent=1 // pred_check_branch
      %123 = sbr.rel (0) target = $region45
    $region44: #{tpu_custom_call.1} parent=1 // pred_region
      _
    $region45: #{tpu_custom_call.1} parent=1 // pred_fallthru
      _
    // Predicated region
    $region46: #{tpu_custom_call.1} parent=1 // pred_check
      _
    $region47: #{tpu_custom_call.1} parent=1 // pred_check_branch
      %125 = sbr.rel (0) target = $region49
    $region48: #{tpu_custom_call.1} parent=1 // pred_region
      %s127 = ssub.s32 8192, 8192
      %128 = vsyncadd [#allocation15], %s127
      %s129 = sshll.u32 [#allocation14], 4
      %s130 = int_to_ptr.vmem [resolvable:$true] %s129
      %135 = dma.hbm_to_vmem [thread:$0]  %s11, 8192, %s130, [#allocation15], 256, 256, 16
    $region49: #{tpu_custom_call.1} parent=1 // pred_fallthru
      _
    // Predicated region
    $region50: #{tpu_custom_call.1} parent=1 // pred_check
      _
    $region51: #{tpu_custom_call.1} parent=1 // pred_check_branch
      %137 = sbr.rel (0) target = $region53
    $region52: #{tpu_custom_call.1} parent=1 // pred_region
      %s139 = ssub.s32 8192, 8192
      %140 = vsyncadd [#allocation15], %s139
      %s141 = sshll.u32 [#allocation16], 4
      %s142 = int_to_ptr.vmem [resolvable:$true] %s141
      %147 = dma.hbm_to_vmem [thread:$0]  %s12, 8192, %s142, [#allocation15], 256, 256, 16
    $region53: #{tpu_custom_call.1} parent=1 // pred_fallthru
      _
    // Predicated region
    $region54: #{tpu_custom_call.1} parent=1 // pred_check
      _
    $region55: #{tpu_custom_call.1} parent=1 // pred_check_branch
      %149 = sbr.rel (0) target = $region57
    $region56: #{tpu_custom_call.1} parent=1 // pred_region
      _
    $region57: #{tpu_custom_call.1} parent=1 // pred_fallthru
      _
    // Predicated region
    $region58: #{tpu_custom_call.1} parent=1 // pred_check
      _
    $region59: #{tpu_custom_call.1} parent=1 // pred_check_branch
      %151 = sbr.rel (0) target = $region61
    $region60: #{tpu_custom_call.1} parent=1 // pred_region
      %s153 = ssub.s32 4096, 4096
      %154 = vsyncadd [#allocation18], %s153
      %s155 = sshll.u32 [#allocation17], 4
      %s156 = int_to_ptr.vmem [resolvable:$true] %s155
      %161 = dma.hbm_to_vmem [thread:$0]  %s14, 4096, %s156, [#allocation18], 64, 64, 4
    $region61: #{tpu_custom_call.1} parent=1 // pred_fallthru
      _
    // Predicated region
    $region62: #{tpu_custom_call.1} parent=1 // pred_check
      _
    $region63: #{tpu_custom_call.1} parent=1 // pred_check_branch
      %163 = sbr.rel (0) target = $region65
    $region64: #{tpu_custom_call.1} parent=1 // pred_region
      _
    $region65: #{tpu_custom_call.1} parent=1 // pred_fallthru
      _
    // Predicated region
    $region66: #{tpu_custom_call.1} parent=1 // pred_check
      _
    $region67: #{tpu_custom_call.1} parent=1 // pred_check_branch
      %165 = sbr.rel (0) target = $region69
    $region68: #{tpu_custom_call.1} parent=1 // pred_region
      %166 = dma.done [#allocation3], 256
    $region69: #{tpu_custom_call.1} parent=1 // pred_fallthru
      _
    // Predicated region
    $region70: #{tpu_custom_call.1} parent=1 // pred_check
      _
    $region71: #{tpu_custom_call.1} parent=1 // pred_check_branch
      %168 = sbr.rel (0) target = $region73
    $region72: #{tpu_custom_call.1} parent=1 // pred_region
      %169 = dma.done [#allocation6], 4096
    $region73: #{tpu_custom_call.1} parent=1 // pred_fallthru
      _
    // Predicated region
    $region74: #{tpu_custom_call.1} parent=1 // pred_check
      _
    $region75: #{tpu_custom_call.1} parent=1 // pred_check_branch
      %171 = sbr.rel (0) target = $region77
    $region76: #{tpu_custom_call.1} parent=1 // pred_region
      %172 = dma.done [#allocation6], 128
    $region77: #{tpu_custom_call.1} parent=1 // pred_fallthru
      _
    // Predicated region
    $region78: #{tpu_custom_call.1} parent=1 // pred_check
      _
    $region79: #{tpu_custom_call.1} parent=1 // pred_check_branch
      %174 = sbr.rel (0) target = $region81
    $region80: #{tpu_custom_call.1} parent=1 // pred_region
      %175 = dma.done [#allocation9], 8192
    $region81: #{tpu_custom_call.1} parent=1 // pred_fallthru
      _
    // Predicated region
    $region82: #{tpu_custom_call.1} parent=1 // pred_check
      _
    $region83: #{tpu_custom_call.1} parent=1 // pred_check_branch
      %177 = sbr.rel (0) target = $region85
    $region84: #{tpu_custom_call.1} parent=1 // pred_region
      %178 = dma.done [#allocation9], 8192
    $region85: #{tpu_custom_call.1} parent=1 // pred_fallthru
      _
    // Predicated region
    $region86: #{tpu_custom_call.1} parent=1 // pred_check
      _
    $region87: #{tpu_custom_call.1} parent=1 // pred_check_branch
      %180 = sbr.rel (0) target = $region89
    $region88: #{tpu_custom_call.1} parent=1 // pred_region
      %181 = dma.done [#allocation12], 2048
    $region89: #{tpu_custom_call.1} parent=1 // pred_fallthru
      _
    // Predicated region
    $region90: #{tpu_custom_call.1} parent=1 // pred_check
      _
    $region91: #{tpu_custom_call.1} parent=1 // pred_check_branch
      %183 = sbr.rel (0) target = $region93
    $region92: #{tpu_custom_call.1} parent=1 // pred_region
      %184 = dma.done [#allocation12], 1024
    $region93: #{tpu_custom_call.1} parent=1 // pred_fallthru
      _
    // Predicated region
    $region94: #{tpu_custom_call.1} parent=1 // pred_check
      _
    $region95: #{tpu_custom_call.1} parent=1 // pred_check_branch
      %186 = sbr.rel (0) target = $region97
    $region96: #{tpu_custom_call.1} parent=1 // pred_region
      %187 = dma.done [#allocation15], 8192
    $region97: #{tpu_custom_call.1} parent=1 // pred_fallthru
      _
    // Predicated region
    $region98: #{tpu_custom_call.1} parent=1 // pred_check
      _
    $region99: #{tpu_custom_call.1} parent=1 // pred_check_branch
      %189 = sbr.rel (0) target = $region101
    $region100: #{tpu_custom_call.1} parent=1 // pred_region
      %190 = dma.done [#allocation15], 8192
    $region101: #{tpu_custom_call.1} parent=1 // pred_fallthru
      _
    // Predicated region
    $region102: #{tpu_custom_call.1} parent=1 // pred_check
      _
    $region103: #{tpu_custom_call.1} parent=1 // pred_check_branch
      %192 = sbr.rel (0) target = $region105
    $region104: #{tpu_custom_call.1} parent=1 // pred_region
      %193 = dma.done [#allocation18], 4096
    $region105: #{tpu_custom_call.1} parent=1 // pred_fallthru
      _
    %v195 = vld [vmem:[#allocation2] sm:$0xff]
    %v196 = vld [vmem:[#allocation2 + $0x8] sm:$0xff]
    %v197 = vpack.c.bf16 %v196, %v195
    %v198 = vld [vmem:[#allocation5] sm:$0xff]
    %v199 = vld [vmem:[#allocation5 + $0x8] sm:$0xff]
    %v200 = vld [vmem:[#allocation5 + $0x10] sm:$0xff]
    %v201 = vld [vmem:[#allocation5 + $0x18] sm:$0xff]
    %v202 = vld [vmem:[#allocation5 + $0x20] sm:$0xff]
    %v203 = vld [vmem:[#allocation5 + $0x28] sm:$0xff]
    %v204 = vld [vmem:[#allocation5 + $0x30] sm:$0xff]
    %v205 = vld [vmem:[#allocation5 + $0x38] sm:$0xff]
    %v206 = vld [vmem:[#allocation5 + $0x40] sm:$0xff]
    %v207 = vld [vmem:[#allocation5 + $0x48] sm:$0xff]
    %v208 = vld [vmem:[#allocation5 + $0x50] sm:$0xff]
    %v209 = vld [vmem:[#allocation5 + $0x58] sm:$0xff]
    %v210 = vld [vmem:[#allocation5 + $0x60] sm:$0xff]
    %v211 = vld [vmem:[#allocation5 + $0x68] sm:$0xff]
    %v212 = vld [vmem:[#allocation5 + $0x70] sm:$0xff]
    %v213 = vld [vmem:[#allocation5 + $0x78] sm:$0xff]
    %v214 = vld [vmem:[#allocation5 + $0x80] sm:$0xff]
    %v215 = vld [vmem:[#allocation5 + $0x88] sm:$0xff]
    %v216 = vld [vmem:[#allocation5 + $0x90] sm:$0xff]
    %v217 = vld [vmem:[#allocation5 + $0x98] sm:$0xff]
    %v218 = vld [vmem:[#allocation5 + $0xa0] sm:$0xff]
    %v219 = vld [vmem:[#allocation5 + $0xa8] sm:$0xff]
    %v220 = vld [vmem:[#allocation5 + $0xb0] sm:$0xff]
    %v221 = vld [vmem:[#allocation5 + $0xb8] sm:$0xff]
    %v222 = vld [vmem:[#allocation5 + $0xc0] sm:$0xff]
    %v223 = vld [vmem:[#allocation5 + $0xc8] sm:$0xff]
    %v224 = vld [vmem:[#allocation5 + $0xd0] sm:$0xff]
    %v225 = vld [vmem:[#allocation5 + $0xd8] sm:$0xff]
    %v226 = vld [vmem:[#allocation5 + $0xe0] sm:$0xff]
    %v227 = vld [vmem:[#allocation5 + $0xe8] sm:$0xff]
    %v228 = vld [vmem:[#allocation5 + $0xf0] sm:$0xff]
    %v229 = vld [vmem:[#allocation5 + $0xf8] sm:$0xff]
    %v230 = vld [vmem:[#allocation7] sm:$0xff]
    %v232 = vlaneseq
    %v233 = vshrl.u32 %v232, 7
    %v234 = vsub.s32 0, %v233
    %v235 = vrot.slane %v230, %v234
    %v236 = vlaneseq
    %v237 = vshrl.u32 %v236, 7
    %v238 = vsub.s32 1, %v237
    %v239 = vrot.slane %v230, %v238
    %v240 = vlaneseq
    %v241 = vshrl.u32 %v240, 7
    %v242 = vsub.s32 2, %v241
    %v243 = vrot.slane %v230, %v242
    %v244 = vlaneseq
    %v245 = vshrl.u32 %v244, 7
    %v246 = vsub.s32 3, %v245
    %v247 = vrot.slane %v230, %v246
    %v248 = vlaneseq
    %v249 = vshrl.u32 %v248, 7
    %v250 = vsub.s32 4, %v249
    %v251 = vrot.slane %v230, %v250
    %v252 = vlaneseq
    %v253 = vshrl.u32 %v252, 7
    %v254 = vsub.s32 5, %v253
    %v255 = vrot.slane %v230, %v254
    %v256 = vlaneseq
    %v257 = vshrl.u32 %v256, 7
    %v258 = vsub.s32 6, %v257
    %v259 = vrot.slane %v230, %v258
    %v260 = vlaneseq
    %v261 = vshrl.u32 %v260, 7
    %v262 = vsub.s32 7, %v261
    %v263 = vrot.slane %v230, %v262
    %v304 = vunpack.c.l.b16 %v198
    %v305 = vunpack.c.h.b16 %v198
    %v306 = vunpack.c.l.b16 %v199
    %v307 = vunpack.c.h.b16 %v199
    %v308 = vunpack.c.l.b16 %v200
    %v309 = vunpack.c.h.b16 %v200
    %v310 = vunpack.c.l.b16 %v201
    %v311 = vunpack.c.h.b16 %v201
    %v312 = vunpack.c.l.b16 %v202
    %v313 = vunpack.c.h.b16 %v202
    %v314 = vunpack.c.l.b16 %v203
    %v315 = vunpack.c.h.b16 %v203
    %v316 = vunpack.c.l.b16 %v204
    %v317 = vunpack.c.h.b16 %v204
    %v318 = vunpack.c.l.b16 %v205
    %v319 = vunpack.c.h.b16 %v205
    %v320 = vunpack.c.l.b16 %v206
    %v321 = vunpack.c.h.b16 %v206
    %v322 = vunpack.c.l.b16 %v207
    %v323 = vunpack.c.h.b16 %v207
    %v324 = vunpack.c.l.b16 %v208
    %v325 = vunpack.c.h.b16 %v208
    %v326 = vunpack.c.l.b16 %v209
    %v327 = vunpack.c.h.b16 %v209
    %v328 = vunpack.c.l.b16 %v210
    %v329 = vunpack.c.h.b16 %v210
    %v330 = vunpack.c.l.b16 %v211
    %v331 = vunpack.c.h.b16 %v211
    %v332 = vunpack.c.l.b16 %v212
    %v333 = vunpack.c.h.b16 %v212
    %v334 = vunpack.c.l.b16 %v213
    %v335 = vunpack.c.h.b16 %v213
    %v336 = vunpack.c.l.b16 %v214
    %v337 = vunpack.c.h.b16 %v214
    %v338 = vunpack.c.l.b16 %v215
    %v339 = vunpack.c.h.b16 %v215
    %v340 = vunpack.c.l.b16 %v216
    %v341 = vunpack.c.h.b16 %v216
    %v342 = vunpack.c.l.b16 %v217
    %v343 = vunpack.c.h.b16 %v217
    %v344 = vunpack.c.l.b16 %v218
    %v345 = vunpack.c.h.b16 %v218
    %v346 = vunpack.c.l.b16 %v219
    %v347 = vunpack.c.h.b16 %v219
    %v348 = vunpack.c.l.b16 %v220
    %v349 = vunpack.c.h.b16 %v220
    %v350 = vunpack.c.l.b16 %v221
    %v351 = vunpack.c.h.b16 %v221
    %v352 = vunpack.c.l.b16 %v222
    %v353 = vunpack.c.h.b16 %v222
    %v354 = vunpack.c.l.b16 %v223
    %v355 = vunpack.c.h.b16 %v223
    %v356 = vunpack.c.l.b16 %v224
    %v357 = vunpack.c.h.b16 %v224
    %v358 = vunpack.c.l.b16 %v225
    %v359 = vunpack.c.h.b16 %v225
    %v360 = vunpack.c.l.b16 %v226
    %v361 = vunpack.c.h.b16 %v226
    %v362 = vunpack.c.l.b16 %v227
    %v363 = vunpack.c.h.b16 %v227
    %v364 = vunpack.c.l.b16 %v228
    %v365 = vunpack.c.h.b16 %v228
    %v366 = vunpack.c.l.b16 %v229
    %v367 = vunpack.c.h.b16 %v229
    %v368 = vpack.c.b16 %v312, %v304
    %v369 = vpack.c.b16 %v313, %v305
    %v370 = vpack.c.b16 %v314, %v306
    %v371 = vpack.c.b16 %v315, %v307
    %v372 = vpack.c.b16 %v316, %v308
    %v373 = vpack.c.b16 %v317, %v309
    %v374 = vpack.c.b16 %v318, %v310
    %v375 = vpack.c.b16 %v319, %v311
    %v376 = vpack.c.b16 %v328, %v320
    %v377 = vpack.c.b16 %v329, %v321
    %v378 = vpack.c.b16 %v330, %v322
    %v379 = vpack.c.b16 %v331, %v323
    %v380 = vpack.c.b16 %v332, %v324
    %v381 = vpack.c.b16 %v333, %v325
    %v382 = vpack.c.b16 %v334, %v326
    %v383 = vpack.c.b16 %v335, %v327
    %v384 = vpack.c.b16 %v344, %v336
    %v385 = vpack.c.b16 %v345, %v337
    %v386 = vpack.c.b16 %v346, %v338
    %v387 = vpack.c.b16 %v347, %v339
    %v388 = vpack.c.b16 %v348, %v340
    %v389 = vpack.c.b16 %v349, %v341
    %v390 = vpack.c.b16 %v350, %v342
    %v391 = vpack.c.b16 %v351, %v343
    %v392 = vpack.c.b16 %v360, %v352
    %v393 = vpack.c.b16 %v361, %v353
    %v394 = vpack.c.b16 %v362, %v354
    %v395 = vpack.c.b16 %v363, %v355
    %v396 = vpack.c.b16 %v364, %v356
    %v397 = vpack.c.b16 %v365, %v357
    %v398 = vpack.c.b16 %v366, %v358
    %v399 = vpack.c.b16 %v367, %v359
    %vm432 = vcmask 523264
    %v434 = vsel %vm432, %v197, 0
    %436 = vmatprep.subr.bf16.mxu0 %v369
    %437 = vmatpush1.bf16.msra.mxu0 %v368
    %438 = vmatprep.subr.bf16.mxu0 %v377
    %439 = vmatpush1.bf16.msra.mxu0 %v376
    %440 = vmatprep.subr.bf16.mxu0 %v385
    %441 = vmatpush1.bf16.msra.mxu0 %v384
    %442 = vmatprep.subr.bf16.mxu0 %v393
    %443 = vmatpush1.bf16.msra.mxu0 %v392
    %444 = vmatprep.subr.bf16.mxu0 0
    %445 = vmatpush1.bf16.msra.mxu0 0
    %446 = vmatprep.subr.bf16.mxu0 0
    %447 = vmatpush1.bf16.msra.mxu0 0
    %448 = vmatprep.subr.bf16.mxu0 0
    %449 = vmatpush1.bf16.msra.mxu0 0
    %450 = vmatprep.subr.bf16.mxu0 0
    %451 = vmatpush1.bf16.msra.mxu0 0
    %452 = vmatprep.subr.bf16.mxu0 0
    %453 = vmatpush1.bf16.msra.mxu0 0
    %454 = vmatprep.subr.bf16.mxu0 0
    %455 = vmatpush1.bf16.msra.mxu0 0
    %456 = vmatprep.subr.bf16.mxu0 0
    %457 = vmatpush1.bf16.msra.mxu0 0
    %458 = vmatprep.subr.bf16.mxu0 0
    %459 = vmatpush1.bf16.msra.mxu0 0
    %460 = vmatprep.subr.bf16.mxu0 0
    %461 = vmatpush1.bf16.msra.mxu0 0
    %462 = vmatprep.subr.bf16.mxu0 0
    %463 = vmatpush1.bf16.msra.mxu0 0
    %464 = vmatprep.subr.bf16.mxu0 0
    %465 = vmatpush1.bf16.msra.mxu0 0
    %466 = vmatprep.subr.bf16.mxu0 0
    %467 = vmatpush1.bf16.msra.mxu0 0
    %468 = vmatprep.mubr.bf16.mxu0 0
    %469 = vmatmul.mubr.bf16.gmra.mrb[0].mxu0 %v434
    %v470 = vpop.f32.mrb[0].mxu0
    %v471 = vadd.f32 %v235, %v470
    %v472 = vpop.f32.mrb[0].mxu0
    %v473 = vadd.f32 %v239, %v472
    %v474 = vpop.f32.mrb[0].mxu0
    %v475 = vadd.f32 %v235, %v474
    %v476 = vpop.f32.mrb[0].mxu0
    %v477 = vadd.f32 %v239, %v476
    %478 = vdwg.mxu0
    %479 = vmatprep.subr.bf16.mxu0 %v371
    %480 = vmatpush1.bf16.msra.mxu0 %v370
    %481 = vmatprep.subr.bf16.mxu0 %v379
    %482 = vmatpush1.bf16.msra.mxu0 %v378
    %483 = vmatprep.subr.bf16.mxu0 %v387
    %484 = vmatpush1.bf16.msra.mxu0 %v386
    %485 = vmatprep.subr.bf16.mxu0 %v395
    %486 = vmatpush1.bf16.msra.mxu0 %v394
    %487 = vmatprep.subr.bf16.mxu0 0
    %488 = vmatpush1.bf16.msra.mxu0 0
    %489 = vmatprep.subr.bf16.mxu0 0
    %490 = vmatpush1.bf16.msra.mxu0 0
    %491 = vmatprep.subr.bf16.mxu0 0
    %492 = vmatpush1.bf16.msra.mxu0 0
    %493 = vmatprep.subr.bf16.mxu0 0
    %494 = vmatpush1.bf16.msra.mxu0 0
    %495 = vmatprep.subr.bf16.mxu0 0
    %496 = vmatpush1.bf16.msra.mxu0 0
    %497 = vmatprep.subr.bf16.mxu0 0
    %498 = vmatpush1.bf16.msra.mxu0 0
    %499 = vmatprep.subr.bf16.mxu0 0
    %500 = vmatpush1.bf16.msra.mxu0 0
    %501 = vmatprep.subr.bf16.mxu0 0
    %502 = vmatpush1.bf16.msra.mxu0 0
    %503 = vmatprep.subr.bf16.mxu0 0
    %504 = vmatpush1.bf16.msra.mxu0 0
    %505 = vmatprep.subr.bf16.mxu0 0
    %506 = vmatpush1.bf16.msra.mxu0 0
    %507 = vmatprep.subr.bf16.mxu0 0
    %508 = vmatpush1.bf16.msra.mxu0 0
    %509 = vmatprep.subr.bf16.mxu0 0
    %510 = vmatpush1.bf16.msra.mxu0 0
    %511 = vmatprep.mubr.bf16.mxu0 0
    %512 = vmatmul.mubr.bf16.gmra.mrb[0].mxu0 %v434
    %v513 = vpop.f32.mrb[0].mxu0
    %v514 = vadd.f32 %v243, %v513
    %v515 = vpop.f32.mrb[0].mxu0
    %v516 = vadd.f32 %v247, %v515
    %v517 = vpop.f32.mrb[0].mxu0
    %v518 = vadd.f32 %v243, %v517
    %v519 = vpop.f32.mrb[0].mxu0
    %v520 = vadd.f32 %v247, %v519
    %521 = vdwg.mxu0
    %522 = vmatprep.subr.bf16.mxu0 %v373
    %523 = vmatpush1.bf16.msra.mxu0 %v372
    %524 = vmatprep.subr.bf16.mxu0 %v381
    %525 = vmatpush1.bf16.msra.mxu0 %v380
    %526 = vmatprep.subr.bf16.mxu0 %v389
    %527 = vmatpush1.bf16.msra.mxu0 %v388
    %528 = vmatprep.subr.bf16.mxu0 %v397
    %529 = vmatpush1.bf16.msra.mxu0 %v396
    %530 = vmatprep.subr.bf16.mxu0 0
    %531 = vmatpush1.bf16.msra.mxu0 0
    %532 = vmatprep.subr.bf16.mxu0 0
    %533 = vmatpush1.bf16.msra.mxu0 0
    %534 = vmatprep.subr.bf16.mxu0 0
    %535 = vmatpush1.bf16.msra.mxu0 0
    %536 = vmatprep.subr.bf16.mxu0 0
    %537 = vmatpush1.bf16.msra.mxu0 0
    %538 = vmatprep.subr.bf16.mxu0 0
    %539 = vmatpush1.bf16.msra.mxu0 0
    %540 = vmatprep.subr.bf16.mxu0 0
    %541 = vmatpush1.bf16.msra.mxu0 0
    %542 = vmatprep.subr.bf16.mxu0 0
    %543 = vmatpush1.bf16.msra.mxu0 0
    %544 = vmatprep.subr.bf16.mxu0 0
    %545 = vmatpush1.bf16.msra.mxu0 0
    %546 = vmatprep.subr.bf16.mxu0 0
    %547 = vmatpush1.bf16.msra.mxu0 0
    %548 = vmatprep.subr.bf16.mxu0 0
    %549 = vmatpush1.bf16.msra.mxu0 0
    %550 = vmatprep.subr.bf16.mxu0 0
    %551 = vmatpush1.bf16.msra.mxu0 0
    %552 = vmatprep.subr.bf16.mxu0 0
    %553 = vmatpush1.bf16.msra.mxu0 0
    %554 = vmatprep.mubr.bf16.mxu0 0
    %555 = vmatmul.mubr.bf16.gmra.mrb[0].mxu0 %v434
    %v556 = vpop.f32.mrb[0].mxu0
    %v557 = vadd.f32 %v251, %v556
    %v558 = vpop.f32.mrb[0].mxu0
    %v559 = vadd.f32 %v255, %v558
    %v560 = vpop.f32.mrb[0].mxu0
    %v561 = vadd.f32 %v251, %v560
    %v562 = vpop.f32.mrb[0].mxu0
    %v563 = vadd.f32 %v255, %v562
    %564 = vdwg.mxu0
    %565 = vmatprep.subr.bf16.mxu0 %v375
    %566 = vmatpush1.bf16.msra.mxu0 %v374
    %567 = vmatprep.subr.bf16.mxu0 %v383
    %568 = vmatpush1.bf16.msra.mxu0 %v382
    %569 = vmatprep.subr.bf16.mxu0 %v391
    %570 = vmatpush1.bf16.msra.mxu0 %v390
    %571 = vmatprep.subr.bf16.mxu0 %v399
    %572 = vmatpush1.bf16.msra.mxu0 %v398
    %573 = vmatprep.subr.bf16.mxu0 0
    %574 = vmatpush1.bf16.msra.mxu0 0
    %575 = vmatprep.subr.bf16.mxu0 0
    %576 = vmatpush1.bf16.msra.mxu0 0
    %577 = vmatprep.subr.bf16.mxu0 0
    %578 = vmatpush1.bf16.msra.mxu0 0
    %579 = vmatprep.subr.bf16.mxu0 0
    %580 = vmatpush1.bf16.msra.mxu0 0
    %581 = vmatprep.subr.bf16.mxu0 0
    %582 = vmatpush1.bf16.msra.mxu0 0
    %583 = vmatprep.subr.bf16.mxu0 0
    %584 = vmatpush1.bf16.msra.mxu0 0
    %585 = vmatprep.subr.bf16.mxu0 0
    %586 = vmatpush1.bf16.msra.mxu0 0
    %587 = vmatprep.subr.bf16.mxu0 0
    %588 = vmatpush1.bf16.msra.mxu0 0
    %589 = vmatprep.subr.bf16.mxu0 0
    %590 = vmatpush1.bf16.msra.mxu0 0
    %591 = vmatprep.subr.bf16.mxu0 0
    %592 = vmatpush1.bf16.msra.mxu0 0
    %593 = vmatprep.subr.bf16.mxu0 0
    %594 = vmatpush1.bf16.msra.mxu0 0
    %595 = vmatprep.subr.bf16.mxu0 0
    %596 = vmatpush1.bf16.msra.mxu0 0
    %597 = vmatprep.mubr.bf16.mxu0 0
    %598 = vmatmul.mubr.bf16.gmra.mrb[0].mxu0 %v434
    %v599 = vpop.f32.mrb[0].mxu0
    %v600 = vadd.f32 %v259, %v599
    %v601 = vpop.f32.mrb[0].mxu0
    %v602 = vadd.f32 %v263, %v601
    %v603 = vpop.f32.mrb[0].mxu0
    %v604 = vadd.f32 %v259, %v603
    %v605 = vpop.f32.mrb[0].mxu0
    %v606 = vadd.f32 %v263, %v605
    %607 = vdwg.mxu0
    %v608 = vmax.f32 %v471, 0.0
    %v609 = vmax.f32 %v473, 0.0
    %v610 = vmax.f32 %v514, 0.0
    %v611 = vmax.f32 %v516, 0.0
    %v612 = vmax.f32 %v557, 0.0
    %v613 = vmax.f32 %v559, 0.0
    %v614 = vmax.f32 %v600, 0.0
    %v615 = vmax.f32 %v602, 0.0
    %v616 = vmax.f32 %v475, 0.0
    %v617 = vmax.f32 %v477, 0.0
    %v618 = vmax.f32 %v518, 0.0
    %v619 = vmax.f32 %v520, 0.0
    %v620 = vmax.f32 %v561, 0.0
    %v621 = vmax.f32 %v563, 0.0
    %v622 = vmax.f32 %v604, 0.0
    %v623 = vmax.f32 %v606, 0.0
    %v624 = vpack.c.bf16 %v616, %v608
    %v625 = vpack.c.bf16 %v617, %v609
    %v626 = vpack.c.bf16 %v618, %v610
    %v627 = vpack.c.bf16 %v619, %v611
    %v628 = vpack.c.bf16 %v620, %v612
    %v629 = vpack.c.bf16 %v621, %v613
    %v630 = vpack.c.bf16 %v622, %v614
    %v631 = vpack.c.bf16 %v623, %v615
    %v632 = vld [vmem:[#allocation8] sm:$0xff]
    %v633 = vld [vmem:[#allocation8 + $0x8] sm:$0xff]
    %v634 = vld [vmem:[#allocation8 + $0x10] sm:$0xff]
    %v635 = vld [vmem:[#allocation8 + $0x18] sm:$0xff]
    %v636 = vld [vmem:[#allocation8 + $0x20] sm:$0xff]
    %v637 = vld [vmem:[#allocation8 + $0x28] sm:$0xff]
    %v638 = vld [vmem:[#allocation8 + $0x30] sm:$0xff]
    %v639 = vld [vmem:[#allocation8 + $0x38] sm:$0xff]
    %v640 = vld [vmem:[#allocation8 + $0x40] sm:$0xff]
    %v641 = vld [vmem:[#allocation8 + $0x48] sm:$0xff]
    %v642 = vld [vmem:[#allocation8 + $0x50] sm:$0xff]
    %v643 = vld [vmem:[#allocation8 + $0x58] sm:$0xff]
    %v644 = vld [vmem:[#allocation8 + $0x60] sm:$0xff]
    %v645 = vld [vmem:[#allocation8 + $0x68] sm:$0xff]
    %v646 = vld [vmem:[#allocation8 + $0x70] sm:$0xff]
    %v647 = vld [vmem:[#allocation8 + $0x78] sm:$0xff]
    %v648 = vld [vmem:[#allocation8 + $0x80] sm:$0xff]
    %v649 = vld [vmem:[#allocation8 + $0x88] sm:$0xff]
    %v650 = vld [vmem:[#allocation8 + $0x90] sm:$0xff]
    %v651 = vld [vmem:[#allocation8 + $0x98] sm:$0xff]
    %v652 = vld [vmem:[#allocation8 + $0xa0] sm:$0xff]
    %v653 = vld [vmem:[#allocation8 + $0xa8] sm:$0xff]
    %v654 = vld [vmem:[#allocation8 + $0xb0] sm:$0xff]
    %v655 = vld [vmem:[#allocation8 + $0xb8] sm:$0xff]
    %v656 = vld [vmem:[#allocation8 + $0xc0] sm:$0xff]
    %v657 = vld [vmem:[#allocation8 + $0xc8] sm:$0xff]
    %v658 = vld [vmem:[#allocation8 + $0xd0] sm:$0xff]
    %v659 = vld [vmem:[#allocation8 + $0xd8] sm:$0xff]
    %v660 = vld [vmem:[#allocation8 + $0xe0] sm:$0xff]
    %v661 = vld [vmem:[#allocation8 + $0xe8] sm:$0xff]
    %v662 = vld [vmem:[#allocation8 + $0xf0] sm:$0xff]
    %v663 = vld [vmem:[#allocation8 + $0xf8] sm:$0xff]
    %v664 = vld [vmem:[#allocation8 + $0x100] sm:$0xff]
    %v665 = vld [vmem:[#allocation8 + $0x108] sm:$0xff]
    %v666 = vld [vmem:[#allocation8 + $0x110] sm:$0xff]
    %v667 = vld [vmem:[#allocation8 + $0x118] sm:$0xff]
    %v668 = vld [vmem:[#allocation8 + $0x120] sm:$0xff]
    %v669 = vld [vmem:[#allocation8 + $0x128] sm:$0xff]
    %v670 = vld [vmem:[#allocation8 + $0x130] sm:$0xff]
    %v671 = vld [vmem:[#allocation8 + $0x138] sm:$0xff]
    %v672 = vld [vmem:[#allocation8 + $0x140] sm:$0xff]
    %v673 = vld [vmem:[#allocation8 + $0x148] sm:$0xff]
    %v674 = vld [vmem:[#allocation8 + $0x150] sm:$0xff]
    %v675 = vld [vmem:[#allocation8 + $0x158] sm:$0xff]
    %v676 = vld [vmem:[#allocation8 + $0x160] sm:$0xff]
    %v677 = vld [vmem:[#allocation8 + $0x168] sm:$0xff]
    %v678 = vld [vmem:[#allocation8 + $0x170] sm:$0xff]
    %v679 = vld [vmem:[#allocation8 + $0x178] sm:$0xff]
    %v680 = vld [vmem:[#allocation8 + $0x180] sm:$0xff]
    %v681 = vld [vmem:[#allocation8 + $0x188] sm:$0xff]
    %v682 = vld [vmem:[#allocation8 + $0x190] sm:$0xff]
    %v683 = vld [vmem:[#allocation8 + $0x198] sm:$0xff]
    %v684 = vld [vmem:[#allocation8 + $0x1a0] sm:$0xff]
    %v685 = vld [vmem:[#allocation8 + $0x1a8] sm:$0xff]
    %v686 = vld [vmem:[#allocation8 + $0x1b0] sm:$0xff]
    %v687 = vld [vmem:[#allocation8 + $0x1b8] sm:$0xff]
    %v688 = vld [vmem:[#allocation8 + $0x1c0] sm:$0xff]
    %v689 = vld [vmem:[#allocation8 + $0x1c8] sm:$0xff]
    %v690 = vld [vmem:[#allocation8 + $0x1d0] sm:$0xff]
    %v691 = vld [vmem:[#allocation8 + $0x1d8] sm:$0xff]
    %v692 = vld [vmem:[#allocation8 + $0x1e0] sm:$0xff]
    %v693 = vld [vmem:[#allocation8 + $0x1e8] sm:$0xff]
    %v694 = vld [vmem:[#allocation8 + $0x1f0] sm:$0xff]
    %v695 = vld [vmem:[#allocation8 + $0x1f8] sm:$0xff]
    %v696 = vld [vmem:[%s4] sm:$0x3]
    %v698 = vlaneseq
    %v699 = vshrl.u32 %v698, 7
    %v700 = vsub.s32 0, %v699
    %v701 = vrot.slane %v696, %v700
    %v702 = vlaneseq
    %v703 = vshrl.u32 %v702, 7
    %v704 = vsub.s32 1, %v703
    %v705 = vrot.slane %v696, %v704
    %v772 = vunpack.c.l.b16 %v632
    %v773 = vunpack.c.h.b16 %v632
    %v774 = vunpack.c.l.b16 %v633
    %v775 = vunpack.c.h.b16 %v633
    %v776 = vunpack.c.l.b16 %v634
    %v777 = vunpack.c.h.b16 %v634
    %v778 = vunpack.c.l.b16 %v635
    %v779 = vunpack.c.h.b16 %v635
    %v780 = vunpack.c.l.b16 %v636
    %v781 = vunpack.c.h.b16 %v636
    %v782 = vunpack.c.l.b16 %v637
    %v783 = vunpack.c.h.b16 %v637
    %v784 = vunpack.c.l.b16 %v638
    %v785 = vunpack.c.h.b16 %v638
    %v786 = vunpack.c.l.b16 %v639
    %v787 = vunpack.c.h.b16 %v639
    %v788 = vunpack.c.l.b16 %v640
    %v789 = vunpack.c.h.b16 %v640
    %v790 = vunpack.c.l.b16 %v641
    %v791 = vunpack.c.h.b16 %v641
    %v792 = vunpack.c.l.b16 %v642
    %v793 = vunpack.c.h.b16 %v642
    %v794 = vunpack.c.l.b16 %v643
    %v795 = vunpack.c.h.b16 %v643
    %v796 = vunpack.c.l.b16 %v644
    %v797 = vunpack.c.h.b16 %v644
    %v798 = vunpack.c.l.b16 %v645
    %v799 = vunpack.c.h.b16 %v645
    %v800 = vunpack.c.l.b16 %v646
    %v801 = vunpack.c.h.b16 %v646
    %v802 = vunpack.c.l.b16 %v647
    %v803 = vunpack.c.h.b16 %v647
    %v804 = vunpack.c.l.b16 %v648
    %v805 = vunpack.c.h.b16 %v648
    %v806 = vunpack.c.l.b16 %v649
    %v807 = vunpack.c.h.b16 %v649
    %v808 = vunpack.c.l.b16 %v650
    %v809 = vunpack.c.h.b16 %v650
    %v810 = vunpack.c.l.b16 %v651
    %v811 = vunpack.c.h.b16 %v651
    %v812 = vunpack.c.l.b16 %v652
    %v813 = vunpack.c.h.b16 %v652
    %v814 = vunpack.c.l.b16 %v653
    %v815 = vunpack.c.h.b16 %v653
    %v816 = vunpack.c.l.b16 %v654
    %v817 = vunpack.c.h.b16 %v654
    %v818 = vunpack.c.l.b16 %v655
    %v819 = vunpack.c.h.b16 %v655
    %v820 = vunpack.c.l.b16 %v656
    %v821 = vunpack.c.h.b16 %v656
    %v822 = vunpack.c.l.b16 %v657
    %v823 = vunpack.c.h.b16 %v657
    %v824 = vunpack.c.l.b16 %v658
    %v825 = vunpack.c.h.b16 %v658
    %v826 = vunpack.c.l.b16 %v659
    %v827 = vunpack.c.h.b16 %v659
    %v828 = vunpack.c.l.b16 %v660
    %v829 = vunpack.c.h.b16 %v660
    %v830 = vunpack.c.l.b16 %v661
    %v831 = vunpack.c.h.b16 %v661
    %v832 = vunpack.c.l.b16 %v662
    %v833 = vunpack.c.h.b16 %v662
    %v834 = vunpack.c.l.b16 %v663
    %v835 = vunpack.c.h.b16 %v663
    %v836 = vunpack.c.l.b16 %v664
    %v837 = vunpack.c.h.b16 %v664
    %v838 = vunpack.c.l.b16 %v665
    %v839 = vunpack.c.h.b16 %v665
    %v840 = vunpack.c.l.b16 %v666
    %v841 = vunpack.c.h.b16 %v666
    %v842 = vunpack.c.l.b16 %v667
    %v843 = vunpack.c.h.b16 %v667
    %v844 = vunpack.c.l.b16 %v668
    %v845 = vunpack.c.h.b16 %v668
    %v846 = vunpack.c.l.b16 %v669
    %v847 = vunpack.c.h.b16 %v669
    %v848 = vunpack.c.l.b16 %v670
    %v849 = vunpack.c.h.b16 %v670
    %v850 = vunpack.c.l.b16 %v671
    %v851 = vunpack.c.h.b16 %v671
    %v852 = vunpack.c.l.b16 %v672
    %v853 = vunpack.c.h.b16 %v672
    %v854 = vunpack.c.l.b16 %v673
    %v855 = vunpack.c.h.b16 %v673
    %v856 = vunpack.c.l.b16 %v674
    %v857 = vunpack.c.h.b16 %v674
    %v858 = vunpack.c.l.b16 %v675
    %v859 = vunpack.c.h.b16 %v675
    %v860 = vunpack.c.l.b16 %v676
    %v861 = vunpack.c.h.b16 %v676
    %v862 = vunpack.c.l.b16 %v677
    %v863 = vunpack.c.h.b16 %v677
    %v864 = vunpack.c.l.b16 %v678
    %v865 = vunpack.c.h.b16 %v678
    %v866 = vunpack.c.l.b16 %v679
    %v867 = vunpack.c.h.b16 %v679
    %v868 = vunpack.c.l.b16 %v680
    %v869 = vunpack.c.h.b16 %v680
    %v870 = vunpack.c.l.b16 %v681
    %v871 = vunpack.c.h.b16 %v681
    %v872 = vunpack.c.l.b16 %v682
    %v873 = vunpack.c.h.b16 %v682
    %v874 = vunpack.c.l.b16 %v683
    %v875 = vunpack.c.h.b16 %v683
    %v876 = vunpack.c.l.b16 %v684
    %v877 = vunpack.c.h.b16 %v684
    %v878 = vunpack.c.l.b16 %v685
    %v879 = vunpack.c.h.b16 %v685
    %v880 = vunpack.c.l.b16 %v686
    %v881 = vunpack.c.h.b16 %v686
    %v882 = vunpack.c.l.b16 %v687
    %v883 = vunpack.c.h.b16 %v687
    %v884 = vunpack.c.l.b16 %v688
    %v885 = vunpack.c.h.b16 %v688
    %v886 = vunpack.c.l.b16 %v689
    %v887 = vunpack.c.h.b16 %v689
    %v888 = vunpack.c.l.b16 %v690
    %v889 = vunpack.c.h.b16 %v690
    %v890 = vunpack.c.l.b16 %v691
    %v891 = vunpack.c.h.b16 %v691
    %v892 = vunpack.c.l.b16 %v692
    %v893 = vunpack.c.h.b16 %v692
    %v894 = vunpack.c.l.b16 %v693
    %v895 = vunpack.c.h.b16 %v693
    %v896 = vunpack.c.l.b16 %v694
    %v897 = vunpack.c.h.b16 %v694
    %v898 = vunpack.c.l.b16 %v695
    %v899 = vunpack.c.h.b16 %v695
    %v900 = vpack.c.b16 %v774, %v772
    %v901 = vpack.c.b16 %v775, %v773
    %v902 = vpack.c.b16 %v778, %v776
    %v903 = vpack.c.b16 %v779, %v777
    %v904 = vpack.c.b16 %v782, %v780
    %v905 = vpack.c.b16 %v783, %v781
    %v906 = vpack.c.b16 %v786, %v784
    %v907 = vpack.c.b16 %v787, %v785
    %v908 = vpack.c.b16 %v790, %v788
    %v909 = vpack.c.b16 %v791, %v789
    %v910 = vpack.c.b16 %v794, %v792
    %v911 = vpack.c.b16 %v795, %v793
    %v912 = vpack.c.b16 %v798, %v796
    %v913 = vpack.c.b16 %v799, %v797
    %v914 = vpack.c.b16 %v802, %v800
    %v915 = vpack.c.b16 %v803, %v801
    %v916 = vpack.c.b16 %v806, %v804
    %v917 = vpack.c.b16 %v807, %v805
    %v918 = vpack.c.b16 %v810, %v808
    %v919 = vpack.c.b16 %v811, %v809
    %v920 = vpack.c.b16 %v814, %v812
    %v921 = vpack.c.b16 %v815, %v813
    %v922 = vpack.c.b16 %v818, %v816
    %v923 = vpack.c.b16 %v819, %v817
    %v924 = vpack.c.b16 %v822, %v820
    %v925 = vpack.c.b16 %v823, %v821
    %v926 = vpack.c.b16 %v826, %v824
    %v927 = vpack.c.b16 %v827, %v825
    %v928 = vpack.c.b16 %v830, %v828
    %v929 = vpack.c.b16 %v831, %v829
    %v930 = vpack.c.b16 %v834, %v832
    %v931 = vpack.c.b16 %v835, %v833
    %v932 = vpack.c.b16 %v838, %v836
    %v933 = vpack.c.b16 %v839, %v837
    %v934 = vpack.c.b16 %v842, %v840
    %v935 = vpack.c.b16 %v843, %v841
    %v936 = vpack.c.b16 %v846, %v844
    %v937 = vpack.c.b16 %v847, %v845
    %v938 = vpack.c.b16 %v850, %v848
    %v939 = vpack.c.b16 %v851, %v849
    %v940 = vpack.c.b16 %v854, %v852
    %v941 = vpack.c.b16 %v855, %v853
    %v942 = vpack.c.b16 %v858, %v856
    %v943 = vpack.c.b16 %v859, %v857
    %v944 = vpack.c.b16 %v862, %v860
    %v945 = vpack.c.b16 %v863, %v861
    %v946 = vpack.c.b16 %v866, %v864
    %v947 = vpack.c.b16 %v867, %v865
    %v948 = vpack.c.b16 %v870, %v868
    %v949 = vpack.c.b16 %v871, %v869
    %v950 = vpack.c.b16 %v874, %v872
    %v951 = vpack.c.b16 %v875, %v873
    %v952 = vpack.c.b16 %v878, %v876
    %v953 = vpack.c.b16 %v879, %v877
    %v954 = vpack.c.b16 %v882, %v880
    %v955 = vpack.c.b16 %v883, %v881
    %v956 = vpack.c.b16 %v886, %v884
    %v957 = vpack.c.b16 %v887, %v885
    %v958 = vpack.c.b16 %v890, %v888
    %v959 = vpack.c.b16 %v891, %v889
    %v960 = vpack.c.b16 %v894, %v892
    %v961 = vpack.c.b16 %v895, %v893
    %v962 = vpack.c.b16 %v898, %v896
    %v963 = vpack.c.b16 %v899, %v897
    %1028 = vmatprep.subr.bf16.mxu0 %v901
    %1029 = vmatpush1.bf16.msra.mxu0 %v900
    %1030 = vmatprep.subr.bf16.mxu0 %v903
    %1031 = vmatpush1.bf16.msra.mxu0 %v902
    %1032 = vmatprep.subr.bf16.mxu0 %v905
    %1033 = vmatpush1.bf16.msra.mxu0 %v904
    %1034 = vmatprep.subr.bf16.mxu0 %v907
    %1035 = vmatpush1.bf16.msra.mxu0 %v906
    %1036 = vmatprep.subr.bf16.mxu0 %v909
    %1037 = vmatpush1.bf16.msra.mxu0 %v908
    %1038 = vmatprep.subr.bf16.mxu0 %v911
    %1039 = vmatpush1.bf16.msra.mxu0 %v910
    %1040 = vmatprep.subr.bf16.mxu0 %v913
    %1041 = vmatpush1.bf16.msra.mxu0 %v912
    %1042 = vmatprep.subr.bf16.mxu0 %v915
    %1043 = vmatpush1.bf16.msra.mxu0 %v914
    %1044 = vmatprep.subr.bf16.mxu0 %v917
    %1045 = vmatpush1.bf16.msra.mxu0 %v916
    %1046 = vmatprep.subr.bf16.mxu0 %v919
    %1047 = vmatpush1.bf16.msra.mxu0 %v918
    %1048 = vmatprep.subr.bf16.mxu0 %v921
    %1049 = vmatpush1.bf16.msra.mxu0 %v920
    %1050 = vmatprep.subr.bf16.mxu0 %v923
    %1051 = vmatpush1.bf16.msra.mxu0 %v922
    %1052 = vmatprep.subr.bf16.mxu0 %v925
    %1053 = vmatpush1.bf16.msra.mxu0 %v924
    %1054 = vmatprep.subr.bf16.mxu0 %v927
    %1055 = vmatpush1.bf16.msra.mxu0 %v926
    %1056 = vmatprep.subr.bf16.mxu0 %v929
    %1057 = vmatpush1.bf16.msra.mxu0 %v928
    %1058 = vmatprep.subr.bf16.mxu0 %v931
    %1059 = vmatpush1.bf16.msra.mxu0 %v930
    %1060 = vmatprep.mubr.bf16.mxu0 %v625
    %1061 = vmatmul.mubr.bf16.gmra.mrb[0].mxu0 %v624
    %v1062 = vpop.f32.mrb[0].mxu0
    %v1063 = vadd.f32 %v701, %v1062
    %v1064 = vpop.f32.mrb[0].mxu0
    %v1065 = vadd.f32 %v705, %v1064
    %v1066 = vpop.f32.mrb[0].mxu0
    %v1067 = vadd.f32 %v701, %v1066
    %v1068 = vpop.f32.mrb[0].mxu0
    %v1069 = vadd.f32 %v705, %v1068
    %1070 = vdwg.mxu0
    %1071 = vmatprep.subr.bf16.mxu0 %v933
    %1072 = vmatpush1.bf16.msra.mxu0 %v932
    %1073 = vmatprep.subr.bf16.mxu0 %v935
    %1074 = vmatpush1.bf16.msra.mxu0 %v934
    %1075 = vmatprep.subr.bf16.mxu0 %v937
    %1076 = vmatpush1.bf16.msra.mxu0 %v936
    %1077 = vmatprep.subr.bf16.mxu0 %v939
    %1078 = vmatpush1.bf16.msra.mxu0 %v938
    %1079 = vmatprep.subr.bf16.mxu0 %v941
    %1080 = vmatpush1.bf16.msra.mxu0 %v940
    %1081 = vmatprep.subr.bf16.mxu0 %v943
    %1082 = vmatpush1.bf16.msra.mxu0 %v942
    %1083 = vmatprep.subr.bf16.mxu0 %v945
    %1084 = vmatpush1.bf16.msra.mxu0 %v944
    %1085 = vmatprep.subr.bf16.mxu0 %v947
    %1086 = vmatpush1.bf16.msra.mxu0 %v946
    %1087 = vmatprep.subr.bf16.mxu0 %v949
    %1088 = vmatpush1.bf16.msra.mxu0 %v948
    %1089 = vmatprep.subr.bf16.mxu0 %v951
    %1090 = vmatpush1.bf16.msra.mxu0 %v950
    %1091 = vmatprep.subr.bf16.mxu0 %v953
    %1092 = vmatpush1.bf16.msra.mxu0 %v952
    %1093 = vmatprep.subr.bf16.mxu0 %v955
    %1094 = vmatpush1.bf16.msra.mxu0 %v954
    %1095 = vmatprep.subr.bf16.mxu0 %v957
    %1096 = vmatpush1.bf16.msra.mxu0 %v956
    %1097 = vmatprep.subr.bf16.mxu0 %v959
    %1098 = vmatpush1.bf16.msra.mxu0 %v958
    %1099 = vmatprep.subr.bf16.mxu0 %v961
    %1100 = vmatpush1.bf16.msra.mxu0 %v960
    %1101 = vmatprep.subr.bf16.mxu0 %v963
    %1102 = vmatpush1.bf16.msra.mxu0 %v962
    %1103 = vmatprep.mubr.bf16.mxu0 %v627
    %1104 = vmatmul.mubr.bf16.gmra.mrb[0].mxu0 %v626
    %v1105 = vpop.f32.mrb[0].mxu0
    %v1106 = vadd.f32 %v1063, %v1105
    %v1107 = vpop.f32.mrb[0].mxu0
    %v1108 = vadd.f32 %v1065, %v1107
    %v1109 = vpop.f32.mrb[0].mxu0
    %v1110 = vadd.f32 %v1067, %v1109
    %v1111 = vpop.f32.mrb[0].mxu0
    %v1112 = vadd.f32 %v1069, %v1111
    %1113 = vdwg.mxu0
    %v1114 = vmax.f32 %v1106, 0.0
    %v1115 = vmax.f32 %v1108, 0.0
    %v1116 = vmax.f32 %v1110, 0.0
    %v1117 = vmax.f32 %v1112, 0.0
    %1118 = vst [vmem:[#allocation19] sm:$0xff] %v1114
    %1119 = vst [vmem:[#allocation19 + $0x8] sm:$0xff] %v1115
    %1120 = vst [vmem:[#allocation19 + $0x10] sm:$0xff] %v1116
    %1121 = vst [vmem:[#allocation19 + $0x18] sm:$0xff] %v1117
    %v1122 = vld [vmem:[#allocation10] sm:$0xff]
    %v1123 = vld [vmem:[#allocation10 + $0x8] sm:$0xff]
    %v1124 = vld [vmem:[#allocation10 + $0x10] sm:$0xff]
    %v1125 = vld [vmem:[#allocation10 + $0x18] sm:$0xff]
    %v1126 = vld [vmem:[#allocation10 + $0x20] sm:$0xff]
    %v1127 = vld [vmem:[#allocation10 + $0x28] sm:$0xff]
    %v1128 = vld [vmem:[#allocation10 + $0x30] sm:$0xff]
    %v1129 = vld [vmem:[#allocation10 + $0x38] sm:$0xff]
    %v1130 = vld [vmem:[#allocation10 + $0x40] sm:$0xff]
    %v1131 = vld [vmem:[#allocation10 + $0x48] sm:$0xff]
    %v1132 = vld [vmem:[#allocation10 + $0x50] sm:$0xff]
    %v1133 = vld [vmem:[#allocation10 + $0x58] sm:$0xff]
    %v1134 = vld [vmem:[#allocation10 + $0x60] sm:$0xff]
    %v1135 = vld [vmem:[#allocation10 + $0x68] sm:$0xff]
    %v1136 = vld [vmem:[#allocation10 + $0x70] sm:$0xff]
    %v1137 = vld [vmem:[#allocation10 + $0x78] sm:$0xff]
    %v1138 = vld [vmem:[#allocation10 + $0x80] sm:$0xff]
    %v1139 = vld [vmem:[#allocation10 + $0x88] sm:$0xff]
    %v1140 = vld [vmem:[#allocation10 + $0x90] sm:$0xff]
    %v1141 = vld [vmem:[#allocation10 + $0x98] sm:$0xff]
    %v1142 = vld [vmem:[#allocation10 + $0xa0] sm:$0xff]
    %v1143 = vld [vmem:[#allocation10 + $0xa8] sm:$0xff]
    %v1144 = vld [vmem:[#allocation10 + $0xb0] sm:$0xff]
    %v1145 = vld [vmem:[#allocation10 + $0xb8] sm:$0xff]
    %v1146 = vld [vmem:[#allocation10 + $0xc0] sm:$0xff]
    %v1147 = vld [vmem:[#allocation10 + $0xc8] sm:$0xff]
    %v1148 = vld [vmem:[#allocation10 + $0xd0] sm:$0xff]
    %v1149 = vld [vmem:[#allocation10 + $0xd8] sm:$0xff]
    %v1150 = vld [vmem:[#allocation10 + $0xe0] sm:$0xff]
    %v1151 = vld [vmem:[#allocation10 + $0xe8] sm:$0xff]
    %v1152 = vld [vmem:[#allocation10 + $0xf0] sm:$0xff]
    %v1153 = vld [vmem:[#allocation10 + $0xf8] sm:$0xff]
    %v1154 = vld [vmem:[#allocation10 + $0x100] sm:$0xff]
    %v1155 = vld [vmem:[#allocation10 + $0x108] sm:$0xff]
    %v1156 = vld [vmem:[#allocation10 + $0x110] sm:$0xff]
    %v1157 = vld [vmem:[#allocation10 + $0x118] sm:$0xff]
    %v1158 = vld [vmem:[#allocation10 + $0x120] sm:$0xff]
    %v1159 = vld [vmem:[#allocation10 + $0x128] sm:$0xff]
    %v1160 = vld [vmem:[#allocation10 + $0x130] sm:$0xff]
    %v1161 = vld [vmem:[#allocation10 + $0x138] sm:$0xff]
    %v1162 = vld [vmem:[#allocation10 + $0x140] sm:$0xff]
    %v1163 = vld [vmem:[#allocation10 + $0x148] sm:$0xff]
    %v1164 = vld [vmem:[#allocation10 + $0x150] sm:$0xff]
    %v1165 = vld [vmem:[#allocation10 + $0x158] sm:$0xff]
    %v1166 = vld [vmem:[#allocation10 + $0x160] sm:$0xff]
    %v1167 = vld [vmem:[#allocation10 + $0x168] sm:$0xff]
    %v1168 = vld [vmem:[#allocation10 + $0x170] sm:$0xff]
    %v1169 = vld [vmem:[#allocation10 + $0x178] sm:$0xff]
    %v1170 = vld [vmem:[#allocation10 + $0x180] sm:$0xff]
    %v1171 = vld [vmem:[#allocation10 + $0x188] sm:$0xff]
    %v1172 = vld [vmem:[#allocation10 + $0x190] sm:$0xff]
    %v1173 = vld [vmem:[#allocation10 + $0x198] sm:$0xff]
    %v1174 = vld [vmem:[#allocation10 + $0x1a0] sm:$0xff]
    %v1175 = vld [vmem:[#allocation10 + $0x1a8] sm:$0xff]
    %v1176 = vld [vmem:[#allocation10 + $0x1b0] sm:$0xff]
    %v1177 = vld [vmem:[#allocation10 + $0x1b8] sm:$0xff]
    %v1178 = vld [vmem:[#allocation10 + $0x1c0] sm:$0xff]
    %v1179 = vld [vmem:[#allocation10 + $0x1c8] sm:$0xff]
    %v1180 = vld [vmem:[#allocation10 + $0x1d0] sm:$0xff]
    %v1181 = vld [vmem:[#allocation10 + $0x1d8] sm:$0xff]
    %v1182 = vld [vmem:[#allocation10 + $0x1e0] sm:$0xff]
    %v1183 = vld [vmem:[#allocation10 + $0x1e8] sm:$0xff]
    %v1184 = vld [vmem:[#allocation10 + $0x1f0] sm:$0xff]
    %v1185 = vld [vmem:[#allocation10 + $0x1f8] sm:$0xff]
    %v1186 = vld [vmem:[%s6] sm:$0x3]
    %v1188 = vlaneseq
    %v1189 = vshrl.u32 %v1188, 7
    %v1190 = vsub.s32 0, %v1189
    %v1191 = vrot.slane %v1186, %v1190
    %v1192 = vlaneseq
    %v1193 = vshrl.u32 %v1192, 7
    %v1194 = vsub.s32 1, %v1193
    %v1195 = vrot.slane %v1186, %v1194
    %v1262 = vunpack.c.l.b16 %v1122
    %v1263 = vunpack.c.h.b16 %v1122
    %v1264 = vunpack.c.l.b16 %v1123
    %v1265 = vunpack.c.h.b16 %v1123
    %v1266 = vunpack.c.l.b16 %v1124
    %v1267 = vunpack.c.h.b16 %v1124
    %v1268 = vunpack.c.l.b16 %v1125
    %v1269 = vunpack.c.h.b16 %v1125
    %v1270 = vunpack.c.l.b16 %v1126
    %v1271 = vunpack.c.h.b16 %v1126
    %v1272 = vunpack.c.l.b16 %v1127
    %v1273 = vunpack.c.h.b16 %v1127
    %v1274 = vunpack.c.l.b16 %v1128
    %v1275 = vunpack.c.h.b16 %v1128
    %v1276 = vunpack.c.l.b16 %v1129
    %v1277 = vunpack.c.h.b16 %v1129
    %v1278 = vunpack.c.l.b16 %v1130
    %v1279 = vunpack.c.h.b16 %v1130
    %v1280 = vunpack.c.l.b16 %v1131
    %v1281 = vunpack.c.h.b16 %v1131
    %v1282 = vunpack.c.l.b16 %v1132
    %v1283 = vunpack.c.h.b16 %v1132
    %v1284 = vunpack.c.l.b16 %v1133
    %v1285 = vunpack.c.h.b16 %v1133
    %v1286 = vunpack.c.l.b16 %v1134
    %v1287 = vunpack.c.h.b16 %v1134
    %v1288 = vunpack.c.l.b16 %v1135
    %v1289 = vunpack.c.h.b16 %v1135
    %v1290 = vunpack.c.l.b16 %v1136
    %v1291 = vunpack.c.h.b16 %v1136
    %v1292 = vunpack.c.l.b16 %v1137
    %v1293 = vunpack.c.h.b16 %v1137
    %v1294 = vunpack.c.l.b16 %v1138
    %v1295 = vunpack.c.h.b16 %v1138
    %v1296 = vunpack.c.l.b16 %v1139
    %v1297 = vunpack.c.h.b16 %v1139
    %v1298 = vunpack.c.l.b16 %v1140
    %v1299 = vunpack.c.h.b16 %v1140
    %v1300 = vunpack.c.l.b16 %v1141
    %v1301 = vunpack.c.h.b16 %v1141
    %v1302 = vunpack.c.l.b16 %v1142
    %v1303 = vunpack.c.h.b16 %v1142
    %v1304 = vunpack.c.l.b16 %v1143
    %v1305 = vunpack.c.h.b16 %v1143
    %v1306 = vunpack.c.l.b16 %v1144
    %v1307 = vunpack.c.h.b16 %v1144
    %v1308 = vunpack.c.l.b16 %v1145
    %v1309 = vunpack.c.h.b16 %v1145
    %v1310 = vunpack.c.l.b16 %v1146
    %v1311 = vunpack.c.h.b16 %v1146
    %v1312 = vunpack.c.l.b16 %v1147
    %v1313 = vunpack.c.h.b16 %v1147
    %v1314 = vunpack.c.l.b16 %v1148
    %v1315 = vunpack.c.h.b16 %v1148
    %v1316 = vunpack.c.l.b16 %v1149
    %v1317 = vunpack.c.h.b16 %v1149
    %v1318 = vunpack.c.l.b16 %v1150
    %v1319 = vunpack.c.h.b16 %v1150
    %v1320 = vunpack.c.l.b16 %v1151
    %v1321 = vunpack.c.h.b16 %v1151
    %v1322 = vunpack.c.l.b16 %v1152
    %v1323 = vunpack.c.h.b16 %v1152
    %v1324 = vunpack.c.l.b16 %v1153
    %v1325 = vunpack.c.h.b16 %v1153
    %v1326 = vunpack.c.l.b16 %v1154
    %v1327 = vunpack.c.h.b16 %v1154
    %v1328 = vunpack.c.l.b16 %v1155
    %v1329 = vunpack.c.h.b16 %v1155
    %v1330 = vunpack.c.l.b16 %v1156
    %v1331 = vunpack.c.h.b16 %v1156
    %v1332 = vunpack.c.l.b16 %v1157
    %v1333 = vunpack.c.h.b16 %v1157
    %v1334 = vunpack.c.l.b16 %v1158
    %v1335 = vunpack.c.h.b16 %v1158
    %v1336 = vunpack.c.l.b16 %v1159
    %v1337 = vunpack.c.h.b16 %v1159
    %v1338 = vunpack.c.l.b16 %v1160
    %v1339 = vunpack.c.h.b16 %v1160
    %v1340 = vunpack.c.l.b16 %v1161
    %v1341 = vunpack.c.h.b16 %v1161
    %v1342 = vunpack.c.l.b16 %v1162
    %v1343 = vunpack.c.h.b16 %v1162
    %v1344 = vunpack.c.l.b16 %v1163
    %v1345 = vunpack.c.h.b16 %v1163
    %v1346 = vunpack.c.l.b16 %v1164
    %v1347 = vunpack.c.h.b16 %v1164
    %v1348 = vunpack.c.l.b16 %v1165
    %v1349 = vunpack.c.h.b16 %v1165
    %v1350 = vunpack.c.l.b16 %v1166
    %v1351 = vunpack.c.h.b16 %v1166
    %v1352 = vunpack.c.l.b16 %v1167
    %v1353 = vunpack.c.h.b16 %v1167
    %v1354 = vunpack.c.l.b16 %v1168
    %v1355 = vunpack.c.h.b16 %v1168
    %v1356 = vunpack.c.l.b16 %v1169
    %v1357 = vunpack.c.h.b16 %v1169
    %v1358 = vunpack.c.l.b16 %v1170
    %v1359 = vunpack.c.h.b16 %v1170
    %v1360 = vunpack.c.l.b16 %v1171
    %v1361 = vunpack.c.h.b16 %v1171
    %v1362 = vunpack.c.l.b16 %v1172
    %v1363 = vunpack.c.h.b16 %v1172
    %v1364 = vunpack.c.l.b16 %v1173
    %v1365 = vunpack.c.h.b16 %v1173
    %v1366 = vunpack.c.l.b16 %v1174
    %v1367 = vunpack.c.h.b16 %v1174
    %v1368 = vunpack.c.l.b16 %v1175
    %v1369 = vunpack.c.h.b16 %v1175
    %v1370 = vunpack.c.l.b16 %v1176
    %v1371 = vunpack.c.h.b16 %v1176
    %v1372 = vunpack.c.l.b16 %v1177
    %v1373 = vunpack.c.h.b16 %v1177
    %v1374 = vunpack.c.l.b16 %v1178
    %v1375 = vunpack.c.h.b16 %v1178
    %v1376 = vunpack.c.l.b16 %v1179
    %v1377 = vunpack.c.h.b16 %v1179
    %v1378 = vunpack.c.l.b16 %v1180
    %v1379 = vunpack.c.h.b16 %v1180
    %v1380 = vunpack.c.l.b16 %v1181
    %v1381 = vunpack.c.h.b16 %v1181
    %v1382 = vunpack.c.l.b16 %v1182
    %v1383 = vunpack.c.h.b16 %v1182
    %v1384 = vunpack.c.l.b16 %v1183
    %v1385 = vunpack.c.h.b16 %v1183
    %v1386 = vunpack.c.l.b16 %v1184
    %v1387 = vunpack.c.h.b16 %v1184
    %v1388 = vunpack.c.l.b16 %v1185
    %v1389 = vunpack.c.h.b16 %v1185
    %v1390 = vpack.c.b16 %v1264, %v1262
    %v1391 = vpack.c.b16 %v1265, %v1263
    %v1392 = vpack.c.b16 %v1268, %v1266
    %v1393 = vpack.c.b16 %v1269, %v1267
    %v1394 = vpack.c.b16 %v1272, %v1270
    %v1395 = vpack.c.b16 %v1273, %v1271
    %v1396 = vpack.c.b16 %v1276, %v1274
    %v1397 = vpack.c.b16 %v1277, %v1275
    %v1398 = vpack.c.b16 %v1280, %v1278
    %v1399 = vpack.c.b16 %v1281, %v1279
    %v1400 = vpack.c.b16 %v1284, %v1282
    %v1401 = vpack.c.b16 %v1285, %v1283
    %v1402 = vpack.c.b16 %v1288, %v1286
    %v1403 = vpack.c.b16 %v1289, %v1287
    %v1404 = vpack.c.b16 %v1292, %v1290
    %v1405 = vpack.c.b16 %v1293, %v1291
    %v1406 = vpack.c.b16 %v1296, %v1294
    %v1407 = vpack.c.b16 %v1297, %v1295
    %v1408 = vpack.c.b16 %v1300, %v1298
    %v1409 = vpack.c.b16 %v1301, %v1299
    %v1410 = vpack.c.b16 %v1304, %v1302
    %v1411 = vpack.c.b16 %v1305, %v1303
    %v1412 = vpack.c.b16 %v1308, %v1306
    %v1413 = vpack.c.b16 %v1309, %v1307
    %v1414 = vpack.c.b16 %v1312, %v1310
    %v1415 = vpack.c.b16 %v1313, %v1311
    %v1416 = vpack.c.b16 %v1316, %v1314
    %v1417 = vpack.c.b16 %v1317, %v1315
    %v1418 = vpack.c.b16 %v1320, %v1318
    %v1419 = vpack.c.b16 %v1321, %v1319
    %v1420 = vpack.c.b16 %v1324, %v1322
    %v1421 = vpack.c.b16 %v1325, %v1323
    %v1422 = vpack.c.b16 %v1328, %v1326
    %v1423 = vpack.c.b16 %v1329, %v1327
    %v1424 = vpack.c.b16 %v1332, %v1330
    %v1425 = vpack.c.b16 %v1333, %v1331
    %v1426 = vpack.c.b16 %v1336, %v1334
    %v1427 = vpack.c.b16 %v1337, %v1335
    %v1428 = vpack.c.b16 %v1340, %v1338
    %v1429 = vpack.c.b16 %v1341, %v1339
    %v1430 = vpack.c.b16 %v1344, %v1342
    %v1431 = vpack.c.b16 %v1345, %v1343
    %v1432 = vpack.c.b16 %v1348, %v1346
    %v1433 = vpack.c.b16 %v1349, %v1347
    %v1434 = vpack.c.b16 %v1352, %v1350
    %v1435 = vpack.c.b16 %v1353, %v1351
    %v1436 = vpack.c.b16 %v1356, %v1354
    %v1437 = vpack.c.b16 %v1357, %v1355
    %v1438 = vpack.c.b16 %v1360, %v1358
    %v1439 = vpack.c.b16 %v1361, %v1359
    %v1440 = vpack.c.b16 %v1364, %v1362
    %v1441 = vpack.c.b16 %v1365, %v1363
    %v1442 = vpack.c.b16 %v1368, %v1366
    %v1443 = vpack.c.b16 %v1369, %v1367
    %v1444 = vpack.c.b16 %v1372, %v1370
    %v1445 = vpack.c.b16 %v1373, %v1371
    %v1446 = vpack.c.b16 %v1376, %v1374
    %v1447 = vpack.c.b16 %v1377, %v1375
    %v1448 = vpack.c.b16 %v1380, %v1378
    %v1449 = vpack.c.b16 %v1381, %v1379
    %v1450 = vpack.c.b16 %v1384, %v1382
    %v1451 = vpack.c.b16 %v1385, %v1383
    %v1452 = vpack.c.b16 %v1388, %v1386
    %v1453 = vpack.c.b16 %v1389, %v1387
    %1518 = vmatprep.subr.bf16.mxu0 %v1391
    %1519 = vmatpush1.bf16.msra.mxu0 %v1390
    %1520 = vmatprep.subr.bf16.mxu0 %v1393
    %1521 = vmatpush1.bf16.msra.mxu0 %v1392
    %1522 = vmatprep.subr.bf16.mxu0 %v1395
    %1523 = vmatpush1.bf16.msra.mxu0 %v1394
    %1524 = vmatprep.subr.bf16.mxu0 %v1397
    %1525 = vmatpush1.bf16.msra.mxu0 %v1396
    %1526 = vmatprep.subr.bf16.mxu0 %v1399
    %1527 = vmatpush1.bf16.msra.mxu0 %v1398
    %1528 = vmatprep.subr.bf16.mxu0 %v1401
    %1529 = vmatpush1.bf16.msra.mxu0 %v1400
    %1530 = vmatprep.subr.bf16.mxu0 %v1403
    %1531 = vmatpush1.bf16.msra.mxu0 %v1402
    %1532 = vmatprep.subr.bf16.mxu0 %v1405
    %1533 = vmatpush1.bf16.msra.mxu0 %v1404
    %1534 = vmatprep.subr.bf16.mxu0 %v1407
    %1535 = vmatpush1.bf16.msra.mxu0 %v1406
    %1536 = vmatprep.subr.bf16.mxu0 %v1409
    %1537 = vmatpush1.bf16.msra.mxu0 %v1408
    %1538 = vmatprep.subr.bf16.mxu0 %v1411
    %1539 = vmatpush1.bf16.msra.mxu0 %v1410
    %1540 = vmatprep.subr.bf16.mxu0 %v1413
    %1541 = vmatpush1.bf16.msra.mxu0 %v1412
    %1542 = vmatprep.subr.bf16.mxu0 %v1415
    %1543 = vmatpush1.bf16.msra.mxu0 %v1414
    %1544 = vmatprep.subr.bf16.mxu0 %v1417
    %1545 = vmatpush1.bf16.msra.mxu0 %v1416
    %1546 = vmatprep.subr.bf16.mxu0 %v1419
    %1547 = vmatpush1.bf16.msra.mxu0 %v1418
    %1548 = vmatprep.subr.bf16.mxu0 %v1421
    %1549 = vmatpush1.bf16.msra.mxu0 %v1420
    %1550 = vmatprep.mubr.bf16.mxu0 %v629
    %1551 = vmatmul.mubr.bf16.gmra.mrb[0].mxu0 %v628
    %v1552 = vpop.f32.mrb[0].mxu0
    %v1553 = vadd.f32 %v1191, %v1552
    %v1554 = vpop.f32.mrb[0].mxu0
    %v1555 = vadd.f32 %v1195, %v1554
    %v1556 = vpop.f32.mrb[0].mxu0
    %v1557 = vadd.f32 %v1191, %v1556
    %v1558 = vpop.f32.mrb[0].mxu0
    %v1559 = vadd.f32 %v1195, %v1558
    %1560 = vdwg.mxu0
    %1561 = vmatprep.subr.bf16.mxu0 %v1423
    %1562 = vmatpush1.bf16.msra.mxu0 %v1422
    %1563 = vmatprep.subr.bf16.mxu0 %v1425
    %1564 = vmatpush1.bf16.msra.mxu0 %v1424
    %1565 = vmatprep.subr.bf16.mxu0 %v1427
    %1566 = vmatpush1.bf16.msra.mxu0 %v1426
    %1567 = vmatprep.subr.bf16.mxu0 %v1429
    %1568 = vmatpush1.bf16.msra.mxu0 %v1428
    %1569 = vmatprep.subr.bf16.mxu0 %v1431
    %1570 = vmatpush1.bf16.msra.mxu0 %v1430
    %1571 = vmatprep.subr.bf16.mxu0 %v1433
    %1572 = vmatpush1.bf16.msra.mxu0 %v1432
    %1573 = vmatprep.subr.bf16.mxu0 %v1435
    %1574 = vmatpush1.bf16.msra.mxu0 %v1434
    %1575 = vmatprep.subr.bf16.mxu0 %v1437
    %1576 = vmatpush1.bf16.msra.mxu0 %v1436
    %1577 = vmatprep.subr.bf16.mxu0 %v1439
    %1578 = vmatpush1.bf16.msra.mxu0 %v1438
    %1579 = vmatprep.subr.bf16.mxu0 %v1441
    %1580 = vmatpush1.bf16.msra.mxu0 %v1440
    %1581 = vmatprep.subr.bf16.mxu0 %v1443
    %1582 = vmatpush1.bf16.msra.mxu0 %v1442
    %1583 = vmatprep.subr.bf16.mxu0 %v1445
    %1584 = vmatpush1.bf16.msra.mxu0 %v1444
    %1585 = vmatprep.subr.bf16.mxu0 %v1447
    %1586 = vmatpush1.bf16.msra.mxu0 %v1446
    %1587 = vmatprep.subr.bf16.mxu0 %v1449
    %1588 = vmatpush1.bf16.msra.mxu0 %v1448
    %1589 = vmatprep.subr.bf16.mxu0 %v1451
    %1590 = vmatpush1.bf16.msra.mxu0 %v1450
    %1591 = vmatprep.subr.bf16.mxu0 %v1453
    %1592 = vmatpush1.bf16.msra.mxu0 %v1452
    %1593 = vmatprep.mubr.bf16.mxu0 %v631
    %1594 = vmatmul.mubr.bf16.gmra.mrb[0].mxu0 %v630
    %v1595 = vpop.f32.mrb[0].mxu0
    %v1596 = vadd.f32 %v1553, %v1595
    %v1597 = vpop.f32.mrb[0].mxu0
    %v1598 = vadd.f32 %v1555, %v1597
    %v1599 = vpop.f32.mrb[0].mxu0
    %v1600 = vadd.f32 %v1557, %v1599
    %v1601 = vpop.f32.mrb[0].mxu0
    %v1602 = vadd.f32 %v1559, %v1601
    %1603 = vdwg.mxu0
    %1604 = vst [vmem:[#allocation20] sm:$0xff] %v1596
    %1605 = vst [vmem:[#allocation20 + $0x8] sm:$0xff] %v1598
    %1606 = vst [vmem:[#allocation20 + $0x10] sm:$0xff] %v1600
    %1607 = vst [vmem:[#allocation20 + $0x18] sm:$0xff] %v1602
    %v1608 = vpack.c.bf16 %v1600, %v1596
    %v1609 = vpack.c.bf16 %v1602, %v1598
    %v1610 = vld [vmem:[#allocation11] sm:$0xf]
    %v1611 = vld [vmem:[#allocation11 + $0x4] sm:$0xf]
    %v1612 = vld [vmem:[#allocation11 + $0x8] sm:$0xf]
    %v1613 = vld [vmem:[#allocation11 + $0xc] sm:$0xf]
    %v1614 = vld [vmem:[#allocation11 + $0x10] sm:$0xf]
    %v1615 = vld [vmem:[#allocation11 + $0x14] sm:$0xf]
    %v1616 = vld [vmem:[#allocation11 + $0x18] sm:$0xf]
    %v1617 = vld [vmem:[#allocation11 + $0x1c] sm:$0xf]
    %v1618 = vld [vmem:[#allocation11 + $0x20] sm:$0xf]
    %v1619 = vld [vmem:[#allocation11 + $0x24] sm:$0xf]
    %v1620 = vld [vmem:[#allocation11 + $0x28] sm:$0xf]
    %v1621 = vld [vmem:[#allocation11 + $0x2c] sm:$0xf]
    %v1622 = vld [vmem:[#allocation11 + $0x30] sm:$0xf]
    %v1623 = vld [vmem:[#allocation11 + $0x34] sm:$0xf]
    %v1624 = vld [vmem:[#allocation11 + $0x38] sm:$0xf]
    %v1625 = vld [vmem:[#allocation11 + $0x3c] sm:$0xf]
    %v1626 = vld [vmem:[#allocation11 + $0x40] sm:$0xf]
    %v1627 = vld [vmem:[#allocation11 + $0x44] sm:$0xf]
    %v1628 = vld [vmem:[#allocation11 + $0x48] sm:$0xf]
    %v1629 = vld [vmem:[#allocation11 + $0x4c] sm:$0xf]
    %v1630 = vld [vmem:[#allocation11 + $0x50] sm:$0xf]
    %v1631 = vld [vmem:[#allocation11 + $0x54] sm:$0xf]
    %v1632 = vld [vmem:[#allocation11 + $0x58] sm:$0xf]
    %v1633 = vld [vmem:[#allocation11 + $0x5c] sm:$0xf]
    %v1634 = vld [vmem:[#allocation11 + $0x60] sm:$0xf]
    %v1635 = vld [vmem:[#allocation11 + $0x64] sm:$0xf]
    %v1636 = vld [vmem:[#allocation11 + $0x68] sm:$0xf]
    %v1637 = vld [vmem:[#allocation11 + $0x6c] sm:$0xf]
    %v1638 = vld [vmem:[#allocation11 + $0x70] sm:$0xf]
    %v1639 = vld [vmem:[#allocation11 + $0x74] sm:$0xf]
    %v1640 = vld [vmem:[#allocation11 + $0x78] sm:$0xf]
    %v1641 = vld [vmem:[#allocation11 + $0x7c] sm:$0xf]
    %v1642 = vld [vmem:[%s8] sm:$0x1]
    %v1644 = vlaneseq
    %v1645 = vshrl.u32 %v1644, 7
    %v1646 = vsub.s32 0, %v1645
    %v1647 = vrot.slane %v1642, %v1646
    %v1681 = vunpack.c.l.b16 %v1610
    %v1682 = vunpack.c.l.b16 %v1611
    %v1683 = vunpack.c.l.b16 %v1612
    %v1684 = vunpack.c.l.b16 %v1613
    %v1685 = vunpack.c.l.b16 %v1614
    %v1686 = vunpack.c.l.b16 %v1615
    %v1687 = vunpack.c.l.b16 %v1616
    %v1688 = vunpack.c.l.b16 %v1617
    %v1689 = vunpack.c.l.b16 %v1618
    %v1690 = vunpack.c.l.b16 %v1619
    %v1691 = vunpack.c.l.b16 %v1620
    %v1692 = vunpack.c.l.b16 %v1621
    %v1693 = vunpack.c.l.b16 %v1622
    %v1694 = vunpack.c.l.b16 %v1623
    %v1695 = vunpack.c.l.b16 %v1624
    %v1696 = vunpack.c.l.b16 %v1625
    %v1697 = vunpack.c.l.b16 %v1626
    %v1698 = vunpack.c.l.b16 %v1627
    %v1699 = vunpack.c.l.b16 %v1628
    %v1700 = vunpack.c.l.b16 %v1629
    %v1701 = vunpack.c.l.b16 %v1630
    %v1702 = vunpack.c.l.b16 %v1631
    %v1703 = vunpack.c.l.b16 %v1632
    %v1704 = vunpack.c.l.b16 %v1633
    %v1705 = vunpack.c.l.b16 %v1634
    %v1706 = vunpack.c.l.b16 %v1635
    %v1707 = vunpack.c.l.b16 %v1636
    %v1708 = vunpack.c.l.b16 %v1637
    %v1709 = vunpack.c.l.b16 %v1638
    %v1710 = vunpack.c.l.b16 %v1639
    %v1711 = vunpack.c.l.b16 %v1640
    %v1712 = vunpack.c.l.b16 %v1641
    %v1713 = vpack.c.b16 %v1682, %v1681
    %v1714 = vpack.c.b16 %v1684, %v1683
    %v1715 = vpack.c.b16 %v1686, %v1685
    %v1716 = vpack.c.b16 %v1688, %v1687
    %v1717 = vpack.c.b16 %v1690, %v1689
    %v1718 = vpack.c.b16 %v1692, %v1691
    %v1719 = vpack.c.b16 %v1694, %v1693
    %v1720 = vpack.c.b16 %v1696, %v1695
    %v1721 = vpack.c.b16 %v1698, %v1697
    %v1722 = vpack.c.b16 %v1700, %v1699
    %v1723 = vpack.c.b16 %v1702, %v1701
    %v1724 = vpack.c.b16 %v1704, %v1703
    %v1725 = vpack.c.b16 %v1706, %v1705
    %v1726 = vpack.c.b16 %v1708, %v1707
    %v1727 = vpack.c.b16 %v1710, %v1709
    %v1728 = vpack.c.b16 %v1712, %v1711
    %1745 = vmatprep.subr.bf16.mxu0 0
    %1746 = vmatpush1.bf16.msra.mxu0 %v1713
    %1747 = vmatprep.subr.bf16.mxu0 0
    %1748 = vmatpush1.bf16.msra.mxu0 %v1714
    %1749 = vmatprep.subr.bf16.mxu0 0
    %1750 = vmatpush1.bf16.msra.mxu0 %v1715
    %1751 = vmatprep.subr.bf16.mxu0 0
    %1752 = vmatpush1.bf16.msra.mxu0 %v1716
    %1753 = vmatprep.subr.bf16.mxu0 0
    %1754 = vmatpush1.bf16.msra.mxu0 %v1717
    %1755 = vmatprep.subr.bf16.mxu0 0
    %1756 = vmatpush1.bf16.msra.mxu0 %v1718
    %1757 = vmatprep.subr.bf16.mxu0 0
    %1758 = vmatpush1.bf16.msra.mxu0 %v1719
    %1759 = vmatprep.subr.bf16.mxu0 0
    %1760 = vmatpush1.bf16.msra.mxu0 %v1720
    %1761 = vmatprep.subr.bf16.mxu0 0
    %1762 = vmatpush1.bf16.msra.mxu0 %v1721
    %1763 = vmatprep.subr.bf16.mxu0 0
    %1764 = vmatpush1.bf16.msra.mxu0 %v1722
    %1765 = vmatprep.subr.bf16.mxu0 0
    %1766 = vmatpush1.bf16.msra.mxu0 %v1723
    %1767 = vmatprep.subr.bf16.mxu0 0
    %1768 = vmatpush1.bf16.msra.mxu0 %v1724
    %1769 = vmatprep.subr.bf16.mxu0 0
    %1770 = vmatpush1.bf16.msra.mxu0 %v1725
    %1771 = vmatprep.subr.bf16.mxu0 0
    %1772 = vmatpush1.bf16.msra.mxu0 %v1726
    %1773 = vmatprep.subr.bf16.mxu0 0
    %1774 = vmatpush1.bf16.msra.mxu0 %v1727
    %1775 = vmatprep.subr.bf16.mxu0 0
    %1776 = vmatpush1.bf16.msra.mxu0 %v1728
    %1777 = vmatprep.mubr.bf16.mxu0 %v1609
    %1778 = vmatmul.mubr.bf16.gmra.mrb[0].mxu0 %v1608
    %v1779 = vpop.f32.mrb[0].mxu0
    %v1780 = vadd.f32 %v1647, %v1779
    %v1781 = vpop.f32.mrb[0].mxu0
    %v1782 = vpop.f32.mrb[0].mxu0
    %v1783 = vadd.f32 %v1647, %v1782
    %v1784 = vpop.f32.mrb[0].mxu0
    %1785 = vdwg.mxu0
    %v1786 = vmax.f32 %v1780, 0.0
    %v1787 = vmax.f32 %v1783, 0.0
    %v1788 = vpack.c.bf16 %v1787, %v1786
    %v1789 = vld [vmem:[#allocation13] sm:$0xf]
    %v1790 = vld [vmem:[#allocation13 + $0x4] sm:$0xf]
    %v1791 = vld [vmem:[#allocation13 + $0x8] sm:$0xf]
    %v1792 = vld [vmem:[#allocation13 + $0xc] sm:$0xf]
    %v1793 = vld [vmem:[#allocation13 + $0x10] sm:$0xf]
    %v1794 = vld [vmem:[#allocation13 + $0x14] sm:$0xf]
    %v1795 = vld [vmem:[#allocation13 + $0x18] sm:$0xf]
    %v1796 = vld [vmem:[#allocation13 + $0x1c] sm:$0xf]
    %v1797 = vld [vmem:[#allocation13 + $0x20] sm:$0xf]
    %v1798 = vld [vmem:[#allocation13 + $0x24] sm:$0xf]
    %v1799 = vld [vmem:[#allocation13 + $0x28] sm:$0xf]
    %v1800 = vld [vmem:[#allocation13 + $0x2c] sm:$0xf]
    %v1801 = vld [vmem:[#allocation13 + $0x30] sm:$0xf]
    %v1802 = vld [vmem:[#allocation13 + $0x34] sm:$0xf]
    %v1803 = vld [vmem:[#allocation13 + $0x38] sm:$0xf]
    %v1804 = vld [vmem:[#allocation13 + $0x3c] sm:$0xf]
    %v1805 = vld [vmem:[%s10] sm:$0x1]
    %v1807 = vlaneseq
    %v1808 = vshrl.u32 %v1807, 7
    %v1809 = vsub.s32 0, %v1808
    %v1810 = vrot.slane %v1805, %v1809
    %v1828 = vunpack.c.l.b16 %v1789
    %v1829 = vunpack.c.l.b16 %v1790
    %v1830 = vunpack.c.l.b16 %v1791
    %v1831 = vunpack.c.l.b16 %v1792
    %v1832 = vunpack.c.l.b16 %v1793
    %v1833 = vunpack.c.l.b16 %v1794
    %v1834 = vunpack.c.l.b16 %v1795
    %v1835 = vunpack.c.l.b16 %v1796
    %v1836 = vunpack.c.l.b16 %v1797
    %v1837 = vunpack.c.l.b16 %v1798
    %v1838 = vunpack.c.l.b16 %v1799
    %v1839 = vunpack.c.l.b16 %v1800
    %v1840 = vunpack.c.l.b16 %v1801
    %v1841 = vunpack.c.l.b16 %v1802
    %v1842 = vunpack.c.l.b16 %v1803
    %v1843 = vunpack.c.l.b16 %v1804
    %v1844 = vpack.c.b16 %v1829, %v1828
    %v1845 = vpack.c.b16 %v1831, %v1830
    %v1846 = vpack.c.b16 %v1833, %v1832
    %v1847 = vpack.c.b16 %v1835, %v1834
    %v1848 = vpack.c.b16 %v1837, %v1836
    %v1849 = vpack.c.b16 %v1839, %v1838
    %v1850 = vpack.c.b16 %v1841, %v1840
    %v1851 = vpack.c.b16 %v1843, %v1842
    %1860 = vmatprep.subr.bf16.mxu0 0
    %1861 = vmatpush1.bf16.msra.mxu0 %v1844
    %1862 = vmatprep.subr.bf16.mxu0 0
    %1863 = vmatpush1.bf16.msra.mxu0 %v1845
    %1864 = vmatprep.subr.bf16.mxu0 0
    %1865 = vmatpush1.bf16.msra.mxu0 %v1846
    %1866 = vmatprep.subr.bf16.mxu0 0
    %1867 = vmatpush1.bf16.msra.mxu0 %v1847
    %1868 = vmatprep.subr.bf16.mxu0 0
    %1869 = vmatpush1.bf16.msra.mxu0 %v1848
    %1870 = vmatprep.subr.bf16.mxu0 0
    %1871 = vmatpush1.bf16.msra.mxu0 %v1849
    %1872 = vmatprep.subr.bf16.mxu0 0
    %1873 = vmatpush1.bf16.msra.mxu0 %v1850
    %1874 = vmatprep.subr.bf16.mxu0 0
    %1875 = vmatpush1.bf16.msra.mxu0 %v1851
    %1876 = vmatprep.subr.bf16.mxu0 0
    %1877 = vmatpush1.bf16.msra.mxu0 0
    %1878 = vmatprep.subr.bf16.mxu0 0
    %1879 = vmatpush1.bf16.msra.mxu0 0
    %1880 = vmatprep.subr.bf16.mxu0 0
    %1881 = vmatpush1.bf16.msra.mxu0 0
    %1882 = vmatprep.subr.bf16.mxu0 0
    %1883 = vmatpush1.bf16.msra.mxu0 0
    %1884 = vmatprep.subr.bf16.mxu0 0
    %1885 = vmatpush1.bf16.msra.mxu0 0
    %1886 = vmatprep.subr.bf16.mxu0 0
    %1887 = vmatpush1.bf16.msra.mxu0 0
    %1888 = vmatprep.subr.bf16.mxu0 0
    %1889 = vmatpush1.bf16.msra.mxu0 0
    %1890 = vmatprep.subr.bf16.mxu0 0
    %1891 = vmatpush1.bf16.msra.mxu0 0
    %1892 = vmatprep.mubr.bf16.mxu0 0
    %1893 = vmatmul.mubr.bf16.gmra.mrb[0].mxu0 %v1788
    %v1894 = vpop.f32.mrb[0].mxu0
    %v1895 = vadd.f32 %v1810, %v1894
    %v1896 = vpop.f32.mrb[0].mxu0
    %v1897 = vpop.f32.mrb[0].mxu0
    %v1898 = vadd.f32 %v1810, %v1897
    %v1899 = vpop.f32.mrb[0].mxu0
    %1900 = vdwg.mxu0
    %1901 = vst [vmem:[#allocation22] sm:$0xff] %v1895
    %1902 = vst [vmem:[#allocation22 + $0x8] sm:$0xff] %v1898
    %v1903 = vpack.c.bf16 %v1116, %v1114
    %v1904 = vpack.c.bf16 %v1117, %v1115
    %v1905 = vld [vmem:[#allocation14] sm:$0xff]
    %v1906 = vld [vmem:[#allocation14 + $0x8] sm:$0xff]
    %v1907 = vld [vmem:[#allocation14 + $0x10] sm:$0xff]
    %v1908 = vld [vmem:[#allocation14 + $0x18] sm:$0xff]
    %v1909 = vld [vmem:[#allocation14 + $0x20] sm:$0xff]
    %v1910 = vld [vmem:[#allocation14 + $0x28] sm:$0xff]
    %v1911 = vld [vmem:[#allocation14 + $0x30] sm:$0xff]
    %v1912 = vld [vmem:[#allocation14 + $0x38] sm:$0xff]
    %v1913 = vld [vmem:[#allocation14 + $0x40] sm:$0xff]
    %v1914 = vld [vmem:[#allocation14 + $0x48] sm:$0xff]
    %v1915 = vld [vmem:[#allocation14 + $0x50] sm:$0xff]
    %v1916 = vld [vmem:[#allocation14 + $0x58] sm:$0xff]
    %v1917 = vld [vmem:[#allocation14 + $0x60] sm:$0xff]
    %v1918 = vld [vmem:[#allocation14 + $0x68] sm:$0xff]
    %v1919 = vld [vmem:[#allocation14 + $0x70] sm:$0xff]
    %v1920 = vld [vmem:[#allocation14 + $0x78] sm:$0xff]
    %v1921 = vld [vmem:[#allocation14 + $0x80] sm:$0xff]
    %v1922 = vld [vmem:[#allocation14 + $0x88] sm:$0xff]
    %v1923 = vld [vmem:[#allocation14 + $0x90] sm:$0xff]
    %v1924 = vld [vmem:[#allocation14 + $0x98] sm:$0xff]
    %v1925 = vld [vmem:[#allocation14 + $0xa0] sm:$0xff]
    %v1926 = vld [vmem:[#allocation14 + $0xa8] sm:$0xff]
    %v1927 = vld [vmem:[#allocation14 + $0xb0] sm:$0xff]
    %v1928 = vld [vmem:[#allocation14 + $0xb8] sm:$0xff]
    %v1929 = vld [vmem:[#allocation14 + $0xc0] sm:$0xff]
    %v1930 = vld [vmem:[#allocation14 + $0xc8] sm:$0xff]
    %v1931 = vld [vmem:[#allocation14 + $0xd0] sm:$0xff]
    %v1932 = vld [vmem:[#allocation14 + $0xd8] sm:$0xff]
    %v1933 = vld [vmem:[#allocation14 + $0xe0] sm:$0xff]
    %v1934 = vld [vmem:[#allocation14 + $0xe8] sm:$0xff]
    %v1935 = vld [vmem:[#allocation14 + $0xf0] sm:$0xff]
    %v1936 = vld [vmem:[#allocation14 + $0xf8] sm:$0xff]
    %v1937 = vld [vmem:[#allocation14 + $0x100] sm:$0xff]
    %v1938 = vld [vmem:[#allocation14 + $0x108] sm:$0xff]
    %v1939 = vld [vmem:[#allocation14 + $0x110] sm:$0xff]
    %v1940 = vld [vmem:[#allocation14 + $0x118] sm:$0xff]
    %v1941 = vld [vmem:[#allocation14 + $0x120] sm:$0xff]
    %v1942 = vld [vmem:[#allocation14 + $0x128] sm:$0xff]
    %v1943 = vld [vmem:[#allocation14 + $0x130] sm:$0xff]
    %v1944 = vld [vmem:[#allocation14 + $0x138] sm:$0xff]
    %v1945 = vld [vmem:[#allocation14 + $0x140] sm:$0xff]
    %v1946 = vld [vmem:[#allocation14 + $0x148] sm:$0xff]
    %v1947 = vld [vmem:[#allocation14 + $0x150] sm:$0xff]
    %v1948 = vld [vmem:[#allocation14 + $0x158] sm:$0xff]
    %v1949 = vld [vmem:[#allocation14 + $0x160] sm:$0xff]
    %v1950 = vld [vmem:[#allocation14 + $0x168] sm:$0xff]
    %v1951 = vld [vmem:[#allocation14 + $0x170] sm:$0xff]
    %v1952 = vld [vmem:[#allocation14 + $0x178] sm:$0xff]
    %v1953 = vld [vmem:[#allocation14 + $0x180] sm:$0xff]
    %v1954 = vld [vmem:[#allocation14 + $0x188] sm:$0xff]
    %v1955 = vld [vmem:[#allocation14 + $0x190] sm:$0xff]
    %v1956 = vld [vmem:[#allocation14 + $0x198] sm:$0xff]
    %v1957 = vld [vmem:[#allocation14 + $0x1a0] sm:$0xff]
    %v1958 = vld [vmem:[#allocation14 + $0x1a8] sm:$0xff]
    %v1959 = vld [vmem:[#allocation14 + $0x1b0] sm:$0xff]
    %v1960 = vld [vmem:[#allocation14 + $0x1b8] sm:$0xff]
    %v1961 = vld [vmem:[#allocation14 + $0x1c0] sm:$0xff]
    %v1962 = vld [vmem:[#allocation14 + $0x1c8] sm:$0xff]
    %v1963 = vld [vmem:[#allocation14 + $0x1d0] sm:$0xff]
    %v1964 = vld [vmem:[#allocation14 + $0x1d8] sm:$0xff]
    %v1965 = vld [vmem:[#allocation14 + $0x1e0] sm:$0xff]
    %v1966 = vld [vmem:[#allocation14 + $0x1e8] sm:$0xff]
    %v1967 = vld [vmem:[#allocation14 + $0x1f0] sm:$0xff]
    %v1968 = vld [vmem:[#allocation14 + $0x1f8] sm:$0xff]
    %v1969 = vld [vmem:[#allocation16] sm:$0xff]
    %v1970 = vld [vmem:[#allocation16 + $0x8] sm:$0xff]
    %v1971 = vld [vmem:[#allocation16 + $0x10] sm:$0xff]
    %v1972 = vld [vmem:[#allocation16 + $0x18] sm:$0xff]
    %v1973 = vld [vmem:[#allocation16 + $0x20] sm:$0xff]
    %v1974 = vld [vmem:[#allocation16 + $0x28] sm:$0xff]
    %v1975 = vld [vmem:[#allocation16 + $0x30] sm:$0xff]
    %v1976 = vld [vmem:[#allocation16 + $0x38] sm:$0xff]
    %v1977 = vld [vmem:[#allocation16 + $0x40] sm:$0xff]
    %v1978 = vld [vmem:[#allocation16 + $0x48] sm:$0xff]
    %v1979 = vld [vmem:[#allocation16 + $0x50] sm:$0xff]
    %v1980 = vld [vmem:[#allocation16 + $0x58] sm:$0xff]
    %v1981 = vld [vmem:[#allocation16 + $0x60] sm:$0xff]
    %v1982 = vld [vmem:[#allocation16 + $0x68] sm:$0xff]
    %v1983 = vld [vmem:[#allocation16 + $0x70] sm:$0xff]
    %v1984 = vld [vmem:[#allocation16 + $0x78] sm:$0xff]
    %v1985 = vld [vmem:[#allocation16 + $0x80] sm:$0xff]
    %v1986 = vld [vmem:[#allocation16 + $0x88] sm:$0xff]
    %v1987 = vld [vmem:[#allocation16 + $0x90] sm:$0xff]
    %v1988 = vld [vmem:[#allocation16 + $0x98] sm:$0xff]
    %v1989 = vld [vmem:[#allocation16 + $0xa0] sm:$0xff]
    %v1990 = vld [vmem:[#allocation16 + $0xa8] sm:$0xff]
    %v1991 = vld [vmem:[#allocation16 + $0xb0] sm:$0xff]
    %v1992 = vld [vmem:[#allocation16 + $0xb8] sm:$0xff]
    %v1993 = vld [vmem:[#allocation16 + $0xc0] sm:$0xff]
    %v1994 = vld [vmem:[#allocation16 + $0xc8] sm:$0xff]
    %v1995 = vld [vmem:[#allocation16 + $0xd0] sm:$0xff]
    %v1996 = vld [vmem:[#allocation16 + $0xd8] sm:$0xff]
    %v1997 = vld [vmem:[#allocation16 + $0xe0] sm:$0xff]
    %v1998 = vld [vmem:[#allocation16 + $0xe8] sm:$0xff]
    %v1999 = vld [vmem:[#allocation16 + $0xf0] sm:$0xff]
    %v2000 = vld [vmem:[#allocation16 + $0xf8] sm:$0xff]
    %v2001 = vld [vmem:[#allocation16 + $0x100] sm:$0xff]
    %v2002 = vld [vmem:[#allocation16 + $0x108] sm:$0xff]
    %v2003 = vld [vmem:[#allocation16 + $0x110] sm:$0xff]
    %v2004 = vld [vmem:[#allocation16 + $0x118] sm:$0xff]
    %v2005 = vld [vmem:[#allocation16 + $0x120] sm:$0xff]
    %v2006 = vld [vmem:[#allocation16 + $0x128] sm:$0xff]
    %v2007 = vld [vmem:[#allocation16 + $0x130] sm:$0xff]
    %v2008 = vld [vmem:[#allocation16 + $0x138] sm:$0xff]
    %v2009 = vld [vmem:[#allocation16 + $0x140] sm:$0xff]
    %v2010 = vld [vmem:[#allocation16 + $0x148] sm:$0xff]
    %v2011 = vld [vmem:[#allocation16 + $0x150] sm:$0xff]
    %v2012 = vld [vmem:[#allocation16 + $0x158] sm:$0xff]
    %v2013 = vld [vmem:[#allocation16 + $0x160] sm:$0xff]
    %v2014 = vld [vmem:[#allocation16 + $0x168] sm:$0xff]
    %v2015 = vld [vmem:[#allocation16 + $0x170] sm:$0xff]
    %v2016 = vld [vmem:[#allocation16 + $0x178] sm:$0xff]
    %v2017 = vld [vmem:[#allocation16 + $0x180] sm:$0xff]
    %v2018 = vld [vmem:[#allocation16 + $0x188] sm:$0xff]
    %v2019 = vld [vmem:[#allocation16 + $0x190] sm:$0xff]
    %v2020 = vld [vmem:[#allocation16 + $0x198] sm:$0xff]
    %v2021 = vld [vmem:[#allocation16 + $0x1a0] sm:$0xff]
    %v2022 = vld [vmem:[#allocation16 + $0x1a8] sm:$0xff]
    %v2023 = vld [vmem:[#allocation16 + $0x1b0] sm:$0xff]
    %v2024 = vld [vmem:[#allocation16 + $0x1b8] sm:$0xff]
    %v2025 = vld [vmem:[#allocation16 + $0x1c0] sm:$0xff]
    %v2026 = vld [vmem:[#allocation16 + $0x1c8] sm:$0xff]
    %v2027 = vld [vmem:[#allocation16 + $0x1d0] sm:$0xff]
    %v2028 = vld [vmem:[#allocation16 + $0x1d8] sm:$0xff]
    %v2029 = vld [vmem:[#allocation16 + $0x1e0] sm:$0xff]
    %v2030 = vld [vmem:[#allocation16 + $0x1e8] sm:$0xff]
    %v2031 = vld [vmem:[#allocation16 + $0x1f0] sm:$0xff]
    %v2032 = vld [vmem:[#allocation16 + $0x1f8] sm:$0xff]
    %v2097 = vunpack.c.l.b16 %v1969
    %v2098 = vunpack.c.h.b16 %v1969
    %v2099 = vunpack.c.l.b16 %v1970
    %v2100 = vunpack.c.h.b16 %v1970
    %v2101 = vunpack.c.l.b16 %v1971
    %v2102 = vunpack.c.h.b16 %v1971
    %v2103 = vunpack.c.l.b16 %v1972
    %v2104 = vunpack.c.h.b16 %v1972
    %v2105 = vunpack.c.l.b16 %v1973
    %v2106 = vunpack.c.h.b16 %v1973
    %v2107 = vunpack.c.l.b16 %v1974
    %v2108 = vunpack.c.h.b16 %v1974
    %v2109 = vunpack.c.l.b16 %v1975
    %v2110 = vunpack.c.h.b16 %v1975
    %v2111 = vunpack.c.l.b16 %v1976
    %v2112 = vunpack.c.h.b16 %v1976
    %v2113 = vunpack.c.l.b16 %v1977
    %v2114 = vunpack.c.h.b16 %v1977
    %v2115 = vunpack.c.l.b16 %v1978
    %v2116 = vunpack.c.h.b16 %v1978
    %v2117 = vunpack.c.l.b16 %v1979
    %v2118 = vunpack.c.h.b16 %v1979
    %v2119 = vunpack.c.l.b16 %v1980
    %v2120 = vunpack.c.h.b16 %v1980
    %v2121 = vunpack.c.l.b16 %v1981
    %v2122 = vunpack.c.h.b16 %v1981
    %v2123 = vunpack.c.l.b16 %v1982
    %v2124 = vunpack.c.h.b16 %v1982
    %v2125 = vunpack.c.l.b16 %v1983
    %v2126 = vunpack.c.h.b16 %v1983
    %v2127 = vunpack.c.l.b16 %v1984
    %v2128 = vunpack.c.h.b16 %v1984
    %v2129 = vunpack.c.l.b16 %v1985
    %v2130 = vunpack.c.h.b16 %v1985
    %v2131 = vunpack.c.l.b16 %v1986
    %v2132 = vunpack.c.h.b16 %v1986
    %v2133 = vunpack.c.l.b16 %v1987
    %v2134 = vunpack.c.h.b16 %v1987
    %v2135 = vunpack.c.l.b16 %v1988
    %v2136 = vunpack.c.h.b16 %v1988
    %v2137 = vunpack.c.l.b16 %v1989
    %v2138 = vunpack.c.h.b16 %v1989
    %v2139 = vunpack.c.l.b16 %v1990
    %v2140 = vunpack.c.h.b16 %v1990
    %v2141 = vunpack.c.l.b16 %v1991
    %v2142 = vunpack.c.h.b16 %v1991
    %v2143 = vunpack.c.l.b16 %v1992
    %v2144 = vunpack.c.h.b16 %v1992
    %v2145 = vunpack.c.l.b16 %v1993
    %v2146 = vunpack.c.h.b16 %v1993
    %v2147 = vunpack.c.l.b16 %v1994
    %v2148 = vunpack.c.h.b16 %v1994
    %v2149 = vunpack.c.l.b16 %v1995
    %v2150 = vunpack.c.h.b16 %v1995
    %v2151 = vunpack.c.l.b16 %v1996
    %v2152 = vunpack.c.h.b16 %v1996
    %v2153 = vunpack.c.l.b16 %v1997
    %v2154 = vunpack.c.h.b16 %v1997
    %v2155 = vunpack.c.l.b16 %v1998
    %v2156 = vunpack.c.h.b16 %v1998
    %v2157 = vunpack.c.l.b16 %v1999
    %v2158 = vunpack.c.h.b16 %v1999
    %v2159 = vunpack.c.l.b16 %v2000
    %v2160 = vunpack.c.h.b16 %v2000
    %v2161 = vunpack.c.l.b16 %v2001
    %v2162 = vunpack.c.h.b16 %v2001
    %v2163 = vunpack.c.l.b16 %v2002
    %v2164 = vunpack.c.h.b16 %v2002
    %v2165 = vunpack.c.l.b16 %v2003
    %v2166 = vunpack.c.h.b16 %v2003
    %v2167 = vunpack.c.l.b16 %v2004
    %v2168 = vunpack.c.h.b16 %v2004
    %v2169 = vunpack.c.l.b16 %v2005
    %v2170 = vunpack.c.h.b16 %v2005
    %v2171 = vunpack.c.l.b16 %v2006
    %v2172 = vunpack.c.h.b16 %v2006
    %v2173 = vunpack.c.l.b16 %v2007
    %v2174 = vunpack.c.h.b16 %v2007
    %v2175 = vunpack.c.l.b16 %v2008
    %v2176 = vunpack.c.h.b16 %v2008
    %v2177 = vunpack.c.l.b16 %v2009
    %v2178 = vunpack.c.h.b16 %v2009
    %v2179 = vunpack.c.l.b16 %v2010
    %v2180 = vunpack.c.h.b16 %v2010
    %v2181 = vunpack.c.l.b16 %v2011
    %v2182 = vunpack.c.h.b16 %v2011
    %v2183 = vunpack.c.l.b16 %v2012
    %v2184 = vunpack.c.h.b16 %v2012
    %v2185 = vunpack.c.l.b16 %v2013
    %v2186 = vunpack.c.h.b16 %v2013
    %v2187 = vunpack.c.l.b16 %v2014
    %v2188 = vunpack.c.h.b16 %v2014
    %v2189 = vunpack.c.l.b16 %v2015
    %v2190 = vunpack.c.h.b16 %v2015
    %v2191 = vunpack.c.l.b16 %v2016
    %v2192 = vunpack.c.h.b16 %v2016
    %v2193 = vunpack.c.l.b16 %v2017
    %v2194 = vunpack.c.h.b16 %v2017
    %v2195 = vunpack.c.l.b16 %v2018
    %v2196 = vunpack.c.h.b16 %v2018
    %v2197 = vunpack.c.l.b16 %v2019
    %v2198 = vunpack.c.h.b16 %v2019
    %v2199 = vunpack.c.l.b16 %v2020
    %v2200 = vunpack.c.h.b16 %v2020
    %v2201 = vunpack.c.l.b16 %v2021
    %v2202 = vunpack.c.h.b16 %v2021
    %v2203 = vunpack.c.l.b16 %v2022
    %v2204 = vunpack.c.h.b16 %v2022
    %v2205 = vunpack.c.l.b16 %v2023
    %v2206 = vunpack.c.h.b16 %v2023
    %v2207 = vunpack.c.l.b16 %v2024
    %v2208 = vunpack.c.h.b16 %v2024
    %v2209 = vunpack.c.l.b16 %v2025
    %v2210 = vunpack.c.h.b16 %v2025
    %v2211 = vunpack.c.l.b16 %v2026
    %v2212 = vunpack.c.h.b16 %v2026
    %v2213 = vunpack.c.l.b16 %v2027
    %v2214 = vunpack.c.h.b16 %v2027
    %v2215 = vunpack.c.l.b16 %v2028
    %v2216 = vunpack.c.h.b16 %v2028
    %v2217 = vunpack.c.l.b16 %v2029
    %v2218 = vunpack.c.h.b16 %v2029
    %v2219 = vunpack.c.l.b16 %v2030
    %v2220 = vunpack.c.h.b16 %v2030
    %v2221 = vunpack.c.l.b16 %v2031
    %v2222 = vunpack.c.h.b16 %v2031
    %v2223 = vunpack.c.l.b16 %v2032
    %v2224 = vunpack.c.h.b16 %v2032
    %v2225 = vpack.c.b16 %v2101, %v2097
    %v2226 = vpack.c.b16 %v2102, %v2098
    %v2227 = vpack.c.b16 %v2103, %v2099
    %v2228 = vpack.c.b16 %v2104, %v2100
    %v2229 = vpack.c.b16 %v2109, %v2105
    %v2230 = vpack.c.b16 %v2110, %v2106
    %v2231 = vpack.c.b16 %v2111, %v2107
    %v2232 = vpack.c.b16 %v2112, %v2108
    %v2233 = vpack.c.b16 %v2117, %v2113
    %v2234 = vpack.c.b16 %v2118, %v2114
    %v2235 = vpack.c.b16 %v2119, %v2115
    %v2236 = vpack.c.b16 %v2120, %v2116
    %v2237 = vpack.c.b16 %v2125, %v2121
    %v2238 = vpack.c.b16 %v2126, %v2122
    %v2239 = vpack.c.b16 %v2127, %v2123
    %v2240 = vpack.c.b16 %v2128, %v2124
    %v2241 = vpack.c.b16 %v2133, %v2129
    %v2242 = vpack.c.b16 %v2134, %v2130
    %v2243 = vpack.c.b16 %v2135, %v2131
    %v2244 = vpack.c.b16 %v2136, %v2132
    %v2245 = vpack.c.b16 %v2141, %v2137
    %v2246 = vpack.c.b16 %v2142, %v2138
    %v2247 = vpack.c.b16 %v2143, %v2139
    %v2248 = vpack.c.b16 %v2144, %v2140
    %v2249 = vpack.c.b16 %v2149, %v2145
    %v2250 = vpack.c.b16 %v2150, %v2146
    %v2251 = vpack.c.b16 %v2151, %v2147
    %v2252 = vpack.c.b16 %v2152, %v2148
    %v2253 = vpack.c.b16 %v2157, %v2153
    %v2254 = vpack.c.b16 %v2158, %v2154
    %v2255 = vpack.c.b16 %v2159, %v2155
    %v2256 = vpack.c.b16 %v2160, %v2156
    %v2257 = vpack.c.b16 %v2165, %v2161
    %v2258 = vpack.c.b16 %v2166, %v2162
    %v2259 = vpack.c.b16 %v2167, %v2163
    %v2260 = vpack.c.b16 %v2168, %v2164
    %v2261 = vpack.c.b16 %v2173, %v2169
    %v2262 = vpack.c.b16 %v2174, %v2170
    %v2263 = vpack.c.b16 %v2175, %v2171
    %v2264 = vpack.c.b16 %v2176, %v2172
    %v2265 = vpack.c.b16 %v2181, %v2177
    %v2266 = vpack.c.b16 %v2182, %v2178
    %v2267 = vpack.c.b16 %v2183, %v2179
    %v2268 = vpack.c.b16 %v2184, %v2180
    %v2269 = vpack.c.b16 %v2189, %v2185
    %v2270 = vpack.c.b16 %v2190, %v2186
    %v2271 = vpack.c.b16 %v2191, %v2187
    %v2272 = vpack.c.b16 %v2192, %v2188
    %v2273 = vpack.c.b16 %v2197, %v2193
    %v2274 = vpack.c.b16 %v2198, %v2194
    %v2275 = vpack.c.b16 %v2199, %v2195
    %v2276 = vpack.c.b16 %v2200, %v2196
    %v2277 = vpack.c.b16 %v2205, %v2201
    %v2278 = vpack.c.b16 %v2206, %v2202
    %v2279 = vpack.c.b16 %v2207, %v2203
    %v2280 = vpack.c.b16 %v2208, %v2204
    %v2281 = vpack.c.b16 %v2213, %v2209
    %v2282 = vpack.c.b16 %v2214, %v2210
    %v2283 = vpack.c.b16 %v2215, %v2211
    %v2284 = vpack.c.b16 %v2216, %v2212
    %v2285 = vpack.c.b16 %v2221, %v2217
    %v2286 = vpack.c.b16 %v2222, %v2218
    %v2287 = vpack.c.b16 %v2223, %v2219
    %v2288 = vpack.c.b16 %v2224, %v2220
    %2353 = vmatprep.subr.bf16.mxu0 %v2226
    %2354 = vmatpush1.bf16.msra.mxu0 %v2225
    %2355 = vmatprep.subr.bf16.mxu0 %v2230
    %2356 = vmatpush1.bf16.msra.mxu0 %v2229
    %2357 = vmatprep.subr.bf16.mxu0 %v2234
    %2358 = vmatpush1.bf16.msra.mxu0 %v2233
    %2359 = vmatprep.subr.bf16.mxu0 %v2238
    %2360 = vmatpush1.bf16.msra.mxu0 %v2237
    %2361 = vmatprep.subr.bf16.mxu0 %v2242
    %2362 = vmatpush1.bf16.msra.mxu0 %v2241
    %2363 = vmatprep.subr.bf16.mxu0 %v2246
    %2364 = vmatpush1.bf16.msra.mxu0 %v2245
    %2365 = vmatprep.subr.bf16.mxu0 %v2250
    %2366 = vmatpush1.bf16.msra.mxu0 %v2249
    %2367 = vmatprep.subr.bf16.mxu0 %v2254
    %2368 = vmatpush1.bf16.msra.mxu0 %v2253
    %2369 = vmatprep.subr.bf16.mxu0 %v2258
    %2370 = vmatpush1.bf16.msra.mxu0 %v2257
    %2371 = vmatprep.subr.bf16.mxu0 %v2262
    %2372 = vmatpush1.bf16.msra.mxu0 %v2261
    %2373 = vmatprep.subr.bf16.mxu0 %v2266
    %2374 = vmatpush1.bf16.msra.mxu0 %v2265
    %2375 = vmatprep.subr.bf16.mxu0 %v2270
    %2376 = vmatpush1.bf16.msra.mxu0 %v2269
    %2377 = vmatprep.subr.bf16.mxu0 %v2274
    %2378 = vmatpush1.bf16.msra.mxu0 %v2273
    %2379 = vmatprep.subr.bf16.mxu0 %v2278
    %2380 = vmatpush1.bf16.msra.mxu0 %v2277
    %2381 = vmatprep.subr.bf16.mxu0 %v2282
    %2382 = vmatpush1.bf16.msra.mxu0 %v2281
    %2383 = vmatprep.subr.bf16.mxu0 %v2286
    %2384 = vmatpush1.bf16.msra.mxu0 %v2285
    %2385 = vmatprep.mubr.bf16.mxu0 %v1609
    %2386 = vmatmul.mubr.bf16.gmra.mrb[0].mxu0 %v1608
    %v2387 = vpop.f32.mrb[0].mxu0
    %v2388 = vadd.f32 0.0, %v2387
    %v2389 = vpop.f32.mrb[0].mxu0
    %v2390 = vadd.f32 0.0, %v2389
    %v2391 = vpop.f32.mrb[0].mxu0
    %v2392 = vadd.f32 0.0, %v2391
    %v2393 = vpop.f32.mrb[0].mxu0
    %v2394 = vadd.f32 0.0, %v2393
    %2395 = vdwg.mxu0
    %2396 = vmatprep.subr.bf16.mxu0 %v2228
    %2397 = vmatpush1.bf16.msra.mxu0 %v2227
    %2398 = vmatprep.subr.bf16.mxu0 %v2232
    %2399 = vmatpush1.bf16.msra.mxu0 %v2231
    %2400 = vmatprep.subr.bf16.mxu0 %v2236
    %2401 = vmatpush1.bf16.msra.mxu0 %v2235
    %2402 = vmatprep.subr.bf16.mxu0 %v2240
    %2403 = vmatpush1.bf16.msra.mxu0 %v2239
    %2404 = vmatprep.subr.bf16.mxu0 %v2244
    %2405 = vmatpush1.bf16.msra.mxu0 %v2243
    %2406 = vmatprep.subr.bf16.mxu0 %v2248
    %2407 = vmatpush1.bf16.msra.mxu0 %v2247
    %2408 = vmatprep.subr.bf16.mxu0 %v2252
    %2409 = vmatpush1.bf16.msra.mxu0 %v2251
    %2410 = vmatprep.subr.bf16.mxu0 %v2256
    %2411 = vmatpush1.bf16.msra.mxu0 %v2255
    %2412 = vmatprep.subr.bf16.mxu0 %v2260
    %2413 = vmatpush1.bf16.msra.mxu0 %v2259
    %2414 = vmatprep.subr.bf16.mxu0 %v2264
    %2415 = vmatpush1.bf16.msra.mxu0 %v2263
    %2416 = vmatprep.subr.bf16.mxu0 %v2268
    %2417 = vmatpush1.bf16.msra.mxu0 %v2267
    %2418 = vmatprep.subr.bf16.mxu0 %v2272
    %2419 = vmatpush1.bf16.msra.mxu0 %v2271
    %2420 = vmatprep.subr.bf16.mxu0 %v2276
    %2421 = vmatpush1.bf16.msra.mxu0 %v2275
    %2422 = vmatprep.subr.bf16.mxu0 %v2280
    %2423 = vmatpush1.bf16.msra.mxu0 %v2279
    %2424 = vmatprep.subr.bf16.mxu0 %v2284
    %2425 = vmatpush1.bf16.msra.mxu0 %v2283
    %2426 = vmatprep.subr.bf16.mxu0 %v2288
    %2427 = vmatpush1.bf16.msra.mxu0 %v2287
    %2428 = vmatprep.mubr.bf16.mxu0 %v1609
    %2429 = vmatmul.mubr.bf16.gmra.mrb[0].mxu0 %v1608
    %v2430 = vpop.f32.mrb[0].mxu0
    %v2431 = vadd.f32 0.0, %v2430
    %v2432 = vpop.f32.mrb[0].mxu0
    %v2433 = vadd.f32 0.0, %v2432
    %v2434 = vpop.f32.mrb[0].mxu0
    %v2435 = vadd.f32 0.0, %v2434
    %v2436 = vpop.f32.mrb[0].mxu0
    %v2437 = vadd.f32 0.0, %v2436
    %2438 = vdwg.mxu0
    %v2503 = vunpack.c.l.b16 %v1905
    %v2504 = vunpack.c.h.b16 %v1905
    %v2505 = vunpack.c.l.b16 %v1906
    %v2506 = vunpack.c.h.b16 %v1906
    %v2507 = vunpack.c.l.b16 %v1907
    %v2508 = vunpack.c.h.b16 %v1907
    %v2509 = vunpack.c.l.b16 %v1908
    %v2510 = vunpack.c.h.b16 %v1908
    %v2511 = vunpack.c.l.b16 %v1909
    %v2512 = vunpack.c.h.b16 %v1909
    %v2513 = vunpack.c.l.b16 %v1910
    %v2514 = vunpack.c.h.b16 %v1910
    %v2515 = vunpack.c.l.b16 %v1911
    %v2516 = vunpack.c.h.b16 %v1911
    %v2517 = vunpack.c.l.b16 %v1912
    %v2518 = vunpack.c.h.b16 %v1912
    %v2519 = vunpack.c.l.b16 %v1913
    %v2520 = vunpack.c.h.b16 %v1913
    %v2521 = vunpack.c.l.b16 %v1914
    %v2522 = vunpack.c.h.b16 %v1914
    %v2523 = vunpack.c.l.b16 %v1915
    %v2524 = vunpack.c.h.b16 %v1915
    %v2525 = vunpack.c.l.b16 %v1916
    %v2526 = vunpack.c.h.b16 %v1916
    %v2527 = vunpack.c.l.b16 %v1917
    %v2528 = vunpack.c.h.b16 %v1917
    %v2529 = vunpack.c.l.b16 %v1918
    %v2530 = vunpack.c.h.b16 %v1918
    %v2531 = vunpack.c.l.b16 %v1919
    %v2532 = vunpack.c.h.b16 %v1919
    %v2533 = vunpack.c.l.b16 %v1920
    %v2534 = vunpack.c.h.b16 %v1920
    %v2535 = vunpack.c.l.b16 %v1921
    %v2536 = vunpack.c.h.b16 %v1921
    %v2537 = vunpack.c.l.b16 %v1922
    %v2538 = vunpack.c.h.b16 %v1922
    %v2539 = vunpack.c.l.b16 %v1923
    %v2540 = vunpack.c.h.b16 %v1923
    %v2541 = vunpack.c.l.b16 %v1924
    %v2542 = vunpack.c.h.b16 %v1924
    %v2543 = vunpack.c.l.b16 %v1925
    %v2544 = vunpack.c.h.b16 %v1925
    %v2545 = vunpack.c.l.b16 %v1926
    %v2546 = vunpack.c.h.b16 %v1926
    %v2547 = vunpack.c.l.b16 %v1927
    %v2548 = vunpack.c.h.b16 %v1927
    %v2549 = vunpack.c.l.b16 %v1928
    %v2550 = vunpack.c.h.b16 %v1928
    %v2551 = vunpack.c.l.b16 %v1929
    %v2552 = vunpack.c.h.b16 %v1929
    %v2553 = vunpack.c.l.b16 %v1930
    %v2554 = vunpack.c.h.b16 %v1930
    %v2555 = vunpack.c.l.b16 %v1931
    %v2556 = vunpack.c.h.b16 %v1931
    %v2557 = vunpack.c.l.b16 %v1932
    %v2558 = vunpack.c.h.b16 %v1932
    %v2559 = vunpack.c.l.b16 %v1933
    %v2560 = vunpack.c.h.b16 %v1933
    %v2561 = vunpack.c.l.b16 %v1934
    %v2562 = vunpack.c.h.b16 %v1934
    %v2563 = vunpack.c.l.b16 %v1935
    %v2564 = vunpack.c.h.b16 %v1935
    %v2565 = vunpack.c.l.b16 %v1936
    %v2566 = vunpack.c.h.b16 %v1936
    %v2567 = vunpack.c.l.b16 %v1937
    %v2568 = vunpack.c.h.b16 %v1937
    %v2569 = vunpack.c.l.b16 %v1938
    %v2570 = vunpack.c.h.b16 %v1938
    %v2571 = vunpack.c.l.b16 %v1939
    %v2572 = vunpack.c.h.b16 %v1939
    %v2573 = vunpack.c.l.b16 %v1940
    %v2574 = vunpack.c.h.b16 %v1940
    %v2575 = vunpack.c.l.b16 %v1941
    %v2576 = vunpack.c.h.b16 %v1941
    %v2577 = vunpack.c.l.b16 %v1942
    %v2578 = vunpack.c.h.b16 %v1942
    %v2579 = vunpack.c.l.b16 %v1943
    %v2580 = vunpack.c.h.b16 %v1943
    %v2581 = vunpack.c.l.b16 %v1944
    %v2582 = vunpack.c.h.b16 %v1944
    %v2583 = vunpack.c.l.b16 %v1945
    %v2584 = vunpack.c.h.b16 %v1945
    %v2585 = vunpack.c.l.b16 %v1946
    %v2586 = vunpack.c.h.b16 %v1946
    %v2587 = vunpack.c.l.b16 %v1947
    %v2588 = vunpack.c.h.b16 %v1947
    %v2589 = vunpack.c.l.b16 %v1948
    %v2590 = vunpack.c.h.b16 %v1948
    %v2591 = vunpack.c.l.b16 %v1949
    %v2592 = vunpack.c.h.b16 %v1949
    %v2593 = vunpack.c.l.b16 %v1950
    %v2594 = vunpack.c.h.b16 %v1950
    %v2595 = vunpack.c.l.b16 %v1951
    %v2596 = vunpack.c.h.b16 %v1951
    %v2597 = vunpack.c.l.b16 %v1952
    %v2598 = vunpack.c.h.b16 %v1952
    %v2599 = vunpack.c.l.b16 %v1953
    %v2600 = vunpack.c.h.b16 %v1953
    %v2601 = vunpack.c.l.b16 %v1954
    %v2602 = vunpack.c.h.b16 %v1954
    %v2603 = vunpack.c.l.b16 %v1955
    %v2604 = vunpack.c.h.b16 %v1955
    %v2605 = vunpack.c.l.b16 %v1956
    %v2606 = vunpack.c.h.b16 %v1956
    %v2607 = vunpack.c.l.b16 %v1957
    %v2608 = vunpack.c.h.b16 %v1957
    %v2609 = vunpack.c.l.b16 %v1958
    %v2610 = vunpack.c.h.b16 %v1958
    %v2611 = vunpack.c.l.b16 %v1959
    %v2612 = vunpack.c.h.b16 %v1959
    %v2613 = vunpack.c.l.b16 %v1960
    %v2614 = vunpack.c.h.b16 %v1960
    %v2615 = vunpack.c.l.b16 %v1961
    %v2616 = vunpack.c.h.b16 %v1961
    %v2617 = vunpack.c.l.b16 %v1962
    %v2618 = vunpack.c.h.b16 %v1962
    %v2619 = vunpack.c.l.b16 %v1963
    %v2620 = vunpack.c.h.b16 %v1963
    %v2621 = vunpack.c.l.b16 %v1964
    %v2622 = vunpack.c.h.b16 %v1964
    %v2623 = vunpack.c.l.b16 %v1965
    %v2624 = vunpack.c.h.b16 %v1965
    %v2625 = vunpack.c.l.b16 %v1966
    %v2626 = vunpack.c.h.b16 %v1966
    %v2627 = vunpack.c.l.b16 %v1967
    %v2628 = vunpack.c.h.b16 %v1967
    %v2629 = vunpack.c.l.b16 %v1968
    %v2630 = vunpack.c.h.b16 %v1968
    %v2631 = vpack.c.b16 %v2507, %v2503
    %v2632 = vpack.c.b16 %v2508, %v2504
    %v2633 = vpack.c.b16 %v2509, %v2505
    %v2634 = vpack.c.b16 %v2510, %v2506
    %v2635 = vpack.c.b16 %v2515, %v2511
    %v2636 = vpack.c.b16 %v2516, %v2512
    %v2637 = vpack.c.b16 %v2517, %v2513
    %v2638 = vpack.c.b16 %v2518, %v2514
    %v2639 = vpack.c.b16 %v2523, %v2519
    %v2640 = vpack.c.b16 %v2524, %v2520
    %v2641 = vpack.c.b16 %v2525, %v2521
    %v2642 = vpack.c.b16 %v2526, %v2522
    %v2643 = vpack.c.b16 %v2531, %v2527
    %v2644 = vpack.c.b16 %v2532, %v2528
    %v2645 = vpack.c.b16 %v2533, %v2529
    %v2646 = vpack.c.b16 %v2534, %v2530
    %v2647 = vpack.c.b16 %v2539, %v2535
    %v2648 = vpack.c.b16 %v2540, %v2536
    %v2649 = vpack.c.b16 %v2541, %v2537
    %v2650 = vpack.c.b16 %v2542, %v2538
    %v2651 = vpack.c.b16 %v2547, %v2543
    %v2652 = vpack.c.b16 %v2548, %v2544
    %v2653 = vpack.c.b16 %v2549, %v2545
    %v2654 = vpack.c.b16 %v2550, %v2546
    %v2655 = vpack.c.b16 %v2555, %v2551
    %v2656 = vpack.c.b16 %v2556, %v2552
    %v2657 = vpack.c.b16 %v2557, %v2553
    %v2658 = vpack.c.b16 %v2558, %v2554
    %v2659 = vpack.c.b16 %v2563, %v2559
    %v2660 = vpack.c.b16 %v2564, %v2560
    %v2661 = vpack.c.b16 %v2565, %v2561
    %v2662 = vpack.c.b16 %v2566, %v2562
    %v2663 = vpack.c.b16 %v2571, %v2567
    %v2664 = vpack.c.b16 %v2572, %v2568
    %v2665 = vpack.c.b16 %v2573, %v2569
    %v2666 = vpack.c.b16 %v2574, %v2570
    %v2667 = vpack.c.b16 %v2579, %v2575
    %v2668 = vpack.c.b16 %v2580, %v2576
    %v2669 = vpack.c.b16 %v2581, %v2577
    %v2670 = vpack.c.b16 %v2582, %v2578
    %v2671 = vpack.c.b16 %v2587, %v2583
    %v2672 = vpack.c.b16 %v2588, %v2584
    %v2673 = vpack.c.b16 %v2589, %v2585
    %v2674 = vpack.c.b16 %v2590, %v2586
    %v2675 = vpack.c.b16 %v2595, %v2591
    %v2676 = vpack.c.b16 %v2596, %v2592
    %v2677 = vpack.c.b16 %v2597, %v2593
    %v2678 = vpack.c.b16 %v2598, %v2594
    %v2679 = vpack.c.b16 %v2603, %v2599
    %v2680 = vpack.c.b16 %v2604, %v2600
    %v2681 = vpack.c.b16 %v2605, %v2601
    %v2682 = vpack.c.b16 %v2606, %v2602
    %v2683 = vpack.c.b16 %v2611, %v2607
    %v2684 = vpack.c.b16 %v2612, %v2608
    %v2685 = vpack.c.b16 %v2613, %v2609
    %v2686 = vpack.c.b16 %v2614, %v2610
    %v2687 = vpack.c.b16 %v2619, %v2615
    %v2688 = vpack.c.b16 %v2620, %v2616
    %v2689 = vpack.c.b16 %v2621, %v2617
    %v2690 = vpack.c.b16 %v2622, %v2618
    %v2691 = vpack.c.b16 %v2627, %v2623
    %v2692 = vpack.c.b16 %v2628, %v2624
    %v2693 = vpack.c.b16 %v2629, %v2625
    %v2694 = vpack.c.b16 %v2630, %v2626
    %2759 = vmatprep.subr.bf16.mxu0 %v2632
    %2760 = vmatpush1.bf16.msra.mxu0 %v2631
    %2761 = vmatprep.subr.bf16.mxu0 %v2636
    %2762 = vmatpush1.bf16.msra.mxu0 %v2635
    %2763 = vmatprep.subr.bf16.mxu0 %v2640
    %2764 = vmatpush1.bf16.msra.mxu0 %v2639
    %2765 = vmatprep.subr.bf16.mxu0 %v2644
    %2766 = vmatpush1.bf16.msra.mxu0 %v2643
    %2767 = vmatprep.subr.bf16.mxu0 %v2648
    %2768 = vmatpush1.bf16.msra.mxu0 %v2647
    %2769 = vmatprep.subr.bf16.mxu0 %v2652
    %2770 = vmatpush1.bf16.msra.mxu0 %v2651
    %2771 = vmatprep.subr.bf16.mxu0 %v2656
    %2772 = vmatpush1.bf16.msra.mxu0 %v2655
    %2773 = vmatprep.subr.bf16.mxu0 %v2660
    %2774 = vmatpush1.bf16.msra.mxu0 %v2659
    %2775 = vmatprep.subr.bf16.mxu0 %v2664
    %2776 = vmatpush1.bf16.msra.mxu0 %v2663
    %2777 = vmatprep.subr.bf16.mxu0 %v2668
    %2778 = vmatpush1.bf16.msra.mxu0 %v2667
    %2779 = vmatprep.subr.bf16.mxu0 %v2672
    %2780 = vmatpush1.bf16.msra.mxu0 %v2671
    %2781 = vmatprep.subr.bf16.mxu0 %v2676
    %2782 = vmatpush1.bf16.msra.mxu0 %v2675
    %2783 = vmatprep.subr.bf16.mxu0 %v2680
    %2784 = vmatpush1.bf16.msra.mxu0 %v2679
    %2785 = vmatprep.subr.bf16.mxu0 %v2684
    %2786 = vmatpush1.bf16.msra.mxu0 %v2683
    %2787 = vmatprep.subr.bf16.mxu0 %v2688
    %2788 = vmatpush1.bf16.msra.mxu0 %v2687
    %2789 = vmatprep.subr.bf16.mxu0 %v2692
    %2790 = vmatpush1.bf16.msra.mxu0 %v2691
    %2791 = vmatprep.mubr.bf16.mxu0 %v1904
    %2792 = vmatmul.mubr.bf16.gmra.mrb[0].mxu0 %v1903
    %v2793 = vpop.f32.mrb[0].mxu0
    %v2794 = vadd.f32 %v2388, %v2793
    %v2795 = vpop.f32.mrb[0].mxu0
    %v2796 = vadd.f32 %v2390, %v2795
    %v2797 = vpop.f32.mrb[0].mxu0
    %v2798 = vadd.f32 %v2392, %v2797
    %v2799 = vpop.f32.mrb[0].mxu0
    %v2800 = vadd.f32 %v2394, %v2799
    %2801 = vdwg.mxu0
    %2802 = vmatprep.subr.bf16.mxu0 %v2634
    %2803 = vmatpush1.bf16.msra.mxu0 %v2633
    %2804 = vmatprep.subr.bf16.mxu0 %v2638
    %2805 = vmatpush1.bf16.msra.mxu0 %v2637
    %2806 = vmatprep.subr.bf16.mxu0 %v2642
    %2807 = vmatpush1.bf16.msra.mxu0 %v2641
    %2808 = vmatprep.subr.bf16.mxu0 %v2646
    %2809 = vmatpush1.bf16.msra.mxu0 %v2645
    %2810 = vmatprep.subr.bf16.mxu0 %v2650
    %2811 = vmatpush1.bf16.msra.mxu0 %v2649
    %2812 = vmatprep.subr.bf16.mxu0 %v2654
    %2813 = vmatpush1.bf16.msra.mxu0 %v2653
    %2814 = vmatprep.subr.bf16.mxu0 %v2658
    %2815 = vmatpush1.bf16.msra.mxu0 %v2657
    %2816 = vmatprep.subr.bf16.mxu0 %v2662
    %2817 = vmatpush1.bf16.msra.mxu0 %v2661
    %2818 = vmatprep.subr.bf16.mxu0 %v2666
    %2819 = vmatpush1.bf16.msra.mxu0 %v2665
    %2820 = vmatprep.subr.bf16.mxu0 %v2670
    %2821 = vmatpush1.bf16.msra.mxu0 %v2669
    %2822 = vmatprep.subr.bf16.mxu0 %v2674
    %2823 = vmatpush1.bf16.msra.mxu0 %v2673
    %2824 = vmatprep.subr.bf16.mxu0 %v2678
    %2825 = vmatpush1.bf16.msra.mxu0 %v2677
    %2826 = vmatprep.subr.bf16.mxu0 %v2682
    %2827 = vmatpush1.bf16.msra.mxu0 %v2681
    %2828 = vmatprep.subr.bf16.mxu0 %v2686
    %2829 = vmatpush1.bf16.msra.mxu0 %v2685
    %2830 = vmatprep.subr.bf16.mxu0 %v2690
    %2831 = vmatpush1.bf16.msra.mxu0 %v2689
    %2832 = vmatprep.subr.bf16.mxu0 %v2694
    %2833 = vmatpush1.bf16.msra.mxu0 %v2693
    %2834 = vmatprep.mubr.bf16.mxu0 %v1904
    %2835 = vmatmul.mubr.bf16.gmra.mrb[0].mxu0 %v1903
    %v2836 = vpop.f32.mrb[0].mxu0
    %v2837 = vadd.f32 %v2431, %v2836
    %v2838 = vpop.f32.mrb[0].mxu0
    %v2839 = vadd.f32 %v2433, %v2838
    %v2840 = vpop.f32.mrb[0].mxu0
    %v2841 = vadd.f32 %v2435, %v2840
    %v2842 = vpop.f32.mrb[0].mxu0
    %v2843 = vadd.f32 %v2437, %v2842
    %2844 = vdwg.mxu0
    %v2845 = vld [vmem:[%s13] sm:$0xf]
    %v2847 = vlaneseq
    %v2848 = vshrl.u32 %v2847, 7
    %v2849 = vsub.s32 0, %v2848
    %v2850 = vrot.slane %v2845, %v2849
    %v2851 = vlaneseq
    %v2852 = vshrl.u32 %v2851, 7
    %v2853 = vsub.s32 1, %v2852
    %v2854 = vrot.slane %v2845, %v2853
    %v2855 = vlaneseq
    %v2856 = vshrl.u32 %v2855, 7
    %v2857 = vsub.s32 2, %v2856
    %v2858 = vrot.slane %v2845, %v2857
    %v2859 = vlaneseq
    %v2860 = vshrl.u32 %v2859, 7
    %v2861 = vsub.s32 3, %v2860
    %v2862 = vrot.slane %v2845, %v2861
    %v2867 = vadd.f32 %v2794, %v2850
    %v2868 = vadd.f32 %v2796, %v2854
    %v2869 = vadd.f32 %v2837, %v2858
    %v2870 = vadd.f32 %v2839, %v2862
    %v2871 = vadd.f32 %v2798, %v2850
    %v2872 = vadd.f32 %v2800, %v2854
    %v2873 = vadd.f32 %v2841, %v2858
    %v2874 = vadd.f32 %v2843, %v2862
    %v2875 = vmax.f32 %v2867, 0.0
    %v2876 = vmax.f32 %v2868, 0.0
    %v2877 = vmax.f32 %v2869, 0.0
    %v2878 = vmax.f32 %v2870, 0.0
    %v2879 = vmax.f32 %v2871, 0.0
    %v2880 = vmax.f32 %v2872, 0.0
    %v2881 = vmax.f32 %v2873, 0.0
    %v2882 = vmax.f32 %v2874, 0.0
    %v2883 = vpack.c.bf16 %v2879, %v2875
    %v2884 = vpack.c.bf16 %v2880, %v2876
    %v2885 = vpack.c.bf16 %v2881, %v2877
    %v2886 = vpack.c.bf16 %v2882, %v2878
    %v2887 = vld [vmem:[#allocation17] sm:$0xf]
    %v2888 = vld [vmem:[#allocation17 + $0x4] sm:$0xf]
    %v2889 = vld [vmem:[#allocation17 + $0x8] sm:$0xf]
    %v2890 = vld [vmem:[#allocation17 + $0xc] sm:$0xf]
    %v2891 = vld [vmem:[#allocation17 + $0x10] sm:$0xf]
    %v2892 = vld [vmem:[#allocation17 + $0x14] sm:$0xf]
    %v2893 = vld [vmem:[#allocation17 + $0x18] sm:$0xf]
    %v2894 = vld [vmem:[#allocation17 + $0x1c] sm:$0xf]
    %v2895 = vld [vmem:[#allocation17 + $0x20] sm:$0xf]
    %v2896 = vld [vmem:[#allocation17 + $0x24] sm:$0xf]
    %v2897 = vld [vmem:[#allocation17 + $0x28] sm:$0xf]
    %v2898 = vld [vmem:[#allocation17 + $0x2c] sm:$0xf]
    %v2899 = vld [vmem:[#allocation17 + $0x30] sm:$0xf]
    %v2900 = vld [vmem:[#allocation17 + $0x34] sm:$0xf]
    %v2901 = vld [vmem:[#allocation17 + $0x38] sm:$0xf]
    %v2902 = vld [vmem:[#allocation17 + $0x3c] sm:$0xf]
    %v2903 = vld [vmem:[#allocation17 + $0x40] sm:$0xf]
    %v2904 = vld [vmem:[#allocation17 + $0x44] sm:$0xf]
    %v2905 = vld [vmem:[#allocation17 + $0x48] sm:$0xf]
    %v2906 = vld [vmem:[#allocation17 + $0x4c] sm:$0xf]
    %v2907 = vld [vmem:[#allocation17 + $0x50] sm:$0xf]
    %v2908 = vld [vmem:[#allocation17 + $0x54] sm:$0xf]
    %v2909 = vld [vmem:[#allocation17 + $0x58] sm:$0xf]
    %v2910 = vld [vmem:[#allocation17 + $0x5c] sm:$0xf]
    %v2911 = vld [vmem:[#allocation17 + $0x60] sm:$0xf]
    %v2912 = vld [vmem:[#allocation17 + $0x64] sm:$0xf]
    %v2913 = vld [vmem:[#allocation17 + $0x68] sm:$0xf]
    %v2914 = vld [vmem:[#allocation17 + $0x6c] sm:$0xf]
    %v2915 = vld [vmem:[#allocation17 + $0x70] sm:$0xf]
    %v2916 = vld [vmem:[#allocation17 + $0x74] sm:$0xf]
    %v2917 = vld [vmem:[#allocation17 + $0x78] sm:$0xf]
    %v2918 = vld [vmem:[#allocation17 + $0x7c] sm:$0xf]
    %v2919 = vld [vmem:[#allocation17 + $0x80] sm:$0xf]
    %v2920 = vld [vmem:[#allocation17 + $0x84] sm:$0xf]
    %v2921 = vld [vmem:[#allocation17 + $0x88] sm:$0xf]
    %v2922 = vld [vmem:[#allocation17 + $0x8c] sm:$0xf]
    %v2923 = vld [vmem:[#allocation17 + $0x90] sm:$0xf]
    %v2924 = vld [vmem:[#allocation17 + $0x94] sm:$0xf]
    %v2925 = vld [vmem:[#allocation17 + $0x98] sm:$0xf]
    %v2926 = vld [vmem:[#allocation17 + $0x9c] sm:$0xf]
    %v2927 = vld [vmem:[#allocation17 + $0xa0] sm:$0xf]
    %v2928 = vld [vmem:[#allocation17 + $0xa4] sm:$0xf]
    %v2929 = vld [vmem:[#allocation17 + $0xa8] sm:$0xf]
    %v2930 = vld [vmem:[#allocation17 + $0xac] sm:$0xf]
    %v2931 = vld [vmem:[#allocation17 + $0xb0] sm:$0xf]
    %v2932 = vld [vmem:[#allocation17 + $0xb4] sm:$0xf]
    %v2933 = vld [vmem:[#allocation17 + $0xb8] sm:$0xf]
    %v2934 = vld [vmem:[#allocation17 + $0xbc] sm:$0xf]
    %v2935 = vld [vmem:[#allocation17 + $0xc0] sm:$0xf]
    %v2936 = vld [vmem:[#allocation17 + $0xc4] sm:$0xf]
    %v2937 = vld [vmem:[#allocation17 + $0xc8] sm:$0xf]
    %v2938 = vld [vmem:[#allocation17 + $0xcc] sm:$0xf]
    %v2939 = vld [vmem:[#allocation17 + $0xd0] sm:$0xf]
    %v2940 = vld [vmem:[#allocation17 + $0xd4] sm:$0xf]
    %v2941 = vld [vmem:[#allocation17 + $0xd8] sm:$0xf]
    %v2942 = vld [vmem:[#allocation17 + $0xdc] sm:$0xf]
    %v2943 = vld [vmem:[#allocation17 + $0xe0] sm:$0xf]
    %v2944 = vld [vmem:[#allocation17 + $0xe4] sm:$0xf]
    %v2945 = vld [vmem:[#allocation17 + $0xe8] sm:$0xf]
    %v2946 = vld [vmem:[#allocation17 + $0xec] sm:$0xf]
    %v2947 = vld [vmem:[#allocation17 + $0xf0] sm:$0xf]
    %v2948 = vld [vmem:[#allocation17 + $0xf4] sm:$0xf]
    %v2949 = vld [vmem:[#allocation17 + $0xf8] sm:$0xf]
    %v2950 = vld [vmem:[#allocation17 + $0xfc] sm:$0xf]
    %v2951 = vld [vmem:[%s15] sm:$0x1]
    %v2953 = vlaneseq
    %v2954 = vshrl.u32 %v2953, 7
    %v2955 = vsub.s32 0, %v2954
    %v2956 = vrot.slane %v2951, %v2955
    %v3022 = vunpack.c.l.b16 %v2887
    %v3023 = vunpack.c.l.b16 %v2888
    %v3024 = vunpack.c.l.b16 %v2889
    %v3025 = vunpack.c.l.b16 %v2890
    %v3026 = vunpack.c.l.b16 %v2891
    %v3027 = vunpack.c.l.b16 %v2892
    %v3028 = vunpack.c.l.b16 %v2893
    %v3029 = vunpack.c.l.b16 %v2894
    %v3030 = vunpack.c.l.b16 %v2895
    %v3031 = vunpack.c.l.b16 %v2896
    %v3032 = vunpack.c.l.b16 %v2897
    %v3033 = vunpack.c.l.b16 %v2898
    %v3034 = vunpack.c.l.b16 %v2899
    %v3035 = vunpack.c.l.b16 %v2900
    %v3036 = vunpack.c.l.b16 %v2901
    %v3037 = vunpack.c.l.b16 %v2902
    %v3038 = vunpack.c.l.b16 %v2903
    %v3039 = vunpack.c.l.b16 %v2904
    %v3040 = vunpack.c.l.b16 %v2905
    %v3041 = vunpack.c.l.b16 %v2906
    %v3042 = vunpack.c.l.b16 %v2907
    %v3043 = vunpack.c.l.b16 %v2908
    %v3044 = vunpack.c.l.b16 %v2909
    %v3045 = vunpack.c.l.b16 %v2910
    %v3046 = vunpack.c.l.b16 %v2911
    %v3047 = vunpack.c.l.b16 %v2912
    %v3048 = vunpack.c.l.b16 %v2913
    %v3049 = vunpack.c.l.b16 %v2914
    %v3050 = vunpack.c.l.b16 %v2915
    %v3051 = vunpack.c.l.b16 %v2916
    %v3052 = vunpack.c.l.b16 %v2917
    %v3053 = vunpack.c.l.b16 %v2918
    %v3054 = vunpack.c.l.b16 %v2919
    %v3055 = vunpack.c.l.b16 %v2920
    %v3056 = vunpack.c.l.b16 %v2921
    %v3057 = vunpack.c.l.b16 %v2922
    %v3058 = vunpack.c.l.b16 %v2923
    %v3059 = vunpack.c.l.b16 %v2924
    %v3060 = vunpack.c.l.b16 %v2925
    %v3061 = vunpack.c.l.b16 %v2926
    %v3062 = vunpack.c.l.b16 %v2927
    %v3063 = vunpack.c.l.b16 %v2928
    %v3064 = vunpack.c.l.b16 %v2929
    %v3065 = vunpack.c.l.b16 %v2930
    %v3066 = vunpack.c.l.b16 %v2931
    %v3067 = vunpack.c.l.b16 %v2932
    %v3068 = vunpack.c.l.b16 %v2933
    %v3069 = vunpack.c.l.b16 %v2934
    %v3070 = vunpack.c.l.b16 %v2935
    %v3071 = vunpack.c.l.b16 %v2936
    %v3072 = vunpack.c.l.b16 %v2937
    %v3073 = vunpack.c.l.b16 %v2938
    %v3074 = vunpack.c.l.b16 %v2939
    %v3075 = vunpack.c.l.b16 %v2940
    %v3076 = vunpack.c.l.b16 %v2941
    %v3077 = vunpack.c.l.b16 %v2942
    %v3078 = vunpack.c.l.b16 %v2943
    %v3079 = vunpack.c.l.b16 %v2944
    %v3080 = vunpack.c.l.b16 %v2945
    %v3081 = vunpack.c.l.b16 %v2946
    %v3082 = vunpack.c.l.b16 %v2947
    %v3083 = vunpack.c.l.b16 %v2948
    %v3084 = vunpack.c.l.b16 %v2949
    %v3085 = vunpack.c.l.b16 %v2950
    %v3086 = vpack.c.b16 %v3023, %v3022
    %v3087 = vpack.c.b16 %v3025, %v3024
    %v3088 = vpack.c.b16 %v3027, %v3026
    %v3089 = vpack.c.b16 %v3029, %v3028
    %v3090 = vpack.c.b16 %v3031, %v3030
    %v3091 = vpack.c.b16 %v3033, %v3032
    %v3092 = vpack.c.b16 %v3035, %v3034
    %v3093 = vpack.c.b16 %v3037, %v3036
    %v3094 = vpack.c.b16 %v3039, %v3038
    %v3095 = vpack.c.b16 %v3041, %v3040
    %v3096 = vpack.c.b16 %v3043, %v3042
    %v3097 = vpack.c.b16 %v3045, %v3044
    %v3098 = vpack.c.b16 %v3047, %v3046
    %v3099 = vpack.c.b16 %v3049, %v3048
    %v3100 = vpack.c.b16 %v3051, %v3050
    %v3101 = vpack.c.b16 %v3053, %v3052
    %v3102 = vpack.c.b16 %v3055, %v3054
    %v3103 = vpack.c.b16 %v3057, %v3056
    %v3104 = vpack.c.b16 %v3059, %v3058
    %v3105 = vpack.c.b16 %v3061, %v3060
    %v3106 = vpack.c.b16 %v3063, %v3062
    %v3107 = vpack.c.b16 %v3065, %v3064
    %v3108 = vpack.c.b16 %v3067, %v3066
    %v3109 = vpack.c.b16 %v3069, %v3068
    %v3110 = vpack.c.b16 %v3071, %v3070
    %v3111 = vpack.c.b16 %v3073, %v3072
    %v3112 = vpack.c.b16 %v3075, %v3074
    %v3113 = vpack.c.b16 %v3077, %v3076
    %v3114 = vpack.c.b16 %v3079, %v3078
    %v3115 = vpack.c.b16 %v3081, %v3080
    %v3116 = vpack.c.b16 %v3083, %v3082
    %v3117 = vpack.c.b16 %v3085, %v3084
    %3150 = vmatprep.subr.bf16.mxu0 0
    %3151 = vmatpush1.bf16.msra.mxu0 %v3086
    %3152 = vmatprep.subr.bf16.mxu0 0
    %3153 = vmatpush1.bf16.msra.mxu0 %v3087
    %3154 = vmatprep.subr.bf16.mxu0 0
    %3155 = vmatpush1.bf16.msra.mxu0 %v3088
    %3156 = vmatprep.subr.bf16.mxu0 0
    %3157 = vmatpush1.bf16.msra.mxu0 %v3089
    %3158 = vmatprep.subr.bf16.mxu0 0
    %3159 = vmatpush1.bf16.msra.mxu0 %v3090
    %3160 = vmatprep.subr.bf16.mxu0 0
    %3161 = vmatpush1.bf16.msra.mxu0 %v3091
    %3162 = vmatprep.subr.bf16.mxu0 0
    %3163 = vmatpush1.bf16.msra.mxu0 %v3092
    %3164 = vmatprep.subr.bf16.mxu0 0
    %3165 = vmatpush1.bf16.msra.mxu0 %v3093
    %3166 = vmatprep.subr.bf16.mxu0 0
    %3167 = vmatpush1.bf16.msra.mxu0 %v3094
    %3168 = vmatprep.subr.bf16.mxu0 0
    %3169 = vmatpush1.bf16.msra.mxu0 %v3095
    %3170 = vmatprep.subr.bf16.mxu0 0
    %3171 = vmatpush1.bf16.msra.mxu0 %v3096
    %3172 = vmatprep.subr.bf16.mxu0 0
    %3173 = vmatpush1.bf16.msra.mxu0 %v3097
    %3174 = vmatprep.subr.bf16.mxu0 0
    %3175 = vmatpush1.bf16.msra.mxu0 %v3098
    %3176 = vmatprep.subr.bf16.mxu0 0
    %3177 = vmatpush1.bf16.msra.mxu0 %v3099
    %3178 = vmatprep.subr.bf16.mxu0 0
    %3179 = vmatpush1.bf16.msra.mxu0 %v3100
    %3180 = vmatprep.subr.bf16.mxu0 0
    %3181 = vmatpush1.bf16.msra.mxu0 %v3101
    %3182 = vmatprep.mubr.bf16.mxu0 %v2884
    %3183 = vmatmul.mubr.bf16.gmra.mrb[0].mxu0 %v2883
    %v3184 = vpop.f32.mrb[0].mxu0
    %v3185 = vadd.f32 %v2956, %v3184
    %v3186 = vpop.f32.mrb[0].mxu0
    %v3187 = vpop.f32.mrb[0].mxu0
    %v3188 = vadd.f32 %v2956, %v3187
    %v3189 = vpop.f32.mrb[0].mxu0
    %3190 = vdwg.mxu0
    %3191 = vmatprep.subr.bf16.mxu0 0
    %3192 = vmatpush1.bf16.msra.mxu0 %v3102
    %3193 = vmatprep.subr.bf16.mxu0 0
    %3194 = vmatpush1.bf16.msra.mxu0 %v3103
    %3195 = vmatprep.subr.bf16.mxu0 0
    %3196 = vmatpush1.bf16.msra.mxu0 %v3104
    %3197 = vmatprep.subr.bf16.mxu0 0
    %3198 = vmatpush1.bf16.msra.mxu0 %v3105
    %3199 = vmatprep.subr.bf16.mxu0 0
    %3200 = vmatpush1.bf16.msra.mxu0 %v3106
    %3201 = vmatprep.subr.bf16.mxu0 0
    %3202 = vmatpush1.bf16.msra.mxu0 %v3107
    %3203 = vmatprep.subr.bf16.mxu0 0
    %3204 = vmatpush1.bf16.msra.mxu0 %v3108
    %3205 = vmatprep.subr.bf16.mxu0 0
    %3206 = vmatpush1.bf16.msra.mxu0 %v3109
    %3207 = vmatprep.subr.bf16.mxu0 0
    %3208 = vmatpush1.bf16.msra.mxu0 %v3110
    %3209 = vmatprep.subr.bf16.mxu0 0
    %3210 = vmatpush1.bf16.msra.mxu0 %v3111
    %3211 = vmatprep.subr.bf16.mxu0 0
    %3212 = vmatpush1.bf16.msra.mxu0 %v3112
    %3213 = vmatprep.subr.bf16.mxu0 0
    %3214 = vmatpush1.bf16.msra.mxu0 %v3113
    %3215 = vmatprep.subr.bf16.mxu0 0
    %3216 = vmatpush1.bf16.msra.mxu0 %v3114
    %3217 = vmatprep.subr.bf16.mxu0 0
    %3218 = vmatpush1.bf16.msra.mxu0 %v3115
    %3219 = vmatprep.subr.bf16.mxu0 0
    %3220 = vmatpush1.bf16.msra.mxu0 %v3116
    %3221 = vmatprep.subr.bf16.mxu0 0
    %3222 = vmatpush1.bf16.msra.mxu0 %v3117
    %3223 = vmatprep.mubr.bf16.mxu0 %v2886
    %3224 = vmatmul.mubr.bf16.gmra.mrb[0].mxu0 %v2885
    %v3225 = vpop.f32.mrb[0].mxu0
    %v3226 = vadd.f32 %v3185, %v3225
    %v3227 = vpop.f32.mrb[0].mxu0
    %v3228 = vpop.f32.mrb[0].mxu0
    %v3229 = vadd.f32 %v3188, %v3228
    %v3230 = vpop.f32.mrb[0].mxu0
    %3231 = vdwg.mxu0
    %3232 = vst [vmem:[#allocation23] sm:$0xff] %v3226
    %3233 = vst [vmem:[#allocation23 + $0x8] sm:$0xff] %v3229
    // Predicated region
    $region106: #{tpu_custom_call.1} parent=1 // pred_check
      _
    $region107: #{tpu_custom_call.1} parent=1 // pred_check_branch
      %3235 = sbr.rel (0) target = $region109
    $region108: #{tpu_custom_call.1} parent=1 // pred_region
      %s3237 = ssub.s32 512, 512
      %3238 = vsyncadd [#allocation4], %s3237
      %s3239 = sshll.u32 [#allocation19], 4
      %s3240 = int_to_ptr.vmem [resolvable:$true] %s3239
      %3245 = dma.vmem_to_hbm [thread:$0]  %s3240, 512, %s16, [#allocation4], 256, 256, 16
    $region109: #{tpu_custom_call.1} parent=1 // pred_fallthru
      _
    // Predicated region
    $region110: #{tpu_custom_call.1} parent=1 // pred_check
      _
    $region111: #{tpu_custom_call.1} parent=1 // pred_check_branch
      %3247 = sbr.rel (0) target = $region113
    $region112: #{tpu_custom_call.1} parent=1 // pred_region
      %s3249 = ssub.s32 512, 512
      %3250 = vsyncadd [#allocation21], %s3249
      %s3251 = sshll.u32 [#allocation20], 4
      %s3252 = int_to_ptr.vmem [resolvable:$true] %s3251
      %3257 = dma.vmem_to_hbm [thread:$0]  %s3252, 512, %s17, [#allocation21], 256, 256, 16
    $region113: #{tpu_custom_call.1} parent=1 // pred_fallthru
      _
    // Predicated region
    $region114: #{tpu_custom_call.1} parent=1 // pred_check
      _
    $region115: #{tpu_custom_call.1} parent=1 // pred_check_branch
      %3259 = sbr.rel (0) target = $region117
    $region116: #{tpu_custom_call.1} parent=1 // pred_region
      %s3261 = ssub.s32 256, 256
      %3262 = vsyncadd [#allocation21], %s3261
      %s3263 = sshll.u32 [#allocation22], 4
      %s3264 = int_to_ptr.vmem [resolvable:$true] %s3263
      %3269 = dma.vmem_to_hbm [thread:$0]  %s3264, 256, %s18, [#allocation21], 128, 128, 8
    $region117: #{tpu_custom_call.1} parent=1 // pred_fallthru
      _
    // Predicated region
    $region118: #{tpu_custom_call.1} parent=1 // pred_check
      _
    $region119: #{tpu_custom_call.1} parent=1 // pred_check_branch
      %3271 = sbr.rel (0) target = $region121
    $region120: #{tpu_custom_call.1} parent=1 // pred_region
      %s3273 = ssub.s32 256, 256
      %3274 = vsyncadd [#allocation24], %s3273
      %s3275 = sshll.u32 [#allocation23], 4
      %s3276 = int_to_ptr.vmem [resolvable:$true] %s3275
      %3281 = dma.vmem_to_hbm [thread:$0]  %s3276, 256, %s19, [#allocation24], 128, 128, 8
    $region121: #{tpu_custom_call.1} parent=1 // pred_fallthru
      _
    // Predicated region
    $region122: #{tpu_custom_call.1} parent=1 // pred_check
      _
    $region123: #{tpu_custom_call.1} parent=1 // pred_check_branch
      %3283 = sbr.rel (0) target = $region125
    $region124: #{tpu_custom_call.1} parent=1 // pred_region
      %3284 = dma.done [#allocation4], 512
    $region125: #{tpu_custom_call.1} parent=1 // pred_fallthru
      _
    // Predicated region
    $region126: #{tpu_custom_call.1} parent=1 // pred_check
      _
    $region127: #{tpu_custom_call.1} parent=1 // pred_check_branch
      %3286 = sbr.rel (0) target = $region129
    $region128: #{tpu_custom_call.1} parent=1 // pred_region
      %3287 = dma.done [#allocation21], 512
    $region129: #{tpu_custom_call.1} parent=1 // pred_fallthru
      _
    // Predicated region
    $region130: #{tpu_custom_call.1} parent=1 // pred_check
      _
    $region131: #{tpu_custom_call.1} parent=1 // pred_check_branch
      %3289 = sbr.rel (0) target = $region133
    $region132: #{tpu_custom_call.1} parent=1 // pred_region
      %3290 = dma.done [#allocation21], 256
    $region133: #{tpu_custom_call.1} parent=1 // pred_fallthru
      _
    // Predicated region
    $region134: #{tpu_custom_call.1} parent=1 // pred_check
      _
    $region135: #{tpu_custom_call.1} parent=1 // pred_check_branch
      %3292 = sbr.rel (0) target = $region137
    $region136: #{tpu_custom_call.1} parent=1 // pred_region
      %3293 = dma.done [#allocation24], 256
    $region137: #{tpu_custom_call.1} parent=1 // pred_fallthru
      _
    %3294 = vsyncpa [#allocation3], 1
    %3295 = vsyncpa [#allocation6], 1
    %3296 = vsyncpa [#allocation9], 1
    %3297 = vsyncpa [#allocation12], 1
    %3298 = vsyncpa [#allocation15], 1
    %3299 = vsyncpa [#allocation18], 1
    %3300 = vsyncpa [#allocation4], 1
    %3301 = vsyncpa [#allocation21], 1
    %3302 = vsyncpa [#allocation24], 1

// kernel: tpu_custom_call.1
$region0: #{tpu_custom_call.1}
  #allocation0 [shape = 'u32[]', space=smem, size = 0x4, offset = 0x4, fixed_abs, tag = 'smem constant byte address 0x4 - core index']
  #allocation1 [shape = 'u32[144,128]{1,0:T(1,128)}', space=vmem, size = 0x12000, scoped, tag = 'internal scratch']
  %s0 = inlined_call_operand.hbm [shape: f32[16,64], index: 0, kind: input, shape index: {}]
  %s1 = inlined_call_operand.hbm [shape: bf16[64,1024], index: 1, kind: input, shape index: {}]
  %s2 = inlined_call_operand.hbm [shape: f32[1,1024], index: 2, kind: input, shape index: {}]
  %s3 = inlined_call_operand.hbm [shape: bf16[512,256], index: 3, kind: input, shape index: {}]
  %s4 = inlined_call_operand.vmem [shape: f32[1,256], index: 4, kind: input, shape index: {}]
  %s5 = inlined_call_operand.hbm [shape: bf16[512,256], index: 5, kind: input, shape index: {}]
  %s6 = inlined_call_operand.vmem [shape: f32[1,256], index: 6, kind: input, shape index: {}]
  %s7 = inlined_call_operand.hbm [shape: bf16[256,128], index: 7, kind: input, shape index: {}]
  %s8 = inlined_call_operand.vmem [shape: f32[1,128], index: 8, kind: input, shape index: {}]
  %s9 = inlined_call_operand.hbm [shape: bf16[128,128], index: 9, kind: input, shape index: {}]
  %s10 = inlined_call_operand.vmem [shape: f32[1,128], index: 10, kind: input, shape index: {}]
  %s11 = inlined_call_operand.hbm [shape: bf16[256,512], index: 11, kind: input, shape index: {}]
  %s12 = inlined_call_operand.hbm [shape: bf16[256,512], index: 12, kind: input, shape index: {}]
  %s13 = inlined_call_operand.vmem [shape: f32[1,512], index: 13, kind: input, shape index: {}]
  %s14 = inlined_call_operand.hbm [shape: bf16[512,128], index: 14, kind: input, shape index: {}]
  %s15 = inlined_call_operand.vmem [shape: f32[1,128], index: 15, kind: input, shape index: {}]
  %s16 = inlined_call_operand.hbm [shape: f32[16,256], index: 16, kind: output, shape index: {0}]
  %s17 = inlined_call_operand.hbm [shape: f32[16,256], index: 17, kind: output, shape index: {1}]
  %s18 = inlined_call_operand.hbm [shape: f32[16,128], index: 18, kind: output, shape index: {2}]
  %s19 = inlined_call_operand.hbm [shape: f32[16,128], index: 19, kind: output, shape index: {3}]
  %20 = xla_tuple %s16, %s17, %s18, %s19
  %s21 = sld [smem:[#allocation0]]
  $region138: #{tpu_custom_call.1} parent=0
    _
  %s23 = ssub.s32 1, %s21
  %s24 = scalar_select 0, %s23, %s21
  $region1: #{tpu_custom_call.1} parent=0
    #allocation2 [shape = 'u8[8192]{0}', space=vmem, size = 0x2000, scoped, tag = 'input window, operand 0, single buffered']
    #allocation3 [shape = 's32[1]{0}', space=sflag, size = 0x4, scoped, tag = 'scoped memory for tpu_custom_call.1']
    #allocation4 [shape = 's32[1]{0}', space=sflag, size = 0x4, scoped, tag = 'scoped memory for tpu_custom_call.1']
    #allocation5 [shape = 'u8[131072]{0}', space=vmem, size = 0x20000, scoped, tag = 'input window, operand 1, single buffered']
    #allocation6 [shape = 's32[1]{0}', space=sflag, size = 0x4, scoped, tag = 'scoped memory for tpu_custom_call.1']
    #allocation7 [shape = 'u8[4096]{0}', space=vmem, size = 0x1000, scoped, tag = 'input window, operand 2, single buffered']
    #allocation8 [shape = 'u8[262144]{0}', space=vmem, size = 0x40000, scoped, tag = 'input window, operand 3, single buffered']
    #allocation9 [shape = 's32[1]{0}', space=sflag, size = 0x4, scoped, tag = 'scoped memory for tpu_custom_call.1']
    #allocation10 [shape = 'u8[262144]{0}', space=vmem, size = 0x40000, scoped, tag = 'input window, operand 5, single buffered']
    #allocation11 [shape = 'u8[65536]{0}', space=vmem, size = 0x10000, scoped, tag = 'input window, operand 7, single buffered']
    #allocation12 [shape = 's32[1]{0}', space=sflag, size = 0x4, scoped, tag = 'scoped memory for tpu_custom_call.1']
    #allocation13 [shape = 'u8[32768]{0}', space=vmem, size = 0x8000, scoped, tag = 'input window, operand 9, single buffered']
    #allocation14 [shape = 'u8[262144]{0}', space=vmem, size = 0x40000, scoped, tag = 'input window, operand 11, single buffered']
    #allocation15 [shape = 's32[1]{0}', space=sflag, size = 0x4, scoped, tag = 'scoped memory for tpu_custom_call.1']
    #allocation16 [shape = 'u8[262144]{0}', space=vmem, size = 0x40000, scoped, tag = 'input window, operand 12, single buffered']
    #allocation17 [shape = 'u8[131072]{0}', space=vmem, size = 0x20000, scoped, tag = 'input window, operand 14, single buffered']
    #allocation18 [shape = 's32[1]{0}', space=sflag, size = 0x4, scoped, tag = 'scoped memory for tpu_custom_call.1']
    #allocation19 [shape = 'u8[16384]{0}', space=vmem, size = 0x4000, scoped, tag = 'output window, operand 0, single buffered']
    #allocation20 [shape = 'u8[16384]{0}', space=vmem, size = 0x4000, scoped, tag = 'output window, operand 1, single buffered']
    #allocation21 [shape = 's32[1]{0}', space=sflag, size = 0x4, scoped, tag = 'scoped memory for tpu_custom_call.1']
    #allocation22 [shape = 'u8[8192]{0}', space=vmem, size = 0x2000, scoped, tag = 'output window, operand 2, single buffered']
    #allocation23 [shape = 'u8[8192]{0}', space=vmem, size = 0x2000, scoped, tag = 'output window, operand 3, single buffered']
    #allocation24 [shape = 's32[1]{0}', space=sflag, size = 0x4, scoped, tag = 'scoped memory for tpu_custom_call.1']
    %25 = vsyncpa [#allocation3], 0
    %26 = vsyncpa [#allocation6], 0
    %27 = vsyncpa [#allocation9], 0
    %28 = vsyncpa [#allocation12], 0
    %29 = vsyncpa [#allocation15], 0
    %30 = vsyncpa [#allocation18], 0
    %31 = vsyncpa [#allocation4], 0
    %32 = vsyncpa [#allocation21], 0
    %33 = vsyncpa [#allocation24], 0
    // Predicated region
    $region2: #{tpu_custom_call.1} parent=1 // pred_check
      _
    $region3: #{tpu_custom_call.1} parent=1 // pred_check_branch
      %35 = sbr.rel (0) target = $region5
    $region4: #{tpu_custom_call.1} parent=1 // pred_region
      %s37 = ssub.s32 256, 256
      %38 = vsyncadd [#allocation3], %s37
      %s39 = sshll.u32 [#allocation2], 4
      %s40 = int_to_ptr.vmem [resolvable:$true] %s39
      %45 = dma.hbm_to_vmem [thread:$0]  %s0, 256, %s40, [#allocation3], 128, 128, 8
    $region5: #{tpu_custom_call.1} parent=1 // pred_fallthru
      _
    // Predicated region
    $region6: #{tpu_custom_call.1} parent=1 // pred_check
      _
    $region7: #{tpu_custom_call.1} parent=1 // pred_check_branch
      %47 = sbr.rel (0) target = $region9
    $region8: #{tpu_custom_call.1} parent=1 // pred_region
      %s49 = ssub.s32 4096, 4096
      %50 = vsyncadd [#allocation6], %s49
      %s51 = sshll.u32 [#allocation5], 4
      %s52 = int_to_ptr.vmem [resolvable:$true] %s51
      %57 = dma.hbm_to_vmem [thread:$0]  %s1, 4096, %s52, [#allocation6], 512, 512, 32
    $region9: #{tpu_custom_call.1} parent=1 // pred_fallthru
      _
    // Predicated region
    $region10: #{tpu_custom_call.1} parent=1 // pred_check
      _
    $region11: #{tpu_custom_call.1} parent=1 // pred_check_branch
      %59 = sbr.rel (0) target = $region13
    $region12: #{tpu_custom_call.1} parent=1 // pred_region
      %s61 = ssub.s32 128, 128
      %62 = vsyncadd [#allocation6], %s61
      %s64 = sshll.u32 [#allocation7], 4
      %s65 = int_to_ptr.vmem [resolvable:$true] %s64
      %67 = dma.hbm_to_vmem [thread:$0]  %s2, 128, %s65, [#allocation6]
    $region13: #{tpu_custom_call.1} parent=1 // pred_fallthru
      _
    // Predicated region
    $region14: #{tpu_custom_call.1} parent=1 // pred_check
      _
    $region15: #{tpu_custom_call.1} parent=1 // pred_check_branch
      %69 = sbr.rel (0) target = $region17
    $region16: #{tpu_custom_call.1} parent=1 // pred_region
      %s71 = ssub.s32 8192, 8192
      %72 = vsyncadd [#allocation9], %s71
      %s73 = sshll.u32 [#allocation8], 4
      %s74 = int_to_ptr.vmem [resolvable:$true] %s73
      %79 = dma.hbm_to_vmem [thread:$0]  %s3, 8192, %s74, [#allocation9], 128, 128, 8
    $region17: #{tpu_custom_call.1} parent=1 // pred_fallthru
      _
    // Predicated region
    $region18: #{tpu_custom_call.1} parent=1 // pred_check
      _
    $region19: #{tpu_custom_call.1} parent=1 // pred_check_branch
      %81 = sbr.rel (0) target = $region21
    $region20: #{tpu_custom_call.1} parent=1 // pred_region
      _
    $region21: #{tpu_custom_call.1} parent=1 // pred_fallthru
      _
    // Predicated region
    $region22: #{tpu_custom_call.1} parent=1 // pred_check
      _
    $region23: #{tpu_custom_call.1} parent=1 // pred_check_branch
      %83 = sbr.rel (0) target = $region25
    $region24: #{tpu_custom_call.1} parent=1 // pred_region
      %s85 = ssub.s32 8192, 8192
      %86 = vsyncadd [#allocation9], %s85
      %s87 = sshll.u32 [#allocation10], 4
      %s88 = int_to_ptr.vmem [resolvable:$true] %s87
      %93 = dma.hbm_to_vmem [thread:$0]  %s5, 8192, %s88, [#allocation9], 128, 128, 8
    $region25: #{tpu_custom_call.1} parent=1 // pred_fallthru
      _
    // Predicated region
    $region26: #{tpu_custom_call.1} parent=1 // pred_check
      _
    $region27: #{tpu_custom_call.1} parent=1 // pred_check_branch
      %95 = sbr.rel (0) target = $region29
    $region28: #{tpu_custom_call.1} parent=1 // pred_region
      _
    $region29: #{tpu_custom_call.1} parent=1 // pred_fallthru
      _
    // Predicated region
    $region30: #{tpu_custom_call.1} parent=1 // pred_check
      _
    $region31: #{tpu_custom_call.1} parent=1 // pred_check_branch
      %97 = sbr.rel (0) target = $region33
    $region32: #{tpu_custom_call.1} parent=1 // pred_region
      %s99 = ssub.s32 2048, 2048
      %100 = vsyncadd [#allocation12], %s99
      %s101 = sshll.u32 [#allocation11], 4
      %s102 = int_to_ptr.vmem [resolvable:$true] %s101
      %107 = dma.hbm_to_vmem [thread:$0]  %s7, 2048, %s102, [#allocation12], 64, 64, 4
    $region33: #{tpu_custom_call.1} parent=1 // pred_fallthru
      _
    // Predicated region
    $region34: #{tpu_custom_call.1} parent=1 // pred_check
      _
    $region35: #{tpu_custom_call.1} parent=1 // pred_check_branch
      %109 = sbr.rel (0) target = $region37
    $region36: #{tpu_custom_call.1} parent=1 // pred_region
      _
    $region37: #{tpu_custom_call.1} parent=1 // pred_fallthru
      _
    // Predicated region
    $region38: #{tpu_custom_call.1} parent=1 // pred_check
      _
    $region39: #{tpu_custom_call.1} parent=1 // pred_check_branch
      %111 = sbr.rel (0) target = $region41
    $region40: #{tpu_custom_call.1} parent=1 // pred_region
      %s113 = ssub.s32 1024, 1024
      %114 = vsyncadd [#allocation12], %s113
      %s115 = sshll.u32 [#allocation13], 4
      %s116 = int_to_ptr.vmem [resolvable:$true] %s115
      %121 = dma.hbm_to_vmem [thread:$0]  %s9, 1024, %s116, [#allocation12], 64, 64, 4
    $region41: #{tpu_custom_call.1} parent=1 // pred_fallthru
      _
    // Predicated region
    $region42: #{tpu_custom_call.1} parent=1 // pred_check
      _
    $region43: #{tpu_custom_call.1} parent=1 // pred_check_branch
      %123 = sbr.rel (0) target = $region45
    $region44: #{tpu_custom_call.1} parent=1 // pred_region
      _
    $region45: #{tpu_custom_call.1} parent=1 // pred_fallthru
      _
    // Predicated region
    $region46: #{tpu_custom_call.1} parent=1 // pred_check
      _
    $region47: #{tpu_custom_call.1} parent=1 // pred_check_branch
      %125 = sbr.rel (0) target = $region49
    $region48: #{tpu_custom_call.1} parent=1 // pred_region
      %s127 = ssub.s32 8192, 8192
      %128 = vsyncadd [#allocation15], %s127
      %s129 = sshll.u32 [#allocation14], 4
      %s130 = int_to_ptr.vmem [resolvable:$true] %s129
      %135 = dma.hbm_to_vmem [thread:$0]  %s11, 8192, %s130, [#allocation15], 256, 256, 16
    $region49: #{tpu_custom_call.1} parent=1 // pred_fallthru
      _
    // Predicated region
    $region50: #{tpu_custom_call.1} parent=1 // pred_check
      _
    $region51: #{tpu_custom_call.1} parent=1 // pred_check_branch
      %137 = sbr.rel (0) target = $region53
    $region52: #{tpu_custom_call.1} parent=1 // pred_region
      %s139 = ssub.s32 8192, 8192
      %140 = vsyncadd [#allocation15], %s139
      %s141 = sshll.u32 [#allocation16], 4
      %s142 = int_to_ptr.vmem [resolvable:$true] %s141
      %147 = dma.hbm_to_vmem [thread:$0]  %s12, 8192, %s142, [#allocation15], 256, 256, 16
    $region53: #{tpu_custom_call.1} parent=1 // pred_fallthru
      _
    // Predicated region
    $region54: #{tpu_custom_call.1} parent=1 // pred_check
      _
    $region55: #{tpu_custom_call.1} parent=1 // pred_check_branch
      %149 = sbr.rel (0) target = $region57
    $region56: #{tpu_custom_call.1} parent=1 // pred_region
      _
    $region57: #{tpu_custom_call.1} parent=1 // pred_fallthru
      _
    // Predicated region
    $region58: #{tpu_custom_call.1} parent=1 // pred_check
      _
    $region59: #{tpu_custom_call.1} parent=1 // pred_check_branch
      %151 = sbr.rel (0) target = $region61
    $region60: #{tpu_custom_call.1} parent=1 // pred_region
      %s153 = ssub.s32 4096, 4096
      %154 = vsyncadd [#allocation18], %s153
      %s155 = sshll.u32 [#allocation17], 4
      %s156 = int_to_ptr.vmem [resolvable:$true] %s155
      %161 = dma.hbm_to_vmem [thread:$0]  %s14, 4096, %s156, [#allocation18], 64, 64, 4
    $region61: #{tpu_custom_call.1} parent=1 // pred_fallthru
      _
    // Predicated region
    $region62: #{tpu_custom_call.1} parent=1 // pred_check
      _
    $region63: #{tpu_custom_call.1} parent=1 // pred_check_branch
      %163 = sbr.rel (0) target = $region65
    $region64: #{tpu_custom_call.1} parent=1 // pred_region
      _
    $region65: #{tpu_custom_call.1} parent=1 // pred_fallthru
      _
    // Predicated region
    $region66: #{tpu_custom_call.1} parent=1 // pred_check
      _
    $region67: #{tpu_custom_call.1} parent=1 // pred_check_branch
      %165 = sbr.rel (0) target = $region69
    $region68: #{tpu_custom_call.1} parent=1 // pred_region
      %166 = dma.done [#allocation3], 256
    $region69: #{tpu_custom_call.1} parent=1 // pred_fallthru
      _
    // Predicated region
    $region70: #{tpu_custom_call.1} parent=1 // pred_check
      _
    $region71: #{tpu_custom_call.1} parent=1 // pred_check_branch
      %168 = sbr.rel (0) target = $region73
    $region72: #{tpu_custom_call.1} parent=1 // pred_region
      %169 = dma.done [#allocation6], 4096
    $region73: #{tpu_custom_call.1} parent=1 // pred_fallthru
      _
    // Predicated region
    $region74: #{tpu_custom_call.1} parent=1 // pred_check
      _
    $region75: #{tpu_custom_call.1} parent=1 // pred_check_branch
      %171 = sbr.rel (0) target = $region77
    $region76: #{tpu_custom_call.1} parent=1 // pred_region
      %172 = dma.done [#allocation6], 128
    $region77: #{tpu_custom_call.1} parent=1 // pred_fallthru
      _
    // Predicated region
    $region78: #{tpu_custom_call.1} parent=1 // pred_check
      _
    $region79: #{tpu_custom_call.1} parent=1 // pred_check_branch
      %174 = sbr.rel (0) target = $region81
    $region80: #{tpu_custom_call.1} parent=1 // pred_region
      %175 = dma.done [#allocation9], 8192
    $region81: #{tpu_custom_call.1} parent=1 // pred_fallthru
      _
    // Predicated region
    $region82: #{tpu_custom_call.1} parent=1 // pred_check
      _
    $region83: #{tpu_custom_call.1} parent=1 // pred_check_branch
      %177 = sbr.rel (0) target = $region85
    $region84: #{tpu_custom_call.1} parent=1 // pred_region
      %178 = dma.done [#allocation9], 8192
    $region85: #{tpu_custom_call.1} parent=1 // pred_fallthru
      _
    // Predicated region
    $region86: #{tpu_custom_call.1} parent=1 // pred_check
      _
    $region87: #{tpu_custom_call.1} parent=1 // pred_check_branch
      %180 = sbr.rel (0) target = $region89
    $region88: #{tpu_custom_call.1} parent=1 // pred_region
      %181 = dma.done [#allocation12], 2048
    $region89: #{tpu_custom_call.1} parent=1 // pred_fallthru
      _
    // Predicated region
    $region90: #{tpu_custom_call.1} parent=1 // pred_check
      _
    $region91: #{tpu_custom_call.1} parent=1 // pred_check_branch
      %183 = sbr.rel (0) target = $region93
    $region92: #{tpu_custom_call.1} parent=1 // pred_region
      %184 = dma.done [#allocation12], 1024
    $region93: #{tpu_custom_call.1} parent=1 // pred_fallthru
      _
    // Predicated region
    $region94: #{tpu_custom_call.1} parent=1 // pred_check
      _
    $region95: #{tpu_custom_call.1} parent=1 // pred_check_branch
      %186 = sbr.rel (0) target = $region97
    $region96: #{tpu_custom_call.1} parent=1 // pred_region
      %187 = dma.done [#allocation15], 8192
    $region97: #{tpu_custom_call.1} parent=1 // pred_fallthru
      _
    // Predicated region
    $region98: #{tpu_custom_call.1} parent=1 // pred_check
      _
    $region99: #{tpu_custom_call.1} parent=1 // pred_check_branch
      %189 = sbr.rel (0) target = $region101
    $region100: #{tpu_custom_call.1} parent=1 // pred_region
      %190 = dma.done [#allocation15], 8192
    $region101: #{tpu_custom_call.1} parent=1 // pred_fallthru
      _
    // Predicated region
    $region102: #{tpu_custom_call.1} parent=1 // pred_check
      _
    $region103: #{tpu_custom_call.1} parent=1 // pred_check_branch
      %192 = sbr.rel (0) target = $region105
    $region104: #{tpu_custom_call.1} parent=1 // pred_region
      %193 = dma.done [#allocation18], 4096
    $region105: #{tpu_custom_call.1} parent=1 // pred_fallthru
      _
    %v195 = vld [vmem:[#allocation2] sm:$0xff]
    %v196 = vld [vmem:[#allocation2 + $0x8] sm:$0xff]
    %v197 = vpack.c.bf16 %v196, %v195
    %v198 = vld [vmem:[#allocation5] sm:$0xff]
    %v199 = vld [vmem:[#allocation5 + $0x8] sm:$0xff]
    %v200 = vld [vmem:[#allocation5 + $0x10] sm:$0xff]
    %v201 = vld [vmem:[#allocation5 + $0x18] sm:$0xff]
    %v202 = vld [vmem:[#allocation5 + $0x20] sm:$0xff]
    %v203 = vld [vmem:[#allocation5 + $0x28] sm:$0xff]
    %v204 = vld [vmem:[#allocation5 + $0x30] sm:$0xff]
    %v205 = vld [vmem:[#allocation5 + $0x38] sm:$0xff]
    %v206 = vld [vmem:[#allocation5 + $0x40] sm:$0xff]
    %v207 = vld [vmem:[#allocation5 + $0x48] sm:$0xff]
    %v208 = vld [vmem:[#allocation5 + $0x50] sm:$0xff]
    %v209 = vld [vmem:[#allocation5 + $0x58] sm:$0xff]
    %v210 = vld [vmem:[#allocation5 + $0x60] sm:$0xff]
    %v211 = vld [vmem:[#allocation5 + $0x68] sm:$0xff]
    %v212 = vld [vmem:[#allocation5 + $0x70] sm:$0xff]
    %v213 = vld [vmem:[#allocation5 + $0x78] sm:$0xff]
    %v214 = vld [vmem:[#allocation5 + $0x80] sm:$0xff]
    %v215 = vld [vmem:[#allocation5 + $0x88] sm:$0xff]
    %v216 = vld [vmem:[#allocation5 + $0x90] sm:$0xff]
    %v217 = vld [vmem:[#allocation5 + $0x98] sm:$0xff]
    %v218 = vld [vmem:[#allocation5 + $0xa0] sm:$0xff]
    %v219 = vld [vmem:[#allocation5 + $0xa8] sm:$0xff]
    %v220 = vld [vmem:[#allocation5 + $0xb0] sm:$0xff]
    %v221 = vld [vmem:[#allocation5 + $0xb8] sm:$0xff]
    %v222 = vld [vmem:[#allocation5 + $0xc0] sm:$0xff]
    %v223 = vld [vmem:[#allocation5 + $0xc8] sm:$0xff]
    %v224 = vld [vmem:[#allocation5 + $0xd0] sm:$0xff]
    %v225 = vld [vmem:[#allocation5 + $0xd8] sm:$0xff]
    %v226 = vld [vmem:[#allocation5 + $0xe0] sm:$0xff]
    %v227 = vld [vmem:[#allocation5 + $0xe8] sm:$0xff]
    %v228 = vld [vmem:[#allocation5 + $0xf0] sm:$0xff]
    %v229 = vld [vmem:[#allocation5 + $0xf8] sm:$0xff]
    %v230 = vld [vmem:[#allocation7] sm:$0xff]
    %v232 = vlaneseq
    %v233 = vshrl.u32 %v232, 7
    %v234 = vsub.s32 0, %v233
    %v235 = vrot.slane %v230, %v234
    %v236 = vlaneseq
    %v237 = vshrl.u32 %v236, 7
    %v238 = vsub.s32 1, %v237
    %v239 = vrot.slane %v230, %v238
    %v240 = vlaneseq
    %v241 = vshrl.u32 %v240, 7
    %v242 = vsub.s32 2, %v241
    %v243 = vrot.slane %v230, %v242
    %v244 = vlaneseq
    %v245 = vshrl.u32 %v244, 7
    %v246 = vsub.s32 3, %v245
    %v247 = vrot.slane %v230, %v246
    %v248 = vlaneseq
    %v249 = vshrl.u32 %v248, 7
    %v250 = vsub.s32 4, %v249
    %v251 = vrot.slane %v230, %v250
    %v252 = vlaneseq
    %v253 = vshrl.u32 %v252, 7
    %v254 = vsub.s32 5, %v253
    %v255 = vrot.slane %v230, %v254
    %v256 = vlaneseq
    %v257 = vshrl.u32 %v256, 7
    %v258 = vsub.s32 6, %v257
    %v259 = vrot.slane %v230, %v258
    %v260 = vlaneseq
    %v261 = vshrl.u32 %v260, 7
    %v262 = vsub.s32 7, %v261
    %v263 = vrot.slane %v230, %v262
    %v304 = vunpack.c.l.b16 %v198
    %v305 = vunpack.c.h.b16 %v198
    %v306 = vunpack.c.l.b16 %v199
    %v307 = vunpack.c.h.b16 %v199
    %v308 = vunpack.c.l.b16 %v200
    %v309 = vunpack.c.h.b16 %v200
    %v310 = vunpack.c.l.b16 %v201
    %v311 = vunpack.c.h.b16 %v201
    %v312 = vunpack.c.l.b16 %v202
    %v313 = vunpack.c.h.b16 %v202
    %v314 = vunpack.c.l.b16 %v203
    %v315 = vunpack.c.h.b16 %v203
    %v316 = vunpack.c.l.b16 %v204
    %v317 = vunpack.c.h.b16 %v204
    %v318 = vunpack.c.l.b16 %v205
    %v319 = vunpack.c.h.b16 %v205
    %v320 = vunpack.c.l.b16 %v206
    %v321 = vunpack.c.h.b16 %v206
    %v322 = vunpack.c.l.b16 %v207
    %v323 = vunpack.c.h.b16 %v207
    %v324 = vunpack.c.l.b16 %v208
    %v325 = vunpack.c.h.b16 %v208
    %v326 = vunpack.c.l.b16 %v209
    %v327 = vunpack.c.h.b16 %v209
    %v328 = vunpack.c.l.b16 %v210
    %v329 = vunpack.c.h.b16 %v210
    %v330 = vunpack.c.l.b16 %v211
    %v331 = vunpack.c.h.b16 %v211
    %v332 = vunpack.c.l.b16 %v212
    %v333 = vunpack.c.h.b16 %v212
    %v334 = vunpack.c.l.b16 %v213
    %v335 = vunpack.c.h.b16 %v213
    %v336 = vunpack.c.l.b16 %v214
    %v337 = vunpack.c.h.b16 %v214
    %v338 = vunpack.c.l.b16 %v215
    %v339 = vunpack.c.h.b16 %v215
    %v340 = vunpack.c.l.b16 %v216
    %v341 = vunpack.c.h.b16 %v216
    %v342 = vunpack.c.l.b16 %v217
    %v343 = vunpack.c.h.b16 %v217
    %v344 = vunpack.c.l.b16 %v218
    %v345 = vunpack.c.h.b16 %v218
    %v346 = vunpack.c.l.b16 %v219
    %v347 = vunpack.c.h.b16 %v219
    %v348 = vunpack.c.l.b16 %v220
    %v349 = vunpack.c.h.b16 %v220
    %v350 = vunpack.c.l.b16 %v221
    %v351 = vunpack.c.h.b16 %v221
    %v352 = vunpack.c.l.b16 %v222
    %v353 = vunpack.c.h.b16 %v222
    %v354 = vunpack.c.l.b16 %v223
    %v355 = vunpack.c.h.b16 %v223
    %v356 = vunpack.c.l.b16 %v224
    %v357 = vunpack.c.h.b16 %v224
    %v358 = vunpack.c.l.b16 %v225
    %v359 = vunpack.c.h.b16 %v225
    %v360 = vunpack.c.l.b16 %v226
    %v361 = vunpack.c.h.b16 %v226
    %v362 = vunpack.c.l.b16 %v227
    %v363 = vunpack.c.h.b16 %v227
    %v364 = vunpack.c.l.b16 %v228
    %v365 = vunpack.c.h.b16 %v228
    %v366 = vunpack.c.l.b16 %v229
    %v367 = vunpack.c.h.b16 %v229
    %v368 = vpack.c.b16 %v312, %v304
    %v369 = vpack.c.b16 %v313, %v305
    %v370 = vpack.c.b16 %v314, %v306
    %v371 = vpack.c.b16 %v315, %v307
    %v372 = vpack.c.b16 %v316, %v308
    %v373 = vpack.c.b16 %v317, %v309
    %v374 = vpack.c.b16 %v318, %v310
    %v375 = vpack.c.b16 %v319, %v311
    %v376 = vpack.c.b16 %v328, %v320
    %v377 = vpack.c.b16 %v329, %v321
    %v378 = vpack.c.b16 %v330, %v322
    %v379 = vpack.c.b16 %v331, %v323
    %v380 = vpack.c.b16 %v332, %v324
    %v381 = vpack.c.b16 %v333, %v325
    %v382 = vpack.c.b16 %v334, %v326
    %v383 = vpack.c.b16 %v335, %v327
    %v384 = vpack.c.b16 %v344, %v336
    %v385 = vpack.c.b16 %v345, %v337
    %v386 = vpack.c.b16 %v346, %v338
    %v387 = vpack.c.b16 %v347, %v339
    %v388 = vpack.c.b16 %v348, %v340
    %v389 = vpack.c.b16 %v349, %v341
    %v390 = vpack.c.b16 %v350, %v342
    %v391 = vpack.c.b16 %v351, %v343
    %v392 = vpack.c.b16 %v360, %v352
    %v393 = vpack.c.b16 %v361, %v353
    %v394 = vpack.c.b16 %v362, %v354
    %v395 = vpack.c.b16 %v363, %v355
    %v396 = vpack.c.b16 %v364, %v356
    %v397 = vpack.c.b16 %v365, %v357
    %v398 = vpack.c.b16 %v366, %v358
    %v399 = vpack.c.b16 %v367, %v359
    %vm432 = vcmask 523264
    %v434 = vsel %vm432, %v197, 0
    %436 = vmatprep.subr.bf16.mxu0 %v369
    %437 = vmatpush1.bf16.msra.mxu0 %v368
    %438 = vmatprep.subr.bf16.mxu0 %v377
    %439 = vmatpush1.bf16.msra.mxu0 %v376
    %440 = vmatprep.subr.bf16.mxu0 %v385
    %441 = vmatpush1.bf16.msra.mxu0 %v384
    %442 = vmatprep.subr.bf16.mxu0 %v393
    %443 = vmatpush1.bf16.msra.mxu0 %v392
    %444 = vmatprep.subr.bf16.mxu0 0
    %445 = vmatpush1.bf16.msra.mxu0 0
    %446 = vmatprep.subr.bf16.mxu0 0
    %447 = vmatpush1.bf16.msra.mxu0 0
    %448 = vmatprep.subr.bf16.mxu0 0
    %449 = vmatpush1.bf16.msra.mxu0 0
    %450 = vmatprep.subr.bf16.mxu0 0
    %451 = vmatpush1.bf16.msra.mxu0 0
    %452 = vmatprep.subr.bf16.mxu0 0
    %453 = vmatpush1.bf16.msra.mxu0 0
    %454 = vmatprep.subr.bf16.mxu0 0
    %455 = vmatpush1.bf16.msra.mxu0 0
    %456 = vmatprep.subr.bf16.mxu0 0
    %457 = vmatpush1.bf16.msra.mxu0 0
    %458 = vmatprep.subr.bf16.mxu0 0
    %459 = vmatpush1.bf16.msra.mxu0 0
    %460 = vmatprep.subr.bf16.mxu0 0
    %461 = vmatpush1.bf16.msra.mxu0 0
    %462 = vmatprep.subr.bf16.mxu0 0
    %463 = vmatpush1.bf16.msra.mxu0 0
    %464 = vmatprep.subr.bf16.mxu0 0
    %465 = vmatpush1.bf16.msra.mxu0 0
    %466 = vmatprep.subr.bf16.mxu0 0
    %467 = vmatpush1.bf16.msra.mxu0 0
    %468 = vmatprep.mubr.bf16.mxu0 0
    %469 = vmatmul.mubr.bf16.gmra.mrb[0].mxu0 %v434
    %v470 = vpop.f32.mrb[0].mxu0
    %v471 = vadd.f32 %v235, %v470
    %v472 = vpop.f32.mrb[0].mxu0
    %v473 = vadd.f32 %v239, %v472
    %v474 = vpop.f32.mrb[0].mxu0
    %v475 = vadd.f32 %v235, %v474
    %v476 = vpop.f32.mrb[0].mxu0
    %v477 = vadd.f32 %v239, %v476
    %478 = vdwg.mxu0
    %479 = vmatprep.subr.bf16.mxu0 %v371
    %480 = vmatpush1.bf16.msra.mxu0 %v370
    %481 = vmatprep.subr.bf16.mxu0 %v379
    %482 = vmatpush1.bf16.msra.mxu0 %v378
    %483 = vmatprep.subr.bf16.mxu0 %v387
    %484 = vmatpush1.bf16.msra.mxu0 %v386
    %485 = vmatprep.subr.bf16.mxu0 %v395
    %486 = vmatpush1.bf16.msra.mxu0 %v394
    %487 = vmatprep.subr.bf16.mxu0 0
    %488 = vmatpush1.bf16.msra.mxu0 0
    %489 = vmatprep.subr.bf16.mxu0 0
    %490 = vmatpush1.bf16.msra.mxu0 0
    %491 = vmatprep.subr.bf16.mxu0 0
    %492 = vmatpush1.bf16.msra.mxu0 0
    %493 = vmatprep.subr.bf16.mxu0 0
    %494 = vmatpush1.bf16.msra.mxu0 0
    %495 = vmatprep.subr.bf16.mxu0 0
    %496 = vmatpush1.bf16.msra.mxu0 0
    %497 = vmatprep.subr.bf16.mxu0 0
    %498 = vmatpush1.bf16.msra.mxu0 0
    %499 = vmatprep.subr.bf16.mxu0 0
    %500 = vmatpush1.bf16.msra.mxu0 0
    %501 = vmatprep.subr.bf16.mxu0 0
    %502 = vmatpush1.bf16.msra.mxu0 0
    %503 = vmatprep.subr.bf16.mxu0 0
    %504 = vmatpush1.bf16.msra.mxu0 0
    %505 = vmatprep.subr.bf16.mxu0 0
    %506 = vmatpush1.bf16.msra.mxu0 0
    %507 = vmatprep.subr.bf16.mxu0 0
    %508 = vmatpush1.bf16.msra.mxu0 0
    %509 = vmatprep.subr.bf16.mxu0 0
    %510 = vmatpush1.bf16.msra.mxu0 0
    %511 = vmatprep.mubr.bf16.mxu0 0
    %512 = vmatmul.mubr.bf16.gmra.mrb[0].mxu0 %v434
    %v513 = vpop.f32.mrb[0].mxu0
    %v514 = vadd.f32 %v243, %v513
    %v515 = vpop.f32.mrb[0].mxu0
    %v516 = vadd.f32 %v247, %v515
    %v517 = vpop.f32.mrb[0].mxu0
    %v518 = vadd.f32 %v243, %v517
    %v519 = vpop.f32.mrb[0].mxu0
    %v520 = vadd.f32 %v247, %v519
    %521 = vdwg.mxu0
    %522 = vmatprep.subr.bf16.mxu0 %v373
    %523 = vmatpush1.bf16.msra.mxu0 %v372
    %524 = vmatprep.subr.bf16.mxu0 %v381
    %525 = vmatpush1.bf16.msra.mxu0 %v380
    %526 = vmatprep.subr.bf16.mxu0 %v389
    %527 = vmatpush1.bf16.msra.mxu0 %v388
    %528 = vmatprep.subr.bf16.mxu0 %v397
    %529 = vmatpush1.bf16.msra.mxu0 %v396
    %530 = vmatprep.subr.bf16.mxu0 0
    %531 = vmatpush1.bf16.msra.mxu0 0
    %532 = vmatprep.subr.bf16.mxu0 0
    %533 = vmatpush1.bf16.msra.mxu0 0
    %534 = vmatprep.subr.bf16.mxu0 0
    %535 = vmatpush1.bf16.msra.mxu0 0
    %536 = vmatprep.subr.bf16.mxu0 0
    %537 = vmatpush1.bf16.msra.mxu0 0
    %538 = vmatprep.subr.bf16.mxu0 0
    %539 = vmatpush1.bf16.msra.mxu0 0
    %540 = vmatprep.subr.bf16.mxu0 0
    %541 = vmatpush1.bf16.msra.mxu0 0
    %542 = vmatprep.subr.bf16.mxu0 0
    %543 = vmatpush1.bf16.msra.mxu0 0
    %544 = vmatprep.subr.bf16.mxu0 0
    %545 = vmatpush1.bf16.msra.mxu0 0
    %546 = vmatprep.subr.bf16.mxu0 0
    %547 = vmatpush1.bf16.msra.mxu0 0
    %548 = vmatprep.subr.bf16.mxu0 0
    %549 = vmatpush1.bf16.msra.mxu0 0
    %550 = vmatprep.subr.bf16.mxu0 0
    %551 = vmatpush1.bf16.msra.mxu0 0
    %552 = vmatprep.subr.bf16.mxu0 0
    %553 = vmatpush1.bf16.msra.mxu0 0
    %554 = vmatprep.mubr.bf16.mxu0 0
    %555 = vmatmul.mubr.bf16.gmra.mrb[0].mxu0 %v434
    %v556 = vpop.f32.mrb[0].mxu0
    %v557 = vadd.f32 %v251, %v556
    %v558 = vpop.f32.mrb[0].mxu0
    %v559 = vadd.f32 %v255, %v558
    %v560 = vpop.f32.mrb[0].mxu0
    %v561 = vadd.f32 %v251, %v560
    %v562 = vpop.f32.mrb[0].mxu0
    %v563 = vadd.f32 %v255, %v562
    %564 = vdwg.mxu0
    %565 = vmatprep.subr.bf16.mxu0 %v375
    %566 = vmatpush1.bf16.msra.mxu0 %v374
    %567 = vmatprep.subr.bf16.mxu0 %v383
    %568 = vmatpush1.bf16.msra.mxu0 %v382
    %569 = vmatprep.subr.bf16.mxu0 %v391
    %570 = vmatpush1.bf16.msra.mxu0 %v390
    %571 = vmatprep.subr.bf16.mxu0 %v399
    %572 = vmatpush1.bf16.msra.mxu0 %v398
    %573 = vmatprep.subr.bf16.mxu0 0
    %574 = vmatpush1.bf16.msra.mxu0 0
    %575 = vmatprep.subr.bf16.mxu0 0
    %576 = vmatpush1.bf16.msra.mxu0 0
    %577 = vmatprep.subr.bf16.mxu0 0
    %578 = vmatpush1.bf16.msra.mxu0 0
    %579 = vmatprep.subr.bf16.mxu0 0
    %580 = vmatpush1.bf16.msra.mxu0 0
    %581 = vmatprep.subr.bf16.mxu0 0
    %582 = vmatpush1.bf16.msra.mxu0 0
    %583 = vmatprep.subr.bf16.mxu0 0
    %584 = vmatpush1.bf16.msra.mxu0 0
    %585 = vmatprep.subr.bf16.mxu0 0
    %586 = vmatpush1.bf16.msra.mxu0 0
    %587 = vmatprep.subr.bf16.mxu0 0
    %588 = vmatpush1.bf16.msra.mxu0 0
    %589 = vmatprep.subr.bf16.mxu0 0
    %590 = vmatpush1.bf16.msra.mxu0 0
    %591 = vmatprep.subr.bf16.mxu0 0
    %592 = vmatpush1.bf16.msra.mxu0 0
    %593 = vmatprep.subr.bf16.mxu0 0
    %594 = vmatpush1.bf16.msra.mxu0 0
    %595 = vmatprep.subr.bf16.mxu0 0
    %596 = vmatpush1.bf16.msra.mxu0 0
    %597 = vmatprep.mubr.bf16.mxu0 0
    %598 = vmatmul.mubr.bf16.gmra.mrb[0].mxu0 %v434
    %v599 = vpop.f32.mrb[0].mxu0
    %v600 = vadd.f32 %v259, %v599
    %v601 = vpop.f32.mrb[0].mxu0
    %v602 = vadd.f32 %v263, %v601
    %v603 = vpop.f32.mrb[0].mxu0
    %v604 = vadd.f32 %v259, %v603
    %v605 = vpop.f32.mrb[0].mxu0
    %v606 = vadd.f32 %v263, %v605
    %607 = vdwg.mxu0
    %v608 = vmax.f32 %v471, 0.0
    %v609 = vmax.f32 %v473, 0.0
    %v610 = vmax.f32 %v514, 0.0
    %v611 = vmax.f32 %v516, 0.0
    %v612 = vmax.f32 %v557, 0.0
    %v613 = vmax.f32 %v559, 0.0
    %v614 = vmax.f32 %v600, 0.0
    %v615 = vmax.f32 %v602, 0.0
    %v616 = vmax.f32 %v475, 0.0
    %v617 = vmax.f32 %v477, 0.0
    %v618 = vmax.f32 %v518, 0.0
    %v619 = vmax.f32 %v520, 0.0
    %v620 = vmax.f32 %v561, 0.0
    %v621 = vmax.f32 %v563, 0.0
    %v622 = vmax.f32 %v604, 0.0
    %v623 = vmax.f32 %v606, 0.0
    %v624 = vpack.c.bf16 %v616, %v608
    %v625 = vpack.c.bf16 %v617, %v609
    %v626 = vpack.c.bf16 %v618, %v610
    %v627 = vpack.c.bf16 %v619, %v611
    %v628 = vpack.c.bf16 %v620, %v612
    %v629 = vpack.c.bf16 %v621, %v613
    %v630 = vpack.c.bf16 %v622, %v614
    %v631 = vpack.c.bf16 %v623, %v615
    %v632 = vld [vmem:[#allocation8] sm:$0xff]
    %v633 = vld [vmem:[#allocation8 + $0x8] sm:$0xff]
    %v634 = vld [vmem:[#allocation8 + $0x10] sm:$0xff]
    %v635 = vld [vmem:[#allocation8 + $0x18] sm:$0xff]
    %v636 = vld [vmem:[#allocation8 + $0x20] sm:$0xff]
    %v637 = vld [vmem:[#allocation8 + $0x28] sm:$0xff]
    %v638 = vld [vmem:[#allocation8 + $0x30] sm:$0xff]
    %v639 = vld [vmem:[#allocation8 + $0x38] sm:$0xff]
    %v640 = vld [vmem:[#allocation8 + $0x40] sm:$0xff]
    %v641 = vld [vmem:[#allocation8 + $0x48] sm:$0xff]
    %v642 = vld [vmem:[#allocation8 + $0x50] sm:$0xff]
    %v643 = vld [vmem:[#allocation8 + $0x58] sm:$0xff]
    %v644 = vld [vmem:[#allocation8 + $0x60] sm:$0xff]
    %v645 = vld [vmem:[#allocation8 + $0x68] sm:$0xff]
    %v646 = vld [vmem:[#allocation8 + $0x70] sm:$0xff]
    %v647 = vld [vmem:[#allocation8 + $0x78] sm:$0xff]
    %v648 = vld [vmem:[#allocation8 + $0x80] sm:$0xff]
    %v649 = vld [vmem:[#allocation8 + $0x88] sm:$0xff]
    %v650 = vld [vmem:[#allocation8 + $0x90] sm:$0xff]
    %v651 = vld [vmem:[#allocation8 + $0x98] sm:$0xff]
    %v652 = vld [vmem:[#allocation8 + $0xa0] sm:$0xff]
    %v653 = vld [vmem:[#allocation8 + $0xa8] sm:$0xff]
    %v654 = vld [vmem:[#allocation8 + $0xb0] sm:$0xff]
    %v655 = vld [vmem:[#allocation8 + $0xb8] sm:$0xff]
    %v656 = vld [vmem:[#allocation8 + $0xc0] sm:$0xff]
    %v657 = vld [vmem:[#allocation8 + $0xc8] sm:$0xff]
    %v658 = vld [vmem:[#allocation8 + $0xd0] sm:$0xff]
    %v659 = vld [vmem:[#allocation8 + $0xd8] sm:$0xff]
    %v660 = vld [vmem:[#allocation8 + $0xe0] sm:$0xff]
    %v661 = vld [vmem:[#allocation8 + $0xe8] sm:$0xff]
    %v662 = vld [vmem:[#allocation8 + $0xf0] sm:$0xff]
    %v663 = vld [vmem:[#allocation8 + $0xf8] sm:$0xff]
    %v664 = vld [vmem:[#allocation8 + $0x100] sm:$0xff]
    %v665 = vld [vmem:[#allocation8 + $0x108] sm:$0xff]
    %v666 = vld [vmem:[#allocation8 + $0x110] sm:$0xff]
    %v667 = vld [vmem:[#allocation8 + $0x118] sm:$0xff]
    %v668 = vld [vmem:[#allocation8 + $0x120] sm:$0xff]
    %v669 = vld [vmem:[#allocation8 + $0x128] sm:$0xff]
    %v670 = vld [vmem:[#allocation8 + $0x130] sm:$0xff]
    %v671 = vld [vmem:[#allocation8 + $0x138] sm:$0xff]
    %v672 = vld [vmem:[#allocation8 + $0x140] sm:$0xff]
    %v673 = vld [vmem:[#allocation8 + $0x148] sm:$0xff]
    %v674 = vld [vmem:[#allocation8 + $0x150] sm:$0xff]
    %v675 = vld [vmem:[#allocation8 + $0x158] sm:$0xff]
    %v676 = vld [vmem:[#allocation8 + $0x160] sm:$0xff]
    %v677 = vld [vmem:[#allocation8 + $0x168] sm:$0xff]
    %v678 = vld [vmem:[#allocation8 + $0x170] sm:$0xff]
    %v679 = vld [vmem:[#allocation8 + $0x178] sm:$0xff]
    %v680 = vld [vmem:[#allocation8 + $0x180] sm:$0xff]
    %v681 = vld [vmem:[#allocation8 + $0x188] sm:$0xff]
    %v682 = vld [vmem:[#allocation8 + $0x190] sm:$0xff]
    %v683 = vld [vmem:[#allocation8 + $0x198] sm:$0xff]
    %v684 = vld [vmem:[#allocation8 + $0x1a0] sm:$0xff]
    %v685 = vld [vmem:[#allocation8 + $0x1a8] sm:$0xff]
    %v686 = vld [vmem:[#allocation8 + $0x1b0] sm:$0xff]
    %v687 = vld [vmem:[#allocation8 + $0x1b8] sm:$0xff]
    %v688 = vld [vmem:[#allocation8 + $0x1c0] sm:$0xff]
    %v689 = vld [vmem:[#allocation8 + $0x1c8] sm:$0xff]
    %v690 = vld [vmem:[#allocation8 + $0x1d0] sm:$0xff]
    %v691 = vld [vmem:[#allocation8 + $0x1d8] sm:$0xff]
    %v692 = vld [vmem:[#allocation8 + $0x1e0] sm:$0xff]
    %v693 = vld [vmem:[#allocation8 + $0x1e8] sm:$0xff]
    %v694 = vld [vmem:[#allocation8 + $0x1f0] sm:$0xff]
    %v695 = vld [vmem:[#allocation8 + $0x1f8] sm:$0xff]
    %v696 = vld [vmem:[%s4] sm:$0x3]
    %v698 = vlaneseq
    %v699 = vshrl.u32 %v698, 7
    %v700 = vsub.s32 0, %v699
    %v701 = vrot.slane %v696, %v700
    %v702 = vlaneseq
    %v703 = vshrl.u32 %v702, 7
    %v704 = vsub.s32 1, %v703
    %v705 = vrot.slane %v696, %v704
    %v772 = vunpack.c.l.b16 %v632
    %v773 = vunpack.c.h.b16 %v632
    %v774 = vunpack.c.l.b16 %v633
    %v775 = vunpack.c.h.b16 %v633
    %v776 = vunpack.c.l.b16 %v634
    %v777 = vunpack.c.h.b16 %v634
    %v778 = vunpack.c.l.b16 %v635
    %v779 = vunpack.c.h.b16 %v635
    %v780 = vunpack.c.l.b16 %v636
    %v781 = vunpack.c.h.b16 %v636
    %v782 = vunpack.c.l.b16 %v637
    %v783 = vunpack.c.h.b16 %v637
    %v784 = vunpack.c.l.b16 %v638
    %v785 = vunpack.c.h.b16 %v638
    %v786 = vunpack.c.l.b16 %v639
    %v787 = vunpack.c.h.b16 %v639
    %v788 = vunpack.c.l.b16 %v640
    %v789 = vunpack.c.h.b16 %v640
    %v790 = vunpack.c.l.b16 %v641
    %v791 = vunpack.c.h.b16 %v641
    %v792 = vunpack.c.l.b16 %v642
    %v793 = vunpack.c.h.b16 %v642
    %v794 = vunpack.c.l.b16 %v643
    %v795 = vunpack.c.h.b16 %v643
    %v796 = vunpack.c.l.b16 %v644
    %v797 = vunpack.c.h.b16 %v644
    %v798 = vunpack.c.l.b16 %v645
    %v799 = vunpack.c.h.b16 %v645
    %v800 = vunpack.c.l.b16 %v646
    %v801 = vunpack.c.h.b16 %v646
    %v802 = vunpack.c.l.b16 %v647
    %v803 = vunpack.c.h.b16 %v647
    %v804 = vunpack.c.l.b16 %v648
    %v805 = vunpack.c.h.b16 %v648
    %v806 = vunpack.c.l.b16 %v649
    %v807 = vunpack.c.h.b16 %v649
    %v808 = vunpack.c.l.b16 %v650
    %v809 = vunpack.c.h.b16 %v650
    %v810 = vunpack.c.l.b16 %v651
    %v811 = vunpack.c.h.b16 %v651
    %v812 = vunpack.c.l.b16 %v652
    %v813 = vunpack.c.h.b16 %v652
    %v814 = vunpack.c.l.b16 %v653
    %v815 = vunpack.c.h.b16 %v653
    %v816 = vunpack.c.l.b16 %v654
    %v817 = vunpack.c.h.b16 %v654
    %v818 = vunpack.c.l.b16 %v655
    %v819 = vunpack.c.h.b16 %v655
    %v820 = vunpack.c.l.b16 %v656
    %v821 = vunpack.c.h.b16 %v656
    %v822 = vunpack.c.l.b16 %v657
    %v823 = vunpack.c.h.b16 %v657
    %v824 = vunpack.c.l.b16 %v658
    %v825 = vunpack.c.h.b16 %v658
    %v826 = vunpack.c.l.b16 %v659
    %v827 = vunpack.c.h.b16 %v659
    %v828 = vunpack.c.l.b16 %v660
    %v829 = vunpack.c.h.b16 %v660
    %v830 = vunpack.c.l.b16 %v661
    %v831 = vunpack.c.h.b16 %v661
    %v832 = vunpack.c.l.b16 %v662
    %v833 = vunpack.c.h.b16 %v662
    %v834 = vunpack.c.l.b16 %v663
    %v835 = vunpack.c.h.b16 %v663
    %v836 = vunpack.c.l.b16 %v664
    %v837 = vunpack.c.h.b16 %v664
    %v838 = vunpack.c.l.b16 %v665
    %v839 = vunpack.c.h.b16 %v665
    %v840 = vunpack.c.l.b16 %v666
    %v841 = vunpack.c.h.b16 %v666
    %v842 = vunpack.c.l.b16 %v667
    %v843 = vunpack.c.h.b16 %v667
    %v844 = vunpack.c.l.b16 %v668
    %v845 = vunpack.c.h.b16 %v668
    %v846 = vunpack.c.l.b16 %v669
    %v847 = vunpack.c.h.b16 %v669
    %v848 = vunpack.c.l.b16 %v670
    %v849 = vunpack.c.h.b16 %v670
    %v850 = vunpack.c.l.b16 %v671
    %v851 = vunpack.c.h.b16 %v671
    %v852 = vunpack.c.l.b16 %v672
    %v853 = vunpack.c.h.b16 %v672
    %v854 = vunpack.c.l.b16 %v673
    %v855 = vunpack.c.h.b16 %v673
    %v856 = vunpack.c.l.b16 %v674
    %v857 = vunpack.c.h.b16 %v674
    %v858 = vunpack.c.l.b16 %v675
    %v859 = vunpack.c.h.b16 %v675
    %v860 = vunpack.c.l.b16 %v676
    %v861 = vunpack.c.h.b16 %v676
    %v862 = vunpack.c.l.b16 %v677
    %v863 = vunpack.c.h.b16 %v677
    %v864 = vunpack.c.l.b16 %v678
    %v865 = vunpack.c.h.b16 %v678
    %v866 = vunpack.c.l.b16 %v679
    %v867 = vunpack.c.h.b16 %v679
    %v868 = vunpack.c.l.b16 %v680
    %v869 = vunpack.c.h.b16 %v680
    %v870 = vunpack.c.l.b16 %v681
    %v871 = vunpack.c.h.b16 %v681
    %v872 = vunpack.c.l.b16 %v682
    %v873 = vunpack.c.h.b16 %v682
    %v874 = vunpack.c.l.b16 %v683
    %v875 = vunpack.c.h.b16 %v683
    %v876 = vunpack.c.l.b16 %v684
    %v877 = vunpack.c.h.b16 %v684
    %v878 = vunpack.c.l.b16 %v685
    %v879 = vunpack.c.h.b16 %v685
    %v880 = vunpack.c.l.b16 %v686
    %v881 = vunpack.c.h.b16 %v686
    %v882 = vunpack.c.l.b16 %v687
    %v883 = vunpack.c.h.b16 %v687
    %v884 = vunpack.c.l.b16 %v688
    %v885 = vunpack.c.h.b16 %v688
    %v886 = vunpack.c.l.b16 %v689
    %v887 = vunpack.c.h.b16 %v689
    %v888 = vunpack.c.l.b16 %v690
    %v889 = vunpack.c.h.b16 %v690
    %v890 = vunpack.c.l.b16 %v691
    %v891 = vunpack.c.h.b16 %v691
    %v892 = vunpack.c.l.b16 %v692
    %v893 = vunpack.c.h.b16 %v692
    %v894 = vunpack.c.l.b16 %v693
    %v895 = vunpack.c.h.b16 %v693
    %v896 = vunpack.c.l.b16 %v694
    %v897 = vunpack.c.h.b16 %v694
    %v898 = vunpack.c.l.b16 %v695
    %v899 = vunpack.c.h.b16 %v695
    %v900 = vpack.c.b16 %v774, %v772
    %v901 = vpack.c.b16 %v775, %v773
    %v902 = vpack.c.b16 %v778, %v776
    %v903 = vpack.c.b16 %v779, %v777
    %v904 = vpack.c.b16 %v782, %v780
    %v905 = vpack.c.b16 %v783, %v781
    %v906 = vpack.c.b16 %v786, %v784
    %v907 = vpack.c.b16 %v787, %v785
    %v908 = vpack.c.b16 %v790, %v788
    %v909 = vpack.c.b16 %v791, %v789
    %v910 = vpack.c.b16 %v794, %v792
    %v911 = vpack.c.b16 %v795, %v793
    %v912 = vpack.c.b16 %v798, %v796
    %v913 = vpack.c.b16 %v799, %v797
    %v914 = vpack.c.b16 %v802, %v800
    %v915 = vpack.c.b16 %v803, %v801
    %v916 = vpack.c.b16 %v806, %v804
    %v917 = vpack.c.b16 %v807, %v805
    %v918 = vpack.c.b16 %v810, %v808
    %v919 = vpack.c.b16 %v811, %v809
    %v920 = vpack.c.b16 %v814, %v812
    %v921 = vpack.c.b16 %v815, %v813
    %v922 = vpack.c.b16 %v818, %v816
    %v923 = vpack.c.b16 %v819, %v817
    %v924 = vpack.c.b16 %v822, %v820
    %v925 = vpack.c.b16 %v823, %v821
    %v926 = vpack.c.b16 %v826, %v824
    %v927 = vpack.c.b16 %v827, %v825
    %v928 = vpack.c.b16 %v830, %v828
    %v929 = vpack.c.b16 %v831, %v829
    %v930 = vpack.c.b16 %v834, %v832
    %v931 = vpack.c.b16 %v835, %v833
    %v932 = vpack.c.b16 %v838, %v836
    %v933 = vpack.c.b16 %v839, %v837
    %v934 = vpack.c.b16 %v842, %v840
    %v935 = vpack.c.b16 %v843, %v841
    %v936 = vpack.c.b16 %v846, %v844
    %v937 = vpack.c.b16 %v847, %v845
    %v938 = vpack.c.b16 %v850, %v848
    %v939 = vpack.c.b16 %v851, %v849
    %v940 = vpack.c.b16 %v854, %v852
    %v941 = vpack.c.b16 %v855, %v853
    %v942 = vpack.c.b16 %v858, %v856
    %v943 = vpack.c.b16 %v859, %v857
    %v944 = vpack.c.b16 %v862, %v860
    %v945 = vpack.c.b16 %v863, %v861
    %v946 = vpack.c.b16 %v866, %v864
    %v947 = vpack.c.b16 %v867, %v865
    %v948 = vpack.c.b16 %v870, %v868
    %v949 = vpack.c.b16 %v871, %v869
    %v950 = vpack.c.b16 %v874, %v872
    %v951 = vpack.c.b16 %v875, %v873
    %v952 = vpack.c.b16 %v878, %v876
    %v953 = vpack.c.b16 %v879, %v877
    %v954 = vpack.c.b16 %v882, %v880
    %v955 = vpack.c.b16 %v883, %v881
    %v956 = vpack.c.b16 %v886, %v884
    %v957 = vpack.c.b16 %v887, %v885
    %v958 = vpack.c.b16 %v890, %v888
    %v959 = vpack.c.b16 %v891, %v889
    %v960 = vpack.c.b16 %v894, %v892
    %v961 = vpack.c.b16 %v895, %v893
    %v962 = vpack.c.b16 %v898, %v896
    %v963 = vpack.c.b16 %v899, %v897
    %1028 = vmatprep.subr.bf16.mxu0 %v901
    %1029 = vmatpush1.bf16.msra.mxu0 %v900
    %1030 = vmatprep.subr.bf16.mxu0 %v903
    %1031 = vmatpush1.bf16.msra.mxu0 %v902
    %1032 = vmatprep.subr.bf16.mxu0 %v905
    %1033 = vmatpush1.bf16.msra.mxu0 %v904
    %1034 = vmatprep.subr.bf16.mxu0 %v907
    %1035 = vmatpush1.bf16.msra.mxu0 %v906
    %1036 = vmatprep.subr.bf16.mxu0 %v909
    %1037 = vmatpush1.bf16.msra.mxu0 %v908
    %1038 = vmatprep.subr.bf16.mxu0 %v911
    %1039 = vmatpush1.bf16.msra.mxu0 %v910
    %1040 = vmatprep.subr.bf16.mxu0 %v913
    %1041 = vmatpush1.bf16.msra.mxu0 %v912
    %1042 = vmatprep.subr.bf16.mxu0 %v915
    %1043 = vmatpush1.bf16.msra.mxu0 %v914
    %1044 = vmatprep.subr.bf16.mxu0 %v917
    %1045 = vmatpush1.bf16.msra.mxu0 %v916
    %1046 = vmatprep.subr.bf16.mxu0 %v919
    %1047 = vmatpush1.bf16.msra.mxu0 %v918
    %1048 = vmatprep.subr.bf16.mxu0 %v921
    %1049 = vmatpush1.bf16.msra.mxu0 %v920
    %1050 = vmatprep.subr.bf16.mxu0 %v923
    %1051 = vmatpush1.bf16.msra.mxu0 %v922
    %1052 = vmatprep.subr.bf16.mxu0 %v925
    %1053 = vmatpush1.bf16.msra.mxu0 %v924
    %1054 = vmatprep.subr.bf16.mxu0 %v927
    %1055 = vmatpush1.bf16.msra.mxu0 %v926
    %1056 = vmatprep.subr.bf16.mxu0 %v929
    %1057 = vmatpush1.bf16.msra.mxu0 %v928
    %1058 = vmatprep.subr.bf16.mxu0 %v931
    %1059 = vmatpush1.bf16.msra.mxu0 %v930
    %1060 = vmatprep.mubr.bf16.mxu0 %v625
    %1061 = vmatmul.mubr.bf16.gmra.mrb[0].mxu0 %v624
    %v1062 = vpop.f32.mrb[0].mxu0
    %v1063 = vadd.f32 %v701, %v1062
    %v1064 = vpop.f32.mrb[0].mxu0
    %v1065 = vadd.f32 %v705, %v1064
    %v1066 = vpop.f32.mrb[0].mxu0
    %v1067 = vadd.f32 %v701, %v1066
    %v1068 = vpop.f32.mrb[0].mxu0
    %v1069 = vadd.f32 %v705, %v1068
    %1070 = vdwg.mxu0
    %1071 = vmatprep.subr.bf16.mxu0 %v933
    %1072 = vmatpush1.bf16.msra.mxu0 %v932
    %1073 = vmatprep.subr.bf16.mxu0 %v935
    %1074 = vmatpush1.bf16.msra.mxu0 %v934
    %1075 = vmatprep.subr.bf16.mxu0 %v937
    %1076 = vmatpush1.bf16.msra.mxu0 %v936
    %1077 = vmatprep.subr.bf16.mxu0 %v939
    %1078 = vmatpush1.bf16.msra.mxu0 %v938
    %1079 = vmatprep.subr.bf16.mxu0 %v941
    %1080 = vmatpush1.bf16.msra.mxu0 %v940
    %1081 = vmatprep.subr.bf16.mxu0 %v943
    %1082 = vmatpush1.bf16.msra.mxu0 %v942
    %1083 = vmatprep.subr.bf16.mxu0 %v945
    %1084 = vmatpush1.bf16.msra.mxu0 %v944
    %1085 = vmatprep.subr.bf16.mxu0 %v947
    %1086 = vmatpush1.bf16.msra.mxu0 %v946
    %1087 = vmatprep.subr.bf16.mxu0 %v949
    %1088 = vmatpush1.bf16.msra.mxu0 %v948
    %1089 = vmatprep.subr.bf16.mxu0 %v951
    %1090 = vmatpush1.bf16.msra.mxu0 %v950
    %1091 = vmatprep.subr.bf16.mxu0 %v953
    %1092 = vmatpush1.bf16.msra.mxu0 %v952
    %1093 = vmatprep.subr.bf16.mxu0 %v955
    %1094 = vmatpush1.bf16.msra.mxu0 %v954
    %1095 = vmatprep.subr.bf16.mxu0 %v957
    %1096 = vmatpush1.bf16.msra.mxu0 %v956
    %1097 = vmatprep.subr.bf16.mxu0 %v959
    %1098 = vmatpush1.bf16.msra.mxu0 %v958
    %1099 = vmatprep.subr.bf16.mxu0 %v961
    %1100 = vmatpush1.bf16.msra.mxu0 %v960
    %1101 = vmatprep.subr.bf16.mxu0 %v963
    %1102 = vmatpush1.bf16.msra.mxu0 %v962
    %1103 = vmatprep.mubr.bf16.mxu0 %v627
    %1104 = vmatmul.mubr.bf16.gmra.mrb[0].mxu0 %v626
    %v1105 = vpop.f32.mrb[0].mxu0
    %v1106 = vadd.f32 %v1063, %v1105
    %v1107 = vpop.f32.mrb[0].mxu0
    %v1108 = vadd.f32 %v1065, %v1107
    %v1109 = vpop.f32.mrb[0].mxu0
    %v1110 = vadd.f32 %v1067, %v1109
    %v1111 = vpop.f32.mrb[0].mxu0
    %v1112 = vadd.f32 %v1069, %v1111
    %1113 = vdwg.mxu0
    %v1114 = vmax.f32 %v1106, 0.0
    %v1115 = vmax.f32 %v1108, 0.0
    %v1116 = vmax.f32 %v1110, 0.0
    %v1117 = vmax.f32 %v1112, 0.0
    %1118 = vst [vmem:[#allocation19] sm:$0xff] %v1114
    %1119 = vst [vmem:[#allocation19 + $0x8] sm:$0xff] %v1115
    %1120 = vst [vmem:[#allocation19 + $0x10] sm:$0xff] %v1116
    %1121 = vst [vmem:[#allocation19 + $0x18] sm:$0xff] %v1117
    %v1122 = vld [vmem:[#allocation10] sm:$0xff]
    %v1123 = vld [vmem:[#allocation10 + $0x8] sm:$0xff]
    %v1124 = vld [vmem:[#allocation10 + $0x10] sm:$0xff]
    %v1125 = vld [vmem:[#allocation10 + $0x18] sm:$0xff]
    %v1126 = vld [vmem:[#allocation10 + $0x20] sm:$0xff]
    %v1127 = vld [vmem:[#allocation10 + $0x28] sm:$0xff]
    %v1128 = vld [vmem:[#allocation10 + $0x30] sm:$0xff]
    %v1129 = vld [vmem:[#allocation10 + $0x38] sm:$0xff]
    %v1130 = vld [vmem:[#allocation10 + $0x40] sm:$0xff]
    %v1131 = vld [vmem:[#allocation10 + $0x48] sm:$0xff]
    %v1132 = vld [vmem:[#allocation10 + $0x50] sm:$0xff]
    %v1133 = vld [vmem:[#allocation10 + $0x58] sm:$0xff]
    %v1134 = vld [vmem:[#allocation10 + $0x60] sm:$0xff]
    %v1135 = vld [vmem:[#allocation10 + $0x68] sm:$0xff]
    %v1136 = vld [vmem:[#allocation10 + $0x70] sm:$0xff]
    %v1137 = vld [vmem:[#allocation10 + $0x78] sm:$0xff]
    %v1138 = vld [vmem:[#allocation10 + $0x80] sm:$0xff]
    %v1139 = vld [vmem:[#allocation10 + $0x88] sm:$0xff]
    %v1140 = vld [vmem:[#allocation10 + $0x90] sm:$0xff]
    %v1141 = vld [vmem:[#allocation10 + $0x98] sm:$0xff]
    %v1142 = vld [vmem:[#allocation10 + $0xa0] sm:$0xff]
    %v1143 = vld [vmem:[#allocation10 + $0xa8] sm:$0xff]
    %v1144 = vld [vmem:[#allocation10 + $0xb0] sm:$0xff]
    %v1145 = vld [vmem:[#allocation10 + $0xb8] sm:$0xff]
    %v1146 = vld [vmem:[#allocation10 + $0xc0] sm:$0xff]
    %v1147 = vld [vmem:[#allocation10 + $0xc8] sm:$0xff]
    %v1148 = vld [vmem:[#allocation10 + $0xd0] sm:$0xff]
    %v1149 = vld [vmem:[#allocation10 + $0xd8] sm:$0xff]
    %v1150 = vld [vmem:[#allocation10 + $0xe0] sm:$0xff]
    %v1151 = vld [vmem:[#allocation10 + $0xe8] sm:$0xff]
    %v1152 = vld [vmem:[#allocation10 + $0xf0] sm:$0xff]
    %v1153 = vld [vmem:[#allocation10 + $0xf8] sm:$0xff]
    %v1154 = vld [vmem:[#allocation10 + $0x100] sm:$0xff]
    %v1155 = vld [vmem:[#allocation10 + $0x108] sm:$0xff]
    %v1156 = vld [vmem:[#allocation10 + $0x110] sm:$0xff]
    %v1157 = vld [vmem:[#allocation10 + $0x118] sm:$0xff]
    %v1158 = vld [vmem:[#allocation10 + $0x120] sm:$0xff]
    %v1159 = vld [vmem:[#allocation10 + $0x128] sm:$0xff]
    %v1160 = vld [vmem:[#allocation10 + $0x130] sm:$0xff]
    %v1161 = vld [vmem:[#allocation10 + $0x138] sm:$0xff]
    %v1162 = vld [vmem:[#allocation10 + $0x140] sm:$0xff]
    %v1163 = vld [vmem:[#allocation10 + $0x148] sm:$0xff]
    %v1164 = vld [vmem:[#allocation10 + $0x150] sm:$0xff]
    %v1165 = vld [vmem:[#allocation10 + $0x158] sm:$0xff]
    %v1166 = vld [vmem:[#allocation10 + $0x160] sm:$0xff]
    %v1167 = vld [vmem:[#allocation10 + $0x168] sm:$0xff]
    %v1168 = vld [vmem:[#allocation10 + $0x170] sm:$0xff]
    %v1169 = vld [vmem:[#allocation10 + $0x178] sm:$0xff]
    %v1170 = vld [vmem:[#allocation10 + $0x180] sm:$0xff]
    %v1171 = vld [vmem:[#allocation10 + $0x188] sm:$0xff]
    %v1172 = vld [vmem:[#allocation10 + $0x190] sm:$0xff]
    %v1173 = vld [vmem:[#allocation10 + $0x198] sm:$0xff]
    %v1174 = vld [vmem:[#allocation10 + $0x1a0] sm:$0xff]
    %v1175 = vld [vmem:[#allocation10 + $0x1a8] sm:$0xff]
    %v1176 = vld [vmem:[#allocation10 + $0x1b0] sm:$0xff]
    %v1177 = vld [vmem:[#allocation10 + $0x1b8] sm:$0xff]
    %v1178 = vld [vmem:[#allocation10 + $0x1c0] sm:$0xff]
    %v1179 = vld [vmem:[#allocation10 + $0x1c8] sm:$0xff]
    %v1180 = vld [vmem:[#allocation10 + $0x1d0] sm:$0xff]
    %v1181 = vld [vmem:[#allocation10 + $0x1d8] sm:$0xff]
    %v1182 = vld [vmem:[#allocation10 + $0x1e0] sm:$0xff]
    %v1183 = vld [vmem:[#allocation10 + $0x1e8] sm:$0xff]
    %v1184 = vld [vmem:[#allocation10 + $0x1f0] sm:$0xff]
    %v1185 = vld [vmem:[#allocation10 + $0x1f8] sm:$0xff]
    %v1186 = vld [vmem:[%s6] sm:$0x3]
    %v1188 = vlaneseq
    %v1189 = vshrl.u32 %v1188, 7
    %v1190 = vsub.s32 0, %v1189
    %v1191 = vrot.slane %v1186, %v1190
    %v1192 = vlaneseq
    %v1193 = vshrl.u32 %v1192, 7
    %v1194 = vsub.s32 1, %v1193
    %v1195 = vrot.slane %v1186, %v1194
    %v1262 = vunpack.c.l.b16 %v1122
    %v1263 = vunpack.c.h.b16 %v1122
    %v1264 = vunpack.c.l.b16 %v1123
    %v1265 = vunpack.c.h.b16 %v1123
    %v1266 = vunpack.c.l.b16 %v1124
    %v1267 = vunpack.c.h.b16 %v1124
    %v1268 = vunpack.c.l.b16 %v1125
    %v1269 = vunpack.c.h.b16 %v1125
    %v1270 = vunpack.c.l.b16 %v1126
    %v1271 = vunpack.c.h.b16 %v1126
    %v1272 = vunpack.c.l.b16 %v1127
    %v1273 = vunpack.c.h.b16 %v1127
    %v1274 = vunpack.c.l.b16 %v1128
    %v1275 = vunpack.c.h.b16 %v1128
    %v1276 = vunpack.c.l.b16 %v1129
    %v1277 = vunpack.c.h.b16 %v1129
    %v1278 = vunpack.c.l.b16 %v1130
    %v1279 = vunpack.c.h.b16 %v1130
    %v1280 = vunpack.c.l.b16 %v1131
    %v1281 = vunpack.c.h.b16 %v1131
    %v1282 = vunpack.c.l.b16 %v1132
    %v1283 = vunpack.c.h.b16 %v1132
    %v1284 = vunpack.c.l.b16 %v1133
    %v1285 = vunpack.c.h.b16 %v1133
    %v1286 = vunpack.c.l.b16 %v1134
    %v1287 = vunpack.c.h.b16 %v1134
    %v1288 = vunpack.c.l.b16 %v1135
    %v1289 = vunpack.c.h.b16 %v1135
    %v1290 = vunpack.c.l.b16 %v1136
    %v1291 = vunpack.c.h.b16 %v1136
    %v1292 = vunpack.c.l.b16 %v1137
    %v1293 = vunpack.c.h.b16 %v1137
    %v1294 = vunpack.c.l.b16 %v1138
    %v1295 = vunpack.c.h.b16 %v1138
    %v1296 = vunpack.c.l.b16 %v1139
    %v1297 = vunpack.c.h.b16 %v1139
    %v1298 = vunpack.c.l.b16 %v1140
    %v1299 = vunpack.c.h.b16 %v1140
    %v1300 = vunpack.c.l.b16 %v1141
    %v1301 = vunpack.c.h.b16 %v1141
    %v1302 = vunpack.c.l.b16 %v1142
    %v1303 = vunpack.c.h.b16 %v1142
    %v1304 = vunpack.c.l.b16 %v1143
    %v1305 = vunpack.c.h.b16 %v1143
    %v1306 = vunpack.c.l.b16 %v1144
    %v1307 = vunpack.c.h.b16 %v1144
    %v1308 = vunpack.c.l.b16 %v1145
    %v1309 = vunpack.c.h.b16 %v1145
    %v1310 = vunpack.c.l.b16 %v1146
    %v1311 = vunpack.c.h.b16 %v1146
    %v1312 = vunpack.c.l.b16 %v1147
    %v1313 = vunpack.c.h.b16 %v1147
    %v1314 = vunpack.c.l.b16 %v1148
    %v1315 = vunpack.c.h.b16 %v1148
    %v1316 = vunpack.c.l.b16 %v1149
    %v1317 = vunpack.c.h.b16 %v1149
    %v1318 = vunpack.c.l.b16 %v1150
    %v1319 = vunpack.c.h.b16 %v1150
    %v1320 = vunpack.c.l.b16 %v1151
    %v1321 = vunpack.c.h.b16 %v1151
    %v1322 = vunpack.c.l.b16 %v1152
    %v1323 = vunpack.c.h.b16 %v1152
    %v1324 = vunpack.c.l.b16 %v1153
    %v1325 = vunpack.c.h.b16 %v1153
    %v1326 = vunpack.c.l.b16 %v1154
    %v1327 = vunpack.c.h.b16 %v1154
    %v1328 = vunpack.c.l.b16 %v1155
    %v1329 = vunpack.c.h.b16 %v1155
    %v1330 = vunpack.c.l.b16 %v1156
    %v1331 = vunpack.c.h.b16 %v1156
    %v1332 = vunpack.c.l.b16 %v1157
    %v1333 = vunpack.c.h.b16 %v1157
    %v1334 = vunpack.c.l.b16 %v1158
    %v1335 = vunpack.c.h.b16 %v1158
    %v1336 = vunpack.c.l.b16 %v1159
    %v1337 = vunpack.c.h.b16 %v1159
    %v1338 = vunpack.c.l.b16 %v1160
    %v1339 = vunpack.c.h.b16 %v1160
    %v1340 = vunpack.c.l.b16 %v1161
    %v1341 = vunpack.c.h.b16 %v1161
    %v1342 = vunpack.c.l.b16 %v1162
    %v1343 = vunpack.c.h.b16 %v1162
    %v1344 = vunpack.c.l.b16 %v1163
    %v1345 = vunpack.c.h.b16 %v1163
    %v1346 = vunpack.c.l.b16 %v1164
    %v1347 = vunpack.c.h.b16 %v1164
    %v1348 = vunpack.c.l.b16 %v1165
    %v1349 = vunpack.c.h.b16 %v1165
    %v1350 = vunpack.c.l.b16 %v1166
    %v1351 = vunpack.c.h.b16 %v1166
    %v1352 = vunpack.c.l.b16 %v1167
    %v1353 = vunpack.c.h.b16 %v1167
    %v1354 = vunpack.c.l.b16 %v1168
    %v1355 = vunpack.c.h.b16 %v1168
    %v1356 = vunpack.c.l.b16 %v1169
    %v1357 = vunpack.c.h.b16 %v1169
    %v1358 = vunpack.c.l.b16 %v1170
    %v1359 = vunpack.c.h.b16 %v1170
    %v1360 = vunpack.c.l.b16 %v1171
    %v1361 = vunpack.c.h.b16 %v1171
    %v1362 = vunpack.c.l.b16 %v1172
    %v1363 = vunpack.c.h.b16 %v1172
    %v1364 = vunpack.c.l.b16 %v1173
    %v1365 = vunpack.c.h.b16 %v1173
    %v1366 = vunpack.c.l.b16 %v1174
    %v1367 = vunpack.c.h.b16 %v1174
    %v1368 = vunpack.c.l.b16 %v1175
    %v1369 = vunpack.c.h.b16 %v1175
    %v1370 = vunpack.c.l.b16 %v1176
    %v1371 = vunpack.c.h.b16 %v1176
    %v1372 = vunpack.c.l.b16 %v1177
    %v1373 = vunpack.c.h.b16 %v1177
    %v1374 = vunpack.c.l.b16 %v1178
    %v1375 = vunpack.c.h.b16 %v1178
    %v1376 = vunpack.c.l.b16 %v1179
    %v1377 = vunpack.c.h.b16 %v1179
    %v1378 = vunpack.c.l.b16 %v1180
    %v1379 = vunpack.c.h.b16 %v1180
    %v1380 = vunpack.c.l.b16 %v1181
    %v1381 = vunpack.c.h.b16 %v1181
    %v1382 = vunpack.c.l.b16 %v1182
    %v1383 = vunpack.c.h.b16 %v1182
    %v1384 = vunpack.c.l.b16 %v1183
    %v1385 = vunpack.c.h.b16 %v1183
    %v1386 = vunpack.c.l.b16 %v1184
    %v1387 = vunpack.c.h.b16 %v1184
    %v1388 = vunpack.c.l.b16 %v1185
    %v1389 = vunpack.c.h.b16 %v1185
    %v1390 = vpack.c.b16 %v1264, %v1262
    %v1391 = vpack.c.b16 %v1265, %v1263
    %v1392 = vpack.c.b16 %v1268, %v1266
    %v1393 = vpack.c.b16 %v1269, %v1267
    %v1394 = vpack.c.b16 %v1272, %v1270
    %v1395 = vpack.c.b16 %v1273, %v1271
    %v1396 = vpack.c.b16 %v1276, %v1274
    %v1397 = vpack.c.b16 %v1277, %v1275
    %v1398 = vpack.c.b16 %v1280, %v1278
    %v1399 = vpack.c.b16 %v1281, %v1279
    %v1400 = vpack.c.b16 %v1284, %v1282
    %v1401 = vpack.c.b16 %v1285, %v1283
    %v1402 = vpack.c.b16 %v1288, %v1286
    %v1403 = vpack.c.b16 %v1289, %v1287
    %v1404 = vpack.c.b16 %v1292, %v1290
    %v1405 = vpack.c.b16 %v1293, %v1291
    %v1406 = vpack.c.b16 %v1296, %v1294
    %v1407 = vpack.c.b16 %v1297, %v1295
    %v1408 = vpack.c.b16 %v1300, %v1298
    %v1409 = vpack.c.b16 %v1301, %v1299
    %v1410 = vpack.c.b16 %v1304, %v1302
    %v1411 = vpack.c.b16 %v1305, %v1303
    %v1412 = vpack.c.b16 %v1308, %v1306
    %v1413 = vpack.c.b16 %v1309, %v1307
    %v1414 = vpack.c.b16 %v1312, %v1310
    %v1415 = vpack.c.b16 %v1313, %v1311
    %v1416 = vpack.c.b16 %v1316, %v1314
    %v1417 = vpack.c.b16 %v1317, %v1315
    %v1418 = vpack.c.b16 %v1320, %v1318
    %v1419 = vpack.c.b16 %v1321, %v1319
    %v1420 = vpack.c.b16 %v1324, %v1322
    %v1421 = vpack.c.b16 %v1325, %v1323
    %v1422 = vpack.c.b16 %v1328, %v1326
    %v1423 = vpack.c.b16 %v1329, %v1327
    %v1424 = vpack.c.b16 %v1332, %v1330
    %v1425 = vpack.c.b16 %v1333, %v1331
    %v1426 = vpack.c.b16 %v1336, %v1334
    %v1427 = vpack.c.b16 %v1337, %v1335
    %v1428 = vpack.c.b16 %v1340, %v1338
    %v1429 = vpack.c.b16 %v1341, %v1339
    %v1430 = vpack.c.b16 %v1344, %v1342
    %v1431 = vpack.c.b16 %v1345, %v1343
    %v1432 = vpack.c.b16 %v1348, %v1346
    %v1433 = vpack.c.b16 %v1349, %v1347
    %v1434 = vpack.c.b16 %v1352, %v1350
    %v1435 = vpack.c.b16 %v1353, %v1351
    %v1436 = vpack.c.b16 %v1356, %v1354
    %v1437 = vpack.c.b16 %v1357, %v1355
    %v1438 = vpack.c.b16 %v1360, %v1358
    %v1439 = vpack.c.b16 %v1361, %v1359
    %v1440 = vpack.c.b16 %v1364, %v1362
    %v1441 = vpack.c.b16 %v1365, %v1363
    %v1442 = vpack.c.b16 %v1368, %v1366
    %v1443 = vpack.c.b16 %v1369, %v1367
    %v1444 = vpack.c.b16 %v1372, %v1370
    %v1445 = vpack.c.b16 %v1373, %v1371
    %v1446 = vpack.c.b16 %v1376, %v1374
    %v1447 = vpack.c.b16 %v1377, %v1375
    %v1448 = vpack.c.b16 %v1380, %v1378
    %v1449 = vpack.c.b16 %v1381, %v1379
    %v1450 = vpack.c.b16 %v1384, %v1382
    %v1451 = vpack.c.b16 %v1385, %v1383
    %v1452 = vpack.c.b16 %v1388, %v1386
    %v1453 = vpack.c.b16 %v1389, %v1387
    %1518 = vmatprep.subr.bf16.mxu0 %v1391
    %1519 = vmatpush1.bf16.msra.mxu0 %v1390
    %1520 = vmatprep.subr.bf16.mxu0 %v1393
    %1521 = vmatpush1.bf16.msra.mxu0 %v1392
    %1522 = vmatprep.subr.bf16.mxu0 %v1395
    %1523 = vmatpush1.bf16.msra.mxu0 %v1394
    %1524 = vmatprep.subr.bf16.mxu0 %v1397
    %1525 = vmatpush1.bf16.msra.mxu0 %v1396
    %1526 = vmatprep.subr.bf16.mxu0 %v1399
    %1527 = vmatpush1.bf16.msra.mxu0 %v1398
    %1528 = vmatprep.subr.bf16.mxu0 %v1401
    %1529 = vmatpush1.bf16.msra.mxu0 %v1400
    %1530 = vmatprep.subr.bf16.mxu0 %v1403
    %1531 = vmatpush1.bf16.msra.mxu0 %v1402
    %1532 = vmatprep.subr.bf16.mxu0 %v1405
    %1533 = vmatpush1.bf16.msra.mxu0 %v1404
    %1534 = vmatprep.subr.bf16.mxu0 %v1407
    %1535 = vmatpush1.bf16.msra.mxu0 %v1406
    %1536 = vmatprep.subr.bf16.mxu0 %v1409
    %1537 = vmatpush1.bf16.msra.mxu0 %v1408
    %1538 = vmatprep.subr.bf16.mxu0 %v1411
    %1539 = vmatpush1.bf16.msra.mxu0 %v1410
    %1540 = vmatprep.subr.bf16.mxu0 %v1413
    %1541 = vmatpush1.bf16.msra.mxu0 %v1412
    %1542 = vmatprep.subr.bf16.mxu0 %v1415
    %1543 = vmatpush1.bf16.msra.mxu0 %v1414
    %1544 = vmatprep.subr.bf16.mxu0 %v1417
    %1545 = vmatpush1.bf16.msra.mxu0 %v1416
    %1546 = vmatprep.subr.bf16.mxu0 %v1419
    %1547 = vmatpush1.bf16.msra.mxu0 %v1418
    %1548 = vmatprep.subr.bf16.mxu0 %v1421
    %1549 = vmatpush1.bf16.msra.mxu0 %v1420
    %1550 = vmatprep.mubr.bf16.mxu0 %v629
    %1551 = vmatmul.mubr.bf16.gmra.mrb[0].mxu0 %v628
    %v1552 = vpop.f32.mrb[0].mxu0
    %v1553 = vadd.f32 %v1191, %v1552
    %v1554 = vpop.f32.mrb[0].mxu0
    %v1555 = vadd.f32 %v1195, %v1554
    %v1556 = vpop.f32.mrb[0].mxu0
    %v1557 = vadd.f32 %v1191, %v1556
    %v1558 = vpop.f32.mrb[0].mxu0
    %v1559 = vadd.f32 %v1195, %v1558
    %1560 = vdwg.mxu0
    %1561 = vmatprep.subr.bf16.mxu0 %v1423
    %1562 = vmatpush1.bf16.msra.mxu0 %v1422
    %1563 = vmatprep.subr.bf16.mxu0 %v1425
    %1564 = vmatpush1.bf16.msra.mxu0 %v1424
    %1565 = vmatprep.subr.bf16.mxu0 %v1427
    %1566 = vmatpush1.bf16.msra.mxu0 %v1426
    %1567 = vmatprep.subr.bf16.mxu0 %v1429
    %1568 = vmatpush1.bf16.msra.mxu0 %v1428
    %1569 = vmatprep.subr.bf16.mxu0 %v1431
    %1570 = vmatpush1.bf16.msra.mxu0 %v1430
    %1571 = vmatprep.subr.bf16.mxu0 %v1433
    %1572 = vmatpush1.bf16.msra.mxu0 %v1432
    %1573 = vmatprep.subr.bf16.mxu0 %v1435
    %1574 = vmatpush1.bf16.msra.mxu0 %v1434
    %1575 = vmatprep.subr.bf16.mxu0 %v1437
    %1576 = vmatpush1.bf16.msra.mxu0 %v1436
    %1577 = vmatprep.subr.bf16.mxu0 %v1439
    %1578 = vmatpush1.bf16.msra.mxu0 %v1438
    %1579 = vmatprep.subr.bf16.mxu0 %v1441
    %1580 = vmatpush1.bf16.msra.mxu0 %v1440
    %1581 = vmatprep.subr.bf16.mxu0 %v1443
    %1582 = vmatpush1.bf16.msra.mxu0 %v1442
    %1583 = vmatprep.subr.bf16.mxu0 %v1445
    %1584 = vmatpush1.bf16.msra.mxu0 %v1444
    %1585 = vmatprep.subr.bf16.mxu0 %v1447
    %1586 = vmatpush1.bf16.msra.mxu0 %v1446
    %1587 = vmatprep.subr.bf16.mxu0 %v1449
    %1588 = vmatpush1.bf16.msra.mxu0 %v1448
    %1589 = vmatprep.subr.bf16.mxu0 %v1451
    %1590 = vmatpush1.bf16.msra.mxu0 %v1450
    %1591 = vmatprep.subr.bf16.mxu0 %v1453
    %1592 = vmatpush1.bf16.msra.mxu0 %v1452
    %1593 = vmatprep.mubr.bf16.mxu0 %v631
    %1594 = vmatmul.mubr.bf16.gmra.mrb[0].mxu0 %v630
    %v1595 = vpop.f32.mrb[0].mxu0
    %v1596 = vadd.f32 %v1553, %v1595
    %v1597 = vpop.f32.mrb[0].mxu0
    %v1598 = vadd.f32 %v1555, %v1597
    %v1599 = vpop.f32.mrb[0].mxu0
    %v1600 = vadd.f32 %v1557, %v1599
    %v1601 = vpop.f32.mrb[0].mxu0
    %v1602 = vadd.f32 %v1559, %v1601
    %1603 = vdwg.mxu0
    %1604 = vst [vmem:[#allocation20] sm:$0xff] %v1596
    %1605 = vst [vmem:[#allocation20 + $0x8] sm:$0xff] %v1598
    %1606 = vst [vmem:[#allocation20 + $0x10] sm:$0xff] %v1600
    %1607 = vst [vmem:[#allocation20 + $0x18] sm:$0xff] %v1602
    %v1608 = vpack.c.bf16 %v1600, %v1596
    %v1609 = vpack.c.bf16 %v1602, %v1598
    %v1610 = vld [vmem:[#allocation11] sm:$0xf]
    %v1611 = vld [vmem:[#allocation11 + $0x4] sm:$0xf]
    %v1612 = vld [vmem:[#allocation11 + $0x8] sm:$0xf]
    %v1613 = vld [vmem:[#allocation11 + $0xc] sm:$0xf]
    %v1614 = vld [vmem:[#allocation11 + $0x10] sm:$0xf]
    %v1615 = vld [vmem:[#allocation11 + $0x14] sm:$0xf]
    %v1616 = vld [vmem:[#allocation11 + $0x18] sm:$0xf]
    %v1617 = vld [vmem:[#allocation11 + $0x1c] sm:$0xf]
    %v1618 = vld [vmem:[#allocation11 + $0x20] sm:$0xf]
    %v1619 = vld [vmem:[#allocation11 + $0x24] sm:$0xf]
    %v1620 = vld [vmem:[#allocation11 + $0x28] sm:$0xf]
    %v1621 = vld [vmem:[#allocation11 + $0x2c] sm:$0xf]
    %v1622 = vld [vmem:[#allocation11 + $0x30] sm:$0xf]
    %v1623 = vld [vmem:[#allocation11 + $0x34] sm:$0xf]
    %v1624 = vld [vmem:[#allocation11 + $0x38] sm:$0xf]
    %v1625 = vld [vmem:[#allocation11 + $0x3c] sm:$0xf]
    %v1626 = vld [vmem:[#allocation11 + $0x40] sm:$0xf]
    %v1627 = vld [vmem:[#allocation11 + $0x44] sm:$0xf]
    %v1628 = vld [vmem:[#allocation11 + $0x48] sm:$0xf]
    %v1629 = vld [vmem:[#allocation11 + $0x4c] sm:$0xf]
    %v1630 = vld [vmem:[#allocation11 + $0x50] sm:$0xf]
    %v1631 = vld [vmem:[#allocation11 + $0x54] sm:$0xf]
    %v1632 = vld [vmem:[#allocation11 + $0x58] sm:$0xf]
    %v1633 = vld [vmem:[#allocation11 + $0x5c] sm:$0xf]
    %v1634 = vld [vmem:[#allocation11 + $0x60] sm:$0xf]
    %v1635 = vld [vmem:[#allocation11 + $0x64] sm:$0xf]
    %v1636 = vld [vmem:[#allocation11 + $0x68] sm:$0xf]
    %v1637 = vld [vmem:[#allocation11 + $0x6c] sm:$0xf]
    %v1638 = vld [vmem:[#allocation11 + $0x70] sm:$0xf]
    %v1639 = vld [vmem:[#allocation11 + $0x74] sm:$0xf]
    %v1640 = vld [vmem:[#allocation11 + $0x78] sm:$0xf]
    %v1641 = vld [vmem:[#allocation11 + $0x7c] sm:$0xf]
    %v1642 = vld [vmem:[%s8] sm:$0x1]
    %v1644 = vlaneseq
    %v1645 = vshrl.u32 %v1644, 7
    %v1646 = vsub.s32 0, %v1645
    %v1647 = vrot.slane %v1642, %v1646
    %v1681 = vunpack.c.l.b16 %v1610
    %v1682 = vunpack.c.l.b16 %v1611
    %v1683 = vunpack.c.l.b16 %v1612
    %v1684 = vunpack.c.l.b16 %v1613
    %v1685 = vunpack.c.l.b16 %v1614
    %v1686 = vunpack.c.l.b16 %v1615
    %v1687 = vunpack.c.l.b16 %v1616
    %v1688 = vunpack.c.l.b16 %v1617
    %v1689 = vunpack.c.l.b16 %v1618
    %v1690 = vunpack.c.l.b16 %v1619
    %v1691 = vunpack.c.l.b16 %v1620
    %v1692 = vunpack.c.l.b16 %v1621
    %v1693 = vunpack.c.l.b16 %v1622
    %v1694 = vunpack.c.l.b16 %v1623
    %v1695 = vunpack.c.l.b16 %v1624
    %v1696 = vunpack.c.l.b16 %v1625
    %v1697 = vunpack.c.l.b16 %v1626
    %v1698 = vunpack.c.l.b16 %v1627
    %v1699 = vunpack.c.l.b16 %v1628
    %v1700 = vunpack.c.l.b16 %v1629
    %v1701 = vunpack.c.l.b16 %v1630
    %v1702 = vunpack.c.l.b16 %v1631
    %v1703 = vunpack.c.l.b16 %v1632
    %v1704 = vunpack.c.l.b16 %v1633
    %v1705 = vunpack.c.l.b16 %v1634
    %v1706 = vunpack.c.l.b16 %v1635
    %v1707 = vunpack.c.l.b16 %v1636
    %v1708 = vunpack.c.l.b16 %v1637
    %v1709 = vunpack.c.l.b16 %v1638
    %v1710 = vunpack.c.l.b16 %v1639
    %v1711 = vunpack.c.l.b16 %v1640
    %v1712 = vunpack.c.l.b16 %v1641
    %v1713 = vpack.c.b16 %v1682, %v1681
    %v1714 = vpack.c.b16 %v1684, %v1683
    %v1715 = vpack.c.b16 %v1686, %v1685
    %v1716 = vpack.c.b16 %v1688, %v1687
    %v1717 = vpack.c.b16 %v1690, %v1689
    %v1718 = vpack.c.b16 %v1692, %v1691
    %v1719 = vpack.c.b16 %v1694, %v1693
    %v1720 = vpack.c.b16 %v1696, %v1695
    %v1721 = vpack.c.b16 %v1698, %v1697
    %v1722 = vpack.c.b16 %v1700, %v1699
    %v1723 = vpack.c.b16 %v1702, %v1701
    %v1724 = vpack.c.b16 %v1704, %v1703
    %v1725 = vpack.c.b16 %v1706, %v1705
    %v1726 = vpack.c.b16 %v1708, %v1707
    %v1727 = vpack.c.b16 %v1710, %v1709
    %v1728 = vpack.c.b16 %v1712, %v1711
    %1745 = vmatprep.subr.bf16.mxu0 0
    %1746 = vmatpush1.bf16.msra.mxu0 %v1713
    %1747 = vmatprep.subr.bf16.mxu0 0
    %1748 = vmatpush1.bf16.msra.mxu0 %v1714
    %1749 = vmatprep.subr.bf16.mxu0 0
    %1750 = vmatpush1.bf16.msra.mxu0 %v1715
    %1751 = vmatprep.subr.bf16.mxu0 0
    %1752 = vmatpush1.bf16.msra.mxu0 %v1716
    %1753 = vmatprep.subr.bf16.mxu0 0
    %1754 = vmatpush1.bf16.msra.mxu0 %v1717
    %1755 = vmatprep.subr.bf16.mxu0 0
    %1756 = vmatpush1.bf16.msra.mxu0 %v1718
    %1757 = vmatprep.subr.bf16.mxu0 0
    %1758 = vmatpush1.bf16.msra.mxu0 %v1719
    %1759 = vmatprep.subr.bf16.mxu0 0
    %1760 = vmatpush1.bf16.msra.mxu0 %v1720
    %1761 = vmatprep.subr.bf16.mxu0 0
    %1762 = vmatpush1.bf16.msra.mxu0 %v1721
    %1763 = vmatprep.subr.bf16.mxu0 0
    %1764 = vmatpush1.bf16.msra.mxu0 %v1722
    %1765 = vmatprep.subr.bf16.mxu0 0
    %1766 = vmatpush1.bf16.msra.mxu0 %v1723
    %1767 = vmatprep.subr.bf16.mxu0 0
    %1768 = vmatpush1.bf16.msra.mxu0 %v1724
    %1769 = vmatprep.subr.bf16.mxu0 0
    %1770 = vmatpush1.bf16.msra.mxu0 %v1725
    %1771 = vmatprep.subr.bf16.mxu0 0
    %1772 = vmatpush1.bf16.msra.mxu0 %v1726
    %1773 = vmatprep.subr.bf16.mxu0 0
    %1774 = vmatpush1.bf16.msra.mxu0 %v1727
    %1775 = vmatprep.subr.bf16.mxu0 0
    %1776 = vmatpush1.bf16.msra.mxu0 %v1728
    %1777 = vmatprep.mubr.bf16.mxu0 %v1609
    %1778 = vmatmul.mubr.bf16.gmra.mrb[0].mxu0 %v1608
    %v1779 = vpop.f32.mrb[0].mxu0
    %v1780 = vadd.f32 %v1647, %v1779
    %v1781 = vpop.f32.mrb[0].mxu0
    %v1782 = vpop.f32.mrb[0].mxu0
    %v1783 = vadd.f32 %v1647, %v1782
    %v1784 = vpop.f32.mrb[0].mxu0
    %1785 = vdwg.mxu0
    %v1786 = vmax.f32 %v1780, 0.0
    %v1787 = vmax.f32 %v1783, 0.0
    %v1788 = vpack.c.bf16 %v1787, %v1786
    %v1789 = vld [vmem:[#allocation13] sm:$0xf]
    %v1790 = vld [vmem:[#allocation13 + $0x4] sm:$0xf]
    %v1791 = vld [vmem:[#allocation13 + $0x8] sm:$0xf]
    %v1792 = vld [vmem:[#allocation13 + $0xc] sm:$0xf]
    %v1793 = vld [vmem:[#allocation13 + $0x10] sm:$0xf]
    %v1794 = vld [vmem:[#allocation13 + $0x14] sm:$0xf]
    %v1795 = vld [vmem:[#allocation13 + $0x18] sm:$0xf]
    %v1796 = vld [vmem:[#allocation13 + $0x1c] sm:$0xf]
    %v1797 = vld [vmem:[#allocation13 + $0x20] sm:$0xf]
    %v1798 = vld [vmem:[#allocation13 + $0x24] sm:$0xf]
    %v1799 = vld [vmem:[#allocation13 + $0x28] sm:$0xf]
    %v1800 = vld [vmem:[#allocation13 + $0x2c] sm:$0xf]
    %v1801 = vld [vmem:[#allocation13 + $0x30] sm:$0xf]
    %v1802 = vld [vmem:[#allocation13 + $0x34] sm:$0xf]
    %v1803 = vld [vmem:[#allocation13 + $0x38] sm:$0xf]
    %v1804 = vld [vmem:[#allocation13 + $0x3c] sm:$0xf]
    %v1805 = vld [vmem:[%s10] sm:$0x1]
    %v1807 = vlaneseq
    %v1808 = vshrl.u32 %v1807, 7
    %v1809 = vsub.s32 0, %v1808
    %v1810 = vrot.slane %v1805, %v1809
    %v1828 = vunpack.c.l.b16 %v1789
    %v1829 = vunpack.c.l.b16 %v1790
    %v1830 = vunpack.c.l.b16 %v1791
    %v1831 = vunpack.c.l.b16 %v1792
    %v1832 = vunpack.c.l.b16 %v1793
    %v1833 = vunpack.c.l.b16 %v1794
    %v1834 = vunpack.c.l.b16 %v1795
    %v1835 = vunpack.c.l.b16 %v1796
    %v1836 = vunpack.c.l.b16 %v1797
    %v1837 = vunpack.c.l.b16 %v1798
    %v1838 = vunpack.c.l.b16 %v1799
    %v1839 = vunpack.c.l.b16 %v1800
    %v1840 = vunpack.c.l.b16 %v1801
    %v1841 = vunpack.c.l.b16 %v1802
    %v1842 = vunpack.c.l.b16 %v1803
    %v1843 = vunpack.c.l.b16 %v1804
    %v1844 = vpack.c.b16 %v1829, %v1828
    %v1845 = vpack.c.b16 %v1831, %v1830
    %v1846 = vpack.c.b16 %v1833, %v1832
    %v1847 = vpack.c.b16 %v1835, %v1834
    %v1848 = vpack.c.b16 %v1837, %v1836
    %v1849 = vpack.c.b16 %v1839, %v1838
    %v1850 = vpack.c.b16 %v1841, %v1840
    %v1851 = vpack.c.b16 %v1843, %v1842
    %1860 = vmatprep.subr.bf16.mxu0 0
    %1861 = vmatpush1.bf16.msra.mxu0 %v1844
    %1862 = vmatprep.subr.bf16.mxu0 0
    %1863 = vmatpush1.bf16.msra.mxu0 %v1845
    %1864 = vmatprep.subr.bf16.mxu0 0
    %1865 = vmatpush1.bf16.msra.mxu0 %v1846
    %1866 = vmatprep.subr.bf16.mxu0 0
    %1867 = vmatpush1.bf16.msra.mxu0 %v1847
    %1868 = vmatprep.subr.bf16.mxu0 0
    %1869 = vmatpush1.bf16.msra.mxu0 %v1848
    %1870 = vmatprep.subr.bf16.mxu0 0
    %1871 = vmatpush1.bf16.msra.mxu0 %v1849
    %1872 = vmatprep.subr.bf16.mxu0 0
    %1873 = vmatpush1.bf16.msra.mxu0 %v1850
    %1874 = vmatprep.subr.bf16.mxu0 0
    %1875 = vmatpush1.bf16.msra.mxu0 %v1851
    %1876 = vmatprep.subr.bf16.mxu0 0
    %1877 = vmatpush1.bf16.msra.mxu0 0
    %1878 = vmatprep.subr.bf16.mxu0 0
    %1879 = vmatpush1.bf16.msra.mxu0 0
    %1880 = vmatprep.subr.bf16.mxu0 0
    %1881 = vmatpush1.bf16.msra.mxu0 0
    %1882 = vmatprep.subr.bf16.mxu0 0
    %1883 = vmatpush1.bf16.msra.mxu0 0
    %1884 = vmatprep.subr.bf16.mxu0 0
    %1885 = vmatpush1.bf16.msra.mxu0 0
    %1886 = vmatprep.subr.bf16.mxu0 0
    %1887 = vmatpush1.bf16.msra.mxu0 0
    %1888 = vmatprep.subr.bf16.mxu0 0
    %1889 = vmatpush1.bf16.msra.mxu0 0
    %1890 = vmatprep.subr.bf16.mxu0 0
    %1891 = vmatpush1.bf16.msra.mxu0 0
    %1892 = vmatprep.mubr.bf16.mxu0 0
    %1893 = vmatmul.mubr.bf16.gmra.mrb[0].mxu0 %v1788
    %v1894 = vpop.f32.mrb[0].mxu0
    %v1895 = vadd.f32 %v1810, %v1894
    %v1896 = vpop.f32.mrb[0].mxu0
    %v1897 = vpop.f32.mrb[0].mxu0
    %v1898 = vadd.f32 %v1810, %v1897
    %v1899 = vpop.f32.mrb[0].mxu0
    %1900 = vdwg.mxu0
    %1901 = vst [vmem:[#allocation22] sm:$0xff] %v1895
    %1902 = vst [vmem:[#allocation22 + $0x8] sm:$0xff] %v1898
    %v1903 = vpack.c.bf16 %v1116, %v1114
    %v1904 = vpack.c.bf16 %v1117, %v1115
    %v1905 = vld [vmem:[#allocation14] sm:$0xff]
    %v1906 = vld [vmem:[#allocation14 + $0x8] sm:$0xff]
    %v1907 = vld [vmem:[#allocation14 + $0x10] sm:$0xff]
    %v1908 = vld [vmem:[#allocation14 + $0x18] sm:$0xff]
    %v1909 = vld [vmem:[#allocation14 + $0x20] sm:$0xff]
    %v1910 = vld [vmem:[#allocation14 + $0x28] sm:$0xff]
    %v1911 = vld [vmem:[#allocation14 + $0x30] sm:$0xff]
    %v1912 = vld [vmem:[#allocation14 + $0x38] sm:$0xff]
    %v1913 = vld [vmem:[#allocation14 + $0x40] sm:$0xff]
    %v1914 = vld [vmem:[#allocation14 + $0x48] sm:$0xff]
    %v1915 = vld [vmem:[#allocation14 + $0x50] sm:$0xff]
    %v1916 = vld [vmem:[#allocation14 + $0x58] sm:$0xff]
    %v1917 = vld [vmem:[#allocation14 + $0x60] sm:$0xff]
    %v1918 = vld [vmem:[#allocation14 + $0x68] sm:$0xff]
    %v1919 = vld [vmem:[#allocation14 + $0x70] sm:$0xff]
    %v1920 = vld [vmem:[#allocation14 + $0x78] sm:$0xff]
    %v1921 = vld [vmem:[#allocation14 + $0x80] sm:$0xff]
    %v1922 = vld [vmem:[#allocation14 + $0x88] sm:$0xff]
    %v1923 = vld [vmem:[#allocation14 + $0x90] sm:$0xff]
    %v1924 = vld [vmem:[#allocation14 + $0x98] sm:$0xff]
    %v1925 = vld [vmem:[#allocation14 + $0xa0] sm:$0xff]
    %v1926 = vld [vmem:[#allocation14 + $0xa8] sm:$0xff]
    %v1927 = vld [vmem:[#allocation14 + $0xb0] sm:$0xff]
    %v1928 = vld [vmem:[#allocation14 + $0xb8] sm:$0xff]
    %v1929 = vld [vmem:[#allocation14 + $0xc0] sm:$0xff]
    %v1930 = vld [vmem:[#allocation14 + $0xc8] sm:$0xff]
    %v1931 = vld [vmem:[#allocation14 + $0xd0] sm:$0xff]
    %v1932 = vld [vmem:[#allocation14 + $0xd8] sm:$0xff]
    %v1933 = vld [vmem:[#allocation14 + $0xe0] sm:$0xff]
    %v1934 = vld [vmem:[#allocation14 + $0xe8] sm:$0xff]
    %v1935 = vld [vmem:[#allocation14 + $0xf0] sm:$0xff]
    %v1936 = vld [vmem:[#allocation14 + $0xf8] sm:$0xff]
    %v1937 = vld [vmem:[#allocation14 + $0x100] sm:$0xff]
    %v1938 = vld [vmem:[#allocation14 + $0x108] sm:$0xff]
    %v1939 = vld [vmem:[#allocation14 + $0x110] sm:$0xff]
    %v1940 = vld [vmem:[#allocation14 + $0x118] sm:$0xff]
    %v1941 = vld [vmem:[#allocation14 + $0x120] sm:$0xff]
    %v1942 = vld [vmem:[#allocation14 + $0x128] sm:$0xff]
    %v1943 = vld [vmem:[#allocation14 + $0x130] sm:$0xff]
    %v1944 = vld [vmem:[#allocation14 + $0x138] sm:$0xff]
    %v1945 = vld [vmem:[#allocation14 + $0x140] sm:$0xff]
    %v1946 = vld [vmem:[#allocation14 + $0x148] sm:$0xff]
    %v1947 = vld [vmem:[#allocation14 + $0x150] sm:$0xff]
    %v1948 = vld [vmem:[#allocation14 + $0x158] sm:$0xff]
    %v1949 = vld [vmem:[#allocation14 + $0x160] sm:$0xff]
    %v1950 = vld [vmem:[#allocation14 + $0x168] sm:$0xff]
    %v1951 = vld [vmem:[#allocation14 + $0x170] sm:$0xff]
    %v1952 = vld [vmem:[#allocation14 + $0x178] sm:$0xff]
    %v1953 = vld [vmem:[#allocation14 + $0x180] sm:$0xff]
    %v1954 = vld [vmem:[#allocation14 + $0x188] sm:$0xff]
    %v1955 = vld [vmem:[#allocation14 + $0x190] sm:$0xff]
    %v1956 = vld [vmem:[#allocation14 + $0x198] sm:$0xff]
    %v1957 = vld [vmem:[#allocation14 + $0x1a0] sm:$0xff]
    %v1958 = vld [vmem:[#allocation14 + $0x1a8] sm:$0xff]
    %v1959 = vld [vmem:[#allocation14 + $0x1b0] sm:$0xff]
    %v1960 = vld [vmem:[#allocation14 + $0x1b8] sm:$0xff]
    %v1961 = vld [vmem:[#allocation14 + $0x1c0] sm:$0xff]
    %v1962 = vld [vmem:[#allocation14 + $0x1c8] sm:$0xff]
    %v1963 = vld [vmem:[#allocation14 + $0x1d0] sm:$0xff]
    %v1964 = vld [vmem:[#allocation14 + $0x1d8] sm:$0xff]
    %v1965 = vld [vmem:[#allocation14 + $0x1e0] sm:$0xff]
    %v1966 = vld [vmem:[#allocation14 + $0x1e8] sm:$0xff]
    %v1967 = vld [vmem:[#allocation14 + $0x1f0] sm:$0xff]
    %v1968 = vld [vmem:[#allocation14 + $0x1f8] sm:$0xff]
    %v1969 = vld [vmem:[#allocation16] sm:$0xff]
    %v1970 = vld [vmem:[#allocation16 + $0x8] sm:$0xff]
    %v1971 = vld [vmem:[#allocation16 + $0x10] sm:$0xff]
    %v1972 = vld [vmem:[#allocation16 + $0x18] sm:$0xff]
    %v1973 = vld [vmem:[#allocation16 + $0x20] sm:$0xff]
    %v1974 = vld [vmem:[#allocation16 + $0x28] sm:$0xff]
    %v1975 = vld [vmem:[#allocation16 + $0x30] sm:$0xff]
    %v1976 = vld [vmem:[#allocation16 + $0x38] sm:$0xff]
    %v1977 = vld [vmem:[#allocation16 + $0x40] sm:$0xff]
    %v1978 = vld [vmem:[#allocation16 + $0x48] sm:$0xff]
    %v1979 = vld [vmem:[#allocation16 + $0x50] sm:$0xff]
    %v1980 = vld [vmem:[#allocation16 + $0x58] sm:$0xff]
    %v1981 = vld [vmem:[#allocation16 + $0x60] sm:$0xff]
    %v1982 = vld [vmem:[#allocation16 + $0x68] sm:$0xff]
    %v1983 = vld [vmem:[#allocation16 + $0x70] sm:$0xff]
    %v1984 = vld [vmem:[#allocation16 + $0x78] sm:$0xff]
    %v1985 = vld [vmem:[#allocation16 + $0x80] sm:$0xff]
    %v1986 = vld [vmem:[#allocation16 + $0x88] sm:$0xff]
    %v1987 = vld [vmem:[#allocation16 + $0x90] sm:$0xff]
    %v1988 = vld [vmem:[#allocation16 + $0x98] sm:$0xff]
    %v1989 = vld [vmem:[#allocation16 + $0xa0] sm:$0xff]
    %v1990 = vld [vmem:[#allocation16 + $0xa8] sm:$0xff]
    %v1991 = vld [vmem:[#allocation16 + $0xb0] sm:$0xff]
    %v1992 = vld [vmem:[#allocation16 + $0xb8] sm:$0xff]
    %v1993 = vld [vmem:[#allocation16 + $0xc0] sm:$0xff]
    %v1994 = vld [vmem:[#allocation16 + $0xc8] sm:$0xff]
    %v1995 = vld [vmem:[#allocation16 + $0xd0] sm:$0xff]
    %v1996 = vld [vmem:[#allocation16 + $0xd8] sm:$0xff]
    %v1997 = vld [vmem:[#allocation16 + $0xe0] sm:$0xff]
    %v1998 = vld [vmem:[#allocation16 + $0xe8] sm:$0xff]
    %v1999 = vld [vmem:[#allocation16 + $0xf0] sm:$0xff]
    %v2000 = vld [vmem:[#allocation16 + $0xf8] sm:$0xff]
    %v2001 = vld [vmem:[#allocation16 + $0x100] sm:$0xff]
    %v2002 = vld [vmem:[#allocation16 + $0x108] sm:$0xff]
    %v2003 = vld [vmem:[#allocation16 + $0x110] sm:$0xff]
    %v2004 = vld [vmem:[#allocation16 + $0x118] sm:$0xff]
    %v2005 = vld [vmem:[#allocation16 + $0x120] sm:$0xff]
    %v2006 = vld [vmem:[#allocation16 + $0x128] sm:$0xff]
    %v2007 = vld [vmem:[#allocation16 + $0x130] sm:$0xff]
    %v2008 = vld [vmem:[#allocation16 + $0x138] sm:$0xff]
    %v2009 = vld [vmem:[#allocation16 + $0x140] sm:$0xff]
    %v2010 = vld [vmem:[#allocation16 + $0x148] sm:$0xff]
    %v2011 = vld [vmem:[#allocation16 + $0x150] sm:$0xff]
    %v2012 = vld [vmem:[#allocation16 + $0x158] sm:$0xff]
    %v2013 = vld [vmem:[#allocation16 + $0x160] sm:$0xff]
    %v2014 = vld [vmem:[#allocation16 + $0x168] sm:$0xff]
    %v2015 = vld [vmem:[#allocation16 + $0x170] sm:$0xff]
    %v2016 = vld [vmem:[#allocation16 + $0x178] sm:$0xff]
    %v2017 = vld [vmem:[#allocation16 + $0x180] sm:$0xff]
    %v2018 = vld [vmem:[#allocation16 + $0x188] sm:$0xff]
    %v2019 = vld [vmem:[#allocation16 + $0x190] sm:$0xff]
    %v2020 = vld [vmem:[#allocation16 + $0x198] sm:$0xff]
    %v2021 = vld [vmem:[#allocation16 + $0x1a0] sm:$0xff]
    %v2022 = vld [vmem:[#allocation16 + $0x1a8] sm:$0xff]
    %v2023 = vld [vmem:[#allocation16 + $0x1b0] sm:$0xff]
    %v2024 = vld [vmem:[#allocation16 + $0x1b8] sm:$0xff]
    %v2025 = vld [vmem:[#allocation16 + $0x1c0] sm:$0xff]
    %v2026 = vld [vmem:[#allocation16 + $0x1c8] sm:$0xff]
    %v2027 = vld [vmem:[#allocation16 + $0x1d0] sm:$0xff]
    %v2028 = vld [vmem:[#allocation16 + $0x1d8] sm:$0xff]
    %v2029 = vld [vmem:[#allocation16 + $0x1e0] sm:$0xff]
    %v2030 = vld [vmem:[#allocation16 + $0x1e8] sm:$0xff]
    %v2031 = vld [vmem:[#allocation16 + $0x1f0] sm:$0xff]
    %v2032 = vld [vmem:[#allocation16 + $0x1f8] sm:$0xff]
    %v2097 = vunpack.c.l.b16 %v1969
    %v2098 = vunpack.c.h.b16 %v1969
    %v2099 = vunpack.c.l.b16 %v1970
    %v2100 = vunpack.c.h.b16 %v1970
    %v2101 = vunpack.c.l.b16 %v1971
    %v2102 = vunpack.c.h.b16 %v1971
    %v2103 = vunpack.c.l.b16 %v1972
    %v2104 = vunpack.c.h.b16 %v1972
    %v2105 = vunpack.c.l.b16 %v1973
    %v2106 = vunpack.c.h.b16 %v1973
    %v2107 = vunpack.c.l.b16 %v1974
    %v2108 = vunpack.c.h.b16 %v1974
    %v2109 = vunpack.c.l.b16 %v1975
    %v2110 = vunpack.c.h.b16 %v1975
    %v2111 = vunpack.c.l.b16 %v1976
    %v2112 = vunpack.c.h.b16 %v1976
    %v2113 = vunpack.c.l.b16 %v1977
    %v2114 = vunpack.c.h.b16 %v1977
    %v2115 = vunpack.c.l.b16 %v1978
    %v2116 = vunpack.c.h.b16 %v1978
    %v2117 = vunpack.c.l.b16 %v1979
    %v2118 = vunpack.c.h.b16 %v1979
    %v2119 = vunpack.c.l.b16 %v1980
    %v2120 = vunpack.c.h.b16 %v1980
    %v2121 = vunpack.c.l.b16 %v1981
    %v2122 = vunpack.c.h.b16 %v1981
    %v2123 = vunpack.c.l.b16 %v1982
    %v2124 = vunpack.c.h.b16 %v1982
    %v2125 = vunpack.c.l.b16 %v1983
    %v2126 = vunpack.c.h.b16 %v1983
    %v2127 = vunpack.c.l.b16 %v1984
    %v2128 = vunpack.c.h.b16 %v1984
    %v2129 = vunpack.c.l.b16 %v1985
    %v2130 = vunpack.c.h.b16 %v1985
    %v2131 = vunpack.c.l.b16 %v1986
    %v2132 = vunpack.c.h.b16 %v1986
    %v2133 = vunpack.c.l.b16 %v1987
    %v2134 = vunpack.c.h.b16 %v1987
    %v2135 = vunpack.c.l.b16 %v1988
    %v2136 = vunpack.c.h.b16 %v1988
    %v2137 = vunpack.c.l.b16 %v1989
    %v2138 = vunpack.c.h.b16 %v1989
    %v2139 = vunpack.c.l.b16 %v1990
    %v2140 = vunpack.c.h.b16 %v1990
    %v2141 = vunpack.c.l.b16 %v1991
    %v2142 = vunpack.c.h.b16 %v1991
    %v2143 = vunpack.c.l.b16 %v1992
    %v2144 = vunpack.c.h.b16 %v1992
    %v2145 = vunpack.c.l.b16 %v1993
    %v2146 = vunpack.c.h.b16 %v1993
    %v2147 = vunpack.c.l.b16 %v1994
    %v2148 = vunpack.c.h.b16 %v1994
    %v2149 = vunpack.c.l.b16 %v1995
    %v2150 = vunpack.c.h.b16 %v1995
    %v2151 = vunpack.c.l.b16 %v1996
    %v2152 = vunpack.c.h.b16 %v1996
    %v2153 = vunpack.c.l.b16 %v1997
    %v2154 = vunpack.c.h.b16 %v1997
    %v2155 = vunpack.c.l.b16 %v1998
    %v2156 = vunpack.c.h.b16 %v1998
    %v2157 = vunpack.c.l.b16 %v1999
    %v2158 = vunpack.c.h.b16 %v1999
    %v2159 = vunpack.c.l.b16 %v2000
    %v2160 = vunpack.c.h.b16 %v2000
    %v2161 = vunpack.c.l.b16 %v2001
    %v2162 = vunpack.c.h.b16 %v2001
    %v2163 = vunpack.c.l.b16 %v2002
    %v2164 = vunpack.c.h.b16 %v2002
    %v2165 = vunpack.c.l.b16 %v2003
    %v2166 = vunpack.c.h.b16 %v2003
    %v2167 = vunpack.c.l.b16 %v2004
    %v2168 = vunpack.c.h.b16 %v2004
    %v2169 = vunpack.c.l.b16 %v2005
    %v2170 = vunpack.c.h.b16 %v2005
    %v2171 = vunpack.c.l.b16 %v2006
    %v2172 = vunpack.c.h.b16 %v2006
    %v2173 = vunpack.c.l.b16 %v2007
    %v2174 = vunpack.c.h.b16 %v2007
    %v2175 = vunpack.c.l.b16 %v2008
    %v2176 = vunpack.c.h.b16 %v2008
    %v2177 = vunpack.c.l.b16 %v2009
    %v2178 = vunpack.c.h.b16 %v2009
    %v2179 = vunpack.c.l.b16 %v2010
    %v2180 = vunpack.c.h.b16 %v2010
    %v2181 = vunpack.c.l.b16 %v2011
    %v2182 = vunpack.c.h.b16 %v2011
    %v2183 = vunpack.c.l.b16 %v2012
    %v2184 = vunpack.c.h.b16 %v2012
    %v2185 = vunpack.c.l.b16 %v2013
    %v2186 = vunpack.c.h.b16 %v2013
    %v2187 = vunpack.c.l.b16 %v2014
    %v2188 = vunpack.c.h.b16 %v2014
    %v2189 = vunpack.c.l.b16 %v2015
    %v2190 = vunpack.c.h.b16 %v2015
    %v2191 = vunpack.c.l.b16 %v2016
    %v2192 = vunpack.c.h.b16 %v2016
    %v2193 = vunpack.c.l.b16 %v2017
    %v2194 = vunpack.c.h.b16 %v2017
    %v2195 = vunpack.c.l.b16 %v2018
    %v2196 = vunpack.c.h.b16 %v2018
    %v2197 = vunpack.c.l.b16 %v2019
    %v2198 = vunpack.c.h.b16 %v2019
    %v2199 = vunpack.c.l.b16 %v2020
    %v2200 = vunpack.c.h.b16 %v2020
    %v2201 = vunpack.c.l.b16 %v2021
    %v2202 = vunpack.c.h.b16 %v2021
    %v2203 = vunpack.c.l.b16 %v2022
    %v2204 = vunpack.c.h.b16 %v2022
    %v2205 = vunpack.c.l.b16 %v2023
    %v2206 = vunpack.c.h.b16 %v2023
    %v2207 = vunpack.c.l.b16 %v2024
    %v2208 = vunpack.c.h.b16 %v2024
    %v2209 = vunpack.c.l.b16 %v2025
    %v2210 = vunpack.c.h.b16 %v2025
    %v2211 = vunpack.c.l.b16 %v2026
    %v2212 = vunpack.c.h.b16 %v2026
    %v2213 = vunpack.c.l.b16 %v2027
    %v2214 = vunpack.c.h.b16 %v2027
    %v2215 = vunpack.c.l.b16 %v2028
    %v2216 = vunpack.c.h.b16 %v2028
    %v2217 = vunpack.c.l.b16 %v2029
    %v2218 = vunpack.c.h.b16 %v2029
    %v2219 = vunpack.c.l.b16 %v2030
    %v2220 = vunpack.c.h.b16 %v2030
    %v2221 = vunpack.c.l.b16 %v2031
    %v2222 = vunpack.c.h.b16 %v2031
    %v2223 = vunpack.c.l.b16 %v2032
    %v2224 = vunpack.c.h.b16 %v2032
    %v2225 = vpack.c.b16 %v2101, %v2097
    %v2226 = vpack.c.b16 %v2102, %v2098
    %v2227 = vpack.c.b16 %v2103, %v2099
    %v2228 = vpack.c.b16 %v2104, %v2100
    %v2229 = vpack.c.b16 %v2109, %v2105
    %v2230 = vpack.c.b16 %v2110, %v2106
    %v2231 = vpack.c.b16 %v2111, %v2107
    %v2232 = vpack.c.b16 %v2112, %v2108
    %v2233 = vpack.c.b16 %v2117, %v2113
    %v2234 = vpack.c.b16 %v2118, %v2114
    %v2235 = vpack.c.b16 %v2119, %v2115
    %v2236 = vpack.c.b16 %v2120, %v2116
    %v2237 = vpack.c.b16 %v2125, %v2121
    %v2238 = vpack.c.b16 %v2126, %v2122
    %v2239 = vpack.c.b16 %v2127, %v2123
    %v2240 = vpack.c.b16 %v2128, %v2124
    %v2241 = vpack.c.b16 %v2133, %v2129
    %v2242 = vpack.c.b16 %v2134, %v2130
    %v2243 = vpack.c.b16 %v2135, %v2131
    %v2244 = vpack.c.b16 %v2136, %v2132
    %v2245 = vpack.c.b16 %v2141, %v2137
    %v2246 = vpack.c.b16 %v2142, %v2138
    %v2247 = vpack.c.b16 %v2143, %v2139
    %v2248 = vpack.c.b16 %v2144, %v2140
    %v2249 = vpack.c.b16 %v2149, %v2145
    %v2250 = vpack.c.b16 %v2150, %v2146
    %v2251 = vpack.c.b16 %v2151, %v2147
    %v2252 = vpack.c.b16 %v2152, %v2148
    %v2253 = vpack.c.b16 %v2157, %v2153
    %v2254 = vpack.c.b16 %v2158, %v2154
    %v2255 = vpack.c.b16 %v2159, %v2155
    %v2256 = vpack.c.b16 %v2160, %v2156
    %v2257 = vpack.c.b16 %v2165, %v2161
    %v2258 = vpack.c.b16 %v2166, %v2162
    %v2259 = vpack.c.b16 %v2167, %v2163
    %v2260 = vpack.c.b16 %v2168, %v2164
    %v2261 = vpack.c.b16 %v2173, %v2169
    %v2262 = vpack.c.b16 %v2174, %v2170
    %v2263 = vpack.c.b16 %v2175, %v2171
    %v2264 = vpack.c.b16 %v2176, %v2172
    %v2265 = vpack.c.b16 %v2181, %v2177
    %v2266 = vpack.c.b16 %v2182, %v2178
    %v2267 = vpack.c.b16 %v2183, %v2179
    %v2268 = vpack.c.b16 %v2184, %v2180
    %v2269 = vpack.c.b16 %v2189, %v2185
    %v2270 = vpack.c.b16 %v2190, %v2186
    %v2271 = vpack.c.b16 %v2191, %v2187
    %v2272 = vpack.c.b16 %v2192, %v2188
    %v2273 = vpack.c.b16 %v2197, %v2193
    %v2274 = vpack.c.b16 %v2198, %v2194
    %v2275 = vpack.c.b16 %v2199, %v2195
    %v2276 = vpack.c.b16 %v2200, %v2196
    %v2277 = vpack.c.b16 %v2205, %v2201
    %v2278 = vpack.c.b16 %v2206, %v2202
    %v2279 = vpack.c.b16 %v2207, %v2203
    %v2280 = vpack.c.b16 %v2208, %v2204
    %v2281 = vpack.c.b16 %v2213, %v2209
    %v2282 = vpack.c.b16 %v2214, %v2210
    %v2283 = vpack.c.b16 %v2215, %v2211
    %v2284 = vpack.c.b16 %v2216, %v2212
    %v2285 = vpack.c.b16 %v2221, %v2217
    %v2286 = vpack.c.b16 %v2222, %v2218
    %v2287 = vpack.c.b16 %v2223, %v2219
    %v2288 = vpack.c.b16 %v2224, %v2220
    %2353 = vmatprep.subr.bf16.mxu0 %v2226
    %2354 = vmatpush1.bf16.msra.mxu0 %v2225
    %2355 = vmatprep.subr.bf16.mxu0 %v2230
    %2356 = vmatpush1.bf16.msra.mxu0 %v2229
    %2357 = vmatprep.subr.bf16.mxu0 %v2234
    %2358 = vmatpush1.bf16.msra.mxu0 %v2233
    %2359 = vmatprep.subr.bf16.mxu0 %v2238
    %2360 = vmatpush1.bf16.msra.mxu0 %v2237
    %2361 = vmatprep.subr.bf16.mxu0 %v2242
    %2362 = vmatpush1.bf16.msra.mxu0 %v2241
    %2363 = vmatprep.subr.bf16.mxu0 %v2246
    %2364 = vmatpush1.bf16.msra.mxu0 %v2245
    %2365 = vmatprep.subr.bf16.mxu0 %v2250
    %2366 = vmatpush1.bf16.msra.mxu0 %v2249
    %2367 = vmatprep.subr.bf16.mxu0 %v2254
    %2368 = vmatpush1.bf16.msra.mxu0 %v2253
    %2369 = vmatprep.subr.bf16.mxu0 %v2258
    %2370 = vmatpush1.bf16.msra.mxu0 %v2257
    %2371 = vmatprep.subr.bf16.mxu0 %v2262
    %2372 = vmatpush1.bf16.msra.mxu0 %v2261
    %2373 = vmatprep.subr.bf16.mxu0 %v2266
    %2374 = vmatpush1.bf16.msra.mxu0 %v2265
    %2375 = vmatprep.subr.bf16.mxu0 %v2270
    %2376 = vmatpush1.bf16.msra.mxu0 %v2269
    %2377 = vmatprep.subr.bf16.mxu0 %v2274
    %2378 = vmatpush1.bf16.msra.mxu0 %v2273
    %2379 = vmatprep.subr.bf16.mxu0 %v2278
    %2380 = vmatpush1.bf16.msra.mxu0 %v2277
    %2381 = vmatprep.subr.bf16.mxu0 %v2282
    %2382 = vmatpush1.bf16.msra.mxu0 %v2281
    %2383 = vmatprep.subr.bf16.mxu0 %v2286
    %2384 = vmatpush1.bf16.msra.mxu0 %v2285
    %2385 = vmatprep.mubr.bf16.mxu0 %v1609
    %2386 = vmatmul.mubr.bf16.gmra.mrb[0].mxu0 %v1608
    %v2387 = vpop.f32.mrb[0].mxu0
    %v2388 = vadd.f32 0.0, %v2387
    %v2389 = vpop.f32.mrb[0].mxu0
    %v2390 = vadd.f32 0.0, %v2389
    %v2391 = vpop.f32.mrb[0].mxu0
    %v2392 = vadd.f32 0.0, %v2391
    %v2393 = vpop.f32.mrb[0].mxu0
    %v2394 = vadd.f32 0.0, %v2393
    %2395 = vdwg.mxu0
    %2396 = vmatprep.subr.bf16.mxu0 %v2228
    %2397 = vmatpush1.bf16.msra.mxu0 %v2227
    %2398 = vmatprep.subr.bf16.mxu0 %v2232
    %2399 = vmatpush1.bf16.msra.mxu0 %v2231
    %2400 = vmatprep.subr.bf16.mxu0 %v2236
    %2401 = vmatpush1.bf16.msra.mxu0 %v2235
    %2402 = vmatprep.subr.bf16.mxu0 %v2240
    %2403 = vmatpush1.bf16.msra.mxu0 %v2239
    %2404 = vmatprep.subr.bf16.mxu0 %v2244
    %2405 = vmatpush1.bf16.msra.mxu0 %v2243
    %2406 = vmatprep.subr.bf16.mxu0 %v2248
    %2407 = vmatpush1.bf16.msra.mxu0 %v2247
    %2408 = vmatprep.subr.bf16.mxu0 %v2252
    %2409 = vmatpush1.bf16.msra.mxu0 %v2251
    %2410 = vmatprep.subr.bf16.mxu0 %v2256
    %2411 = vmatpush1.bf16.msra.mxu0 %v2255
    %2412 = vmatprep.subr.bf16.mxu0 %v2260
    %2413 = vmatpush1.bf16.msra.mxu0 %v2259
    %2414 = vmatprep.subr.bf16.mxu0 %v2264
    %2415 = vmatpush1.bf16.msra.mxu0 %v2263
    %2416 = vmatprep.subr.bf16.mxu0 %v2268
    %2417 = vmatpush1.bf16.msra.mxu0 %v2267
    %2418 = vmatprep.subr.bf16.mxu0 %v2272
    %2419 = vmatpush1.bf16.msra.mxu0 %v2271
    %2420 = vmatprep.subr.bf16.mxu0 %v2276
    %2421 = vmatpush1.bf16.msra.mxu0 %v2275
    %2422 = vmatprep.subr.bf16.mxu0 %v2280
    %2423 = vmatpush1.bf16.msra.mxu0 %v2279
    %2424 = vmatprep.subr.bf16.mxu0 %v2284
    %2425 = vmatpush1.bf16.msra.mxu0 %v2283
    %2426 = vmatprep.subr.bf16.mxu0 %v2288
    %2427 = vmatpush1.bf16.msra.mxu0 %v2287
    %2428 = vmatprep.mubr.bf16.mxu0 %v1609
    %2429 = vmatmul.mubr.bf16.gmra.mrb[0].mxu0 %v1608
    %v2430 = vpop.f32.mrb[0].mxu0
    %v2431 = vadd.f32 0.0, %v2430
    %v2432 = vpop.f32.mrb[0].mxu0
    %v2433 = vadd.f32 0.0, %v2432
    %v2434 = vpop.f32.mrb[0].mxu0
    %v2435 = vadd.f32 0.0, %v2434
    %v2436 = vpop.f32.mrb[0].mxu0
    %v2437 = vadd.f32 0.0, %v2436
    %2438 = vdwg.mxu0
    %v2503 = vunpack.c.l.b16 %v1905
    %v2504 = vunpack.c.h.b16 %v1905
    %v2505 = vunpack.c.l.b16 %v1906
    %v2506 = vunpack.c.h.b16 %v1906
    %v2507 = vunpack.c.l.b16 %v1907
    %v2508 = vunpack.c.h.b16 %v1907
    %v2509 = vunpack.c.l.b16 %v1908
    %v2510 = vunpack.c.h.b16 %v1908
    %v2511 = vunpack.c.l.b16 %v1909
    %v2512 = vunpack.c.h.b16 %v1909
    %v2513 = vunpack.c.l.b16 %v1910
    %v2514 = vunpack.c.h.b16 %v1910
    %v2515 = vunpack.c.l.b16 %v1911
    %v2516 = vunpack.c.h.b16 %v1911
    %v2517 = vunpack.c.l.b16 %v1912
    %v2518 = vunpack.c.h.b16 %v1912
    %v2519 = vunpack.c.l.b16 %v1913
    %v2520 = vunpack.c.h.b16 %v1913
    %v2521 = vunpack.c.l.b16 %v1914
    %v2522 = vunpack.c.h.b16 %v1914
    %v2523 = vunpack.c.l.b16 %v1915
    %v2524 = vunpack.c.h.b16 %v1915
    %v2525 = vunpack.c.l.b16 %v1916
    %v2526 = vunpack.c.h.b16 %v1916
    %v2527 = vunpack.c.l.b16 %v1917
    %v2528 = vunpack.c.h.b16 %v1917
    %v2529 = vunpack.c.l.b16 %v1918
    %v2530 = vunpack.c.h.b16 %v1918
    %v2531 = vunpack.c.l.b16 %v1919
    %v2532 = vunpack.c.h.b16 %v1919
    %v2533 = vunpack.c.l.b16 %v1920
    %v2534 = vunpack.c.h.b16 %v1920
    %v2535 = vunpack.c.l.b16 %v1921
    %v2536 = vunpack.c.h.b16 %v1921
    %v2537 = vunpack.c.l.b16 %v1922
    %v2538 = vunpack.c.h.b16 %v1922
    %v2539 = vunpack.c.l.b16 %v1923
    %v2540 = vunpack.c.h.b16 %v1923
    %v2541 = vunpack.c.l.b16 %v1924
    %v2542 = vunpack.c.h.b16 %v1924
    %v2543 = vunpack.c.l.b16 %v1925
    %v2544 = vunpack.c.h.b16 %v1925
    %v2545 = vunpack.c.l.b16 %v1926
    %v2546 = vunpack.c.h.b16 %v1926
    %v2547 = vunpack.c.l.b16 %v1927
    %v2548 = vunpack.c.h.b16 %v1927
    %v2549 = vunpack.c.l.b16 %v1928
    %v2550 = vunpack.c.h.b16 %v1928
    %v2551 = vunpack.c.l.b16 %v1929
    %v2552 = vunpack.c.h.b16 %v1929
    %v2553 = vunpack.c.l.b16 %v1930
    %v2554 = vunpack.c.h.b16 %v1930
    %v2555 = vunpack.c.l.b16 %v1931
    %v2556 = vunpack.c.h.b16 %v1931
    %v2557 = vunpack.c.l.b16 %v1932
    %v2558 = vunpack.c.h.b16 %v1932
    %v2559 = vunpack.c.l.b16 %v1933
    %v2560 = vunpack.c.h.b16 %v1933
    %v2561 = vunpack.c.l.b16 %v1934
    %v2562 = vunpack.c.h.b16 %v1934
    %v2563 = vunpack.c.l.b16 %v1935
    %v2564 = vunpack.c.h.b16 %v1935
    %v2565 = vunpack.c.l.b16 %v1936
    %v2566 = vunpack.c.h.b16 %v1936
    %v2567 = vunpack.c.l.b16 %v1937
    %v2568 = vunpack.c.h.b16 %v1937
    %v2569 = vunpack.c.l.b16 %v1938
    %v2570 = vunpack.c.h.b16 %v1938
    %v2571 = vunpack.c.l.b16 %v1939
    %v2572 = vunpack.c.h.b16 %v1939
    %v2573 = vunpack.c.l.b16 %v1940
    %v2574 = vunpack.c.h.b16 %v1940
    %v2575 = vunpack.c.l.b16 %v1941
    %v2576 = vunpack.c.h.b16 %v1941
    %v2577 = vunpack.c.l.b16 %v1942
    %v2578 = vunpack.c.h.b16 %v1942
    %v2579 = vunpack.c.l.b16 %v1943
    %v2580 = vunpack.c.h.b16 %v1943
    %v2581 = vunpack.c.l.b16 %v1944
    %v2582 = vunpack.c.h.b16 %v1944
    %v2583 = vunpack.c.l.b16 %v1945
    %v2584 = vunpack.c.h.b16 %v1945
    %v2585 = vunpack.c.l.b16 %v1946
    %v2586 = vunpack.c.h.b16 %v1946
    %v2587 = vunpack.c.l.b16 %v1947
    %v2588 = vunpack.c.h.b16 %v1947
    %v2589 = vunpack.c.l.b16 %v1948
    %v2590 = vunpack.c.h.b16 %v1948
    %v2591 = vunpack.c.l.b16 %v1949
    %v2592 = vunpack.c.h.b16 %v1949
    %v2593 = vunpack.c.l.b16 %v1950
    %v2594 = vunpack.c.h.b16 %v1950
    %v2595 = vunpack.c.l.b16 %v1951
    %v2596 = vunpack.c.h.b16 %v1951
    %v2597 = vunpack.c.l.b16 %v1952
    %v2598 = vunpack.c.h.b16 %v1952
    %v2599 = vunpack.c.l.b16 %v1953
    %v2600 = vunpack.c.h.b16 %v1953
    %v2601 = vunpack.c.l.b16 %v1954
    %v2602 = vunpack.c.h.b16 %v1954
    %v2603 = vunpack.c.l.b16 %v1955
    %v2604 = vunpack.c.h.b16 %v1955
    %v2605 = vunpack.c.l.b16 %v1956
    %v2606 = vunpack.c.h.b16 %v1956
    %v2607 = vunpack.c.l.b16 %v1957
    %v2608 = vunpack.c.h.b16 %v1957
    %v2609 = vunpack.c.l.b16 %v1958
    %v2610 = vunpack.c.h.b16 %v1958
    %v2611 = vunpack.c.l.b16 %v1959
    %v2612 = vunpack.c.h.b16 %v1959
    %v2613 = vunpack.c.l.b16 %v1960
    %v2614 = vunpack.c.h.b16 %v1960
    %v2615 = vunpack.c.l.b16 %v1961
    %v2616 = vunpack.c.h.b16 %v1961
    %v2617 = vunpack.c.l.b16 %v1962
    %v2618 = vunpack.c.h.b16 %v1962
    %v2619 = vunpack.c.l.b16 %v1963
    %v2620 = vunpack.c.h.b16 %v1963
    %v2621 = vunpack.c.l.b16 %v1964
    %v2622 = vunpack.c.h.b16 %v1964
    %v2623 = vunpack.c.l.b16 %v1965
    %v2624 = vunpack.c.h.b16 %v1965
    %v2625 = vunpack.c.l.b16 %v1966
    %v2626 = vunpack.c.h.b16 %v1966
    %v2627 = vunpack.c.l.b16 %v1967
    %v2628 = vunpack.c.h.b16 %v1967
    %v2629 = vunpack.c.l.b16 %v1968
    %v2630 = vunpack.c.h.b16 %v1968
    %v2631 = vpack.c.b16 %v2507, %v2503
    %v2632 = vpack.c.b16 %v2508, %v2504
    %v2633 = vpack.c.b16 %v2509, %v2505
    %v2634 = vpack.c.b16 %v2510, %v2506
    %v2635 = vpack.c.b16 %v2515, %v2511
    %v2636 = vpack.c.b16 %v2516, %v2512
    %v2637 = vpack.c.b16 %v2517, %v2513
    %v2638 = vpack.c.b16 %v2518, %v2514
    %v2639 = vpack.c.b16 %v2523, %v2519
    %v2640 = vpack.c.b16 %v2524, %v2520
    %v2641 = vpack.c.b16 %v2525, %v2521
    %v2642 = vpack.c.b16 %v2526, %v2522
    %v2643 = vpack.c.b16 %v2531, %v2527
    %v2644 = vpack.c.b16 %v2532, %v2528
    %v2645 = vpack.c.b16 %v2533, %v2529
    %v2646 = vpack.c.b16 %v2534, %v2530
    %v2647 = vpack.c.b16 %v2539, %v2535
    %v2648 = vpack.c.b16 %v2540, %v2536
    %v2649 = vpack.c.b16 %v2541, %v2537
    %v2650 = vpack.c.b16 %v2542, %v2538
    %v2651 = vpack.c.b16 %v2547, %v2543
    %v2652 = vpack.c.b16 %v2548, %v2544
    %v2653 = vpack.c.b16 %v2549, %v2545
    %v2654 = vpack.c.b16 %v2550, %v2546
    %v2655 = vpack.c.b16 %v2555, %v2551
    %v2656 = vpack.c.b16 %v2556, %v2552
    %v2657 = vpack.c.b16 %v2557, %v2553
    %v2658 = vpack.c.b16 %v2558, %v2554
    %v2659 = vpack.c.b16 %v2563, %v2559
    %v2660 = vpack.c.b16 %v2564, %v2560
    %v2661 = vpack.c.b16 %v2565, %v2561
    %v2662 = vpack.c.b16 %v2566, %v2562
    %v2663 = vpack.c.b16 %v2571, %v2567
    %v2664 = vpack.c.b16 %v2572, %v2568
    %v2665 = vpack.c.b16 %v2573, %v2569
    %v2666 = vpack.c.b16 %v2574, %v2570
    %v2667 = vpack.c.b16 %v2579, %v2575
    %v2668 = vpack.c.b16 %v2580, %v2576
    %v2669 = vpack.c.b16 %v2581, %v2577
    %v2670 = vpack.c.b16 %v2582, %v2578
    %v2671 = vpack.c.b16 %v2587, %v2583
    %v2672 = vpack.c.b16 %v2588, %v2584
    %v2673 = vpack.c.b16 %v2589, %v2585
    %v2674 = vpack.c.b16 %v2590, %v2586
    %v2675 = vpack.c.b16 %v2595, %v2591
    %v2676 = vpack.c.b16 %v2596, %v2592
    %v2677 = vpack.c.b16 %v2597, %v2593
    %v2678 = vpack.c.b16 %v2598, %v2594
    %v2679 = vpack.c.b16 %v2603, %v2599
    %v2680 = vpack.c.b16 %v2604, %v2600
    %v2681 = vpack.c.b16 %v2605, %v2601
    %v2682 = vpack.c.b16 %v2606, %v2602
    %v2683 = vpack.c.b16 %v2611, %v2607
    %v2684 = vpack.c.b16 %v2612, %v2608
    %v2685 = vpack.c.b16 %v2613, %v2609
    %v2686 = vpack.c.b16 %v2614, %v2610
    %v2687 = vpack.c.b16 %v2619, %v2615
    %v2688 = vpack.c.b16 %v2620, %v2616
    %v2689 = vpack.c.b16 %v2621, %v2617
    %v2690 = vpack.c.b16 %v2622, %v2618
    %v2691 = vpack.c.b16 %v2627, %v2623
    %v2692 = vpack.c.b16 %v2628, %v2624
    %v2693 = vpack.c.b16 %v2629, %v2625
    %v2694 = vpack.c.b16 %v2630, %v2626
    %2759 = vmatprep.subr.bf16.mxu0 %v2632
    %2760 = vmatpush1.bf16.msra.mxu0 %v2631
    %2761 = vmatprep.subr.bf16.mxu0 %v2636
    %2762 = vmatpush1.bf16.msra.mxu0 %v2635
    %2763 = vmatprep.subr.bf16.mxu0 %v2640
    %2764 = vmatpush1.bf16.msra.mxu0 %v2639
    %2765 = vmatprep.subr.bf16.mxu0 %v2644
    %2766 = vmatpush1.bf16.msra.mxu0 %v2643
    %2767 = vmatprep.subr.bf16.mxu0 %v2648
    %2768 = vmatpush1.bf16.msra.mxu0 %v2647
    %2769 = vmatprep.subr.bf16.mxu0 %v2652
    %2770 = vmatpush1.bf16.msra.mxu0 %v2651
    %2771 = vmatprep.subr.bf16.mxu0 %v2656
    %2772 = vmatpush1.bf16.msra.mxu0 %v2655
    %2773 = vmatprep.subr.bf16.mxu0 %v2660
    %2774 = vmatpush1.bf16.msra.mxu0 %v2659
    %2775 = vmatprep.subr.bf16.mxu0 %v2664
    %2776 = vmatpush1.bf16.msra.mxu0 %v2663
    %2777 = vmatprep.subr.bf16.mxu0 %v2668
    %2778 = vmatpush1.bf16.msra.mxu0 %v2667
    %2779 = vmatprep.subr.bf16.mxu0 %v2672
    %2780 = vmatpush1.bf16.msra.mxu0 %v2671
    %2781 = vmatprep.subr.bf16.mxu0 %v2676
    %2782 = vmatpush1.bf16.msra.mxu0 %v2675
    %2783 = vmatprep.subr.bf16.mxu0 %v2680
    %2784 = vmatpush1.bf16.msra.mxu0 %v2679
    %2785 = vmatprep.subr.bf16.mxu0 %v2684
    %2786 = vmatpush1.bf16.msra.mxu0 %v2683
    %2787 = vmatprep.subr.bf16.mxu0 %v2688
    %2788 = vmatpush1.bf16.msra.mxu0 %v2687
    %2789 = vmatprep.subr.bf16.mxu0 %v2692
    %2790 = vmatpush1.bf16.msra.mxu0 %v2691
    %2791 = vmatprep.mubr.bf16.mxu0 %v1904
    %2792 = vmatmul.mubr.bf16.gmra.mrb[0].mxu0 %v1903
    %v2793 = vpop.f32.mrb[0].mxu0
    %v2794 = vadd.f32 %v2388, %v2793
    %v2795 = vpop.f32.mrb[0].mxu0
    %v2796 = vadd.f32 %v2390, %v2795
    %v2797 = vpop.f32.mrb[0].mxu0
    %v2798 = vadd.f32 %v2392, %v2797
    %v2799 = vpop.f32.mrb[0].mxu0
    %v2800 = vadd.f32 %v2394, %v2799
    %2801 = vdwg.mxu0
    %2802 = vmatprep.subr.bf16.mxu0 %v2634
    %2803 = vmatpush1.bf16.msra.mxu0 %v2633
    %2804 = vmatprep.subr.bf16.mxu0 %v2638
    %2805 = vmatpush1.bf16.msra.mxu0 %v2637
    %2806 = vmatprep.subr.bf16.mxu0 %v2642
    %2807 = vmatpush1.bf16.msra.mxu0 %v2641
    %2808 = vmatprep.subr.bf16.mxu0 %v2646
    %2809 = vmatpush1.bf16.msra.mxu0 %v2645
    %2810 = vmatprep.subr.bf16.mxu0 %v2650
    %2811 = vmatpush1.bf16.msra.mxu0 %v2649
    %2812 = vmatprep.subr.bf16.mxu0 %v2654
    %2813 = vmatpush1.bf16.msra.mxu0 %v2653
    %2814 = vmatprep.subr.bf16.mxu0 %v2658
    %2815 = vmatpush1.bf16.msra.mxu0 %v2657
    %2816 = vmatprep.subr.bf16.mxu0 %v2662
    %2817 = vmatpush1.bf16.msra.mxu0 %v2661
    %2818 = vmatprep.subr.bf16.mxu0 %v2666
    %2819 = vmatpush1.bf16.msra.mxu0 %v2665
    %2820 = vmatprep.subr.bf16.mxu0 %v2670
    %2821 = vmatpush1.bf16.msra.mxu0 %v2669
    %2822 = vmatprep.subr.bf16.mxu0 %v2674
    %2823 = vmatpush1.bf16.msra.mxu0 %v2673
    %2824 = vmatprep.subr.bf16.mxu0 %v2678
    %2825 = vmatpush1.bf16.msra.mxu0 %v2677
    %2826 = vmatprep.subr.bf16.mxu0 %v2682
    %2827 = vmatpush1.bf16.msra.mxu0 %v2681
    %2828 = vmatprep.subr.bf16.mxu0 %v2686
    %2829 = vmatpush1.bf16.msra.mxu0 %v2685
    %2830 = vmatprep.subr.bf16.mxu0 %v2690
    %2831 = vmatpush1.bf16.msra.mxu0 %v2689
    %2832 = vmatprep.subr.bf16.mxu0 %v2694
    %2833 = vmatpush1.bf16.msra.mxu0 %v2693
    %2834 = vmatprep.mubr.bf16.mxu0 %v1904
    %2835 = vmatmul.mubr.bf16.gmra.mrb[0].mxu0 %v1903
    %v2836 = vpop.f32.mrb[0].mxu0
    %v2837 = vadd.f32 %v2431, %v2836
    %v2838 = vpop.f32.mrb[0].mxu0
    %v2839 = vadd.f32 %v2433, %v2838
    %v2840 = vpop.f32.mrb[0].mxu0
    %v2841 = vadd.f32 %v2435, %v2840
    %v2842 = vpop.f32.mrb[0].mxu0
    %v2843 = vadd.f32 %v2437, %v2842
    %2844 = vdwg.mxu0
    %v2845 = vld [vmem:[%s13] sm:$0xf]
    %v2847 = vlaneseq
    %v2848 = vshrl.u32 %v2847, 7
    %v2849 = vsub.s32 0, %v2848
    %v2850 = vrot.slane %v2845, %v2849
    %v2851 = vlaneseq
    %v2852 = vshrl.u32 %v2851, 7
    %v2853 = vsub.s32 1, %v2852
    %v2854 = vrot.slane %v2845, %v2853
    %v2855 = vlaneseq
    %v2856 = vshrl.u32 %v2855, 7
    %v2857 = vsub.s32 2, %v2856
    %v2858 = vrot.slane %v2845, %v2857
    %v2859 = vlaneseq
    %v2860 = vshrl.u32 %v2859, 7
    %v2861 = vsub.s32 3, %v2860
    %v2862 = vrot.slane %v2845, %v2861
    %v2867 = vadd.f32 %v2794, %v2850
    %v2868 = vadd.f32 %v2796, %v2854
    %v2869 = vadd.f32 %v2837, %v2858
    %v2870 = vadd.f32 %v2839, %v2862
    %v2871 = vadd.f32 %v2798, %v2850
    %v2872 = vadd.f32 %v2800, %v2854
    %v2873 = vadd.f32 %v2841, %v2858
    %v2874 = vadd.f32 %v2843, %v2862
    %v2875 = vmax.f32 %v2867, 0.0
    %v2876 = vmax.f32 %v2868, 0.0
    %v2877 = vmax.f32 %v2869, 0.0
    %v2878 = vmax.f32 %v2870, 0.0
    %v2879 = vmax.f32 %v2871, 0.0
    %v2880 = vmax.f32 %v2872, 0.0
    %v2881 = vmax.f32 %v2873, 0.0
    %v2882 = vmax.f32 %v2874, 0.0
    %v2883 = vpack.c.bf16 %v2879, %v2875
    %v2884 = vpack.c.bf16 %v2880, %v2876
    %v2885 = vpack.c.bf16 %v2881, %v2877
    %v2886 = vpack.c.bf16 %v2882, %v2878
    %v2887 = vld [vmem:[#allocation17] sm:$0xf]
    %v2888 = vld [vmem:[#allocation17 + $0x4] sm:$0xf]
    %v2889 = vld [vmem:[#allocation17 + $0x8] sm:$0xf]
    %v2890 = vld [vmem:[#allocation17 + $0xc] sm:$0xf]
    %v2891 = vld [vmem:[#allocation17 + $0x10] sm:$0xf]
    %v2892 = vld [vmem:[#allocation17 + $0x14] sm:$0xf]
    %v2893 = vld [vmem:[#allocation17 + $0x18] sm:$0xf]
    %v2894 = vld [vmem:[#allocation17 + $0x1c] sm:$0xf]
    %v2895 = vld [vmem:[#allocation17 + $0x20] sm:$0xf]
    %v2896 = vld [vmem:[#allocation17 + $0x24] sm:$0xf]
    %v2897 = vld [vmem:[#allocation17 + $0x28] sm:$0xf]
    %v2898 = vld [vmem:[#allocation17 + $0x2c] sm:$0xf]
    %v2899 = vld [vmem:[#allocation17 + $0x30] sm:$0xf]
    %v2900 = vld [vmem:[#allocation17 + $0x34] sm:$0xf]
    %v2901 = vld [vmem:[#allocation17 + $0x38] sm:$0xf]
    %v2902 = vld [vmem:[#allocation17 + $0x3c] sm:$0xf]
    %v2903 = vld [vmem:[#allocation17 + $0x40] sm:$0xf]
    %v2904 = vld [vmem:[#allocation17 + $0x44] sm:$0xf]
    %v2905 = vld [vmem:[#allocation17 + $0x48] sm:$0xf]
    %v2906 = vld [vmem:[#allocation17 + $0x4c] sm:$0xf]
    %v2907 = vld [vmem:[#allocation17 + $0x50] sm:$0xf]
    %v2908 = vld [vmem:[#allocation17 + $0x54] sm:$0xf]
    %v2909 = vld [vmem:[#allocation17 + $0x58] sm:$0xf]
    %v2910 = vld [vmem:[#allocation17 + $0x5c] sm:$0xf]
    %v2911 = vld [vmem:[#allocation17 + $0x60] sm:$0xf]
    %v2912 = vld [vmem:[#allocation17 + $0x64] sm:$0xf]
    %v2913 = vld [vmem:[#allocation17 + $0x68] sm:$0xf]
    %v2914 = vld [vmem:[#allocation17 + $0x6c] sm:$0xf]
    %v2915 = vld [vmem:[#allocation17 + $0x70] sm:$0xf]
    %v2916 = vld [vmem:[#allocation17 + $0x74] sm:$0xf]
    %v2917 = vld [vmem:[#allocation17 + $0x78] sm:$0xf]
    %v2918 = vld [vmem:[#allocation17 + $0x7c] sm:$0xf]
    %v2919 = vld [vmem:[#allocation17 + $0x80] sm:$0xf]
    %v2920 = vld [vmem:[#allocation17 + $0x84] sm:$0xf]
    %v2921 = vld [vmem:[#allocation17 + $0x88] sm:$0xf]
    %v2922 = vld [vmem:[#allocation17 + $0x8c] sm:$0xf]
    %v2923 = vld [vmem:[#allocation17 + $0x90] sm:$0xf]
    %v2924 = vld [vmem:[#allocation17 + $0x94] sm:$0xf]
    %v2925 = vld [vmem:[#allocation17 + $0x98] sm:$0xf]
    %v2926 = vld [vmem:[#allocation17 + $0x9c] sm:$0xf]
    %v2927 = vld [vmem:[#allocation17 + $0xa0] sm:$0xf]
    %v2928 = vld [vmem:[#allocation17 + $0xa4] sm:$0xf]
    %v2929 = vld [vmem:[#allocation17 + $0xa8] sm:$0xf]
    %v2930 = vld [vmem:[#allocation17 + $0xac] sm:$0xf]
    %v2931 = vld [vmem:[#allocation17 + $0xb0] sm:$0xf]
    %v2932 = vld [vmem:[#allocation17 + $0xb4] sm:$0xf]
    %v2933 = vld [vmem:[#allocation17 + $0xb8] sm:$0xf]
    %v2934 = vld [vmem:[#allocation17 + $0xbc] sm:$0xf]
    %v2935 = vld [vmem:[#allocation17 + $0xc0] sm:$0xf]
    %v2936 = vld [vmem:[#allocation17 + $0xc4] sm:$0xf]
    %v2937 = vld [vmem:[#allocation17 + $0xc8] sm:$0xf]
    %v2938 = vld [vmem:[#allocation17 + $0xcc] sm:$0xf]
    %v2939 = vld [vmem:[#allocation17 + $0xd0] sm:$0xf]
    %v2940 = vld [vmem:[#allocation17 + $0xd4] sm:$0xf]
    %v2941 = vld [vmem:[#allocation17 + $0xd8] sm:$0xf]
    %v2942 = vld [vmem:[#allocation17 + $0xdc] sm:$0xf]
    %v2943 = vld [vmem:[#allocation17 + $0xe0] sm:$0xf]
    %v2944 = vld [vmem:[#allocation17 + $0xe4] sm:$0xf]
    %v2945 = vld [vmem:[#allocation17 + $0xe8] sm:$0xf]
    %v2946 = vld [vmem:[#allocation17 + $0xec] sm:$0xf]
    %v2947 = vld [vmem:[#allocation17 + $0xf0] sm:$0xf]
    %v2948 = vld [vmem:[#allocation17 + $0xf4] sm:$0xf]
    %v2949 = vld [vmem:[#allocation17 + $0xf8] sm:$0xf]
    %v2950 = vld [vmem:[#allocation17 + $0xfc] sm:$0xf]
    %v2951 = vld [vmem:[%s15] sm:$0x1]
    %v2953 = vlaneseq
    %v2954 = vshrl.u32 %v2953, 7
    %v2955 = vsub.s32 0, %v2954
    %v2956 = vrot.slane %v2951, %v2955
    %v3022 = vunpack.c.l.b16 %v2887
    %v3023 = vunpack.c.l.b16 %v2888
    %v3024 = vunpack.c.l.b16 %v2889
    %v3025 = vunpack.c.l.b16 %v2890
    %v3026 = vunpack.c.l.b16 %v2891
    %v3027 = vunpack.c.l.b16 %v2892
    %v3028 = vunpack.c.l.b16 %v2893
    %v3029 = vunpack.c.l.b16 %v2894
    %v3030 = vunpack.c.l.b16 %v2895
    %v3031 = vunpack.c.l.b16 %v2896
    %v3032 = vunpack.c.l.b16 %v2897
    %v3033 = vunpack.c.l.b16 %v2898
    %v3034 = vunpack.c.l.b16 %v2899
    %v3035 = vunpack.c.l.b16 %v2900
    %v3036 = vunpack.c.l.b16 %v2901
    %v3037 = vunpack.c.l.b16 %v2902
    %v3038 = vunpack.c.l.b16 %v2903
    %v3039 = vunpack.c.l.b16 %v2904
    %v3040 = vunpack.c.l.b16 %v2905
    %v3041 = vunpack.c.l.b16 %v2906
    %v3042 = vunpack.c.l.b16 %v2907
    %v3043 = vunpack.c.l.b16 %v2908
    %v3044 = vunpack.c.l.b16 %v2909
    %v3045 = vunpack.c.l.b16 %v2910
    %v3046 = vunpack.c.l.b16 %v2911
    %v3047 = vunpack.c.l.b16 %v2912
    %v3048 = vunpack.c.l.b16 %v2913
    %v3049 = vunpack.c.l.b16 %v2914
    %v3050 = vunpack.c.l.b16 %v2915
    %v3051 = vunpack.c.l.b16 %v2916
    %v3052 = vunpack.c.l.b16 %v2917
    %v3053 = vunpack.c.l.b16 %v2918
    %v3054 = vunpack.c.l.b16 %v2919
    %v3055 = vunpack.c.l.b16 %v2920
    %v3056 = vunpack.c.l.b16 %v2921
    %v3057 = vunpack.c.l.b16 %v2922
    %v3058 = vunpack.c.l.b16 %v2923
    %v3059 = vunpack.c.l.b16 %v2924
    %v3060 = vunpack.c.l.b16 %v2925
    %v3061 = vunpack.c.l.b16 %v2926
    %v3062 = vunpack.c.l.b16 %v2927
    %v3063 = vunpack.c.l.b16 %v2928
    %v3064 = vunpack.c.l.b16 %v2929
    %v3065 = vunpack.c.l.b16 %v2930
    %v3066 = vunpack.c.l.b16 %v2931
    %v3067 = vunpack.c.l.b16 %v2932
    %v3068 = vunpack.c.l.b16 %v2933
    %v3069 = vunpack.c.l.b16 %v2934
    %v3070 = vunpack.c.l.b16 %v2935
    %v3071 = vunpack.c.l.b16 %v2936
    %v3072 = vunpack.c.l.b16 %v2937
    %v3073 = vunpack.c.l.b16 %v2938
    %v3074 = vunpack.c.l.b16 %v2939
    %v3075 = vunpack.c.l.b16 %v2940
    %v3076 = vunpack.c.l.b16 %v2941
    %v3077 = vunpack.c.l.b16 %v2942
    %v3078 = vunpack.c.l.b16 %v2943
    %v3079 = vunpack.c.l.b16 %v2944
    %v3080 = vunpack.c.l.b16 %v2945
    %v3081 = vunpack.c.l.b16 %v2946
    %v3082 = vunpack.c.l.b16 %v2947
    %v3083 = vunpack.c.l.b16 %v2948
    %v3084 = vunpack.c.l.b16 %v2949
    %v3085 = vunpack.c.l.b16 %v2950
    %v3086 = vpack.c.b16 %v3023, %v3022
    %v3087 = vpack.c.b16 %v3025, %v3024
    %v3088 = vpack.c.b16 %v3027, %v3026
    %v3089 = vpack.c.b16 %v3029, %v3028
    %v3090 = vpack.c.b16 %v3031, %v3030
    %v3091 = vpack.c.b16 %v3033, %v3032
    %v3092 = vpack.c.b16 %v3035, %v3034
    %v3093 = vpack.c.b16 %v3037, %v3036
    %v3094 = vpack.c.b16 %v3039, %v3038
    %v3095 = vpack.c.b16 %v3041, %v3040
    %v3096 = vpack.c.b16 %v3043, %v3042
    %v3097 = vpack.c.b16 %v3045, %v3044
    %v3098 = vpack.c.b16 %v3047, %v3046
    %v3099 = vpack.c.b16 %v3049, %v3048
    %v3100 = vpack.c.b16 %v3051, %v3050
    %v3101 = vpack.c.b16 %v3053, %v3052
    %v3102 = vpack.c.b16 %v3055, %v3054
    %v3103 = vpack.c.b16 %v3057, %v3056
    %v3104 = vpack.c.b16 %v3059, %v3058
    %v3105 = vpack.c.b16 %v3061, %v3060
    %v3106 = vpack.c.b16 %v3063, %v3062
    %v3107 = vpack.c.b16 %v3065, %v3064
    %v3108 = vpack.c.b16 %v3067, %v3066
    %v3109 = vpack.c.b16 %v3069, %v3068
    %v3110 = vpack.c.b16 %v3071, %v3070
    %v3111 = vpack.c.b16 %v3073, %v3072
    %v3112 = vpack.c.b16 %v3075, %v3074
    %v3113 = vpack.c.b16 %v3077, %v3076
    %v3114 = vpack.c.b16 %v3079, %v3078
    %v3115 = vpack.c.b16 %v3081, %v3080
    %v3116 = vpack.c.b16 %v3083, %v3082
    %v3117 = vpack.c.b16 %v3085, %v3084
    %3150 = vmatprep.subr.bf16.mxu0 0
    %3151 = vmatpush1.bf16.msra.mxu0 %v3086
    %3152 = vmatprep.subr.bf16.mxu0 0
    %3153 = vmatpush1.bf16.msra.mxu0 %v3087
    %3154 = vmatprep.subr.bf16.mxu0 0
    %3155 = vmatpush1.bf16.msra.mxu0 %v3088
    %3156 = vmatprep.subr.bf16.mxu0 0
    %3157 = vmatpush1.bf16.msra.mxu0 %v3089
    %3158 = vmatprep.subr.bf16.mxu0 0
    %3159 = vmatpush1.bf16.msra.mxu0 %v3090
    %3160 = vmatprep.subr.bf16.mxu0 0
    %3161 = vmatpush1.bf16.msra.mxu0 %v3091
    %3162 = vmatprep.subr.bf16.mxu0 0
    %3163 = vmatpush1.bf16.msra.mxu0 %v3092
    %3164 = vmatprep.subr.bf16.mxu0 0
    %3165 = vmatpush1.bf16.msra.mxu0 %v3093
    %3166 = vmatprep.subr.bf16.mxu0 0
    %3167 = vmatpush1.bf16.msra.mxu0 %v3094
    %3168 = vmatprep.subr.bf16.mxu0 0
    %3169 = vmatpush1.bf16.msra.mxu0 %v3095
    %3170 = vmatprep.subr.bf16.mxu0 0
    %3171 = vmatpush1.bf16.msra.mxu0 %v3096
    %3172 = vmatprep.subr.bf16.mxu0 0
    %3173 = vmatpush1.bf16.msra.mxu0 %v3097
    %3174 = vmatprep.subr.bf16.mxu0 0
    %3175 = vmatpush1.bf16.msra.mxu0 %v3098
    %3176 = vmatprep.subr.bf16.mxu0 0
    %3177 = vmatpush1.bf16.msra.mxu0 %v3099
    %3178 = vmatprep.subr.bf16.mxu0 0
    %3179 = vmatpush1.bf16.msra.mxu0 %v3100
    %3180 = vmatprep.subr.bf16.mxu0 0
    %3181 = vmatpush1.bf16.msra.mxu0 %v3101
    %3182 = vmatprep.mubr.bf16.mxu0 %v2884
    %3183 = vmatmul.mubr.bf16.gmra.mrb[0].mxu0 %v2883
    %v3184 = vpop.f32.mrb[0].mxu0
    %v3185 = vadd.f32 %v2956, %v3184
    %v3186 = vpop.f32.mrb[0].mxu0
    %v3187 = vpop.f32.mrb[0].mxu0
    %v3188 = vadd.f32 %v2956, %v3187
    %v3189 = vpop.f32.mrb[0].mxu0
    %3190 = vdwg.mxu0
    %3191 = vmatprep.subr.bf16.mxu0 0
    %3192 = vmatpush1.bf16.msra.mxu0 %v3102
    %3193 = vmatprep.subr.bf16.mxu0 0
    %3194 = vmatpush1.bf16.msra.mxu0 %v3103
    %3195 = vmatprep.subr.bf16.mxu0 0
    %3196 = vmatpush1.bf16.msra.mxu0 %v3104
    %3197 = vmatprep.subr.bf16.mxu0 0
    %3198 = vmatpush1.bf16.msra.mxu0 %v3105
    %3199 = vmatprep.subr.bf16.mxu0 0
    %3200 = vmatpush1.bf16.msra.mxu0 %v3106
    %3201 = vmatprep.subr.bf16.mxu0 0
    %3202 = vmatpush1.bf16.msra.mxu0 %v3107
    %3203 = vmatprep.subr.bf16.mxu0 0
    %3204 = vmatpush1.bf16.msra.mxu0 %v3108
    %3205 = vmatprep.subr.bf16.mxu0 0
    %3206 = vmatpush1.bf16.msra.mxu0 %v3109
    %3207 = vmatprep.subr.bf16.mxu0 0
    %3208 = vmatpush1.bf16.msra.mxu0 %v3110
    %3209 = vmatprep.subr.bf16.mxu0 0
    %3210 = vmatpush1.bf16.msra.mxu0 %v3111
    %3211 = vmatprep.subr.bf16.mxu0 0
    %3212 = vmatpush1.bf16.msra.mxu0 %v3112
    %3213 = vmatprep.subr.bf16.mxu0 0
    %3214 = vmatpush1.bf16.msra.mxu0 %v3113
    %3215 = vmatprep.subr.bf16.mxu0 0
    %3216 = vmatpush1.bf16.msra.mxu0 %v3114
    %3217 = vmatprep.subr.bf16.mxu0 0
    %3218 = vmatpush1.bf16.msra.mxu0 %v3115
    %3219 = vmatprep.subr.bf16.mxu0 0
    %3220 = vmatpush1.bf16.msra.mxu0 %v3116
    %3221 = vmatprep.subr.bf16.mxu0 0
    %3222 = vmatpush1.bf16.msra.mxu0 %v3117
    %3223 = vmatprep.mubr.bf16.mxu0 %v2886
    %3224 = vmatmul.mubr.bf16.gmra.mrb[0].mxu0 %v2885
    %v3225 = vpop.f32.mrb[0].mxu0
    %v3226 = vadd.f32 %v3185, %v3225
    %v3227 = vpop.f32.mrb[0].mxu0
    %v3228 = vpop.f32.mrb[0].mxu0
    %v3229 = vadd.f32 %v3188, %v3228
    %v3230 = vpop.f32.mrb[0].mxu0
    %3231 = vdwg.mxu0
    %3232 = vst [vmem:[#allocation23] sm:$0xff] %v3226
    %3233 = vst [vmem:[#allocation23 + $0x8] sm:$0xff] %v3229
    // Predicated region
    $region106: #{tpu_custom_call.1} parent=1 // pred_check
      _
    $region107: #{tpu_custom_call.1} parent=1 // pred_check_branch
      %3235 = sbr.rel (0) target = $region109
    $region108: #{tpu_custom_call.1} parent=1 // pred_region
      %s3237 = ssub.s32 512, 512
      %3238 = vsyncadd [#allocation4], %s3237
      %s3239 = sshll.u32 [#allocation19], 4
      %s3240 = int_to_ptr.vmem [resolvable:$true] %s3239
      %3245 = dma.vmem_to_hbm [thread:$0]  %s3240, 512, %s16, [#allocation4], 256, 256, 16
    $region109: #{tpu_custom_call.1} parent=1 // pred_fallthru
      _
    // Predicated region
    $region110: #{tpu_custom_call.1} parent=1 // pred_check
      _
    $region111: #{tpu_custom_call.1} parent=1 // pred_check_branch
      %3247 = sbr.rel (0) target = $region113
    $region112: #{tpu_custom_call.1} parent=1 // pred_region
      %s3249 = ssub.s32 512, 512
      %3250 = vsyncadd [#allocation21], %s3249
      %s3251 = sshll.u32 [#allocation20], 4
      %s3252 = int_to_ptr.vmem [resolvable:$true] %s3251
      %3257 = dma.vmem_to_hbm [thread:$0]  %s3252, 512, %s17, [#allocation21], 256, 256, 16
    $region113: #{tpu_custom_call.1} parent=1 // pred_fallthru
      _
    // Predicated region
    $region114: #{tpu_custom_call.1} parent=1 // pred_check
      _
    $region115: #{tpu_custom_call.1} parent=1 // pred_check_branch
      %3259 = sbr.rel (0) target = $region117
    $region116: #{tpu_custom_call.1} parent=1 // pred_region
      %s3261 = ssub.s32 256, 256
      %3262 = vsyncadd [#allocation21], %s3261
      %s3263 = sshll.u32 [#allocation22], 4
      %s3264 = int_to_ptr.vmem [resolvable:$true] %s3263
      %3269 = dma.vmem_to_hbm [thread:$0]  %s3264, 256, %s18, [#allocation21], 128, 128, 8
    $region117: #{tpu_custom_call.1} parent=1 // pred_fallthru
      _
    // Predicated region
    $region118: #{tpu_custom_call.1} parent=1 // pred_check
      _
    $region119: #{tpu_custom_call.1} parent=1 // pred_check_branch
      %3271 = sbr.rel (0) target = $region121
    $region120: #{tpu_custom_call.1} parent=1 // pred_region
      %s3273 = ssub.s32 256, 256
      %3274 = vsyncadd [#allocation24], %s3273
      %s3275 = sshll.u32 [#allocation23], 4
      %s3276 = int_to_ptr.vmem [resolvable:$true] %s3275
      %3281 = dma.vmem_to_hbm [thread:$0]  %s3276, 256, %s19, [#allocation24], 128, 128, 8
    $region121: #{tpu_custom_call.1} parent=1 // pred_fallthru
      _
    // Predicated region
    $region122: #{tpu_custom_call.1} parent=1 // pred_check
      _
    $region123: #{tpu_custom_call.1} parent=1 // pred_check_branch
      %3283 = sbr.rel (0) target = $region125
    $region124: #{tpu_custom_call.1} parent=1 // pred_region
      %3284 = dma.done [#allocation4], 512
    $region125: #{tpu_custom_call.1} parent=1 // pred_fallthru
      _
    // Predicated region
    $region126: #{tpu_custom_call.1} parent=1 // pred_check
      _
    $region127: #{tpu_custom_call.1} parent=1 // pred_check_branch
      %3286 = sbr.rel (0) target = $region129
    $region128: #{tpu_custom_call.1} parent=1 // pred_region
      %3287 = dma.done [#allocation21], 512
    $region129: #{tpu_custom_call.1} parent=1 // pred_fallthru
      _
    // Predicated region
    $region130: #{tpu_custom_call.1} parent=1 // pred_check
      _
    $region131: #{tpu_custom_call.1} parent=1 // pred_check_branch
      %3289 = sbr.rel (0) target = $region133
    $region132: #{tpu_custom_call.1} parent=1 // pred_region
      %3290 = dma.done [#allocation21], 256
    $region133: #{tpu_custom_call.1} parent=1 // pred_fallthru
      _
    // Predicated region
    $region134: #{tpu_custom_call.1} parent=1 // pred_check
      _
    $region135: #{tpu_custom_call.1} parent=1 // pred_check_branch
      %3292 = sbr.rel (0) target = $region137
    $region136: #{tpu_custom_call.1} parent=1 // pred_region
      %3293 = dma.done [#allocation24], 256
    $region137: #{tpu_custom_call.1} parent=1 // pred_fallthru
      _
    %3294 = vsyncpa [#allocation3], 1
    %3295 = vsyncpa [#allocation6], 1
    %3296 = vsyncpa [#allocation9], 1
    %3297 = vsyncpa [#allocation12], 1
    %3298 = vsyncpa [#allocation15], 1
    %3299 = vsyncpa [#allocation18], 1
    %3300 = vsyncpa [#allocation4], 1
    %3301 = vsyncpa [#allocation21], 1
    %3302 = vsyncpa [#allocation24], 1

</llo_original>
